<compile_context>
chip_gen: v7x
topology: tpu7x:2x2x1
jax: 0.10.0
libtpu: 0.0.40
codegen_flags: <defaults>
</compile_context>

<pallas_src>
import jax
import jax.numpy as jnp
from jax.experimental import pallas as pl
from jax.experimental.pallas import tpu as pltpu


def _round_up(x, m):
    return ((x + m - 1) // m) * m


# --------------------------------------------------------------------------
# Kernel 1: full LSTM recurrence (single grid step, in-kernel time loop).
# --------------------------------------------------------------------------
def lstm_kernel(x_ref,    # VMEM (seq, bpad, epad)          embedded inputs (padded)
                w_ref,    # VMEM (epad + hidden, 4*hidden)  [W_ih^T (padded) ; W_hh^T]
                b_ref,    # VMEM (1, 4*hidden)              b_ih + b_hh
                hs_ref):  # VMEM (seq, bpad, hidden)        all hidden states (output)
    seq, bpad, _ = x_ref.shape
    hidden = hs_ref.shape[-1]

    def step(t, carry):
        h, c = carry
        x_t = x_ref[t]                                     # (bpad, epad)
        xh = jnp.concatenate([x_t, h], axis=-1)            # (bpad, epad+hidden), lane-aligned
        # single fused gate matmul (PyTorch gate order: i, f, g, o)
        gates = jnp.dot(xh, w_ref[...],
                        preferred_element_type=jnp.float32) + b_ref[...]
        i = jax.nn.sigmoid(gates[:, 0 * hidden:1 * hidden])
        f = jax.nn.sigmoid(gates[:, 1 * hidden:2 * hidden])
        g = jnp.tanh(gates[:, 2 * hidden:3 * hidden])
        o = jax.nn.sigmoid(gates[:, 3 * hidden:4 * hidden])
        c_new = f * c + i * g
        h_new = o * jnp.tanh(c_new)
        hs_ref[t] = h_new
        return (h_new, c_new)

    h0 = jnp.zeros((bpad, hidden), jnp.float32)
    c0 = jnp.zeros((bpad, hidden), jnp.float32)
    jax.lax.fori_loop(0, seq, step, (h0, c0), unroll=True)


# --------------------------------------------------------------------------
# Kernel 2: output projection, batched over all timesteps, vocab-tiled grid.
# --------------------------------------------------------------------------
def fc_kernel(h_ref,    # VMEM (M, hidden)      all hidden states, flattened
              w_ref,    # VMEM (hidden, tv)     vocab tile of W_fc^T
              b_ref,    # VMEM (1, tv)          vocab tile of b_fc
              o_ref):   # VMEM (M, tv)
    o_ref[...] = (jnp.dot(h_ref[...], w_ref[...],
                          preferred_element_type=jnp.float32)
                  + b_ref[...]).astype(o_ref.dtype)


# --------------------------------------------------------------------------
# Parameters / wrapper
# --------------------------------------------------------------------------
def init_params(key, vocab_size, embedding_dim, hidden_size):
    ks = jax.random.split(key, 7)
    s = 1.0 / jnp.sqrt(jnp.float32(hidden_size))
    return dict(
        emb=jax.random.normal(ks[0], (vocab_size, embedding_dim), jnp.float32),
        w_ih=jax.random.uniform(ks[1], (4 * hidden_size, embedding_dim), jnp.float32, -s, s),
        w_hh=jax.random.uniform(ks[2], (4 * hidden_size, hidden_size), jnp.float32, -s, s),
        b_ih=jax.random.uniform(ks[3], (4 * hidden_size,), jnp.float32, -s, s),
        b_hh=jax.random.uniform(ks[4], (4 * hidden_size,), jnp.float32, -s, s),
        w_fc=jax.random.uniform(ks[5], (vocab_size, hidden_size), jnp.float32, -s, s),
        b_fc=jax.random.uniform(ks[6], (vocab_size,), jnp.float32, -s, s),
    )


def joke_generator_forward(ids, params):
    seq, batch = ids.shape
    vocab, embed = params["emb"].shape
    hidden = params["w_hh"].shape[1]

    bpad = _round_up(batch, 8)      # full sublanes -> unmasked stores
    epad = _round_up(embed, 128)    # lane-aligned embed dim for the fused matmul

    # ---- glue (plain XLA): embedding gather + padding + weight fusion ----
    x = params["emb"][ids.astype(jnp.int32)]                       # (seq, batch, embed)
    x = jnp.pad(x, ((0, 0), (0, bpad - batch), (0, epad - embed)))  # (seq, bpad, epad)

    wih_t = jnp.pad(params["w_ih"].T, ((0, epad - embed), (0, 0)))  # (epad, 4H), zero rows
    whh_t = params["w_hh"].T                                        # (hidden, 4H)
    w_fused = jnp.concatenate([wih_t, whh_t], axis=0)               # (epad+hidden, 4H)
    b = (params["b_ih"] + params["b_hh"])[None, :]                  # (1, 4H)

    # ---- kernel 1: LSTM recurrence, all timesteps in one grid step ----
    hs = pl.pallas_call(
        lstm_kernel,
        out_shape=jax.ShapeDtypeStruct((seq, bpad, hidden), jnp.float32),
        grid=(1,),
        in_specs=[
            pl.BlockSpec((seq, bpad, epad), lambda i: (0, 0, 0)),
            pl.BlockSpec((epad + hidden, 4 * hidden), lambda i: (0, 0)),
            pl.BlockSpec((1, 4 * hidden), lambda i: (0, 0)),
        ],
        out_specs=pl.BlockSpec((seq, bpad, hidden), lambda i: (0, 0, 0)),
        compiler_params=pltpu.CompilerParams(dimension_semantics=("arbitrary",)),
    )(x, w_fused, b)

    # ---- kernel 2: fc projection over all (seq*bpad) rows, vocab-tiled ----
    m = seq * bpad
    hs_flat = hs.reshape(m, hidden)
    wfc_t = params["w_fc"].T                # (hidden, vocab)
    bfc = params["b_fc"][None, :]           # (1, vocab)
    tv = 128 if vocab % 128 == 0 else vocab  # vocab tile (keeps VMEM small on v7x)

    logits_flat = pl.pallas_call(
        fc_kernel,
        out_shape=jax.ShapeDtypeStruct((m, vocab), jnp.float32),
        grid=(vocab // tv,),
        in_specs=[
            pl.BlockSpec((m, hidden), lambda j: (0, 0)),
            pl.BlockSpec((hidden, tv), lambda j: (0, j)),
            pl.BlockSpec((1, tv), lambda j: (0, j)),
        ],
        out_specs=pl.BlockSpec((m, tv), lambda j: (0, j)),
        compiler_params=pltpu.CompilerParams(dimension_semantics=("parallel",)),
    )(hs_flat, wfc_t, bfc)

    logits = logits_flat.reshape(seq, bpad, vocab)[:, :batch, :]
    return logits


def reference_forward(ids, params):
    """Pure-JAX reference matching torch semantics (for correctness check)."""
    emb = params["emb"][ids]  # (seq, batch, embed)
    hidden = params["w_hh"].shape[1]
    batch = ids.shape[1]

    def step(carry, x_t):
        h, c = carry
        gates = (x_t @ params["w_ih"].T + params["b_ih"]
                 + h @ params["w_hh"].T + params["b_hh"])
        i, f, g, o = jnp.split(gates, 4, axis=-1)
        i, f, o = jax.nn.sigmoid(i), jax.nn.sigmoid(f), jax.nn.sigmoid(o)
        g = jnp.tanh(g)
        c = f * c + i * g
        h = o * jnp.tanh(c)
        return (h, c), h

    h0 = jnp.zeros((batch, hidden), jnp.float32)
    c0 = jnp.zeros((batch, hidden), jnp.float32)
    _, hs = jax.lax.scan(step, (h0, c0), emb)
    return hs @ params["w_fc"].T + params["b_fc"]


if __name__ == "__main__":
    # Small, TPU-friendly shapes consistent with the module's forward
    # (embedding_dim=50 and a GPT2-style vocab, scaled down).
    vocab_size, embedding_dim, hidden_size = 256, 50, 256
    seq_len, batch = 8, 2

    key = jax.random.PRNGKey(0)
    kp, kx = jax.random.split(key)
    params = init_params(kp, vocab_size, embedding_dim, hidden_size)
    ids = jax.random.randint(kx, (seq_len, batch), 0, vocab_size, dtype=jnp.int32)

    out = joke_generator_forward(ids, params)
    out = jax.block_until_ready(out)

    ref = reference_forward(ids, params)
    assert out.shape == (seq_len, batch, vocab_size)
    assert jnp.allclose(out, ref, rtol=5e-2, atol=5e-2), "mismatch vs JAX reference"

    print("KERNEL_OK")
</pallas_src>

<mosaic_0001>
module attributes {stable_mosaic.version = 11 : i64} {
  func.func @lstm_kernel(%arg0: i32, %arg1: memref<8x8x128xf32, #tpu.memory_space<vmem>>, %arg2: memref<384x1024xf32, #tpu.memory_space<vmem>>, %arg3: memref<1x1024xf32, #tpu.memory_space<vmem>>, %arg4: memref<8x8x256xf32, #tpu.memory_space<vmem>>) attributes {dimension_semantics = [#tpu.dimension_semantics<arbitrary>], iteration_bounds = array<i64: 1>, scalar_prefetch = 0 : i64, scratch_operands = 0 : i64, tpu.core_type = #tpu.core_type<tc>, window_params = [{pipeline_mode = #tpu.pipeline_mode<synchronous>, transform_indices = @transform_0, window_bounds = array<i64: 8, 8, 128>}, {pipeline_mode = #tpu.pipeline_mode<synchronous>, transform_indices = @transform_1, window_bounds = array<i64: 384, 1024>}, {pipeline_mode = #tpu.pipeline_mode<synchronous>, transform_indices = @transform_2, window_bounds = array<i64: 1, 1024>}, {pipeline_mode = #tpu.pipeline_mode<synchronous>, transform_indices = @transform_3, window_bounds = array<i64: 8, 8, 256>}]} {
    %cst = arith.constant 0.000000e+00 : f32
    %0 = vector.broadcast %cst : f32 to vector<8x256xf32>
    %cst_0 = arith.constant 0.000000e+00 : f32
    %1 = vector.broadcast %cst_0 : f32 to vector<8x256xf32>
    %c0_i32 = arith.constant 0 : i32
    %2 = arith.index_cast %c0_i32 : i32 to index
    %c0 = arith.constant 0 : index
    %c0_1 = arith.constant 0 : index
    %3 = vector.load %arg1[%2, %c0, %c0_1] : memref<8x8x128xf32, #tpu.memory_space<vmem>>, vector<1x8x128xf32>
    %4 = vector.shape_cast %3 : vector<1x8x128xf32> to vector<8x128xf32>
    %5 = tpu.concatenate %4, %0 in 1 : vector<8x128xf32>, vector<8x256xf32> -> vector<8x384xf32>
    %c0_2 = arith.constant 0 : index
    %c0_3 = arith.constant 0 : index
    %6 = vector.load %arg2[%c0_2, %c0_3] : memref<384x1024xf32, #tpu.memory_space<vmem>>, vector<384x1024xf32>
    %cst_4 = arith.constant dense<0.000000e+00> : vector<8x1024xf32>
    %7 = tpu.matmul %5, %6, %cst_4 {dimension_numbers = #tpu.dot_dimension_numbers<[1], [0], [0], [1], [0, 0, 1, 1], [], []>} : vector<8x384xf32>, vector<384x1024xf32>, vector<8x1024xf32> -> vector<8x1024xf32>
    %c0_5 = arith.constant 0 : index
    %c0_6 = arith.constant 0 : index
    %8 = vector.load %arg3[%c0_5, %c0_6] : memref<1x1024xf32, #tpu.memory_space<vmem>>, vector<1x1024xf32>
    %9 = vector.broadcast %8 : vector<1x1024xf32> to vector<8x1024xf32>
    %10 = arith.addf %7, %9 : vector<8x1024xf32>
    %11 = vector.extract_strided_slice %10 {offsets = [0, 0], sizes = [8, 256], strides = [1, 1]} : vector<8x1024xf32> to vector<8x256xf32>
    %12 = arith.negf %11 : vector<8x256xf32>
    %13 = math.exp %12 : vector<8x256xf32>
    %cst_7 = arith.constant 1.000000e+00 : f32
    %14 = vector.broadcast %cst_7 : f32 to vector<8x256xf32>
    %15 = arith.addf %14, %13 : vector<8x256xf32>
    %16 = arith.divf %14, %15 : vector<8x256xf32>
    %17 = vector.extract_strided_slice %10 {offsets = [0, 256], sizes = [8, 256], strides = [1, 1]} : vector<8x1024xf32> to vector<8x256xf32>
    %18 = arith.negf %17 : vector<8x256xf32>
    %19 = math.exp %18 : vector<8x256xf32>
    %cst_8 = arith.constant 1.000000e+00 : f32
    %20 = vector.broadcast %cst_8 : f32 to vector<8x256xf32>
    %21 = arith.addf %20, %19 : vector<8x256xf32>
    %22 = arith.divf %20, %21 : vector<8x256xf32>
    %23 = vector.extract_strided_slice %10 {offsets = [0, 512], sizes = [8, 256], strides = [1, 1]} : vector<8x1024xf32> to vector<8x256xf32>
    %24 = math.tanh %23 : vector<8x256xf32>
    %25 = vector.extract_strided_slice %10 {offsets = [0, 768], sizes = [8, 256], strides = [1, 1]} : vector<8x1024xf32> to vector<8x256xf32>
    %26 = arith.negf %25 : vector<8x256xf32>
    %27 = math.exp %26 : vector<8x256xf32>
    %cst_9 = arith.constant 1.000000e+00 : f32
    %28 = vector.broadcast %cst_9 : f32 to vector<8x256xf32>
    %29 = arith.addf %28, %27 : vector<8x256xf32>
    %30 = arith.divf %28, %29 : vector<8x256xf32>
    %31 = arith.mulf %22, %1 : vector<8x256xf32>
    %32 = arith.mulf %16, %24 : vector<8x256xf32>
    %33 = arith.addf %31, %32 : vector<8x256xf32>
    %34 = math.tanh %33 : vector<8x256xf32>
    %35 = arith.mulf %30, %34 : vector<8x256xf32>
    %36 = arith.index_cast %c0_i32 : i32 to index
    %c0_10 = arith.constant 0 : index
    %c0_11 = arith.constant 0 : index
    %37 = vector.load %arg4[%36, %c0_10, %c0_11] : memref<8x8x256xf32, #tpu.memory_space<vmem>>, vector<1x8x256xf32>
    %38 = vector.shape_cast %37 : vector<1x8x256xf32> to vector<8x256xf32>
    %39 = vector.shape_cast %35 : vector<8x256xf32> to vector<1x8x256xf32>
    tpu.vector_store %arg4[%36, %c0_10, %c0_11], %39 {strides = array<i32>} : memref<8x8x256xf32, #tpu.memory_space<vmem>>, vector<1x8x256xf32>,
    %c1_i32 = arith.constant 1 : i32
    %40 = arith.index_cast %c1_i32 : i32 to index
    %c0_12 = arith.constant 0 : index
    %c0_13 = arith.constant 0 : index
    %41 = vector.load %arg1[%40, %c0_12, %c0_13] : memref<8x8x128xf32, #tpu.memory_space<vmem>>, vector<1x8x128xf32>
    %42 = vector.shape_cast %41 : vector<1x8x128xf32> to vector<8x128xf32>
    %43 = tpu.concatenate %42, %35 in 1 : vector<8x128xf32>, vector<8x256xf32> -> vector<8x384xf32>
    %c0_14 = arith.constant 0 : index
    %c0_15 = arith.constant 0 : index
    %44 = vector.load %arg2[%c0_14, %c0_15] : memref<384x1024xf32, #tpu.memory_space<vmem>>, vector<384x1024xf32>
    %cst_16 = arith.constant dense<0.000000e+00> : vector<8x1024xf32>
    %45 = tpu.matmul %43, %44, %cst_16 {dimension_numbers = #tpu.dot_dimension_numbers<[1], [0], [0], [1], [0, 0, 1, 1], [], []>} : vector<8x384xf32>, vector<384x1024xf32>, vector<8x1024xf32> -> vector<8x1024xf32>
    %c0_17 = arith.constant 0 : index
    %c0_18 = arith.constant 0 : index
    %46 = vector.load %arg3[%c0_17, %c0_18] : memref<1x1024xf32, #tpu.memory_space<vmem>>, vector<1x1024xf32>
    %47 = vector.broadcast %46 : vector<1x1024xf32> to vector<8x1024xf32>
    %48 = arith.addf %45, %47 : vector<8x1024xf32>
    %49 = vector.extract_strided_slice %48 {offsets = [0, 0], sizes = [8, 256], strides = [1, 1]} : vector<8x1024xf32> to vector<8x256xf32>
    %50 = arith.negf %49 : vector<8x256xf32>
    %51 = math.exp %50 : vector<8x256xf32>
    %cst_19 = arith.constant 1.000000e+00 : f32
    %52 = vector.broadcast %cst_19 : f32 to vector<8x256xf32>
    %53 = arith.addf %52, %51 : vector<8x256xf32>
    %54 = arith.divf %52, %53 : vector<8x256xf32>
    %55 = vector.extract_strided_slice %48 {offsets = [0, 256], sizes = [8, 256], strides = [1, 1]} : vector<8x1024xf32> to vector<8x256xf32>
    %56 = arith.negf %55 : vector<8x256xf32>
    %57 = math.exp %56 : vector<8x256xf32>
    %cst_20 = arith.constant 1.000000e+00 : f32
    %58 = vector.broadcast %cst_20 : f32 to vector<8x256xf32>
    %59 = arith.addf %58, %57 : vector<8x256xf32>
    %60 = arith.divf %58, %59 : vector<8x256xf32>
    %61 = vector.extract_strided_slice %48 {offsets = [0, 512], sizes = [8, 256], strides = [1, 1]} : vector<8x1024xf32> to vector<8x256xf32>
    %62 = math.tanh %61 : vector<8x256xf32>
    %63 = vector.extract_strided_slice %48 {offsets = [0, 768], sizes = [8, 256], strides = [1, 1]} : vector<8x1024xf32> to vector<8x256xf32>
    %64 = arith.negf %63 : vector<8x256xf32>
    %65 = math.exp %64 : vector<8x256xf32>
    %cst_21 = arith.constant 1.000000e+00 : f32
    %66 = vector.broadcast %cst_21 : f32 to vector<8x256xf32>
    %67 = arith.addf %66, %65 : vector<8x256xf32>
    %68 = arith.divf %66, %67 : vector<8x256xf32>
    %69 = arith.mulf %60, %33 : vector<8x256xf32>
    %70 = arith.mulf %54, %62 : vector<8x256xf32>
    %71 = arith.addf %69, %70 : vector<8x256xf32>
    %72 = math.tanh %71 : vector<8x256xf32>
    %73 = arith.mulf %68, %72 : vector<8x256xf32>
    %74 = arith.index_cast %c1_i32 : i32 to index
    %c0_22 = arith.constant 0 : index
    %c0_23 = arith.constant 0 : index
    %75 = vector.load %arg4[%74, %c0_22, %c0_23] : memref<8x8x256xf32, #tpu.memory_space<vmem>>, vector<1x8x256xf32>
    %76 = vector.shape_cast %75 : vector<1x8x256xf32> to vector<8x256xf32>
    %77 = vector.shape_cast %73 : vector<8x256xf32> to vector<1x8x256xf32>
    tpu.vector_store %arg4[%74, %c0_22, %c0_23], %77 {strides = array<i32>} : memref<8x8x256xf32, #tpu.memory_space<vmem>>, vector<1x8x256xf32>,
    %c2_i32 = arith.constant 2 : i32
    %78 = arith.index_cast %c2_i32 : i32 to index
    %c0_24 = arith.constant 0 : index
    %c0_25 = arith.constant 0 : index
    %79 = vector.load %arg1[%78, %c0_24, %c0_25] : memref<8x8x128xf32, #tpu.memory_space<vmem>>, vector<1x8x128xf32>
    %80 = vector.shape_cast %79 : vector<1x8x128xf32> to vector<8x128xf32>
    %81 = tpu.concatenate %80, %73 in 1 : vector<8x128xf32>, vector<8x256xf32> -> vector<8x384xf32>
    %c0_26 = arith.constant 0 : index
    %c0_27 = arith.constant 0 : index
    %82 = vector.load %arg2[%c0_26, %c0_27] : memref<384x1024xf32, #tpu.memory_space<vmem>>, vector<384x1024xf32>
    %cst_28 = arith.constant dense<0.000000e+00> : vector<8x1024xf32>
    %83 = tpu.matmul %81, %82, %cst_28 {dimension_numbers = #tpu.dot_dimension_numbers<[1], [0], [0], [1], [0, 0, 1, 1], [], []>} : vector<8x384xf32>, vector<384x1024xf32>, vector<8x1024xf32> -> vector<8x1024xf32>
    %c0_29 = arith.constant 0 : index
    %c0_30 = arith.constant 0 : index
    %84 = vector.load %arg3[%c0_29, %c0_30] : memref<1x1024xf32, #tpu.memory_space<vmem>>, vector<1x1024xf32>
    %85 = vector.broadcast %84 : vector<1x1024xf32> to vector<8x1024xf32>
    %86 = arith.addf %83, %85 : vector<8x1024xf32>
    %87 = vector.extract_strided_slice %86 {offsets = [0, 0], sizes = [8, 256], strides = [1, 1]} : vector<8x1024xf32> to vector<8x256xf32>
    %88 = arith.negf %87 : vector<8x256xf32>
    %89 = math.exp %88 : vector<8x256xf32>
    %cst_31 = arith.constant 1.000000e+00 : f32
    %90 = vector.broadcast %cst_31 : f32 to vector<8x256xf32>
    %91 = arith.addf %90, %89 : vector<8x256xf32>
    %92 = arith.divf %90, %91 : vector<8x256xf32>
    %93 = vector.extract_strided_slice %86 {offsets = [0, 256], sizes = [8, 256], strides = [1, 1]} : vector<8x1024xf32> to vector<8x256xf32>
    %94 = arith.negf %93 : vector<8x256xf32>
    %95 = math.exp %94 : vector<8x256xf32>
    %cst_32 = arith.constant 1.000000e+00 : f32
    %96 = vector.broadcast %cst_32 : f32 to vector<8x256xf32>
    %97 = arith.addf %96, %95 : vector<8x256xf32>
    %98 = arith.divf %96, %97 : vector<8x256xf32>
    %99 = vector.extract_strided_slice %86 {offsets = [0, 512], sizes = [8, 256], strides = [1, 1]} : vector<8x1024xf32> to vector<8x256xf32>
    %100 = math.tanh %99 : vector<8x256xf32>
    %101 = vector.extract_strided_slice %86 {offsets = [0, 768], sizes = [8, 256], strides = [1, 1]} : vector<8x1024xf32> to vector<8x256xf32>
    %102 = arith.negf %101 : vector<8x256xf32>
    %103 = math.exp %102 : vector<8x256xf32>
    %cst_33 = arith.constant 1.000000e+00 : f32
    %104 = vector.broadcast %cst_33 : f32 to vector<8x256xf32>
    %105 = arith.addf %104, %103 : vector<8x256xf32>
    %106 = arith.divf %104, %105 : vector<8x256xf32>
    %107 = arith.mulf %98, %71 : vector<8x256xf32>
    %108 = arith.mulf %92, %100 : vector<8x256xf32>
    %109 = arith.addf %107, %108 : vector<8x256xf32>
    %110 = math.tanh %109 : vector<8x256xf32>
    %111 = arith.mulf %106, %110 : vector<8x256xf32>
    %112 = arith.index_cast %c2_i32 : i32 to index
    %c0_34 = arith.constant 0 : index
    %c0_35 = arith.constant 0 : index
    %113 = vector.load %arg4[%112, %c0_34, %c0_35] : memref<8x8x256xf32, #tpu.memory_space<vmem>>, vector<1x8x256xf32>
    %114 = vector.shape_cast %113 : vector<1x8x256xf32> to vector<8x256xf32>
    %115 = vector.shape_cast %111 : vector<8x256xf32> to vector<1x8x256xf32>
    tpu.vector_store %arg4[%112, %c0_34, %c0_35], %115 {strides = array<i32>} : memref<8x8x256xf32, #tpu.memory_space<vmem>>, vector<1x8x256xf32>,
    %c3_i32 = arith.constant 3 : i32
    %116 = arith.index_cast %c3_i32 : i32 to index
    %c0_36 = arith.constant 0 : index
    %c0_37 = arith.constant 0 : index
    %117 = vector.load %arg1[%116, %c0_36, %c0_37] : memref<8x8x128xf32, #tpu.memory_space<vmem>>, vector<1x8x128xf32>
    %118 = vector.shape_cast %117 : vector<1x8x128xf32> to vector<8x128xf32>
    %119 = tpu.concatenate %118, %111 in 1 : vector<8x128xf32>, vector<8x256xf32> -> vector<8x384xf32>
    %c0_38 = arith.constant 0 : index
    %c0_39 = arith.constant 0 : index
    %120 = vector.load %arg2[%c0_38, %c0_39] : memref<384x1024xf32, #tpu.memory_space<vmem>>, vector<384x1024xf32>
    %cst_40 = arith.constant dense<0.000000e+00> : vector<8x1024xf32>
    %121 = tpu.matmul %119, %120, %cst_40 {dimension_numbers = #tpu.dot_dimension_numbers<[1], [0], [0], [1], [0, 0, 1, 1], [], []>} : vector<8x384xf32>, vector<384x1024xf32>, vector<8x1024xf32> -> vector<8x1024xf32>
    %c0_41 = arith.constant 0 : index
    %c0_42 = arith.constant 0 : index
    %122 = vector.load %arg3[%c0_41, %c0_42] : memref<1x1024xf32, #tpu.memory_space<vmem>>, vector<1x1024xf32>
    %123 = vector.broadcast %122 : vector<1x1024xf32> to vector<8x1024xf32>
    %124 = arith.addf %121, %123 : vector<8x1024xf32>
    %125 = vector.extract_strided_slice %124 {offsets = [0, 0], sizes = [8, 256], strides = [1, 1]} : vector<8x1024xf32> to vector<8x256xf32>
    %126 = arith.negf %125 : vector<8x256xf32>
    %127 = math.exp %126 : vector<8x256xf32>
    %cst_43 = arith.constant 1.000000e+00 : f32
    %128 = vector.broadcast %cst_43 : f32 to vector<8x256xf32>
    %129 = arith.addf %128, %127 : vector<8x256xf32>
    %130 = arith.divf %128, %129 : vector<8x256xf32>
    %131 = vector.extract_strided_slice %124 {offsets = [0, 256], sizes = [8, 256], strides = [1, 1]} : vector<8x1024xf32> to vector<8x256xf32>
    %132 = arith.negf %131 : vector<8x256xf32>
    %133 = math.exp %132 : vector<8x256xf32>
    %cst_44 = arith.constant 1.000000e+00 : f32
    %134 = vector.broadcast %cst_44 : f32 to vector<8x256xf32>
    %135 = arith.addf %134, %133 : vector<8x256xf32>
    %136 = arith.divf %134, %135 : vector<8x256xf32>
    %137 = vector.extract_strided_slice %124 {offsets = [0, 512], sizes = [8, 256], strides = [1, 1]} : vector<8x1024xf32> to vector<8x256xf32>
    %138 = math.tanh %137 : vector<8x256xf32>
    %139 = vector.extract_strided_slice %124 {offsets = [0, 768], sizes = [8, 256], strides = [1, 1]} : vector<8x1024xf32> to vector<8x256xf32>
    %140 = arith.negf %139 : vector<8x256xf32>
    %141 = math.exp %140 : vector<8x256xf32>
    %cst_45 = arith.constant 1.000000e+00 : f32
    %142 = vector.broadcast %cst_45 : f32 to vector<8x256xf32>
    %143 = arith.addf %142, %141 : vector<8x256xf32>
    %144 = arith.divf %142, %143 : vector<8x256xf32>
    %145 = arith.mulf %136, %109 : vector<8x256xf32>
    %146 = arith.mulf %130, %138 : vector<8x256xf32>
    %147 = arith.addf %145, %146 : vector<8x256xf32>
    %148 = math.tanh %147 : vector<8x256xf32>
    %149 = arith.mulf %144, %148 : vector<8x256xf32>
    %150 = arith.index_cast %c3_i32 : i32 to index
    %c0_46 = arith.constant 0 : index
    %c0_47 = arith.constant 0 : index
    %151 = vector.load %arg4[%150, %c0_46, %c0_47] : memref<8x8x256xf32, #tpu.memory_space<vmem>>, vector<1x8x256xf32>
    %152 = vector.shape_cast %151 : vector<1x8x256xf32> to vector<8x256xf32>
    %153 = vector.shape_cast %149 : vector<8x256xf32> to vector<1x8x256xf32>
    tpu.vector_store %arg4[%150, %c0_46, %c0_47], %153 {strides = array<i32>} : memref<8x8x256xf32, #tpu.memory_space<vmem>>, vector<1x8x256xf32>,
    %c4_i32 = arith.constant 4 : i32
    %154 = arith.index_cast %c4_i32 : i32 to index
    %c0_48 = arith.constant 0 : index
    %c0_49 = arith.constant 0 : index
    %155 = vector.load %arg1[%154, %c0_48, %c0_49] : memref<8x8x128xf32, #tpu.memory_space<vmem>>, vector<1x8x128xf32>
    %156 = vector.shape_cast %155 : vector<1x8x128xf32> to vector<8x128xf32>
    %157 = tpu.concatenate %156, %149 in 1 : vector<8x128xf32>, vector<8x256xf32> -> vector<8x384xf32>
    %c0_50 = arith.constant 0 : index
    %c0_51 = arith.constant 0 : index
    %158 = vector.load %arg2[%c0_50, %c0_51] : memref<384x1024xf32, #tpu.memory_space<vmem>>, vector<384x1024xf32>
    %cst_52 = arith.constant dense<0.000000e+00> : vector<8x1024xf32>
    %159 = tpu.matmul %157, %158, %cst_52 {dimension_numbers = #tpu.dot_dimension_numbers<[1], [0], [0], [1], [0, 0, 1, 1], [], []>} : vector<8x384xf32>, vector<384x1024xf32>, vector<8x1024xf32> -> vector<8x1024xf32>
    %c0_53 = arith.constant 0 : index
    %c0_54 = arith.constant 0 : index
    %160 = vector.load %arg3[%c0_53, %c0_54] : memref<1x1024xf32, #tpu.memory_space<vmem>>, vector<1x1024xf32>
    %161 = vector.broadcast %160 : vector<1x1024xf32> to vector<8x1024xf32>
    %162 = arith.addf %159, %161 : vector<8x1024xf32>
    %163 = vector.extract_strided_slice %162 {offsets = [0, 0], sizes = [8, 256], strides = [1, 1]} : vector<8x1024xf32> to vector<8x256xf32>
    %164 = arith.negf %163 : vector<8x256xf32>
    %165 = math.exp %164 : vector<8x256xf32>
    %cst_55 = arith.constant 1.000000e+00 : f32
    %166 = vector.broadcast %cst_55 : f32 to vector<8x256xf32>
    %167 = arith.addf %166, %165 : vector<8x256xf32>
    %168 = arith.divf %166, %167 : vector<8x256xf32>
    %169 = vector.extract_strided_slice %162 {offsets = [0, 256], sizes = [8, 256], strides = [1, 1]} : vector<8x1024xf32> to vector<8x256xf32>
    %170 = arith.negf %169 : vector<8x256xf32>
    %171 = math.exp %170 : vector<8x256xf32>
    %cst_56 = arith.constant 1.000000e+00 : f32
    %172 = vector.broadcast %cst_56 : f32 to vector<8x256xf32>
    %173 = arith.addf %172, %171 : vector<8x256xf32>
    %174 = arith.divf %172, %173 : vector<8x256xf32>
    %175 = vector.extract_strided_slice %162 {offsets = [0, 512], sizes = [8, 256], strides = [1, 1]} : vector<8x1024xf32> to vector<8x256xf32>
    %176 = math.tanh %175 : vector<8x256xf32>
    %177 = vector.extract_strided_slice %162 {offsets = [0, 768], sizes = [8, 256], strides = [1, 1]} : vector<8x1024xf32> to vector<8x256xf32>
    %178 = arith.negf %177 : vector<8x256xf32>
    %179 = math.exp %178 : vector<8x256xf32>
    %cst_57 = arith.constant 1.000000e+00 : f32
    %180 = vector.broadcast %cst_57 : f32 to vector<8x256xf32>
    %181 = arith.addf %180, %179 : vector<8x256xf32>
    %182 = arith.divf %180, %181 : vector<8x256xf32>
    %183 = arith.mulf %174, %147 : vector<8x256xf32>
    %184 = arith.mulf %168, %176 : vector<8x256xf32>
    %185 = arith.addf %183, %184 : vector<8x256xf32>
    %186 = math.tanh %185 : vector<8x256xf32>
    %187 = arith.mulf %182, %186 : vector<8x256xf32>
    %188 = arith.index_cast %c4_i32 : i32 to index
    %c0_58 = arith.constant 0 : index
    %c0_59 = arith.constant 0 : index
    %189 = vector.load %arg4[%188, %c0_58, %c0_59] : memref<8x8x256xf32, #tpu.memory_space<vmem>>, vector<1x8x256xf32>
    %190 = vector.shape_cast %189 : vector<1x8x256xf32> to vector<8x256xf32>
    %191 = vector.shape_cast %187 : vector<8x256xf32> to vector<1x8x256xf32>
    tpu.vector_store %arg4[%188, %c0_58, %c0_59], %191 {strides = array<i32>} : memref<8x8x256xf32, #tpu.memory_space<vmem>>, vector<1x8x256xf32>,
    %c5_i32 = arith.constant 5 : i32
    %192 = arith.index_cast %c5_i32 : i32 to index
    %c0_60 = arith.constant 0 : index
    %c0_61 = arith.constant 0 : index
    %193 = vector.load %arg1[%192, %c0_60, %c0_61] : memref<8x8x128xf32, #tpu.memory_space<vmem>>, vector<1x8x128xf32>
    %194 = vector.shape_cast %193 : vector<1x8x128xf32> to vector<8x128xf32>
    %195 = tpu.concatenate %194, %187 in 1 : vector<8x128xf32>, vector<8x256xf32> -> vector<8x384xf32>
    %c0_62 = arith.constant 0 : index
    %c0_63 = arith.constant 0 : index
    %196 = vector.load %arg2[%c0_62, %c0_63] : memref<384x1024xf32, #tpu.memory_space<vmem>>, vector<384x1024xf32>
    %cst_64 = arith.constant dense<0.000000e+00> : vector<8x1024xf32>
    %197 = tpu.matmul %195, %196, %cst_64 {dimension_numbers = #tpu.dot_dimension_numbers<[1], [0], [0], [1], [0, 0, 1, 1], [], []>} : vector<8x384xf32>, vector<384x1024xf32>, vector<8x1024xf32> -> vector<8x1024xf32>
    %c0_65 = arith.constant 0 : index
    %c0_66 = arith.constant 0 : index
    %198 = vector.load %arg3[%c0_65, %c0_66] : memref<1x1024xf32, #tpu.memory_space<vmem>>, vector<1x1024xf32>
    %199 = vector.broadcast %198 : vector<1x1024xf32> to vector<8x1024xf32>
    %200 = arith.addf %197, %199 : vector<8x1024xf32>
    %201 = vector.extract_strided_slice %200 {offsets = [0, 0], sizes = [8, 256], strides = [1, 1]} : vector<8x1024xf32> to vector<8x256xf32>
    %202 = arith.negf %201 : vector<8x256xf32>
    %203 = math.exp %202 : vector<8x256xf32>
    %cst_67 = arith.constant 1.000000e+00 : f32
    %204 = vector.broadcast %cst_67 : f32 to vector<8x256xf32>
    %205 = arith.addf %204, %203 : vector<8x256xf32>
    %206 = arith.divf %204, %205 : vector<8x256xf32>
    %207 = vector.extract_strided_slice %200 {offsets = [0, 256], sizes = [8, 256], strides = [1, 1]} : vector<8x1024xf32> to vector<8x256xf32>
    %208 = arith.negf %207 : vector<8x256xf32>
    %209 = math.exp %208 : vector<8x256xf32>
    %cst_68 = arith.constant 1.000000e+00 : f32
    %210 = vector.broadcast %cst_68 : f32 to vector<8x256xf32>
    %211 = arith.addf %210, %209 : vector<8x256xf32>
    %212 = arith.divf %210, %211 : vector<8x256xf32>
    %213 = vector.extract_strided_slice %200 {offsets = [0, 512], sizes = [8, 256], strides = [1, 1]} : vector<8x1024xf32> to vector<8x256xf32>
    %214 = math.tanh %213 : vector<8x256xf32>
    %215 = vector.extract_strided_slice %200 {offsets = [0, 768], sizes = [8, 256], strides = [1, 1]} : vector<8x1024xf32> to vector<8x256xf32>
    %216 = arith.negf %215 : vector<8x256xf32>
    %217 = math.exp %216 : vector<8x256xf32>
    %cst_69 = arith.constant 1.000000e+00 : f32
    %218 = vector.broadcast %cst_69 : f32 to vector<8x256xf32>
    %219 = arith.addf %218, %217 : vector<8x256xf32>
    %220 = arith.divf %218, %219 : vector<8x256xf32>
    %221 = arith.mulf %212, %185 : vector<8x256xf32>
    %222 = arith.mulf %206, %214 : vector<8x256xf32>
    %223 = arith.addf %221, %222 : vector<8x256xf32>
    %224 = math.tanh %223 : vector<8x256xf32>
    %225 = arith.mulf %220, %224 : vector<8x256xf32>
    %226 = arith.index_cast %c5_i32 : i32 to index
    %c0_70 = arith.constant 0 : index
    %c0_71 = arith.constant 0 : index
    %227 = vector.load %arg4[%226, %c0_70, %c0_71] : memref<8x8x256xf32, #tpu.memory_space<vmem>>, vector<1x8x256xf32>
    %228 = vector.shape_cast %227 : vector<1x8x256xf32> to vector<8x256xf32>
    %229 = vector.shape_cast %225 : vector<8x256xf32> to vector<1x8x256xf32>
    tpu.vector_store %arg4[%226, %c0_70, %c0_71], %229 {strides = array<i32>} : memref<8x8x256xf32, #tpu.memory_space<vmem>>, vector<1x8x256xf32>,
    %c6_i32 = arith.constant 6 : i32
    %230 = arith.index_cast %c6_i32 : i32 to index
    %c0_72 = arith.constant 0 : index
    %c0_73 = arith.constant 0 : index
    %231 = vector.load %arg1[%230, %c0_72, %c0_73] : memref<8x8x128xf32, #tpu.memory_space<vmem>>, vector<1x8x128xf32>
    %232 = vector.shape_cast %231 : vector<1x8x128xf32> to vector<8x128xf32>
    %233 = tpu.concatenate %232, %225 in 1 : vector<8x128xf32>, vector<8x256xf32> -> vector<8x384xf32>
    %c0_74 = arith.constant 0 : index
    %c0_75 = arith.constant 0 : index
    %234 = vector.load %arg2[%c0_74, %c0_75] : memref<384x1024xf32, #tpu.memory_space<vmem>>, vector<384x1024xf32>
    %cst_76 = arith.constant dense<0.000000e+00> : vector<8x1024xf32>
    %235 = tpu.matmul %233, %234, %cst_76 {dimension_numbers = #tpu.dot_dimension_numbers<[1], [0], [0], [1], [0, 0, 1, 1], [], []>} : vector<8x384xf32>, vector<384x1024xf32>, vector<8x1024xf32> -> vector<8x1024xf32>
    %c0_77 = arith.constant 0 : index
    %c0_78 = arith.constant 0 : index
    %236 = vector.load %arg3[%c0_77, %c0_78] : memref<1x1024xf32, #tpu.memory_space<vmem>>, vector<1x1024xf32>
    %237 = vector.broadcast %236 : vector<1x1024xf32> to vector<8x1024xf32>
    %238 = arith.addf %235, %237 : vector<8x1024xf32>
    %239 = vector.extract_strided_slice %238 {offsets = [0, 0], sizes = [8, 256], strides = [1, 1]} : vector<8x1024xf32> to vector<8x256xf32>
    %240 = arith.negf %239 : vector<8x256xf32>
    %241 = math.exp %240 : vector<8x256xf32>
    %cst_79 = arith.constant 1.000000e+00 : f32
    %242 = vector.broadcast %cst_79 : f32 to vector<8x256xf32>
    %243 = arith.addf %242, %241 : vector<8x256xf32>
    %244 = arith.divf %242, %243 : vector<8x256xf32>
    %245 = vector.extract_strided_slice %238 {offsets = [0, 256], sizes = [8, 256], strides = [1, 1]} : vector<8x1024xf32> to vector<8x256xf32>
    %246 = arith.negf %245 : vector<8x256xf32>
    %247 = math.exp %246 : vector<8x256xf32>
    %cst_80 = arith.constant 1.000000e+00 : f32
    %248 = vector.broadcast %cst_80 : f32 to vector<8x256xf32>
    %249 = arith.addf %248, %247 : vector<8x256xf32>
    %250 = arith.divf %248, %249 : vector<8x256xf32>
    %251 = vector.extract_strided_slice %238 {offsets = [0, 512], sizes = [8, 256], strides = [1, 1]} : vector<8x1024xf32> to vector<8x256xf32>
    %252 = math.tanh %251 : vector<8x256xf32>
    %253 = vector.extract_strided_slice %238 {offsets = [0, 768], sizes = [8, 256], strides = [1, 1]} : vector<8x1024xf32> to vector<8x256xf32>
    %254 = arith.negf %253 : vector<8x256xf32>
    %255 = math.exp %254 : vector<8x256xf32>
    %cst_81 = arith.constant 1.000000e+00 : f32
    %256 = vector.broadcast %cst_81 : f32 to vector<8x256xf32>
    %257 = arith.addf %256, %255 : vector<8x256xf32>
    %258 = arith.divf %256, %257 : vector<8x256xf32>
    %259 = arith.mulf %250, %223 : vector<8x256xf32>
    %260 = arith.mulf %244, %252 : vector<8x256xf32>
    %261 = arith.addf %259, %260 : vector<8x256xf32>
    %262 = math.tanh %261 : vector<8x256xf32>
    %263 = arith.mulf %258, %262 : vector<8x256xf32>
    %264 = arith.index_cast %c6_i32 : i32 to index
    %c0_82 = arith.constant 0 : index
    %c0_83 = arith.constant 0 : index
    %265 = vector.load %arg4[%264, %c0_82, %c0_83] : memref<8x8x256xf32, #tpu.memory_space<vmem>>, vector<1x8x256xf32>
    %266 = vector.shape_cast %265 : vector<1x8x256xf32> to vector<8x256xf32>
    %267 = vector.shape_cast %263 : vector<8x256xf32> to vector<1x8x256xf32>
    tpu.vector_store %arg4[%264, %c0_82, %c0_83], %267 {strides = array<i32>} : memref<8x8x256xf32, #tpu.memory_space<vmem>>, vector<1x8x256xf32>,
    %c7_i32 = arith.constant 7 : i32
    %268 = arith.index_cast %c7_i32 : i32 to index
    %c0_84 = arith.constant 0 : index
    %c0_85 = arith.constant 0 : index
    %269 = vector.load %arg1[%268, %c0_84, %c0_85] : memref<8x8x128xf32, #tpu.memory_space<vmem>>, vector<1x8x128xf32>
    %270 = vector.shape_cast %269 : vector<1x8x128xf32> to vector<8x128xf32>
    %271 = tpu.concatenate %270, %263 in 1 : vector<8x128xf32>, vector<8x256xf32> -> vector<8x384xf32>
    %c0_86 = arith.constant 0 : index
    %c0_87 = arith.constant 0 : index
    %272 = vector.load %arg2[%c0_86, %c0_87] : memref<384x1024xf32, #tpu.memory_space<vmem>>, vector<384x1024xf32>
    %cst_88 = arith.constant dense<0.000000e+00> : vector<8x1024xf32>
    %273 = tpu.matmul %271, %272, %cst_88 {dimension_numbers = #tpu.dot_dimension_numbers<[1], [0], [0], [1], [0, 0, 1, 1], [], []>} : vector<8x384xf32>, vector<384x1024xf32>, vector<8x1024xf32> -> vector<8x1024xf32>
    %c0_89 = arith.constant 0 : index
    %c0_90 = arith.constant 0 : index
    %274 = vector.load %arg3[%c0_89, %c0_90] : memref<1x1024xf32, #tpu.memory_space<vmem>>, vector<1x1024xf32>
    %275 = vector.broadcast %274 : vector<1x1024xf32> to vector<8x1024xf32>
    %276 = arith.addf %273, %275 : vector<8x1024xf32>
    %277 = vector.extract_strided_slice %276 {offsets = [0, 0], sizes = [8, 256], strides = [1, 1]} : vector<8x1024xf32> to vector<8x256xf32>
    %278 = arith.negf %277 : vector<8x256xf32>
    %279 = math.exp %278 : vector<8x256xf32>
    %cst_91 = arith.constant 1.000000e+00 : f32
    %280 = vector.broadcast %cst_91 : f32 to vector<8x256xf32>
    %281 = arith.addf %280, %279 : vector<8x256xf32>
    %282 = arith.divf %280, %281 : vector<8x256xf32>
    %283 = vector.extract_strided_slice %276 {offsets = [0, 256], sizes = [8, 256], strides = [1, 1]} : vector<8x1024xf32> to vector<8x256xf32>
    %284 = arith.negf %283 : vector<8x256xf32>
    %285 = math.exp %284 : vector<8x256xf32>
    %cst_92 = arith.constant 1.000000e+00 : f32
    %286 = vector.broadcast %cst_92 : f32 to vector<8x256xf32>
    %287 = arith.addf %286, %285 : vector<8x256xf32>
    %288 = arith.divf %286, %287 : vector<8x256xf32>
    %289 = vector.extract_strided_slice %276 {offsets = [0, 512], sizes = [8, 256], strides = [1, 1]} : vector<8x1024xf32> to vector<8x256xf32>
    %290 = math.tanh %289 : vector<8x256xf32>
    %291 = vector.extract_strided_slice %276 {offsets = [0, 768], sizes = [8, 256], strides = [1, 1]} : vector<8x1024xf32> to vector<8x256xf32>
    %292 = arith.negf %291 : vector<8x256xf32>
    %293 = math.exp %292 : vector<8x256xf32>
    %cst_93 = arith.constant 1.000000e+00 : f32
    %294 = vector.broadcast %cst_93 : f32 to vector<8x256xf32>
    %295 = arith.addf %294, %293 : vector<8x256xf32>
    %296 = arith.divf %294, %295 : vector<8x256xf32>
    %297 = arith.mulf %288, %261 : vector<8x256xf32>
    %298 = arith.mulf %282, %290 : vector<8x256xf32>
    %299 = arith.addf %297, %298 : vector<8x256xf32>
    %300 = math.tanh %299 : vector<8x256xf32>
    %301 = arith.mulf %296, %300 : vector<8x256xf32>
    %302 = arith.index_cast %c7_i32 : i32 to index
    %c0_94 = arith.constant 0 : index
    %c0_95 = arith.constant 0 : index
    %303 = vector.load %arg4[%302, %c0_94, %c0_95] : memref<8x8x256xf32, #tpu.memory_space<vmem>>, vector<1x8x256xf32>
    %304 = vector.shape_cast %303 : vector<1x8x256xf32> to vector<8x256xf32>
    %305 = vector.shape_cast %301 : vector<8x256xf32> to vector<1x8x256xf32>
    tpu.vector_store %arg4[%302, %c0_94, %c0_95], %305 {strides = array<i32>} : memref<8x8x256xf32, #tpu.memory_space<vmem>>, vector<1x8x256xf32>,
    %c8_i32 = arith.constant 8 : i32
    return
  }
  func.func @transform_0(%arg0: i32) -> (i32, i32, i32) {
    %c0_i32 = arith.constant 0 : i32
    %c0_i32_0 = arith.constant 0 : i32
    %c0_i32_1 = arith.constant 0 : i32
    %c0_i32_2 = arith.constant 0 : i32
    return %c0_i32, %c0_i32_0, %c0_i32_1 : i32, i32, i32
  }
  func.func @transform_1(%arg0: i32) -> (i32, i32) {
    %c0_i32 = arith.constant 0 : i32
    %c0_i32_0 = arith.constant 0 : i32
    %c0_i32_1 = arith.constant 0 : i32
    return %c0_i32, %c0_i32_0 : i32, i32
  }
  func.func @transform_2(%arg0: i32) -> (i32, i32) {
    %c0_i32 = arith.constant 0 : i32
    %c0_i32_0 = arith.constant 0 : i32
    %c0_i32_1 = arith.constant 0 : i32
    return %c0_i32, %c0_i32_0 : i32, i32
  }
  func.func @transform_3(%arg0: i32) -> (i32, i32, i32) {
    %c0_i32 = arith.constant 0 : i32
    %c0_i32_0 = arith.constant 0 : i32
    %c0_i32_1 = arith.constant 0 : i32
    %c0_i32_2 = arith.constant 0 : i32
    return %c0_i32, %c0_i32_0, %c0_i32_1 : i32, i32, i32
  }
}

</mosaic_0001>

<llo_original>
// kernel: tpu_custom_call.1
$region0: #{tpu_custom_call.1}
  #allocation0 [shape = 'u32[]', space=smem, size = 0x4, offset = 0x4, fixed_abs, tag = 'smem constant byte address 0x4 - core index']
  #allocation1 [shape = 'u32[144,128]{1,0:T(1,128)}', space=vmem, size = 0x12000, scoped, tag = 'internal scratch']
  %s0 = inlined_call_operand.hbm [shape: f32[8,8,128], index: 0, kind: input, shape index: {}]
  %s1 = inlined_call_operand.hbm [shape: f32[384,1024], index: 1, kind: input, shape index: {}]
  %s2 = inlined_call_operand.hbm [shape: f32[1,1024], index: 2, kind: input, shape index: {}]
  %s3 = inlined_call_operand.hbm [shape: f32[8,8,256], index: 3, kind: output, shape index: {}]
  %s4 = sld [smem:[#allocation0]]
  $region34: #{tpu_custom_call.1} parent=0
    _
  %s6 = ssub.s32 1, %s4
  %s7 = scalar_select 0, %s6, %s4
  $region1: #{tpu_custom_call.1} parent=0
    #allocation2 [shape = 'u8[32768]{0}', space=vmem, size = 0x8000, scoped, tag = 'input window, operand 0, single buffered']
    #allocation3 [shape = 's32[1]{0}', space=sflag, size = 0x4, scoped, tag = 'scoped memory for tpu_custom_call.1']
    #allocation4 [shape = 's32[1]{0}', space=sflag, size = 0x4, scoped, tag = 'scoped memory for tpu_custom_call.1']
    #allocation5 [shape = 'u8[1572864]{0}', space=vmem, size = 0x180000, scoped, tag = 'input window, operand 1, single buffered']
    #allocation6 [shape = 's32[1]{0}', space=sflag, size = 0x4, scoped, tag = 'scoped memory for tpu_custom_call.1']
    #allocation7 [shape = 'u8[4096]{0}', space=vmem, size = 0x1000, scoped, tag = 'input window, operand 2, single buffered']
    #allocation8 [shape = 'u8[65536]{0}', space=vmem, size = 0x10000, scoped, tag = 'output window, operand 0, single buffered']
    %8 = vsyncpa [#allocation3], 0
    %9 = vsyncpa [#allocation6], 0
    %10 = vsyncpa [#allocation4], 0
    // Predicated region
    $region2: #{tpu_custom_call.1} parent=1 // pred_check
      _
    $region3: #{tpu_custom_call.1} parent=1 // pred_check_branch
      %12 = sbr.rel (0) target = $region5
    $region4: #{tpu_custom_call.1} parent=1 // pred_region
      %s14 = ssub.s32 1024, 1024
      %15 = vsyncadd [#allocation3], %s14
      %s16 = sshll.u32 [#allocation2], 4
      %s17 = int_to_ptr.vmem [resolvable:$true] %s16
      %22 = dma.hbm_to_vmem [thread:$0]  %s0, 1024, %s17, [#allocation3], 128, 128, 8
    $region5: #{tpu_custom_call.1} parent=1 // pred_fallthru
      _
    // Predicated region
    $region6: #{tpu_custom_call.1} parent=1 // pred_check
      _
    $region7: #{tpu_custom_call.1} parent=1 // pred_check_branch
      %24 = sbr.rel (0) target = $region9
    $region8: #{tpu_custom_call.1} parent=1 // pred_region
      %s26 = ssub.s32 49152, 49152
      %27 = vsyncadd [#allocation6], %s26
      %s28 = sshll.u32 [#allocation5], 4
      %s29 = int_to_ptr.vmem [resolvable:$true] %s28
      %34 = dma.hbm_to_vmem [thread:$0]  %s1, 49152, %s29, [#allocation6], 1024, 1024, 64
    $region9: #{tpu_custom_call.1} parent=1 // pred_fallthru
      _
    // Predicated region
    $region10: #{tpu_custom_call.1} parent=1 // pred_check
      _
    $region11: #{tpu_custom_call.1} parent=1 // pred_check_branch
      %36 = sbr.rel (0) target = $region13
    $region12: #{tpu_custom_call.1} parent=1 // pred_region
      %s38 = ssub.s32 128, 128
      %39 = vsyncadd [#allocation6], %s38
      %s41 = sshll.u32 [#allocation7], 4
      %s42 = int_to_ptr.vmem [resolvable:$true] %s41
      %44 = dma.hbm_to_vmem [thread:$0]  %s2, 128, %s42, [#allocation6]
    $region13: #{tpu_custom_call.1} parent=1 // pred_fallthru
      _
    // Predicated region
    $region14: #{tpu_custom_call.1} parent=1 // pred_check
      _
    $region15: #{tpu_custom_call.1} parent=1 // pred_check_branch
      %46 = sbr.rel (0) target = $region17
    $region16: #{tpu_custom_call.1} parent=1 // pred_region
      %47 = dma.done [#allocation3], 1024
    $region17: #{tpu_custom_call.1} parent=1 // pred_fallthru
      _
    // Predicated region
    $region18: #{tpu_custom_call.1} parent=1 // pred_check
      _
    $region19: #{tpu_custom_call.1} parent=1 // pred_check_branch
      %49 = sbr.rel (0) target = $region21
    $region20: #{tpu_custom_call.1} parent=1 // pred_region
      %50 = dma.done [#allocation6], 49152
    $region21: #{tpu_custom_call.1} parent=1 // pred_fallthru
      _
    // Predicated region
    $region22: #{tpu_custom_call.1} parent=1 // pred_check
      _
    $region23: #{tpu_custom_call.1} parent=1 // pred_check_branch
      %52 = sbr.rel (0) target = $region25
    $region24: #{tpu_custom_call.1} parent=1 // pred_region
      %53 = dma.done [#allocation6], 128
    $region25: #{tpu_custom_call.1} parent=1 // pred_fallthru
      _
    %v54 = vld [vmem:[#allocation2] sm:$0xff]
    %v55 = vld [vmem:[#allocation5] sm:$0xff]
    %v56 = vld [vmem:[#allocation5 + $0x8] sm:$0xff]
    %v57 = vld [vmem:[#allocation5 + $0x10] sm:$0xff]
    %v58 = vld [vmem:[#allocation5 + $0x18] sm:$0xff]
    %v59 = vld [vmem:[#allocation5 + $0x20] sm:$0xff]
    %v60 = vld [vmem:[#allocation5 + $0x28] sm:$0xff]
    %v61 = vld [vmem:[#allocation5 + $0x30] sm:$0xff]
    %v62 = vld [vmem:[#allocation5 + $0x38] sm:$0xff]
    %v63 = vld [vmem:[#allocation5 + $0x40] sm:$0xff]
    %v64 = vld [vmem:[#allocation5 + $0x48] sm:$0xff]
    %v65 = vld [vmem:[#allocation5 + $0x50] sm:$0xff]
    %v66 = vld [vmem:[#allocation5 + $0x58] sm:$0xff]
    %v67 = vld [vmem:[#allocation5 + $0x60] sm:$0xff]
    %v68 = vld [vmem:[#allocation5 + $0x68] sm:$0xff]
    %v69 = vld [vmem:[#allocation5 + $0x70] sm:$0xff]
    %v70 = vld [vmem:[#allocation5 + $0x78] sm:$0xff]
    %v71 = vld [vmem:[#allocation5 + $0x80] sm:$0xff]
    %v72 = vld [vmem:[#allocation5 + $0x88] sm:$0xff]
    %v73 = vld [vmem:[#allocation5 + $0x90] sm:$0xff]
    %v74 = vld [vmem:[#allocation5 + $0x98] sm:$0xff]
    %v75 = vld [vmem:[#allocation5 + $0xa0] sm:$0xff]
    %v76 = vld [vmem:[#allocation5 + $0xa8] sm:$0xff]
    %v77 = vld [vmem:[#allocation5 + $0xb0] sm:$0xff]
    %v78 = vld [vmem:[#allocation5 + $0xb8] sm:$0xff]
    %v79 = vld [vmem:[#allocation5 + $0xc0] sm:$0xff]
    %v80 = vld [vmem:[#allocation5 + $0xc8] sm:$0xff]
    %v81 = vld [vmem:[#allocation5 + $0xd0] sm:$0xff]
    %v82 = vld [vmem:[#allocation5 + $0xd8] sm:$0xff]
    %v83 = vld [vmem:[#allocation5 + $0xe0] sm:$0xff]
    %v84 = vld [vmem:[#allocation5 + $0xe8] sm:$0xff]
    %v85 = vld [vmem:[#allocation5 + $0xf0] sm:$0xff]
    %v86 = vld [vmem:[#allocation5 + $0xf8] sm:$0xff]
    %v87 = vld [vmem:[#allocation5 + $0x100] sm:$0xff]
    %v88 = vld [vmem:[#allocation5 + $0x108] sm:$0xff]
    %v89 = vld [vmem:[#allocation5 + $0x110] sm:$0xff]
    %v90 = vld [vmem:[#allocation5 + $0x118] sm:$0xff]
    %v91 = vld [vmem:[#allocation5 + $0x120] sm:$0xff]
    %v92 = vld [vmem:[#allocation5 + $0x128] sm:$0xff]
    %v93 = vld [vmem:[#allocation5 + $0x130] sm:$0xff]
    %v94 = vld [vmem:[#allocation5 + $0x138] sm:$0xff]
    %v95 = vld [vmem:[#allocation5 + $0x140] sm:$0xff]
    %v96 = vld [vmem:[#allocation5 + $0x148] sm:$0xff]
    %v97 = vld [vmem:[#allocation5 + $0x150] sm:$0xff]
    %v98 = vld [vmem:[#allocation5 + $0x158] sm:$0xff]
    %v99 = vld [vmem:[#allocation5 + $0x160] sm:$0xff]
    %v100 = vld [vmem:[#allocation5 + $0x168] sm:$0xff]
    %v101 = vld [vmem:[#allocation5 + $0x170] sm:$0xff]
    %v102 = vld [vmem:[#allocation5 + $0x178] sm:$0xff]
    %v103 = vld [vmem:[#allocation5 + $0x180] sm:$0xff]
    %v104 = vld [vmem:[#allocation5 + $0x188] sm:$0xff]
    %v105 = vld [vmem:[#allocation5 + $0x190] sm:$0xff]
    %v106 = vld [vmem:[#allocation5 + $0x198] sm:$0xff]
    %v107 = vld [vmem:[#allocation5 + $0x1a0] sm:$0xff]
    %v108 = vld [vmem:[#allocation5 + $0x1a8] sm:$0xff]
    %v109 = vld [vmem:[#allocation5 + $0x1b0] sm:$0xff]
    %v110 = vld [vmem:[#allocation5 + $0x1b8] sm:$0xff]
    %v111 = vld [vmem:[#allocation5 + $0x1c0] sm:$0xff]
    %v112 = vld [vmem:[#allocation5 + $0x1c8] sm:$0xff]
    %v113 = vld [vmem:[#allocation5 + $0x1d0] sm:$0xff]
    %v114 = vld [vmem:[#allocation5 + $0x1d8] sm:$0xff]
    %v115 = vld [vmem:[#allocation5 + $0x1e0] sm:$0xff]
    %v116 = vld [vmem:[#allocation5 + $0x1e8] sm:$0xff]
    %v117 = vld [vmem:[#allocation5 + $0x1f0] sm:$0xff]
    %v118 = vld [vmem:[#allocation5 + $0x1f8] sm:$0xff]
    %v119 = vld [vmem:[#allocation5 + $0x200] sm:$0xff]
    %v120 = vld [vmem:[#allocation5 + $0x208] sm:$0xff]
    %v121 = vld [vmem:[#allocation5 + $0x210] sm:$0xff]
    %v122 = vld [vmem:[#allocation5 + $0x218] sm:$0xff]
    %v123 = vld [vmem:[#allocation5 + $0x220] sm:$0xff]
    %v124 = vld [vmem:[#allocation5 + $0x228] sm:$0xff]
    %v125 = vld [vmem:[#allocation5 + $0x230] sm:$0xff]
    %v126 = vld [vmem:[#allocation5 + $0x238] sm:$0xff]
    %v127 = vld [vmem:[#allocation5 + $0x240] sm:$0xff]
    %v128 = vld [vmem:[#allocation5 + $0x248] sm:$0xff]
    %v129 = vld [vmem:[#allocation5 + $0x250] sm:$0xff]
    %v130 = vld [vmem:[#allocation5 + $0x258] sm:$0xff]
    %v131 = vld [vmem:[#allocation5 + $0x260] sm:$0xff]
    %v132 = vld [vmem:[#allocation5 + $0x268] sm:$0xff]
    %v133 = vld [vmem:[#allocation5 + $0x270] sm:$0xff]
    %v134 = vld [vmem:[#allocation5 + $0x278] sm:$0xff]
    %v135 = vld [vmem:[#allocation5 + $0x280] sm:$0xff]
    %v136 = vld [vmem:[#allocation5 + $0x288] sm:$0xff]
    %v137 = vld [vmem:[#allocation5 + $0x290] sm:$0xff]
    %v138 = vld [vmem:[#allocation5 + $0x298] sm:$0xff]
    %v139 = vld [vmem:[#allocation5 + $0x2a0] sm:$0xff]
    %v140 = vld [vmem:[#allocation5 + $0x2a8] sm:$0xff]
    %v141 = vld [vmem:[#allocation5 + $0x2b0] sm:$0xff]
    %v142 = vld [vmem:[#allocation5 + $0x2b8] sm:$0xff]
    %v143 = vld [vmem:[#allocation5 + $0x2c0] sm:$0xff]
    %v144 = vld [vmem:[#allocation5 + $0x2c8] sm:$0xff]
    %v145 = vld [vmem:[#allocation5 + $0x2d0] sm:$0xff]
    %v146 = vld [vmem:[#allocation5 + $0x2d8] sm:$0xff]
    %v147 = vld [vmem:[#allocation5 + $0x2e0] sm:$0xff]
    %v148 = vld [vmem:[#allocation5 + $0x2e8] sm:$0xff]
    %v149 = vld [vmem:[#allocation5 + $0x2f0] sm:$0xff]
    %v150 = vld [vmem:[#allocation5 + $0x2f8] sm:$0xff]
    %v151 = vld [vmem:[#allocation5 + $0x300] sm:$0xff]
    %v152 = vld [vmem:[#allocation5 + $0x308] sm:$0xff]
    %v153 = vld [vmem:[#allocation5 + $0x310] sm:$0xff]
    %v154 = vld [vmem:[#allocation5 + $0x318] sm:$0xff]
    %v155 = vld [vmem:[#allocation5 + $0x320] sm:$0xff]
    %v156 = vld [vmem:[#allocation5 + $0x328] sm:$0xff]
    %v157 = vld [vmem:[#allocation5 + $0x330] sm:$0xff]
    %v158 = vld [vmem:[#allocation5 + $0x338] sm:$0xff]
    %v159 = vld [vmem:[#allocation5 + $0x340] sm:$0xff]
    %v160 = vld [vmem:[#allocation5 + $0x348] sm:$0xff]
    %v161 = vld [vmem:[#allocation5 + $0x350] sm:$0xff]
    %v162 = vld [vmem:[#allocation5 + $0x358] sm:$0xff]
    %v163 = vld [vmem:[#allocation5 + $0x360] sm:$0xff]
    %v164 = vld [vmem:[#allocation5 + $0x368] sm:$0xff]
    %v165 = vld [vmem:[#allocation5 + $0x370] sm:$0xff]
    %v166 = vld [vmem:[#allocation5 + $0x378] sm:$0xff]
    %v167 = vld [vmem:[#allocation5 + $0x380] sm:$0xff]
    %v168 = vld [vmem:[#allocation5 + $0x388] sm:$0xff]
    %v169 = vld [vmem:[#allocation5 + $0x390] sm:$0xff]
    %v170 = vld [vmem:[#allocation5 + $0x398] sm:$0xff]
    %v171 = vld [vmem:[#allocation5 + $0x3a0] sm:$0xff]
    %v172 = vld [vmem:[#allocation5 + $0x3a8] sm:$0xff]
    %v173 = vld [vmem:[#allocation5 + $0x3b0] sm:$0xff]
    %v174 = vld [vmem:[#allocation5 + $0x3b8] sm:$0xff]
    %v175 = vld [vmem:[#allocation5 + $0x3c0] sm:$0xff]
    %v176 = vld [vmem:[#allocation5 + $0x3c8] sm:$0xff]
    %v177 = vld [vmem:[#allocation5 + $0x3d0] sm:$0xff]
    %v178 = vld [vmem:[#allocation5 + $0x3d8] sm:$0xff]
    %v179 = vld [vmem:[#allocation5 + $0x3e0] sm:$0xff]
    %v180 = vld [vmem:[#allocation5 + $0x3e8] sm:$0xff]
    %v181 = vld [vmem:[#allocation5 + $0x3f0] sm:$0xff]
    %v182 = vld [vmem:[#allocation5 + $0x3f8] sm:$0xff]
    %v183 = vld [vmem:[#allocation5 + $0x400] sm:$0xff]
    %v184 = vld [vmem:[#allocation5 + $0x408] sm:$0xff]
    %v185 = vld [vmem:[#allocation5 + $0x410] sm:$0xff]
    %v186 = vld [vmem:[#allocation5 + $0x418] sm:$0xff]
    %v187 = vld [vmem:[#allocation5 + $0x420] sm:$0xff]
    %v188 = vld [vmem:[#allocation5 + $0x428] sm:$0xff]
    %v189 = vld [vmem:[#allocation5 + $0x430] sm:$0xff]
    %v190 = vld [vmem:[#allocation5 + $0x438] sm:$0xff]
    %v191 = vld [vmem:[#allocation5 + $0x440] sm:$0xff]
    %v192 = vld [vmem:[#allocation5 + $0x448] sm:$0xff]
    %v193 = vld [vmem:[#allocation5 + $0x450] sm:$0xff]
    %v194 = vld [vmem:[#allocation5 + $0x458] sm:$0xff]
    %v195 = vld [vmem:[#allocation5 + $0x460] sm:$0xff]
    %v196 = vld [vmem:[#allocation5 + $0x468] sm:$0xff]
    %v197 = vld [vmem:[#allocation5 + $0x470] sm:$0xff]
    %v198 = vld [vmem:[#allocation5 + $0x478] sm:$0xff]
    %v199 = vld [vmem:[#allocation5 + $0x480] sm:$0xff]
    %v200 = vld [vmem:[#allocation5 + $0x488] sm:$0xff]
    %v201 = vld [vmem:[#allocation5 + $0x490] sm:$0xff]
    %v202 = vld [vmem:[#allocation5 + $0x498] sm:$0xff]
    %v203 = vld [vmem:[#allocation5 + $0x4a0] sm:$0xff]
    %v204 = vld [vmem:[#allocation5 + $0x4a8] sm:$0xff]
    %v205 = vld [vmem:[#allocation5 + $0x4b0] sm:$0xff]
    %v206 = vld [vmem:[#allocation5 + $0x4b8] sm:$0xff]
    %v207 = vld [vmem:[#allocation5 + $0x4c0] sm:$0xff]
    %v208 = vld [vmem:[#allocation5 + $0x4c8] sm:$0xff]
    %v209 = vld [vmem:[#allocation5 + $0x4d0] sm:$0xff]
    %v210 = vld [vmem:[#allocation5 + $0x4d8] sm:$0xff]
    %v211 = vld [vmem:[#allocation5 + $0x4e0] sm:$0xff]
    %v212 = vld [vmem:[#allocation5 + $0x4e8] sm:$0xff]
    %v213 = vld [vmem:[#allocation5 + $0x4f0] sm:$0xff]
    %v214 = vld [vmem:[#allocation5 + $0x4f8] sm:$0xff]
    %v215 = vld [vmem:[#allocation5 + $0x500] sm:$0xff]
    %v216 = vld [vmem:[#allocation5 + $0x508] sm:$0xff]
    %v217 = vld [vmem:[#allocation5 + $0x510] sm:$0xff]
    %v218 = vld [vmem:[#allocation5 + $0x518] sm:$0xff]
    %v219 = vld [vmem:[#allocation5 + $0x520] sm:$0xff]
    %v220 = vld [vmem:[#allocation5 + $0x528] sm:$0xff]
    %v221 = vld [vmem:[#allocation5 + $0x530] sm:$0xff]
    %v222 = vld [vmem:[#allocation5 + $0x538] sm:$0xff]
    %v223 = vld [vmem:[#allocation5 + $0x540] sm:$0xff]
    %v224 = vld [vmem:[#allocation5 + $0x548] sm:$0xff]
    %v225 = vld [vmem:[#allocation5 + $0x550] sm:$0xff]
    %v226 = vld [vmem:[#allocation5 + $0x558] sm:$0xff]
    %v227 = vld [vmem:[#allocation5 + $0x560] sm:$0xff]
    %v228 = vld [vmem:[#allocation5 + $0x568] sm:$0xff]
    %v229 = vld [vmem:[#allocation5 + $0x570] sm:$0xff]
    %v230 = vld [vmem:[#allocation5 + $0x578] sm:$0xff]
    %v231 = vld [vmem:[#allocation5 + $0x580] sm:$0xff]
    %v232 = vld [vmem:[#allocation5 + $0x588] sm:$0xff]
    %v233 = vld [vmem:[#allocation5 + $0x590] sm:$0xff]
    %v234 = vld [vmem:[#allocation5 + $0x598] sm:$0xff]
    %v235 = vld [vmem:[#allocation5 + $0x5a0] sm:$0xff]
    %v236 = vld [vmem:[#allocation5 + $0x5a8] sm:$0xff]
    %v237 = vld [vmem:[#allocation5 + $0x5b0] sm:$0xff]
    %v238 = vld [vmem:[#allocation5 + $0x5b8] sm:$0xff]
    %v239 = vld [vmem:[#allocation5 + $0x5c0] sm:$0xff]
    %v240 = vld [vmem:[#allocation5 + $0x5c8] sm:$0xff]
    %v241 = vld [vmem:[#allocation5 + $0x5d0] sm:$0xff]
    %v242 = vld [vmem:[#allocation5 + $0x5d8] sm:$0xff]
    %v243 = vld [vmem:[#allocation5 + $0x5e0] sm:$0xff]
    %v244 = vld [vmem:[#allocation5 + $0x5e8] sm:$0xff]
    %v245 = vld [vmem:[#allocation5 + $0x5f0] sm:$0xff]
    %v246 = vld [vmem:[#allocation5 + $0x5f8] sm:$0xff]
    %v247 = vld [vmem:[#allocation5 + $0x600] sm:$0xff]
    %v248 = vld [vmem:[#allocation5 + $0x608] sm:$0xff]
    %v249 = vld [vmem:[#allocation5 + $0x610] sm:$0xff]
    %v250 = vld [vmem:[#allocation5 + $0x618] sm:$0xff]
    %v251 = vld [vmem:[#allocation5 + $0x620] sm:$0xff]
    %v252 = vld [vmem:[#allocation5 + $0x628] sm:$0xff]
    %v253 = vld [vmem:[#allocation5 + $0x630] sm:$0xff]
    %v254 = vld [vmem:[#allocation5 + $0x638] sm:$0xff]
    %v255 = vld [vmem:[#allocation5 + $0x640] sm:$0xff]
    %v256 = vld [vmem:[#allocation5 + $0x648] sm:$0xff]
    %v257 = vld [vmem:[#allocation5 + $0x650] sm:$0xff]
    %v258 = vld [vmem:[#allocation5 + $0x658] sm:$0xff]
    %v259 = vld [vmem:[#allocation5 + $0x660] sm:$0xff]
    %v260 = vld [vmem:[#allocation5 + $0x668] sm:$0xff]
    %v261 = vld [vmem:[#allocation5 + $0x670] sm:$0xff]
    %v262 = vld [vmem:[#allocation5 + $0x678] sm:$0xff]
    %v263 = vld [vmem:[#allocation5 + $0x680] sm:$0xff]
    %v264 = vld [vmem:[#allocation5 + $0x688] sm:$0xff]
    %v265 = vld [vmem:[#allocation5 + $0x690] sm:$0xff]
    %v266 = vld [vmem:[#allocation5 + $0x698] sm:$0xff]
    %v267 = vld [vmem:[#allocation5 + $0x6a0] sm:$0xff]
    %v268 = vld [vmem:[#allocation5 + $0x6a8] sm:$0xff]
    %v269 = vld [vmem:[#allocation5 + $0x6b0] sm:$0xff]
    %v270 = vld [vmem:[#allocation5 + $0x6b8] sm:$0xff]
    %v271 = vld [vmem:[#allocation5 + $0x6c0] sm:$0xff]
    %v272 = vld [vmem:[#allocation5 + $0x6c8] sm:$0xff]
    %v273 = vld [vmem:[#allocation5 + $0x6d0] sm:$0xff]
    %v274 = vld [vmem:[#allocation5 + $0x6d8] sm:$0xff]
    %v275 = vld [vmem:[#allocation5 + $0x6e0] sm:$0xff]
    %v276 = vld [vmem:[#allocation5 + $0x6e8] sm:$0xff]
    %v277 = vld [vmem:[#allocation5 + $0x6f0] sm:$0xff]
    %v278 = vld [vmem:[#allocation5 + $0x6f8] sm:$0xff]
    %v279 = vld [vmem:[#allocation5 + $0x700] sm:$0xff]
    %v280 = vld [vmem:[#allocation5 + $0x708] sm:$0xff]
    %v281 = vld [vmem:[#allocation5 + $0x710] sm:$0xff]
    %v282 = vld [vmem:[#allocation5 + $0x718] sm:$0xff]
    %v283 = vld [vmem:[#allocation5 + $0x720] sm:$0xff]
    %v284 = vld [vmem:[#allocation5 + $0x728] sm:$0xff]
    %v285 = vld [vmem:[#allocation5 + $0x730] sm:$0xff]
    %v286 = vld [vmem:[#allocation5 + $0x738] sm:$0xff]
    %v287 = vld [vmem:[#allocation5 + $0x740] sm:$0xff]
    %v288 = vld [vmem:[#allocation5 + $0x748] sm:$0xff]
    %v289 = vld [vmem:[#allocation5 + $0x750] sm:$0xff]
    %v290 = vld [vmem:[#allocation5 + $0x758] sm:$0xff]
    %v291 = vld [vmem:[#allocation5 + $0x760] sm:$0xff]
    %v292 = vld [vmem:[#allocation5 + $0x768] sm:$0xff]
    %v293 = vld [vmem:[#allocation5 + $0x770] sm:$0xff]
    %v294 = vld [vmem:[#allocation5 + $0x778] sm:$0xff]
    %v295 = vld [vmem:[#allocation5 + $0x780] sm:$0xff]
    %v296 = vld [vmem:[#allocation5 + $0x788] sm:$0xff]
    %v297 = vld [vmem:[#allocation5 + $0x790] sm:$0xff]
    %v298 = vld [vmem:[#allocation5 + $0x798] sm:$0xff]
    %v299 = vld [vmem:[#allocation5 + $0x7a0] sm:$0xff]
    %v300 = vld [vmem:[#allocation5 + $0x7a8] sm:$0xff]
    %v301 = vld [vmem:[#allocation5 + $0x7b0] sm:$0xff]
    %v302 = vld [vmem:[#allocation5 + $0x7b8] sm:$0xff]
    %v303 = vld [vmem:[#allocation5 + $0x7c0] sm:$0xff]
    %v304 = vld [vmem:[#allocation5 + $0x7c8] sm:$0xff]
    %v305 = vld [vmem:[#allocation5 + $0x7d0] sm:$0xff]
    %v306 = vld [vmem:[#allocation5 + $0x7d8] sm:$0xff]
    %v307 = vld [vmem:[#allocation5 + $0x7e0] sm:$0xff]
    %v308 = vld [vmem:[#allocation5 + $0x7e8] sm:$0xff]
    %v309 = vld [vmem:[#allocation5 + $0x7f0] sm:$0xff]
    %v310 = vld [vmem:[#allocation5 + $0x7f8] sm:$0xff]
    %v311 = vld [vmem:[#allocation5 + $0x800] sm:$0xff]
    %v312 = vld [vmem:[#allocation5 + $0x808] sm:$0xff]
    %v313 = vld [vmem:[#allocation5 + $0x810] sm:$0xff]
    %v314 = vld [vmem:[#allocation5 + $0x818] sm:$0xff]
    %v315 = vld [vmem:[#allocation5 + $0x820] sm:$0xff]
    %v316 = vld [vmem:[#allocation5 + $0x828] sm:$0xff]
    %v317 = vld [vmem:[#allocation5 + $0x830] sm:$0xff]
    %v318 = vld [vmem:[#allocation5 + $0x838] sm:$0xff]
    %v319 = vld [vmem:[#allocation5 + $0x840] sm:$0xff]
    %v320 = vld [vmem:[#allocation5 + $0x848] sm:$0xff]
    %v321 = vld [vmem:[#allocation5 + $0x850] sm:$0xff]
    %v322 = vld [vmem:[#allocation5 + $0x858] sm:$0xff]
    %v323 = vld [vmem:[#allocation5 + $0x860] sm:$0xff]
    %v324 = vld [vmem:[#allocation5 + $0x868] sm:$0xff]
    %v325 = vld [vmem:[#allocation5 + $0x870] sm:$0xff]
    %v326 = vld [vmem:[#allocation5 + $0x878] sm:$0xff]
    %v327 = vld [vmem:[#allocation5 + $0x880] sm:$0xff]
    %v328 = vld [vmem:[#allocation5 + $0x888] sm:$0xff]
    %v329 = vld [vmem:[#allocation5 + $0x890] sm:$0xff]
    %v330 = vld [vmem:[#allocation5 + $0x898] sm:$0xff]
    %v331 = vld [vmem:[#allocation5 + $0x8a0] sm:$0xff]
    %v332 = vld [vmem:[#allocation5 + $0x8a8] sm:$0xff]
    %v333 = vld [vmem:[#allocation5 + $0x8b0] sm:$0xff]
    %v334 = vld [vmem:[#allocation5 + $0x8b8] sm:$0xff]
    %v335 = vld [vmem:[#allocation5 + $0x8c0] sm:$0xff]
    %v336 = vld [vmem:[#allocation5 + $0x8c8] sm:$0xff]
    %v337 = vld [vmem:[#allocation5 + $0x8d0] sm:$0xff]
    %v338 = vld [vmem:[#allocation5 + $0x8d8] sm:$0xff]
    %v339 = vld [vmem:[#allocation5 + $0x8e0] sm:$0xff]
    %v340 = vld [vmem:[#allocation5 + $0x8e8] sm:$0xff]
    %v341 = vld [vmem:[#allocation5 + $0x8f0] sm:$0xff]
    %v342 = vld [vmem:[#allocation5 + $0x8f8] sm:$0xff]
    %v343 = vld [vmem:[#allocation5 + $0x900] sm:$0xff]
    %v344 = vld [vmem:[#allocation5 + $0x908] sm:$0xff]
    %v345 = vld [vmem:[#allocation5 + $0x910] sm:$0xff]
    %v346 = vld [vmem:[#allocation5 + $0x918] sm:$0xff]
    %v347 = vld [vmem:[#allocation5 + $0x920] sm:$0xff]
    %v348 = vld [vmem:[#allocation5 + $0x928] sm:$0xff]
    %v349 = vld [vmem:[#allocation5 + $0x930] sm:$0xff]
    %v350 = vld [vmem:[#allocation5 + $0x938] sm:$0xff]
    %v351 = vld [vmem:[#allocation5 + $0x940] sm:$0xff]
    %v352 = vld [vmem:[#allocation5 + $0x948] sm:$0xff]
    %v353 = vld [vmem:[#allocation5 + $0x950] sm:$0xff]
    %v354 = vld [vmem:[#allocation5 + $0x958] sm:$0xff]
    %v355 = vld [vmem:[#allocation5 + $0x960] sm:$0xff]
    %v356 = vld [vmem:[#allocation5 + $0x968] sm:$0xff]
    %v357 = vld [vmem:[#allocation5 + $0x970] sm:$0xff]
    %v358 = vld [vmem:[#allocation5 + $0x978] sm:$0xff]
    %v359 = vld [vmem:[#allocation5 + $0x980] sm:$0xff]
    %v360 = vld [vmem:[#allocation5 + $0x988] sm:$0xff]
    %v361 = vld [vmem:[#allocation5 + $0x990] sm:$0xff]
    %v362 = vld [vmem:[#allocation5 + $0x998] sm:$0xff]
    %v363 = vld [vmem:[#allocation5 + $0x9a0] sm:$0xff]
    %v364 = vld [vmem:[#allocation5 + $0x9a8] sm:$0xff]
    %v365 = vld [vmem:[#allocation5 + $0x9b0] sm:$0xff]
    %v366 = vld [vmem:[#allocation5 + $0x9b8] sm:$0xff]
    %v367 = vld [vmem:[#allocation5 + $0x9c0] sm:$0xff]
    %v368 = vld [vmem:[#allocation5 + $0x9c8] sm:$0xff]
    %v369 = vld [vmem:[#allocation5 + $0x9d0] sm:$0xff]
    %v370 = vld [vmem:[#allocation5 + $0x9d8] sm:$0xff]
    %v371 = vld [vmem:[#allocation5 + $0x9e0] sm:$0xff]
    %v372 = vld [vmem:[#allocation5 + $0x9e8] sm:$0xff]
    %v373 = vld [vmem:[#allocation5 + $0x9f0] sm:$0xff]
    %v374 = vld [vmem:[#allocation5 + $0x9f8] sm:$0xff]
    %v375 = vld [vmem:[#allocation5 + $0xa00] sm:$0xff]
    %v376 = vld [vmem:[#allocation5 + $0xa08] sm:$0xff]
    %v377 = vld [vmem:[#allocation5 + $0xa10] sm:$0xff]
    %v378 = vld [vmem:[#allocation5 + $0xa18] sm:$0xff]
    %v379 = vld [vmem:[#allocation5 + $0xa20] sm:$0xff]
    %v380 = vld [vmem:[#allocation5 + $0xa28] sm:$0xff]
    %v381 = vld [vmem:[#allocation5 + $0xa30] sm:$0xff]
    %v382 = vld [vmem:[#allocation5 + $0xa38] sm:$0xff]
    %v383 = vld [vmem:[#allocation5 + $0xa40] sm:$0xff]
    %v384 = vld [vmem:[#allocation5 + $0xa48] sm:$0xff]
    %v385 = vld [vmem:[#allocation5 + $0xa50] sm:$0xff]
    %v386 = vld [vmem:[#allocation5 + $0xa58] sm:$0xff]
    %v387 = vld [vmem:[#allocation5 + $0xa60] sm:$0xff]
    %v388 = vld [vmem:[#allocation5 + $0xa68] sm:$0xff]
    %v389 = vld [vmem:[#allocation5 + $0xa70] sm:$0xff]
    %v390 = vld [vmem:[#allocation5 + $0xa78] sm:$0xff]
    %v391 = vld [vmem:[#allocation5 + $0xa80] sm:$0xff]
    %v392 = vld [vmem:[#allocation5 + $0xa88] sm:$0xff]
    %v393 = vld [vmem:[#allocation5 + $0xa90] sm:$0xff]
    %v394 = vld [vmem:[#allocation5 + $0xa98] sm:$0xff]
    %v395 = vld [vmem:[#allocation5 + $0xaa0] sm:$0xff]
    %v396 = vld [vmem:[#allocation5 + $0xaa8] sm:$0xff]
    %v397 = vld [vmem:[#allocation5 + $0xab0] sm:$0xff]
    %v398 = vld [vmem:[#allocation5 + $0xab8] sm:$0xff]
    %v399 = vld [vmem:[#allocation5 + $0xac0] sm:$0xff]
    %v400 = vld [vmem:[#allocation5 + $0xac8] sm:$0xff]
    %v401 = vld [vmem:[#allocation5 + $0xad0] sm:$0xff]
    %v402 = vld [vmem:[#allocation5 + $0xad8] sm:$0xff]
    %v403 = vld [vmem:[#allocation5 + $0xae0] sm:$0xff]
    %v404 = vld [vmem:[#allocation5 + $0xae8] sm:$0xff]
    %v405 = vld [vmem:[#allocation5 + $0xaf0] sm:$0xff]
    %v406 = vld [vmem:[#allocation5 + $0xaf8] sm:$0xff]
    %v407 = vld [vmem:[#allocation5 + $0xb00] sm:$0xff]
    %v408 = vld [vmem:[#allocation5 + $0xb08] sm:$0xff]
    %v409 = vld [vmem:[#allocation5 + $0xb10] sm:$0xff]
    %v410 = vld [vmem:[#allocation5 + $0xb18] sm:$0xff]
    %v411 = vld [vmem:[#allocation5 + $0xb20] sm:$0xff]
    %v412 = vld [vmem:[#allocation5 + $0xb28] sm:$0xff]
    %v413 = vld [vmem:[#allocation5 + $0xb30] sm:$0xff]
    %v414 = vld [vmem:[#allocation5 + $0xb38] sm:$0xff]
    %v415 = vld [vmem:[#allocation5 + $0xb40] sm:$0xff]
    %v416 = vld [vmem:[#allocation5 + $0xb48] sm:$0xff]
    %v417 = vld [vmem:[#allocation5 + $0xb50] sm:$0xff]
    %v418 = vld [vmem:[#allocation5 + $0xb58] sm:$0xff]
    %v419 = vld [vmem:[#allocation5 + $0xb60] sm:$0xff]
    %v420 = vld [vmem:[#allocation5 + $0xb68] sm:$0xff]
    %v421 = vld [vmem:[#allocation5 + $0xb70] sm:$0xff]
    %v422 = vld [vmem:[#allocation5 + $0xb78] sm:$0xff]
    %v423 = vld [vmem:[#allocation5 + $0xb80] sm:$0xff]
    %v424 = vld [vmem:[#allocation5 + $0xb88] sm:$0xff]
    %v425 = vld [vmem:[#allocation5 + $0xb90] sm:$0xff]
    %v426 = vld [vmem:[#allocation5 + $0xb98] sm:$0xff]
    %v427 = vld [vmem:[#allocation5 + $0xba0] sm:$0xff]
    %v428 = vld [vmem:[#allocation5 + $0xba8] sm:$0xff]
    %v429 = vld [vmem:[#allocation5 + $0xbb0] sm:$0xff]
    %v430 = vld [vmem:[#allocation5 + $0xbb8] sm:$0xff]
    %v431 = vld [vmem:[#allocation5 + $0xbc0] sm:$0xff]
    %v432 = vld [vmem:[#allocation5 + $0xbc8] sm:$0xff]
    %v433 = vld [vmem:[#allocation5 + $0xbd0] sm:$0xff]
    %v434 = vld [vmem:[#allocation5 + $0xbd8] sm:$0xff]
    %v435 = vld [vmem:[#allocation5 + $0xbe0] sm:$0xff]
    %v436 = vld [vmem:[#allocation5 + $0xbe8] sm:$0xff]
    %v437 = vld [vmem:[#allocation5 + $0xbf0] sm:$0xff]
    %v438 = vld [vmem:[#allocation5 + $0xbf8] sm:$0xff]
    %v439 = vld [vmem:[#allocation7] sm:$0xff]
    %v441 = vlaneseq
    %v442 = vshrl.u32 %v441, 7
    %v443 = vsub.s32 0, %v442
    %v444 = vrot.slane %v439, %v443
    %v445 = vlaneseq
    %v446 = vshrl.u32 %v445, 7
    %v447 = vsub.s32 1, %v446
    %v448 = vrot.slane %v439, %v447
    %v449 = vlaneseq
    %v450 = vshrl.u32 %v449, 7
    %v451 = vsub.s32 2, %v450
    %v452 = vrot.slane %v439, %v451
    %v453 = vlaneseq
    %v454 = vshrl.u32 %v453, 7
    %v455 = vsub.s32 3, %v454
    %v456 = vrot.slane %v439, %v455
    %v457 = vlaneseq
    %v458 = vshrl.u32 %v457, 7
    %v459 = vsub.s32 4, %v458
    %v460 = vrot.slane %v439, %v459
    %v461 = vlaneseq
    %v462 = vshrl.u32 %v461, 7
    %v463 = vsub.s32 5, %v462
    %v464 = vrot.slane %v439, %v463
    %v465 = vlaneseq
    %v466 = vshrl.u32 %v465, 7
    %v467 = vsub.s32 6, %v466
    %v468 = vrot.slane %v439, %v467
    %v469 = vlaneseq
    %v470 = vshrl.u32 %v469, 7
    %v471 = vsub.s32 7, %v470
    %v472 = vrot.slane %v439, %v471
    %481 = vmatprep.subr.mxu0 %v56
    %482 = vmatpush1.msra.mxu0 %v55
    %483 = vmatprep.subr.mxu0 %v64
    %484 = vmatpush1.msra.mxu0 %v63
    %485 = vmatprep.subr.mxu0 %v72
    %486 = vmatpush1.msra.mxu0 %v71
    %487 = vmatprep.subr.mxu0 %v80
    %488 = vmatpush1.msra.mxu0 %v79
    %489 = vmatprep.subr.mxu0 %v88
    %490 = vmatpush1.msra.mxu0 %v87
    %491 = vmatprep.subr.mxu0 %v96
    %492 = vmatpush1.msra.mxu0 %v95
    %493 = vmatprep.subr.mxu0 %v104
    %494 = vmatpush1.msra.mxu0 %v103
    %495 = vmatprep.subr.mxu0 %v112
    %496 = vmatpush1.msra.mxu0 %v111
    %497 = vmatprep.subr.mxu0 %v120
    %498 = vmatpush1.msra.mxu0 %v119
    %499 = vmatprep.subr.mxu0 %v128
    %500 = vmatpush1.msra.mxu0 %v127
    %501 = vmatprep.subr.mxu0 %v136
    %502 = vmatpush1.msra.mxu0 %v135
    %503 = vmatprep.subr.mxu0 %v144
    %504 = vmatpush1.msra.mxu0 %v143
    %505 = vmatprep.subr.mxu0 %v152
    %506 = vmatpush1.msra.mxu0 %v151
    %507 = vmatprep.subr.mxu0 %v160
    %508 = vmatpush1.msra.mxu0 %v159
    %509 = vmatprep.subr.mxu0 %v168
    %510 = vmatpush1.msra.mxu0 %v167
    %511 = vmatprep.subr.mxu0 %v176
    %512 = vmatpush1.msra.mxu0 %v175
    %513 = vmatprep.subr.mxu0 %v184
    %514 = vmatpush1.msra.mxu0 %v183
    %515 = vmatprep.subr.mxu0 %v192
    %516 = vmatpush1.msra.mxu0 %v191
    %517 = vmatprep.subr.mxu0 %v200
    %518 = vmatpush1.msra.mxu0 %v199
    %519 = vmatprep.subr.mxu0 %v208
    %520 = vmatpush1.msra.mxu0 %v207
    %521 = vmatprep.subr.mxu0 %v216
    %522 = vmatpush1.msra.mxu0 %v215
    %523 = vmatprep.subr.mxu0 %v224
    %524 = vmatpush1.msra.mxu0 %v223
    %525 = vmatprep.subr.mxu0 %v232
    %526 = vmatpush1.msra.mxu0 %v231
    %527 = vmatprep.subr.mxu0 %v240
    %528 = vmatpush1.msra.mxu0 %v239
    %529 = vmatprep.subr.mxu0 %v248
    %530 = vmatpush1.msra.mxu0 %v247
    %531 = vmatprep.subr.mxu0 %v256
    %532 = vmatpush1.msra.mxu0 %v255
    %533 = vmatprep.subr.mxu0 %v264
    %534 = vmatpush1.msra.mxu0 %v263
    %535 = vmatprep.subr.mxu0 %v272
    %536 = vmatpush1.msra.mxu0 %v271
    %537 = vmatprep.subr.mxu0 %v280
    %538 = vmatpush1.msra.mxu0 %v279
    %539 = vmatprep.subr.mxu0 %v288
    %540 = vmatpush1.msra.mxu0 %v287
    %541 = vmatprep.subr.mxu0 %v296
    %542 = vmatpush1.msra.mxu0 %v295
    %543 = vmatprep.subr.mxu0 %v304
    %544 = vmatpush1.msra.mxu0 %v303
    %545 = vmatprep.mubr.f32.mxu0 0.0
    %546 = vmatmul.mubr.f32.gmra.mrb[0].mxu0 %v54
    %v547 = vpop.f32.mrb[0].mxu0
    %v548 = vadd.f32 %v444, %v547
    %v549 = vpop.f32.mrb[0].mxu0
    %v550 = vadd.f32 %v448, %v549
    %551 = vdwg.mxu0
    %552 = vmatprep.subr.mxu0 %v312
    %553 = vmatpush1.msra.mxu0 %v311
    %554 = vmatprep.subr.mxu0 %v320
    %555 = vmatpush1.msra.mxu0 %v319
    %556 = vmatprep.subr.mxu0 %v328
    %557 = vmatpush1.msra.mxu0 %v327
    %558 = vmatprep.subr.mxu0 %v336
    %559 = vmatpush1.msra.mxu0 %v335
    %560 = vmatprep.subr.mxu0 %v344
    %561 = vmatpush1.msra.mxu0 %v343
    %562 = vmatprep.subr.mxu0 %v352
    %563 = vmatpush1.msra.mxu0 %v351
    %564 = vmatprep.subr.mxu0 %v360
    %565 = vmatpush1.msra.mxu0 %v359
    %566 = vmatprep.subr.mxu0 %v368
    %567 = vmatpush1.msra.mxu0 %v367
    %568 = vmatprep.subr.mxu0 %v376
    %569 = vmatpush1.msra.mxu0 %v375
    %570 = vmatprep.subr.mxu0 %v384
    %571 = vmatpush1.msra.mxu0 %v383
    %572 = vmatprep.subr.mxu0 %v392
    %573 = vmatpush1.msra.mxu0 %v391
    %574 = vmatprep.subr.mxu0 %v400
    %575 = vmatpush1.msra.mxu0 %v399
    %576 = vmatprep.subr.mxu0 %v408
    %577 = vmatpush1.msra.mxu0 %v407
    %578 = vmatprep.subr.mxu0 %v416
    %579 = vmatpush1.msra.mxu0 %v415
    %580 = vmatprep.subr.mxu0 %v424
    %581 = vmatpush1.msra.mxu0 %v423
    %582 = vmatprep.subr.mxu0 %v432
    %583 = vmatpush1.msra.mxu0 %v431
    %584 = vmatprep.subr.mxu0 0.0
    %585 = vmatpush1.msra.mxu0 0.0
    %586 = vmatprep.subr.mxu0 0.0
    %587 = vmatpush1.msra.mxu0 0.0
    %588 = vmatprep.subr.mxu0 0.0
    %589 = vmatpush1.msra.mxu0 0.0
    %590 = vmatprep.subr.mxu0 0.0
    %591 = vmatpush1.msra.mxu0 0.0
    %592 = vmatprep.subr.mxu0 0.0
    %593 = vmatpush1.msra.mxu0 0.0
    %594 = vmatprep.subr.mxu0 0.0
    %595 = vmatpush1.msra.mxu0 0.0
    %596 = vmatprep.subr.mxu0 0.0
    %597 = vmatpush1.msra.mxu0 0.0
    %598 = vmatprep.subr.mxu0 0.0
    %599 = vmatpush1.msra.mxu0 0.0
    %600 = vmatprep.subr.mxu0 0.0
    %601 = vmatpush1.msra.mxu0 0.0
    %602 = vmatprep.subr.mxu0 0.0
    %603 = vmatpush1.msra.mxu0 0.0
    %604 = vmatprep.subr.mxu0 0.0
    %605 = vmatpush1.msra.mxu0 0.0
    %606 = vmatprep.subr.mxu0 0.0
    %607 = vmatpush1.msra.mxu0 0.0
    %608 = vmatprep.subr.mxu0 0.0
    %609 = vmatpush1.msra.mxu0 0.0
    %610 = vmatprep.subr.mxu0 0.0
    %611 = vmatpush1.msra.mxu0 0.0
    %612 = vmatprep.subr.mxu0 0.0
    %613 = vmatpush1.msra.mxu0 0.0
    %614 = vmatprep.subr.mxu0 0.0
    %615 = vmatpush1.msra.mxu0 0.0
    %616 = vmatprep.mubr.f32.mxu0 0.0
    %617 = vmatmul.mubr.f32.gmra.mrb[0].mxu0 0.0
    %v618 = vpop.f32.mrb[0].mxu0
    %v619 = vadd.f32 %v548, %v618
    %v620 = vpop.f32.mrb[0].mxu0
    %v621 = vadd.f32 %v550, %v620
    %622 = vdwg.mxu0
    %623 = vmatprep.subr.mxu0 %v58
    %624 = vmatpush1.msra.mxu0 %v57
    %625 = vmatprep.subr.mxu0 %v66
    %626 = vmatpush1.msra.mxu0 %v65
    %627 = vmatprep.subr.mxu0 %v74
    %628 = vmatpush1.msra.mxu0 %v73
    %629 = vmatprep.subr.mxu0 %v82
    %630 = vmatpush1.msra.mxu0 %v81
    %631 = vmatprep.subr.mxu0 %v90
    %632 = vmatpush1.msra.mxu0 %v89
    %633 = vmatprep.subr.mxu0 %v98
    %634 = vmatpush1.msra.mxu0 %v97
    %635 = vmatprep.subr.mxu0 %v106
    %636 = vmatpush1.msra.mxu0 %v105
    %637 = vmatprep.subr.mxu0 %v114
    %638 = vmatpush1.msra.mxu0 %v113
    %639 = vmatprep.subr.mxu0 %v122
    %640 = vmatpush1.msra.mxu0 %v121
    %641 = vmatprep.subr.mxu0 %v130
    %642 = vmatpush1.msra.mxu0 %v129
    %643 = vmatprep.subr.mxu0 %v138
    %644 = vmatpush1.msra.mxu0 %v137
    %645 = vmatprep.subr.mxu0 %v146
    %646 = vmatpush1.msra.mxu0 %v145
    %647 = vmatprep.subr.mxu0 %v154
    %648 = vmatpush1.msra.mxu0 %v153
    %649 = vmatprep.subr.mxu0 %v162
    %650 = vmatpush1.msra.mxu0 %v161
    %651 = vmatprep.subr.mxu0 %v170
    %652 = vmatpush1.msra.mxu0 %v169
    %653 = vmatprep.subr.mxu0 %v178
    %654 = vmatpush1.msra.mxu0 %v177
    %655 = vmatprep.subr.mxu0 %v186
    %656 = vmatpush1.msra.mxu0 %v185
    %657 = vmatprep.subr.mxu0 %v194
    %658 = vmatpush1.msra.mxu0 %v193
    %659 = vmatprep.subr.mxu0 %v202
    %660 = vmatpush1.msra.mxu0 %v201
    %661 = vmatprep.subr.mxu0 %v210
    %662 = vmatpush1.msra.mxu0 %v209
    %663 = vmatprep.subr.mxu0 %v218
    %664 = vmatpush1.msra.mxu0 %v217
    %665 = vmatprep.subr.mxu0 %v226
    %666 = vmatpush1.msra.mxu0 %v225
    %667 = vmatprep.subr.mxu0 %v234
    %668 = vmatpush1.msra.mxu0 %v233
    %669 = vmatprep.subr.mxu0 %v242
    %670 = vmatpush1.msra.mxu0 %v241
    %671 = vmatprep.subr.mxu0 %v250
    %672 = vmatpush1.msra.mxu0 %v249
    %673 = vmatprep.subr.mxu0 %v258
    %674 = vmatpush1.msra.mxu0 %v257
    %675 = vmatprep.subr.mxu0 %v266
    %676 = vmatpush1.msra.mxu0 %v265
    %677 = vmatprep.subr.mxu0 %v274
    %678 = vmatpush1.msra.mxu0 %v273
    %679 = vmatprep.subr.mxu0 %v282
    %680 = vmatpush1.msra.mxu0 %v281
    %681 = vmatprep.subr.mxu0 %v290
    %682 = vmatpush1.msra.mxu0 %v289
    %683 = vmatprep.subr.mxu0 %v298
    %684 = vmatpush1.msra.mxu0 %v297
    %685 = vmatprep.subr.mxu0 %v306
    %686 = vmatpush1.msra.mxu0 %v305
    %687 = vmatprep.mubr.f32.mxu0 0.0
    %688 = vmatmul.mubr.f32.gmra.mrb[0].mxu0 %v54
    %v689 = vpop.f32.mrb[0].mxu0
    %v690 = vadd.f32 %v452, %v689
    %v691 = vpop.f32.mrb[0].mxu0
    %v692 = vadd.f32 %v456, %v691
    %693 = vdwg.mxu0
    %694 = vmatprep.subr.mxu0 %v314
    %695 = vmatpush1.msra.mxu0 %v313
    %696 = vmatprep.subr.mxu0 %v322
    %697 = vmatpush1.msra.mxu0 %v321
    %698 = vmatprep.subr.mxu0 %v330
    %699 = vmatpush1.msra.mxu0 %v329
    %700 = vmatprep.subr.mxu0 %v338
    %701 = vmatpush1.msra.mxu0 %v337
    %702 = vmatprep.subr.mxu0 %v346
    %703 = vmatpush1.msra.mxu0 %v345
    %704 = vmatprep.subr.mxu0 %v354
    %705 = vmatpush1.msra.mxu0 %v353
    %706 = vmatprep.subr.mxu0 %v362
    %707 = vmatpush1.msra.mxu0 %v361
    %708 = vmatprep.subr.mxu0 %v370
    %709 = vmatpush1.msra.mxu0 %v369
    %710 = vmatprep.subr.mxu0 %v378
    %711 = vmatpush1.msra.mxu0 %v377
    %712 = vmatprep.subr.mxu0 %v386
    %713 = vmatpush1.msra.mxu0 %v385
    %714 = vmatprep.subr.mxu0 %v394
    %715 = vmatpush1.msra.mxu0 %v393
    %716 = vmatprep.subr.mxu0 %v402
    %717 = vmatpush1.msra.mxu0 %v401
    %718 = vmatprep.subr.mxu0 %v410
    %719 = vmatpush1.msra.mxu0 %v409
    %720 = vmatprep.subr.mxu0 %v418
    %721 = vmatpush1.msra.mxu0 %v417
    %722 = vmatprep.subr.mxu0 %v426
    %723 = vmatpush1.msra.mxu0 %v425
    %724 = vmatprep.subr.mxu0 %v434
    %725 = vmatpush1.msra.mxu0 %v433
    %726 = vmatprep.subr.mxu0 0.0
    %727 = vmatpush1.msra.mxu0 0.0
    %728 = vmatprep.subr.mxu0 0.0
    %729 = vmatpush1.msra.mxu0 0.0
    %730 = vmatprep.subr.mxu0 0.0
    %731 = vmatpush1.msra.mxu0 0.0
    %732 = vmatprep.subr.mxu0 0.0
    %733 = vmatpush1.msra.mxu0 0.0
    %734 = vmatprep.subr.mxu0 0.0
    %735 = vmatpush1.msra.mxu0 0.0
    %736 = vmatprep.subr.mxu0 0.0
    %737 = vmatpush1.msra.mxu0 0.0
    %738 = vmatprep.subr.mxu0 0.0
    %739 = vmatpush1.msra.mxu0 0.0
    %740 = vmatprep.subr.mxu0 0.0
    %741 = vmatpush1.msra.mxu0 0.0
    %742 = vmatprep.subr.mxu0 0.0
    %743 = vmatpush1.msra.mxu0 0.0
    %744 = vmatprep.subr.mxu0 0.0
    %745 = vmatpush1.msra.mxu0 0.0
    %746 = vmatprep.subr.mxu0 0.0
    %747 = vmatpush1.msra.mxu0 0.0
    %748 = vmatprep.subr.mxu0 0.0
    %749 = vmatpush1.msra.mxu0 0.0
    %750 = vmatprep.subr.mxu0 0.0
    %751 = vmatpush1.msra.mxu0 0.0
    %752 = vmatprep.subr.mxu0 0.0
    %753 = vmatpush1.msra.mxu0 0.0
    %754 = vmatprep.subr.mxu0 0.0
    %755 = vmatpush1.msra.mxu0 0.0
    %756 = vmatprep.subr.mxu0 0.0
    %757 = vmatpush1.msra.mxu0 0.0
    %758 = vmatprep.mubr.f32.mxu0 0.0
    %759 = vmatmul.mubr.f32.gmra.mrb[0].mxu0 0.0
    %v760 = vpop.f32.mrb[0].mxu0
    %v761 = vadd.f32 %v690, %v760
    %v762 = vpop.f32.mrb[0].mxu0
    %v763 = vadd.f32 %v692, %v762
    %764 = vdwg.mxu0
    %765 = vmatprep.subr.mxu0 %v60
    %766 = vmatpush1.msra.mxu0 %v59
    %767 = vmatprep.subr.mxu0 %v68
    %768 = vmatpush1.msra.mxu0 %v67
    %769 = vmatprep.subr.mxu0 %v76
    %770 = vmatpush1.msra.mxu0 %v75
    %771 = vmatprep.subr.mxu0 %v84
    %772 = vmatpush1.msra.mxu0 %v83
    %773 = vmatprep.subr.mxu0 %v92
    %774 = vmatpush1.msra.mxu0 %v91
    %775 = vmatprep.subr.mxu0 %v100
    %776 = vmatpush1.msra.mxu0 %v99
    %777 = vmatprep.subr.mxu0 %v108
    %778 = vmatpush1.msra.mxu0 %v107
    %779 = vmatprep.subr.mxu0 %v116
    %780 = vmatpush1.msra.mxu0 %v115
    %781 = vmatprep.subr.mxu0 %v124
    %782 = vmatpush1.msra.mxu0 %v123
    %783 = vmatprep.subr.mxu0 %v132
    %784 = vmatpush1.msra.mxu0 %v131
    %785 = vmatprep.subr.mxu0 %v140
    %786 = vmatpush1.msra.mxu0 %v139
    %787 = vmatprep.subr.mxu0 %v148
    %788 = vmatpush1.msra.mxu0 %v147
    %789 = vmatprep.subr.mxu0 %v156
    %790 = vmatpush1.msra.mxu0 %v155
    %791 = vmatprep.subr.mxu0 %v164
    %792 = vmatpush1.msra.mxu0 %v163
    %793 = vmatprep.subr.mxu0 %v172
    %794 = vmatpush1.msra.mxu0 %v171
    %795 = vmatprep.subr.mxu0 %v180
    %796 = vmatpush1.msra.mxu0 %v179
    %797 = vmatprep.subr.mxu0 %v188
    %798 = vmatpush1.msra.mxu0 %v187
    %799 = vmatprep.subr.mxu0 %v196
    %800 = vmatpush1.msra.mxu0 %v195
    %801 = vmatprep.subr.mxu0 %v204
    %802 = vmatpush1.msra.mxu0 %v203
    %803 = vmatprep.subr.mxu0 %v212
    %804 = vmatpush1.msra.mxu0 %v211
    %805 = vmatprep.subr.mxu0 %v220
    %806 = vmatpush1.msra.mxu0 %v219
    %807 = vmatprep.subr.mxu0 %v228
    %808 = vmatpush1.msra.mxu0 %v227
    %809 = vmatprep.subr.mxu0 %v236
    %810 = vmatpush1.msra.mxu0 %v235
    %811 = vmatprep.subr.mxu0 %v244
    %812 = vmatpush1.msra.mxu0 %v243
    %813 = vmatprep.subr.mxu0 %v252
    %814 = vmatpush1.msra.mxu0 %v251
    %815 = vmatprep.subr.mxu0 %v260
    %816 = vmatpush1.msra.mxu0 %v259
    %817 = vmatprep.subr.mxu0 %v268
    %818 = vmatpush1.msra.mxu0 %v267
    %819 = vmatprep.subr.mxu0 %v276
    %820 = vmatpush1.msra.mxu0 %v275
    %821 = vmatprep.subr.mxu0 %v284
    %822 = vmatpush1.msra.mxu0 %v283
    %823 = vmatprep.subr.mxu0 %v292
    %824 = vmatpush1.msra.mxu0 %v291
    %825 = vmatprep.subr.mxu0 %v300
    %826 = vmatpush1.msra.mxu0 %v299
    %827 = vmatprep.subr.mxu0 %v308
    %828 = vmatpush1.msra.mxu0 %v307
    %829 = vmatprep.mubr.f32.mxu0 0.0
    %830 = vmatmul.mubr.f32.gmra.mrb[0].mxu0 %v54
    %v831 = vpop.f32.mrb[0].mxu0
    %v832 = vadd.f32 %v460, %v831
    %v833 = vpop.f32.mrb[0].mxu0
    %v834 = vadd.f32 %v464, %v833
    %835 = vdwg.mxu0
    %836 = vmatprep.subr.mxu0 %v316
    %837 = vmatpush1.msra.mxu0 %v315
    %838 = vmatprep.subr.mxu0 %v324
    %839 = vmatpush1.msra.mxu0 %v323
    %840 = vmatprep.subr.mxu0 %v332
    %841 = vmatpush1.msra.mxu0 %v331
    %842 = vmatprep.subr.mxu0 %v340
    %843 = vmatpush1.msra.mxu0 %v339
    %844 = vmatprep.subr.mxu0 %v348
    %845 = vmatpush1.msra.mxu0 %v347
    %846 = vmatprep.subr.mxu0 %v356
    %847 = vmatpush1.msra.mxu0 %v355
    %848 = vmatprep.subr.mxu0 %v364
    %849 = vmatpush1.msra.mxu0 %v363
    %850 = vmatprep.subr.mxu0 %v372
    %851 = vmatpush1.msra.mxu0 %v371
    %852 = vmatprep.subr.mxu0 %v380
    %853 = vmatpush1.msra.mxu0 %v379
    %854 = vmatprep.subr.mxu0 %v388
    %855 = vmatpush1.msra.mxu0 %v387
    %856 = vmatprep.subr.mxu0 %v396
    %857 = vmatpush1.msra.mxu0 %v395
    %858 = vmatprep.subr.mxu0 %v404
    %859 = vmatpush1.msra.mxu0 %v403
    %860 = vmatprep.subr.mxu0 %v412
    %861 = vmatpush1.msra.mxu0 %v411
    %862 = vmatprep.subr.mxu0 %v420
    %863 = vmatpush1.msra.mxu0 %v419
    %864 = vmatprep.subr.mxu0 %v428
    %865 = vmatpush1.msra.mxu0 %v427
    %866 = vmatprep.subr.mxu0 %v436
    %867 = vmatpush1.msra.mxu0 %v435
    %868 = vmatprep.subr.mxu0 0.0
    %869 = vmatpush1.msra.mxu0 0.0
    %870 = vmatprep.subr.mxu0 0.0
    %871 = vmatpush1.msra.mxu0 0.0
    %872 = vmatprep.subr.mxu0 0.0
    %873 = vmatpush1.msra.mxu0 0.0
    %874 = vmatprep.subr.mxu0 0.0
    %875 = vmatpush1.msra.mxu0 0.0
    %876 = vmatprep.subr.mxu0 0.0
    %877 = vmatpush1.msra.mxu0 0.0
    %878 = vmatprep.subr.mxu0 0.0
    %879 = vmatpush1.msra.mxu0 0.0
    %880 = vmatprep.subr.mxu0 0.0
    %881 = vmatpush1.msra.mxu0 0.0
    %882 = vmatprep.subr.mxu0 0.0
    %883 = vmatpush1.msra.mxu0 0.0
    %884 = vmatprep.subr.mxu0 0.0
    %885 = vmatpush1.msra.mxu0 0.0
    %886 = vmatprep.subr.mxu0 0.0
    %887 = vmatpush1.msra.mxu0 0.0
    %888 = vmatprep.subr.mxu0 0.0
    %889 = vmatpush1.msra.mxu0 0.0
    %890 = vmatprep.subr.mxu0 0.0
    %891 = vmatpush1.msra.mxu0 0.0
    %892 = vmatprep.subr.mxu0 0.0
    %893 = vmatpush1.msra.mxu0 0.0
    %894 = vmatprep.subr.mxu0 0.0
    %895 = vmatpush1.msra.mxu0 0.0
    %896 = vmatprep.subr.mxu0 0.0
    %897 = vmatpush1.msra.mxu0 0.0
    %898 = vmatprep.subr.mxu0 0.0
    %899 = vmatpush1.msra.mxu0 0.0
    %900 = vmatprep.mubr.f32.mxu0 0.0
    %901 = vmatmul.mubr.f32.gmra.mrb[0].mxu0 0.0
    %v902 = vpop.f32.mrb[0].mxu0
    %v903 = vadd.f32 %v832, %v902
    %v904 = vpop.f32.mrb[0].mxu0
    %v905 = vadd.f32 %v834, %v904
    %906 = vdwg.mxu0
    %907 = vmatprep.subr.mxu0 %v62
    %908 = vmatpush1.msra.mxu0 %v61
    %909 = vmatprep.subr.mxu0 %v70
    %910 = vmatpush1.msra.mxu0 %v69
    %911 = vmatprep.subr.mxu0 %v78
    %912 = vmatpush1.msra.mxu0 %v77
    %913 = vmatprep.subr.mxu0 %v86
    %914 = vmatpush1.msra.mxu0 %v85
    %915 = vmatprep.subr.mxu0 %v94
    %916 = vmatpush1.msra.mxu0 %v93
    %917 = vmatprep.subr.mxu0 %v102
    %918 = vmatpush1.msra.mxu0 %v101
    %919 = vmatprep.subr.mxu0 %v110
    %920 = vmatpush1.msra.mxu0 %v109
    %921 = vmatprep.subr.mxu0 %v118
    %922 = vmatpush1.msra.mxu0 %v117
    %923 = vmatprep.subr.mxu0 %v126
    %924 = vmatpush1.msra.mxu0 %v125
    %925 = vmatprep.subr.mxu0 %v134
    %926 = vmatpush1.msra.mxu0 %v133
    %927 = vmatprep.subr.mxu0 %v142
    %928 = vmatpush1.msra.mxu0 %v141
    %929 = vmatprep.subr.mxu0 %v150
    %930 = vmatpush1.msra.mxu0 %v149
    %931 = vmatprep.subr.mxu0 %v158
    %932 = vmatpush1.msra.mxu0 %v157
    %933 = vmatprep.subr.mxu0 %v166
    %934 = vmatpush1.msra.mxu0 %v165
    %935 = vmatprep.subr.mxu0 %v174
    %936 = vmatpush1.msra.mxu0 %v173
    %937 = vmatprep.subr.mxu0 %v182
    %938 = vmatpush1.msra.mxu0 %v181
    %939 = vmatprep.subr.mxu0 %v190
    %940 = vmatpush1.msra.mxu0 %v189
    %941 = vmatprep.subr.mxu0 %v198
    %942 = vmatpush1.msra.mxu0 %v197
    %943 = vmatprep.subr.mxu0 %v206
    %944 = vmatpush1.msra.mxu0 %v205
    %945 = vmatprep.subr.mxu0 %v214
    %946 = vmatpush1.msra.mxu0 %v213
    %947 = vmatprep.subr.mxu0 %v222
    %948 = vmatpush1.msra.mxu0 %v221
    %949 = vmatprep.subr.mxu0 %v230
    %950 = vmatpush1.msra.mxu0 %v229
    %951 = vmatprep.subr.mxu0 %v238
    %952 = vmatpush1.msra.mxu0 %v237
    %953 = vmatprep.subr.mxu0 %v246
    %954 = vmatpush1.msra.mxu0 %v245
    %955 = vmatprep.subr.mxu0 %v254
    %956 = vmatpush1.msra.mxu0 %v253
    %957 = vmatprep.subr.mxu0 %v262
    %958 = vmatpush1.msra.mxu0 %v261
    %959 = vmatprep.subr.mxu0 %v270
    %960 = vmatpush1.msra.mxu0 %v269
    %961 = vmatprep.subr.mxu0 %v278
    %962 = vmatpush1.msra.mxu0 %v277
    %963 = vmatprep.subr.mxu0 %v286
    %964 = vmatpush1.msra.mxu0 %v285
    %965 = vmatprep.subr.mxu0 %v294
    %966 = vmatpush1.msra.mxu0 %v293
    %967 = vmatprep.subr.mxu0 %v302
    %968 = vmatpush1.msra.mxu0 %v301
    %969 = vmatprep.subr.mxu0 %v310
    %970 = vmatpush1.msra.mxu0 %v309
    %971 = vmatprep.mubr.f32.mxu0 0.0
    %972 = vmatmul.mubr.f32.gmra.mrb[0].mxu0 %v54
    %v973 = vpop.f32.mrb[0].mxu0
    %v974 = vadd.f32 %v468, %v973
    %v975 = vpop.f32.mrb[0].mxu0
    %v976 = vadd.f32 %v472, %v975
    %977 = vdwg.mxu0
    %978 = vmatprep.subr.mxu0 %v318
    %979 = vmatpush1.msra.mxu0 %v317
    %980 = vmatprep.subr.mxu0 %v326
    %981 = vmatpush1.msra.mxu0 %v325
    %982 = vmatprep.subr.mxu0 %v334
    %983 = vmatpush1.msra.mxu0 %v333
    %984 = vmatprep.subr.mxu0 %v342
    %985 = vmatpush1.msra.mxu0 %v341
    %986 = vmatprep.subr.mxu0 %v350
    %987 = vmatpush1.msra.mxu0 %v349
    %988 = vmatprep.subr.mxu0 %v358
    %989 = vmatpush1.msra.mxu0 %v357
    %990 = vmatprep.subr.mxu0 %v366
    %991 = vmatpush1.msra.mxu0 %v365
    %992 = vmatprep.subr.mxu0 %v374
    %993 = vmatpush1.msra.mxu0 %v373
    %994 = vmatprep.subr.mxu0 %v382
    %995 = vmatpush1.msra.mxu0 %v381
    %996 = vmatprep.subr.mxu0 %v390
    %997 = vmatpush1.msra.mxu0 %v389
    %998 = vmatprep.subr.mxu0 %v398
    %999 = vmatpush1.msra.mxu0 %v397
    %1000 = vmatprep.subr.mxu0 %v406
    %1001 = vmatpush1.msra.mxu0 %v405
    %1002 = vmatprep.subr.mxu0 %v414
    %1003 = vmatpush1.msra.mxu0 %v413
    %1004 = vmatprep.subr.mxu0 %v422
    %1005 = vmatpush1.msra.mxu0 %v421
    %1006 = vmatprep.subr.mxu0 %v430
    %1007 = vmatpush1.msra.mxu0 %v429
    %1008 = vmatprep.subr.mxu0 %v438
    %1009 = vmatpush1.msra.mxu0 %v437
    %1010 = vmatprep.subr.mxu0 0.0
    %1011 = vmatpush1.msra.mxu0 0.0
    %1012 = vmatprep.subr.mxu0 0.0
    %1013 = vmatpush1.msra.mxu0 0.0
    %1014 = vmatprep.subr.mxu0 0.0
    %1015 = vmatpush1.msra.mxu0 0.0
    %1016 = vmatprep.subr.mxu0 0.0
    %1017 = vmatpush1.msra.mxu0 0.0
    %1018 = vmatprep.subr.mxu0 0.0
    %1019 = vmatpush1.msra.mxu0 0.0
    %1020 = vmatprep.subr.mxu0 0.0
    %1021 = vmatpush1.msra.mxu0 0.0
    %1022 = vmatprep.subr.mxu0 0.0
    %1023 = vmatpush1.msra.mxu0 0.0
    %1024 = vmatprep.subr.mxu0 0.0
    %1025 = vmatpush1.msra.mxu0 0.0
    %1026 = vmatprep.subr.mxu0 0.0
    %1027 = vmatpush1.msra.mxu0 0.0
    %1028 = vmatprep.subr.mxu0 0.0
    %1029 = vmatpush1.msra.mxu0 0.0
    %1030 = vmatprep.subr.mxu0 0.0
    %1031 = vmatpush1.msra.mxu0 0.0
    %1032 = vmatprep.subr.mxu0 0.0
    %1033 = vmatpush1.msra.mxu0 0.0
    %1034 = vmatprep.subr.mxu0 0.0
    %1035 = vmatpush1.msra.mxu0 0.0
    %1036 = vmatprep.subr.mxu0 0.0
    %1037 = vmatpush1.msra.mxu0 0.0
    %1038 = vmatprep.subr.mxu0 0.0
    %1039 = vmatpush1.msra.mxu0 0.0
    %1040 = vmatprep.subr.mxu0 0.0
    %1041 = vmatpush1.msra.mxu0 0.0
    %1042 = vmatprep.mubr.f32.mxu0 0.0
    %1043 = vmatmul.mubr.f32.gmra.mrb[0].mxu0 0.0
    %v1044 = vpop.f32.mrb[0].mxu0
    %v1045 = vadd.f32 %v974, %v1044
    %v1046 = vpop.f32.mrb[0].mxu0
    %v1047 = vadd.f32 %v976, %v1046
    %1048 = vdwg.mxu0
    %v1049 = vxor.u32 %v619, 2147483648
    %v1050 = vxor.u32 %v621, 2147483648
    %v1051 = vmul.f32 %v1049, 1.442695
    %v1052 = vpow.pop %v1051
    %v1053 = vmul.f32 %v1050, 1.442695
    %v1054 = vpow.pop %v1053
    %v1055 = vadd.f32 %v1052, 1.0
    %v1056 = vadd.f32 %v1054, 1.0
    %v1057 = vrcp.pop %v1055
    %v1058 = vmul.f32 1.0, %v1057
    %v1059 = vrcp.pop %v1056
    %v1060 = vmul.f32 1.0, %v1059
    %v1061 = vxor.u32 %v761, 2147483648
    %v1062 = vxor.u32 %v763, 2147483648
    %v1063 = vmul.f32 %v1061, 1.442695
    %v1064 = vpow.pop %v1063
    %v1065 = vmul.f32 %v1062, 1.442695
    %v1066 = vpow.pop %v1065
    %v1067 = vadd.f32 %v1064, 1.0
    %v1068 = vadd.f32 %v1066, 1.0
    %v1069 = vrcp.pop %v1067
    %v1070 = vmul.f32 1.0, %v1069
    %v1071 = vrcp.pop %v1068
    %v1072 = vmul.f32 1.0, %v1071
    %v1073 = vtanh.pop %v903
    %v1074 = vtanh.pop %v905
    %v1075 = vxor.u32 %v1045, 2147483648
    %v1076 = vxor.u32 %v1047, 2147483648
    %v1077 = vmul.f32 %v1075, 1.442695
    %v1078 = vpow.pop %v1077
    %v1079 = vmul.f32 %v1076, 1.442695
    %v1080 = vpow.pop %v1079
    %v1081 = vadd.f32 %v1078, 1.0
    %v1082 = vadd.f32 %v1080, 1.0
    %v1083 = vrcp.pop %v1081
    %v1084 = vmul.f32 1.0, %v1083
    %v1085 = vrcp.pop %v1082
    %v1086 = vmul.f32 1.0, %v1085
    %v1087 = vmul.f32 %v1070, 0.0
    %v1088 = vmul.f32 %v1072, 0.0
    %v1089 = vmul.f32 %v1058, %v1073
    %v1090 = vmul.f32 %v1060, %v1074
    %v1091 = vadd.f32 %v1087, %v1089
    %v1092 = vadd.f32 %v1088, %v1090
    %v1093 = vtanh.pop %v1091
    %v1094 = vtanh.pop %v1092
    %v1095 = vmul.f32 %v1084, %v1093
    %v1096 = vmul.f32 %v1086, %v1094
    %1097 = vst [vmem:[#allocation8] sm:$0xff] %v1095
    %1098 = vst [vmem:[#allocation8 + $0x8] sm:$0xff] %v1096
    %s1099 = scalar_lea.vmem [#allocation2], 8
    %v1100 = vld [vmem:[%s1099] sm:$0xff]
    %v1101 = vld [vmem:[#allocation5] sm:$0xff]
    %v1102 = vld [vmem:[#allocation5 + $0x8] sm:$0xff]
    %v1103 = vld [vmem:[#allocation5 + $0x10] sm:$0xff]
    %v1104 = vld [vmem:[#allocation5 + $0x18] sm:$0xff]
    %v1105 = vld [vmem:[#allocation5 + $0x20] sm:$0xff]
    %v1106 = vld [vmem:[#allocation5 + $0x28] sm:$0xff]
    %v1107 = vld [vmem:[#allocation5 + $0x30] sm:$0xff]
    %v1108 = vld [vmem:[#allocation5 + $0x38] sm:$0xff]
    %v1109 = vld [vmem:[#allocation5 + $0x40] sm:$0xff]
    %v1110 = vld [vmem:[#allocation5 + $0x48] sm:$0xff]
    %v1111 = vld [vmem:[#allocation5 + $0x50] sm:$0xff]
    %v1112 = vld [vmem:[#allocation5 + $0x58] sm:$0xff]
    %v1113 = vld [vmem:[#allocation5 + $0x60] sm:$0xff]
    %v1114 = vld [vmem:[#allocation5 + $0x68] sm:$0xff]
    %v1115 = vld [vmem:[#allocation5 + $0x70] sm:$0xff]
    %v1116 = vld [vmem:[#allocation5 + $0x78] sm:$0xff]
    %v1117 = vld [vmem:[#allocation5 + $0x80] sm:$0xff]
    %v1118 = vld [vmem:[#allocation5 + $0x88] sm:$0xff]
    %v1119 = vld [vmem:[#allocation5 + $0x90] sm:$0xff]
    %v1120 = vld [vmem:[#allocation5 + $0x98] sm:$0xff]
    %v1121 = vld [vmem:[#allocation5 + $0xa0] sm:$0xff]
    %v1122 = vld [vmem:[#allocation5 + $0xa8] sm:$0xff]
    %v1123 = vld [vmem:[#allocation5 + $0xb0] sm:$0xff]
    %v1124 = vld [vmem:[#allocation5 + $0xb8] sm:$0xff]
    %v1125 = vld [vmem:[#allocation5 + $0xc0] sm:$0xff]
    %v1126 = vld [vmem:[#allocation5 + $0xc8] sm:$0xff]
    %v1127 = vld [vmem:[#allocation5 + $0xd0] sm:$0xff]
    %v1128 = vld [vmem:[#allocation5 + $0xd8] sm:$0xff]
    %v1129 = vld [vmem:[#allocation5 + $0xe0] sm:$0xff]
    %v1130 = vld [vmem:[#allocation5 + $0xe8] sm:$0xff]
    %v1131 = vld [vmem:[#allocation5 + $0xf0] sm:$0xff]
    %v1132 = vld [vmem:[#allocation5 + $0xf8] sm:$0xff]
    %v1133 = vld [vmem:[#allocation5 + $0x100] sm:$0xff]
    %v1134 = vld [vmem:[#allocation5 + $0x108] sm:$0xff]
    %v1135 = vld [vmem:[#allocation5 + $0x110] sm:$0xff]
    %v1136 = vld [vmem:[#allocation5 + $0x118] sm:$0xff]
    %v1137 = vld [vmem:[#allocation5 + $0x120] sm:$0xff]
    %v1138 = vld [vmem:[#allocation5 + $0x128] sm:$0xff]
    %v1139 = vld [vmem:[#allocation5 + $0x130] sm:$0xff]
    %v1140 = vld [vmem:[#allocation5 + $0x138] sm:$0xff]
    %v1141 = vld [vmem:[#allocation5 + $0x140] sm:$0xff]
    %v1142 = vld [vmem:[#allocation5 + $0x148] sm:$0xff]
    %v1143 = vld [vmem:[#allocation5 + $0x150] sm:$0xff]
    %v1144 = vld [vmem:[#allocation5 + $0x158] sm:$0xff]
    %v1145 = vld [vmem:[#allocation5 + $0x160] sm:$0xff]
    %v1146 = vld [vmem:[#allocation5 + $0x168] sm:$0xff]
    %v1147 = vld [vmem:[#allocation5 + $0x170] sm:$0xff]
    %v1148 = vld [vmem:[#allocation5 + $0x178] sm:$0xff]
    %v1149 = vld [vmem:[#allocation5 + $0x180] sm:$0xff]
    %v1150 = vld [vmem:[#allocation5 + $0x188] sm:$0xff]
    %v1151 = vld [vmem:[#allocation5 + $0x190] sm:$0xff]
    %v1152 = vld [vmem:[#allocation5 + $0x198] sm:$0xff]
    %v1153 = vld [vmem:[#allocation5 + $0x1a0] sm:$0xff]
    %v1154 = vld [vmem:[#allocation5 + $0x1a8] sm:$0xff]
    %v1155 = vld [vmem:[#allocation5 + $0x1b0] sm:$0xff]
    %v1156 = vld [vmem:[#allocation5 + $0x1b8] sm:$0xff]
    %v1157 = vld [vmem:[#allocation5 + $0x1c0] sm:$0xff]
    %v1158 = vld [vmem:[#allocation5 + $0x1c8] sm:$0xff]
    %v1159 = vld [vmem:[#allocation5 + $0x1d0] sm:$0xff]
    %v1160 = vld [vmem:[#allocation5 + $0x1d8] sm:$0xff]
    %v1161 = vld [vmem:[#allocation5 + $0x1e0] sm:$0xff]
    %v1162 = vld [vmem:[#allocation5 + $0x1e8] sm:$0xff]
    %v1163 = vld [vmem:[#allocation5 + $0x1f0] sm:$0xff]
    %v1164 = vld [vmem:[#allocation5 + $0x1f8] sm:$0xff]
    %v1165 = vld [vmem:[#allocation5 + $0x200] sm:$0xff]
    %v1166 = vld [vmem:[#allocation5 + $0x208] sm:$0xff]
    %v1167 = vld [vmem:[#allocation5 + $0x210] sm:$0xff]
    %v1168 = vld [vmem:[#allocation5 + $0x218] sm:$0xff]
    %v1169 = vld [vmem:[#allocation5 + $0x220] sm:$0xff]
    %v1170 = vld [vmem:[#allocation5 + $0x228] sm:$0xff]
    %v1171 = vld [vmem:[#allocation5 + $0x230] sm:$0xff]
    %v1172 = vld [vmem:[#allocation5 + $0x238] sm:$0xff]
    %v1173 = vld [vmem:[#allocation5 + $0x240] sm:$0xff]
    %v1174 = vld [vmem:[#allocation5 + $0x248] sm:$0xff]
    %v1175 = vld [vmem:[#allocation5 + $0x250] sm:$0xff]
    %v1176 = vld [vmem:[#allocation5 + $0x258] sm:$0xff]
    %v1177 = vld [vmem:[#allocation5 + $0x260] sm:$0xff]
    %v1178 = vld [vmem:[#allocation5 + $0x268] sm:$0xff]
    %v1179 = vld [vmem:[#allocation5 + $0x270] sm:$0xff]
    %v1180 = vld [vmem:[#allocation5 + $0x278] sm:$0xff]
    %v1181 = vld [vmem:[#allocation5 + $0x280] sm:$0xff]
    %v1182 = vld [vmem:[#allocation5 + $0x288] sm:$0xff]
    %v1183 = vld [vmem:[#allocation5 + $0x290] sm:$0xff]
    %v1184 = vld [vmem:[#allocation5 + $0x298] sm:$0xff]
    %v1185 = vld [vmem:[#allocation5 + $0x2a0] sm:$0xff]
    %v1186 = vld [vmem:[#allocation5 + $0x2a8] sm:$0xff]
    %v1187 = vld [vmem:[#allocation5 + $0x2b0] sm:$0xff]
    %v1188 = vld [vmem:[#allocation5 + $0x2b8] sm:$0xff]
    %v1189 = vld [vmem:[#allocation5 + $0x2c0] sm:$0xff]
    %v1190 = vld [vmem:[#allocation5 + $0x2c8] sm:$0xff]
    %v1191 = vld [vmem:[#allocation5 + $0x2d0] sm:$0xff]
    %v1192 = vld [vmem:[#allocation5 + $0x2d8] sm:$0xff]
    %v1193 = vld [vmem:[#allocation5 + $0x2e0] sm:$0xff]
    %v1194 = vld [vmem:[#allocation5 + $0x2e8] sm:$0xff]
    %v1195 = vld [vmem:[#allocation5 + $0x2f0] sm:$0xff]
    %v1196 = vld [vmem:[#allocation5 + $0x2f8] sm:$0xff]
    %v1197 = vld [vmem:[#allocation5 + $0x300] sm:$0xff]
    %v1198 = vld [vmem:[#allocation5 + $0x308] sm:$0xff]
    %v1199 = vld [vmem:[#allocation5 + $0x310] sm:$0xff]
    %v1200 = vld [vmem:[#allocation5 + $0x318] sm:$0xff]
    %v1201 = vld [vmem:[#allocation5 + $0x320] sm:$0xff]
    %v1202 = vld [vmem:[#allocation5 + $0x328] sm:$0xff]
    %v1203 = vld [vmem:[#allocation5 + $0x330] sm:$0xff]
    %v1204 = vld [vmem:[#allocation5 + $0x338] sm:$0xff]
    %v1205 = vld [vmem:[#allocation5 + $0x340] sm:$0xff]
    %v1206 = vld [vmem:[#allocation5 + $0x348] sm:$0xff]
    %v1207 = vld [vmem:[#allocation5 + $0x350] sm:$0xff]
    %v1208 = vld [vmem:[#allocation5 + $0x358] sm:$0xff]
    %v1209 = vld [vmem:[#allocation5 + $0x360] sm:$0xff]
    %v1210 = vld [vmem:[#allocation5 + $0x368] sm:$0xff]
    %v1211 = vld [vmem:[#allocation5 + $0x370] sm:$0xff]
    %v1212 = vld [vmem:[#allocation5 + $0x378] sm:$0xff]
    %v1213 = vld [vmem:[#allocation5 + $0x380] sm:$0xff]
    %v1214 = vld [vmem:[#allocation5 + $0x388] sm:$0xff]
    %v1215 = vld [vmem:[#allocation5 + $0x390] sm:$0xff]
    %v1216 = vld [vmem:[#allocation5 + $0x398] sm:$0xff]
    %v1217 = vld [vmem:[#allocation5 + $0x3a0] sm:$0xff]
    %v1218 = vld [vmem:[#allocation5 + $0x3a8] sm:$0xff]
    %v1219 = vld [vmem:[#allocation5 + $0x3b0] sm:$0xff]
    %v1220 = vld [vmem:[#allocation5 + $0x3b8] sm:$0xff]
    %v1221 = vld [vmem:[#allocation5 + $0x3c0] sm:$0xff]
    %v1222 = vld [vmem:[#allocation5 + $0x3c8] sm:$0xff]
    %v1223 = vld [vmem:[#allocation5 + $0x3d0] sm:$0xff]
    %v1224 = vld [vmem:[#allocation5 + $0x3d8] sm:$0xff]
    %v1225 = vld [vmem:[#allocation5 + $0x3e0] sm:$0xff]
    %v1226 = vld [vmem:[#allocation5 + $0x3e8] sm:$0xff]
    %v1227 = vld [vmem:[#allocation5 + $0x3f0] sm:$0xff]
    %v1228 = vld [vmem:[#allocation5 + $0x3f8] sm:$0xff]
    %v1229 = vld [vmem:[#allocation5 + $0x400] sm:$0xff]
    %v1230 = vld [vmem:[#allocation5 + $0x408] sm:$0xff]
    %v1231 = vld [vmem:[#allocation5 + $0x410] sm:$0xff]
    %v1232 = vld [vmem:[#allocation5 + $0x418] sm:$0xff]
    %v1233 = vld [vmem:[#allocation5 + $0x420] sm:$0xff]
    %v1234 = vld [vmem:[#allocation5 + $0x428] sm:$0xff]
    %v1235 = vld [vmem:[#allocation5 + $0x430] sm:$0xff]
    %v1236 = vld [vmem:[#allocation5 + $0x438] sm:$0xff]
    %v1237 = vld [vmem:[#allocation5 + $0x440] sm:$0xff]
    %v1238 = vld [vmem:[#allocation5 + $0x448] sm:$0xff]
    %v1239 = vld [vmem:[#allocation5 + $0x450] sm:$0xff]
    %v1240 = vld [vmem:[#allocation5 + $0x458] sm:$0xff]
    %v1241 = vld [vmem:[#allocation5 + $0x460] sm:$0xff]
    %v1242 = vld [vmem:[#allocation5 + $0x468] sm:$0xff]
    %v1243 = vld [vmem:[#allocation5 + $0x470] sm:$0xff]
    %v1244 = vld [vmem:[#allocation5 + $0x478] sm:$0xff]
    %v1245 = vld [vmem:[#allocation5 + $0x480] sm:$0xff]
    %v1246 = vld [vmem:[#allocation5 + $0x488] sm:$0xff]
    %v1247 = vld [vmem:[#allocation5 + $0x490] sm:$0xff]
    %v1248 = vld [vmem:[#allocation5 + $0x498] sm:$0xff]
    %v1249 = vld [vmem:[#allocation5 + $0x4a0] sm:$0xff]
    %v1250 = vld [vmem:[#allocation5 + $0x4a8] sm:$0xff]
    %v1251 = vld [vmem:[#allocation5 + $0x4b0] sm:$0xff]
    %v1252 = vld [vmem:[#allocation5 + $0x4b8] sm:$0xff]
    %v1253 = vld [vmem:[#allocation5 + $0x4c0] sm:$0xff]
    %v1254 = vld [vmem:[#allocation5 + $0x4c8] sm:$0xff]
    %v1255 = vld [vmem:[#allocation5 + $0x4d0] sm:$0xff]
    %v1256 = vld [vmem:[#allocation5 + $0x4d8] sm:$0xff]
    %v1257 = vld [vmem:[#allocation5 + $0x4e0] sm:$0xff]
    %v1258 = vld [vmem:[#allocation5 + $0x4e8] sm:$0xff]
    %v1259 = vld [vmem:[#allocation5 + $0x4f0] sm:$0xff]
    %v1260 = vld [vmem:[#allocation5 + $0x4f8] sm:$0xff]
    %v1261 = vld [vmem:[#allocation5 + $0x500] sm:$0xff]
    %v1262 = vld [vmem:[#allocation5 + $0x508] sm:$0xff]
    %v1263 = vld [vmem:[#allocation5 + $0x510] sm:$0xff]
    %v1264 = vld [vmem:[#allocation5 + $0x518] sm:$0xff]
    %v1265 = vld [vmem:[#allocation5 + $0x520] sm:$0xff]
    %v1266 = vld [vmem:[#allocation5 + $0x528] sm:$0xff]
    %v1267 = vld [vmem:[#allocation5 + $0x530] sm:$0xff]
    %v1268 = vld [vmem:[#allocation5 + $0x538] sm:$0xff]
    %v1269 = vld [vmem:[#allocation5 + $0x540] sm:$0xff]
    %v1270 = vld [vmem:[#allocation5 + $0x548] sm:$0xff]
    %v1271 = vld [vmem:[#allocation5 + $0x550] sm:$0xff]
    %v1272 = vld [vmem:[#allocation5 + $0x558] sm:$0xff]
    %v1273 = vld [vmem:[#allocation5 + $0x560] sm:$0xff]
    %v1274 = vld [vmem:[#allocation5 + $0x568] sm:$0xff]
    %v1275 = vld [vmem:[#allocation5 + $0x570] sm:$0xff]
    %v1276 = vld [vmem:[#allocation5 + $0x578] sm:$0xff]
    %v1277 = vld [vmem:[#allocation5 + $0x580] sm:$0xff]
    %v1278 = vld [vmem:[#allocation5 + $0x588] sm:$0xff]
    %v1279 = vld [vmem:[#allocation5 + $0x590] sm:$0xff]
    %v1280 = vld [vmem:[#allocation5 + $0x598] sm:$0xff]
    %v1281 = vld [vmem:[#allocation5 + $0x5a0] sm:$0xff]
    %v1282 = vld [vmem:[#allocation5 + $0x5a8] sm:$0xff]
    %v1283 = vld [vmem:[#allocation5 + $0x5b0] sm:$0xff]
    %v1284 = vld [vmem:[#allocation5 + $0x5b8] sm:$0xff]
    %v1285 = vld [vmem:[#allocation5 + $0x5c0] sm:$0xff]
    %v1286 = vld [vmem:[#allocation5 + $0x5c8] sm:$0xff]
    %v1287 = vld [vmem:[#allocation5 + $0x5d0] sm:$0xff]
    %v1288 = vld [vmem:[#allocation5 + $0x5d8] sm:$0xff]
    %v1289 = vld [vmem:[#allocation5 + $0x5e0] sm:$0xff]
    %v1290 = vld [vmem:[#allocation5 + $0x5e8] sm:$0xff]
    %v1291 = vld [vmem:[#allocation5 + $0x5f0] sm:$0xff]
    %v1292 = vld [vmem:[#allocation5 + $0x5f8] sm:$0xff]
    %v1293 = vld [vmem:[#allocation5 + $0x600] sm:$0xff]
    %v1294 = vld [vmem:[#allocation5 + $0x608] sm:$0xff]
    %v1295 = vld [vmem:[#allocation5 + $0x610] sm:$0xff]
    %v1296 = vld [vmem:[#allocation5 + $0x618] sm:$0xff]
    %v1297 = vld [vmem:[#allocation5 + $0x620] sm:$0xff]
    %v1298 = vld [vmem:[#allocation5 + $0x628] sm:$0xff]
    %v1299 = vld [vmem:[#allocation5 + $0x630] sm:$0xff]
    %v1300 = vld [vmem:[#allocation5 + $0x638] sm:$0xff]
    %v1301 = vld [vmem:[#allocation5 + $0x640] sm:$0xff]
    %v1302 = vld [vmem:[#allocation5 + $0x648] sm:$0xff]
    %v1303 = vld [vmem:[#allocation5 + $0x650] sm:$0xff]
    %v1304 = vld [vmem:[#allocation5 + $0x658] sm:$0xff]
    %v1305 = vld [vmem:[#allocation5 + $0x660] sm:$0xff]
    %v1306 = vld [vmem:[#allocation5 + $0x668] sm:$0xff]
    %v1307 = vld [vmem:[#allocation5 + $0x670] sm:$0xff]
    %v1308 = vld [vmem:[#allocation5 + $0x678] sm:$0xff]
    %v1309 = vld [vmem:[#allocation5 + $0x680] sm:$0xff]
    %v1310 = vld [vmem:[#allocation5 + $0x688] sm:$0xff]
    %v1311 = vld [vmem:[#allocation5 + $0x690] sm:$0xff]
    %v1312 = vld [vmem:[#allocation5 + $0x698] sm:$0xff]
    %v1313 = vld [vmem:[#allocation5 + $0x6a0] sm:$0xff]
    %v1314 = vld [vmem:[#allocation5 + $0x6a8] sm:$0xff]
    %v1315 = vld [vmem:[#allocation5 + $0x6b0] sm:$0xff]
    %v1316 = vld [vmem:[#allocation5 + $0x6b8] sm:$0xff]
    %v1317 = vld [vmem:[#allocation5 + $0x6c0] sm:$0xff]
    %v1318 = vld [vmem:[#allocation5 + $0x6c8] sm:$0xff]
    %v1319 = vld [vmem:[#allocation5 + $0x6d0] sm:$0xff]
    %v1320 = vld [vmem:[#allocation5 + $0x6d8] sm:$0xff]
    %v1321 = vld [vmem:[#allocation5 + $0x6e0] sm:$0xff]
    %v1322 = vld [vmem:[#allocation5 + $0x6e8] sm:$0xff]
    %v1323 = vld [vmem:[#allocation5 + $0x6f0] sm:$0xff]
    %v1324 = vld [vmem:[#allocation5 + $0x6f8] sm:$0xff]
    %v1325 = vld [vmem:[#allocation5 + $0x700] sm:$0xff]
    %v1326 = vld [vmem:[#allocation5 + $0x708] sm:$0xff]
    %v1327 = vld [vmem:[#allocation5 + $0x710] sm:$0xff]
    %v1328 = vld [vmem:[#allocation5 + $0x718] sm:$0xff]
    %v1329 = vld [vmem:[#allocation5 + $0x720] sm:$0xff]
    %v1330 = vld [vmem:[#allocation5 + $0x728] sm:$0xff]
    %v1331 = vld [vmem:[#allocation5 + $0x730] sm:$0xff]
    %v1332 = vld [vmem:[#allocation5 + $0x738] sm:$0xff]
    %v1333 = vld [vmem:[#allocation5 + $0x740] sm:$0xff]
    %v1334 = vld [vmem:[#allocation5 + $0x748] sm:$0xff]
    %v1335 = vld [vmem:[#allocation5 + $0x750] sm:$0xff]
    %v1336 = vld [vmem:[#allocation5 + $0x758] sm:$0xff]
    %v1337 = vld [vmem:[#allocation5 + $0x760] sm:$0xff]
    %v1338 = vld [vmem:[#allocation5 + $0x768] sm:$0xff]
    %v1339 = vld [vmem:[#allocation5 + $0x770] sm:$0xff]
    %v1340 = vld [vmem:[#allocation5 + $0x778] sm:$0xff]
    %v1341 = vld [vmem:[#allocation5 + $0x780] sm:$0xff]
    %v1342 = vld [vmem:[#allocation5 + $0x788] sm:$0xff]
    %v1343 = vld [vmem:[#allocation5 + $0x790] sm:$0xff]
    %v1344 = vld [vmem:[#allocation5 + $0x798] sm:$0xff]
    %v1345 = vld [vmem:[#allocation5 + $0x7a0] sm:$0xff]
    %v1346 = vld [vmem:[#allocation5 + $0x7a8] sm:$0xff]
    %v1347 = vld [vmem:[#allocation5 + $0x7b0] sm:$0xff]
    %v1348 = vld [vmem:[#allocation5 + $0x7b8] sm:$0xff]
    %v1349 = vld [vmem:[#allocation5 + $0x7c0] sm:$0xff]
    %v1350 = vld [vmem:[#allocation5 + $0x7c8] sm:$0xff]
    %v1351 = vld [vmem:[#allocation5 + $0x7d0] sm:$0xff]
    %v1352 = vld [vmem:[#allocation5 + $0x7d8] sm:$0xff]
    %v1353 = vld [vmem:[#allocation5 + $0x7e0] sm:$0xff]
    %v1354 = vld [vmem:[#allocation5 + $0x7e8] sm:$0xff]
    %v1355 = vld [vmem:[#allocation5 + $0x7f0] sm:$0xff]
    %v1356 = vld [vmem:[#allocation5 + $0x7f8] sm:$0xff]
    %v1357 = vld [vmem:[#allocation5 + $0x800] sm:$0xff]
    %v1358 = vld [vmem:[#allocation5 + $0x808] sm:$0xff]
    %v1359 = vld [vmem:[#allocation5 + $0x810] sm:$0xff]
    %v1360 = vld [vmem:[#allocation5 + $0x818] sm:$0xff]
    %v1361 = vld [vmem:[#allocation5 + $0x820] sm:$0xff]
    %v1362 = vld [vmem:[#allocation5 + $0x828] sm:$0xff]
    %v1363 = vld [vmem:[#allocation5 + $0x830] sm:$0xff]
    %v1364 = vld [vmem:[#allocation5 + $0x838] sm:$0xff]
    %v1365 = vld [vmem:[#allocation5 + $0x840] sm:$0xff]
    %v1366 = vld [vmem:[#allocation5 + $0x848] sm:$0xff]
    %v1367 = vld [vmem:[#allocation5 + $0x850] sm:$0xff]
    %v1368 = vld [vmem:[#allocation5 + $0x858] sm:$0xff]
    %v1369 = vld [vmem:[#allocation5 + $0x860] sm:$0xff]
    %v1370 = vld [vmem:[#allocation5 + $0x868] sm:$0xff]
    %v1371 = vld [vmem:[#allocation5 + $0x870] sm:$0xff]
    %v1372 = vld [vmem:[#allocation5 + $0x878] sm:$0xff]
    %v1373 = vld [vmem:[#allocation5 + $0x880] sm:$0xff]
    %v1374 = vld [vmem:[#allocation5 + $0x888] sm:$0xff]
    %v1375 = vld [vmem:[#allocation5 + $0x890] sm:$0xff]
    %v1376 = vld [vmem:[#allocation5 + $0x898] sm:$0xff]
    %v1377 = vld [vmem:[#allocation5 + $0x8a0] sm:$0xff]
    %v1378 = vld [vmem:[#allocation5 + $0x8a8] sm:$0xff]
    %v1379 = vld [vmem:[#allocation5 + $0x8b0] sm:$0xff]
    %v1380 = vld [vmem:[#allocation5 + $0x8b8] sm:$0xff]
    %v1381 = vld [vmem:[#allocation5 + $0x8c0] sm:$0xff]
    %v1382 = vld [vmem:[#allocation5 + $0x8c8] sm:$0xff]
    %v1383 = vld [vmem:[#allocation5 + $0x8d0] sm:$0xff]
    %v1384 = vld [vmem:[#allocation5 + $0x8d8] sm:$0xff]
    %v1385 = vld [vmem:[#allocation5 + $0x8e0] sm:$0xff]
    %v1386 = vld [vmem:[#allocation5 + $0x8e8] sm:$0xff]
    %v1387 = vld [vmem:[#allocation5 + $0x8f0] sm:$0xff]
    %v1388 = vld [vmem:[#allocation5 + $0x8f8] sm:$0xff]
    %v1389 = vld [vmem:[#allocation5 + $0x900] sm:$0xff]
    %v1390 = vld [vmem:[#allocation5 + $0x908] sm:$0xff]
    %v1391 = vld [vmem:[#allocation5 + $0x910] sm:$0xff]
    %v1392 = vld [vmem:[#allocation5 + $0x918] sm:$0xff]
    %v1393 = vld [vmem:[#allocation5 + $0x920] sm:$0xff]
    %v1394 = vld [vmem:[#allocation5 + $0x928] sm:$0xff]
    %v1395 = vld [vmem:[#allocation5 + $0x930] sm:$0xff]
    %v1396 = vld [vmem:[#allocation5 + $0x938] sm:$0xff]
    %v1397 = vld [vmem:[#allocation5 + $0x940] sm:$0xff]
    %v1398 = vld [vmem:[#allocation5 + $0x948] sm:$0xff]
    %v1399 = vld [vmem:[#allocation5 + $0x950] sm:$0xff]
    %v1400 = vld [vmem:[#allocation5 + $0x958] sm:$0xff]
    %v1401 = vld [vmem:[#allocation5 + $0x960] sm:$0xff]
    %v1402 = vld [vmem:[#allocation5 + $0x968] sm:$0xff]
    %v1403 = vld [vmem:[#allocation5 + $0x970] sm:$0xff]
    %v1404 = vld [vmem:[#allocation5 + $0x978] sm:$0xff]
    %v1405 = vld [vmem:[#allocation5 + $0x980] sm:$0xff]
    %v1406 = vld [vmem:[#allocation5 + $0x988] sm:$0xff]
    %v1407 = vld [vmem:[#allocation5 + $0x990] sm:$0xff]
    %v1408 = vld [vmem:[#allocation5 + $0x998] sm:$0xff]
    %v1409 = vld [vmem:[#allocation5 + $0x9a0] sm:$0xff]
    %v1410 = vld [vmem:[#allocation5 + $0x9a8] sm:$0xff]
    %v1411 = vld [vmem:[#allocation5 + $0x9b0] sm:$0xff]
    %v1412 = vld [vmem:[#allocation5 + $0x9b8] sm:$0xff]
    %v1413 = vld [vmem:[#allocation5 + $0x9c0] sm:$0xff]
    %v1414 = vld [vmem:[#allocation5 + $0x9c8] sm:$0xff]
    %v1415 = vld [vmem:[#allocation5 + $0x9d0] sm:$0xff]
    %v1416 = vld [vmem:[#allocation5 + $0x9d8] sm:$0xff]
    %v1417 = vld [vmem:[#allocation5 + $0x9e0] sm:$0xff]
    %v1418 = vld [vmem:[#allocation5 + $0x9e8] sm:$0xff]
    %v1419 = vld [vmem:[#allocation5 + $0x9f0] sm:$0xff]
    %v1420 = vld [vmem:[#allocation5 + $0x9f8] sm:$0xff]
    %v1421 = vld [vmem:[#allocation5 + $0xa00] sm:$0xff]
    %v1422 = vld [vmem:[#allocation5 + $0xa08] sm:$0xff]
    %v1423 = vld [vmem:[#allocation5 + $0xa10] sm:$0xff]
    %v1424 = vld [vmem:[#allocation5 + $0xa18] sm:$0xff]
    %v1425 = vld [vmem:[#allocation5 + $0xa20] sm:$0xff]
    %v1426 = vld [vmem:[#allocation5 + $0xa28] sm:$0xff]
    %v1427 = vld [vmem:[#allocation5 + $0xa30] sm:$0xff]
    %v1428 = vld [vmem:[#allocation5 + $0xa38] sm:$0xff]
    %v1429 = vld [vmem:[#allocation5 + $0xa40] sm:$0xff]
    %v1430 = vld [vmem:[#allocation5 + $0xa48] sm:$0xff]
    %v1431 = vld [vmem:[#allocation5 + $0xa50] sm:$0xff]
    %v1432 = vld [vmem:[#allocation5 + $0xa58] sm:$0xff]
    %v1433 = vld [vmem:[#allocation5 + $0xa60] sm:$0xff]
    %v1434 = vld [vmem:[#allocation5 + $0xa68] sm:$0xff]
    %v1435 = vld [vmem:[#allocation5 + $0xa70] sm:$0xff]
    %v1436 = vld [vmem:[#allocation5 + $0xa78] sm:$0xff]
    %v1437 = vld [vmem:[#allocation5 + $0xa80] sm:$0xff]
    %v1438 = vld [vmem:[#allocation5 + $0xa88] sm:$0xff]
    %v1439 = vld [vmem:[#allocation5 + $0xa90] sm:$0xff]
    %v1440 = vld [vmem:[#allocation5 + $0xa98] sm:$0xff]
    %v1441 = vld [vmem:[#allocation5 + $0xaa0] sm:$0xff]
    %v1442 = vld [vmem:[#allocation5 + $0xaa8] sm:$0xff]
    %v1443 = vld [vmem:[#allocation5 + $0xab0] sm:$0xff]
    %v1444 = vld [vmem:[#allocation5 + $0xab8] sm:$0xff]
    %v1445 = vld [vmem:[#allocation5 + $0xac0] sm:$0xff]
    %v1446 = vld [vmem:[#allocation5 + $0xac8] sm:$0xff]
    %v1447 = vld [vmem:[#allocation5 + $0xad0] sm:$0xff]
    %v1448 = vld [vmem:[#allocation5 + $0xad8] sm:$0xff]
    %v1449 = vld [vmem:[#allocation5 + $0xae0] sm:$0xff]
    %v1450 = vld [vmem:[#allocation5 + $0xae8] sm:$0xff]
    %v1451 = vld [vmem:[#allocation5 + $0xaf0] sm:$0xff]
    %v1452 = vld [vmem:[#allocation5 + $0xaf8] sm:$0xff]
    %v1453 = vld [vmem:[#allocation5 + $0xb00] sm:$0xff]
    %v1454 = vld [vmem:[#allocation5 + $0xb08] sm:$0xff]
    %v1455 = vld [vmem:[#allocation5 + $0xb10] sm:$0xff]
    %v1456 = vld [vmem:[#allocation5 + $0xb18] sm:$0xff]
    %v1457 = vld [vmem:[#allocation5 + $0xb20] sm:$0xff]
    %v1458 = vld [vmem:[#allocation5 + $0xb28] sm:$0xff]
    %v1459 = vld [vmem:[#allocation5 + $0xb30] sm:$0xff]
    %v1460 = vld [vmem:[#allocation5 + $0xb38] sm:$0xff]
    %v1461 = vld [vmem:[#allocation5 + $0xb40] sm:$0xff]
    %v1462 = vld [vmem:[#allocation5 + $0xb48] sm:$0xff]
    %v1463 = vld [vmem:[#allocation5 + $0xb50] sm:$0xff]
    %v1464 = vld [vmem:[#allocation5 + $0xb58] sm:$0xff]
    %v1465 = vld [vmem:[#allocation5 + $0xb60] sm:$0xff]
    %v1466 = vld [vmem:[#allocation5 + $0xb68] sm:$0xff]
    %v1467 = vld [vmem:[#allocation5 + $0xb70] sm:$0xff]
    %v1468 = vld [vmem:[#allocation5 + $0xb78] sm:$0xff]
    %v1469 = vld [vmem:[#allocation5 + $0xb80] sm:$0xff]
    %v1470 = vld [vmem:[#allocation5 + $0xb88] sm:$0xff]
    %v1471 = vld [vmem:[#allocation5 + $0xb90] sm:$0xff]
    %v1472 = vld [vmem:[#allocation5 + $0xb98] sm:$0xff]
    %v1473 = vld [vmem:[#allocation5 + $0xba0] sm:$0xff]
    %v1474 = vld [vmem:[#allocation5 + $0xba8] sm:$0xff]
    %v1475 = vld [vmem:[#allocation5 + $0xbb0] sm:$0xff]
    %v1476 = vld [vmem:[#allocation5 + $0xbb8] sm:$0xff]
    %v1477 = vld [vmem:[#allocation5 + $0xbc0] sm:$0xff]
    %v1478 = vld [vmem:[#allocation5 + $0xbc8] sm:$0xff]
    %v1479 = vld [vmem:[#allocation5 + $0xbd0] sm:$0xff]
    %v1480 = vld [vmem:[#allocation5 + $0xbd8] sm:$0xff]
    %v1481 = vld [vmem:[#allocation5 + $0xbe0] sm:$0xff]
    %v1482 = vld [vmem:[#allocation5 + $0xbe8] sm:$0xff]
    %v1483 = vld [vmem:[#allocation5 + $0xbf0] sm:$0xff]
    %v1484 = vld [vmem:[#allocation5 + $0xbf8] sm:$0xff]
    %v1485 = vld [vmem:[#allocation7] sm:$0xff]
    %v1487 = vlaneseq
    %v1488 = vshrl.u32 %v1487, 7
    %v1489 = vsub.s32 0, %v1488
    %v1490 = vrot.slane %v1485, %v1489
    %v1491 = vlaneseq
    %v1492 = vshrl.u32 %v1491, 7
    %v1493 = vsub.s32 1, %v1492
    %v1494 = vrot.slane %v1485, %v1493
    %v1495 = vlaneseq
    %v1496 = vshrl.u32 %v1495, 7
    %v1497 = vsub.s32 2, %v1496
    %v1498 = vrot.slane %v1485, %v1497
    %v1499 = vlaneseq
    %v1500 = vshrl.u32 %v1499, 7
    %v1501 = vsub.s32 3, %v1500
    %v1502 = vrot.slane %v1485, %v1501
    %v1503 = vlaneseq
    %v1504 = vshrl.u32 %v1503, 7
    %v1505 = vsub.s32 4, %v1504
    %v1506 = vrot.slane %v1485, %v1505
    %v1507 = vlaneseq
    %v1508 = vshrl.u32 %v1507, 7
    %v1509 = vsub.s32 5, %v1508
    %v1510 = vrot.slane %v1485, %v1509
    %v1511 = vlaneseq
    %v1512 = vshrl.u32 %v1511, 7
    %v1513 = vsub.s32 6, %v1512
    %v1514 = vrot.slane %v1485, %v1513
    %v1515 = vlaneseq
    %v1516 = vshrl.u32 %v1515, 7
    %v1517 = vsub.s32 7, %v1516
    %v1518 = vrot.slane %v1485, %v1517
    %1527 = vmatprep.subr.mxu0 %v1102
    %1528 = vmatpush1.msra.mxu0 %v1101
    %1529 = vmatprep.subr.mxu0 %v1110
    %1530 = vmatpush1.msra.mxu0 %v1109
    %1531 = vmatprep.subr.mxu0 %v1118
    %1532 = vmatpush1.msra.mxu0 %v1117
    %1533 = vmatprep.subr.mxu0 %v1126
    %1534 = vmatpush1.msra.mxu0 %v1125
    %1535 = vmatprep.subr.mxu0 %v1134
    %1536 = vmatpush1.msra.mxu0 %v1133
    %1537 = vmatprep.subr.mxu0 %v1142
    %1538 = vmatpush1.msra.mxu0 %v1141
    %1539 = vmatprep.subr.mxu0 %v1150
    %1540 = vmatpush1.msra.mxu0 %v1149
    %1541 = vmatprep.subr.mxu0 %v1158
    %1542 = vmatpush1.msra.mxu0 %v1157
    %1543 = vmatprep.subr.mxu0 %v1166
    %1544 = vmatpush1.msra.mxu0 %v1165
    %1545 = vmatprep.subr.mxu0 %v1174
    %1546 = vmatpush1.msra.mxu0 %v1173
    %1547 = vmatprep.subr.mxu0 %v1182
    %1548 = vmatpush1.msra.mxu0 %v1181
    %1549 = vmatprep.subr.mxu0 %v1190
    %1550 = vmatpush1.msra.mxu0 %v1189
    %1551 = vmatprep.subr.mxu0 %v1198
    %1552 = vmatpush1.msra.mxu0 %v1197
    %1553 = vmatprep.subr.mxu0 %v1206
    %1554 = vmatpush1.msra.mxu0 %v1205
    %1555 = vmatprep.subr.mxu0 %v1214
    %1556 = vmatpush1.msra.mxu0 %v1213
    %1557 = vmatprep.subr.mxu0 %v1222
    %1558 = vmatpush1.msra.mxu0 %v1221
    %1559 = vmatprep.subr.mxu0 %v1230
    %1560 = vmatpush1.msra.mxu0 %v1229
    %1561 = vmatprep.subr.mxu0 %v1238
    %1562 = vmatpush1.msra.mxu0 %v1237
    %1563 = vmatprep.subr.mxu0 %v1246
    %1564 = vmatpush1.msra.mxu0 %v1245
    %1565 = vmatprep.subr.mxu0 %v1254
    %1566 = vmatpush1.msra.mxu0 %v1253
    %1567 = vmatprep.subr.mxu0 %v1262
    %1568 = vmatpush1.msra.mxu0 %v1261
    %1569 = vmatprep.subr.mxu0 %v1270
    %1570 = vmatpush1.msra.mxu0 %v1269
    %1571 = vmatprep.subr.mxu0 %v1278
    %1572 = vmatpush1.msra.mxu0 %v1277
    %1573 = vmatprep.subr.mxu0 %v1286
    %1574 = vmatpush1.msra.mxu0 %v1285
    %1575 = vmatprep.subr.mxu0 %v1294
    %1576 = vmatpush1.msra.mxu0 %v1293
    %1577 = vmatprep.subr.mxu0 %v1302
    %1578 = vmatpush1.msra.mxu0 %v1301
    %1579 = vmatprep.subr.mxu0 %v1310
    %1580 = vmatpush1.msra.mxu0 %v1309
    %1581 = vmatprep.subr.mxu0 %v1318
    %1582 = vmatpush1.msra.mxu0 %v1317
    %1583 = vmatprep.subr.mxu0 %v1326
    %1584 = vmatpush1.msra.mxu0 %v1325
    %1585 = vmatprep.subr.mxu0 %v1334
    %1586 = vmatpush1.msra.mxu0 %v1333
    %1587 = vmatprep.subr.mxu0 %v1342
    %1588 = vmatpush1.msra.mxu0 %v1341
    %1589 = vmatprep.subr.mxu0 %v1350
    %1590 = vmatpush1.msra.mxu0 %v1349
    %1591 = vmatprep.mubr.f32.mxu0 %v1095
    %1592 = vmatmul.mubr.f32.gmra.mrb[0].mxu0 %v1100
    %v1593 = vpop.f32.mrb[0].mxu0
    %v1594 = vadd.f32 %v1490, %v1593
    %v1595 = vpop.f32.mrb[0].mxu0
    %v1596 = vadd.f32 %v1494, %v1595
    %1597 = vdwg.mxu0
    %1598 = vmatprep.subr.mxu0 %v1358
    %1599 = vmatpush1.msra.mxu0 %v1357
    %1600 = vmatprep.subr.mxu0 %v1366
    %1601 = vmatpush1.msra.mxu0 %v1365
    %1602 = vmatprep.subr.mxu0 %v1374
    %1603 = vmatpush1.msra.mxu0 %v1373
    %1604 = vmatprep.subr.mxu0 %v1382
    %1605 = vmatpush1.msra.mxu0 %v1381
    %1606 = vmatprep.subr.mxu0 %v1390
    %1607 = vmatpush1.msra.mxu0 %v1389
    %1608 = vmatprep.subr.mxu0 %v1398
    %1609 = vmatpush1.msra.mxu0 %v1397
    %1610 = vmatprep.subr.mxu0 %v1406
    %1611 = vmatpush1.msra.mxu0 %v1405
    %1612 = vmatprep.subr.mxu0 %v1414
    %1613 = vmatpush1.msra.mxu0 %v1413
    %1614 = vmatprep.subr.mxu0 %v1422
    %1615 = vmatpush1.msra.mxu0 %v1421
    %1616 = vmatprep.subr.mxu0 %v1430
    %1617 = vmatpush1.msra.mxu0 %v1429
    %1618 = vmatprep.subr.mxu0 %v1438
    %1619 = vmatpush1.msra.mxu0 %v1437
    %1620 = vmatprep.subr.mxu0 %v1446
    %1621 = vmatpush1.msra.mxu0 %v1445
    %1622 = vmatprep.subr.mxu0 %v1454
    %1623 = vmatpush1.msra.mxu0 %v1453
    %1624 = vmatprep.subr.mxu0 %v1462
    %1625 = vmatpush1.msra.mxu0 %v1461
    %1626 = vmatprep.subr.mxu0 %v1470
    %1627 = vmatpush1.msra.mxu0 %v1469
    %1628 = vmatprep.subr.mxu0 %v1478
    %1629 = vmatpush1.msra.mxu0 %v1477
    %1630 = vmatprep.subr.mxu0 0.0
    %1631 = vmatpush1.msra.mxu0 0.0
    %1632 = vmatprep.subr.mxu0 0.0
    %1633 = vmatpush1.msra.mxu0 0.0
    %1634 = vmatprep.subr.mxu0 0.0
    %1635 = vmatpush1.msra.mxu0 0.0
    %1636 = vmatprep.subr.mxu0 0.0
    %1637 = vmatpush1.msra.mxu0 0.0
    %1638 = vmatprep.subr.mxu0 0.0
    %1639 = vmatpush1.msra.mxu0 0.0
    %1640 = vmatprep.subr.mxu0 0.0
    %1641 = vmatpush1.msra.mxu0 0.0
    %1642 = vmatprep.subr.mxu0 0.0
    %1643 = vmatpush1.msra.mxu0 0.0
    %1644 = vmatprep.subr.mxu0 0.0
    %1645 = vmatpush1.msra.mxu0 0.0
    %1646 = vmatprep.subr.mxu0 0.0
    %1647 = vmatpush1.msra.mxu0 0.0
    %1648 = vmatprep.subr.mxu0 0.0
    %1649 = vmatpush1.msra.mxu0 0.0
    %1650 = vmatprep.subr.mxu0 0.0
    %1651 = vmatpush1.msra.mxu0 0.0
    %1652 = vmatprep.subr.mxu0 0.0
    %1653 = vmatpush1.msra.mxu0 0.0
    %1654 = vmatprep.subr.mxu0 0.0
    %1655 = vmatpush1.msra.mxu0 0.0
    %1656 = vmatprep.subr.mxu0 0.0
    %1657 = vmatpush1.msra.mxu0 0.0
    %1658 = vmatprep.subr.mxu0 0.0
    %1659 = vmatpush1.msra.mxu0 0.0
    %1660 = vmatprep.subr.mxu0 0.0
    %1661 = vmatpush1.msra.mxu0 0.0
    %1662 = vmatprep.mubr.f32.mxu0 0.0
    %1663 = vmatmul.mubr.f32.gmra.mrb[0].mxu0 %v1096
    %v1664 = vpop.f32.mrb[0].mxu0
    %v1665 = vadd.f32 %v1594, %v1664
    %v1666 = vpop.f32.mrb[0].mxu0
    %v1667 = vadd.f32 %v1596, %v1666
    %1668 = vdwg.mxu0
    %1669 = vmatprep.subr.mxu0 %v1104
    %1670 = vmatpush1.msra.mxu0 %v1103
    %1671 = vmatprep.subr.mxu0 %v1112
    %1672 = vmatpush1.msra.mxu0 %v1111
    %1673 = vmatprep.subr.mxu0 %v1120
    %1674 = vmatpush1.msra.mxu0 %v1119
    %1675 = vmatprep.subr.mxu0 %v1128
    %1676 = vmatpush1.msra.mxu0 %v1127
    %1677 = vmatprep.subr.mxu0 %v1136
    %1678 = vmatpush1.msra.mxu0 %v1135
    %1679 = vmatprep.subr.mxu0 %v1144
    %1680 = vmatpush1.msra.mxu0 %v1143
    %1681 = vmatprep.subr.mxu0 %v1152
    %1682 = vmatpush1.msra.mxu0 %v1151
    %1683 = vmatprep.subr.mxu0 %v1160
    %1684 = vmatpush1.msra.mxu0 %v1159
    %1685 = vmatprep.subr.mxu0 %v1168
    %1686 = vmatpush1.msra.mxu0 %v1167
    %1687 = vmatprep.subr.mxu0 %v1176
    %1688 = vmatpush1.msra.mxu0 %v1175
    %1689 = vmatprep.subr.mxu0 %v1184
    %1690 = vmatpush1.msra.mxu0 %v1183
    %1691 = vmatprep.subr.mxu0 %v1192
    %1692 = vmatpush1.msra.mxu0 %v1191
    %1693 = vmatprep.subr.mxu0 %v1200
    %1694 = vmatpush1.msra.mxu0 %v1199
    %1695 = vmatprep.subr.mxu0 %v1208
    %1696 = vmatpush1.msra.mxu0 %v1207
    %1697 = vmatprep.subr.mxu0 %v1216
    %1698 = vmatpush1.msra.mxu0 %v1215
    %1699 = vmatprep.subr.mxu0 %v1224
    %1700 = vmatpush1.msra.mxu0 %v1223
    %1701 = vmatprep.subr.mxu0 %v1232
    %1702 = vmatpush1.msra.mxu0 %v1231
    %1703 = vmatprep.subr.mxu0 %v1240
    %1704 = vmatpush1.msra.mxu0 %v1239
    %1705 = vmatprep.subr.mxu0 %v1248
    %1706 = vmatpush1.msra.mxu0 %v1247
    %1707 = vmatprep.subr.mxu0 %v1256
    %1708 = vmatpush1.msra.mxu0 %v1255
    %1709 = vmatprep.subr.mxu0 %v1264
    %1710 = vmatpush1.msra.mxu0 %v1263
    %1711 = vmatprep.subr.mxu0 %v1272
    %1712 = vmatpush1.msra.mxu0 %v1271
    %1713 = vmatprep.subr.mxu0 %v1280
    %1714 = vmatpush1.msra.mxu0 %v1279
    %1715 = vmatprep.subr.mxu0 %v1288
    %1716 = vmatpush1.msra.mxu0 %v1287
    %1717 = vmatprep.subr.mxu0 %v1296
    %1718 = vmatpush1.msra.mxu0 %v1295
    %1719 = vmatprep.subr.mxu0 %v1304
    %1720 = vmatpush1.msra.mxu0 %v1303
    %1721 = vmatprep.subr.mxu0 %v1312
    %1722 = vmatpush1.msra.mxu0 %v1311
    %1723 = vmatprep.subr.mxu0 %v1320
    %1724 = vmatpush1.msra.mxu0 %v1319
    %1725 = vmatprep.subr.mxu0 %v1328
    %1726 = vmatpush1.msra.mxu0 %v1327
    %1727 = vmatprep.subr.mxu0 %v1336
    %1728 = vmatpush1.msra.mxu0 %v1335
    %1729 = vmatprep.subr.mxu0 %v1344
    %1730 = vmatpush1.msra.mxu0 %v1343
    %1731 = vmatprep.subr.mxu0 %v1352
    %1732 = vmatpush1.msra.mxu0 %v1351
    %1733 = vmatprep.mubr.f32.mxu0 %v1095
    %1734 = vmatmul.mubr.f32.gmra.mrb[0].mxu0 %v1100
    %v1735 = vpop.f32.mrb[0].mxu0
    %v1736 = vadd.f32 %v1498, %v1735
    %v1737 = vpop.f32.mrb[0].mxu0
    %v1738 = vadd.f32 %v1502, %v1737
    %1739 = vdwg.mxu0
    %1740 = vmatprep.subr.mxu0 %v1360
    %1741 = vmatpush1.msra.mxu0 %v1359
    %1742 = vmatprep.subr.mxu0 %v1368
    %1743 = vmatpush1.msra.mxu0 %v1367
    %1744 = vmatprep.subr.mxu0 %v1376
    %1745 = vmatpush1.msra.mxu0 %v1375
    %1746 = vmatprep.subr.mxu0 %v1384
    %1747 = vmatpush1.msra.mxu0 %v1383
    %1748 = vmatprep.subr.mxu0 %v1392
    %1749 = vmatpush1.msra.mxu0 %v1391
    %1750 = vmatprep.subr.mxu0 %v1400
    %1751 = vmatpush1.msra.mxu0 %v1399
    %1752 = vmatprep.subr.mxu0 %v1408
    %1753 = vmatpush1.msra.mxu0 %v1407
    %1754 = vmatprep.subr.mxu0 %v1416
    %1755 = vmatpush1.msra.mxu0 %v1415
    %1756 = vmatprep.subr.mxu0 %v1424
    %1757 = vmatpush1.msra.mxu0 %v1423
    %1758 = vmatprep.subr.mxu0 %v1432
    %1759 = vmatpush1.msra.mxu0 %v1431
    %1760 = vmatprep.subr.mxu0 %v1440
    %1761 = vmatpush1.msra.mxu0 %v1439
    %1762 = vmatprep.subr.mxu0 %v1448
    %1763 = vmatpush1.msra.mxu0 %v1447
    %1764 = vmatprep.subr.mxu0 %v1456
    %1765 = vmatpush1.msra.mxu0 %v1455
    %1766 = vmatprep.subr.mxu0 %v1464
    %1767 = vmatpush1.msra.mxu0 %v1463
    %1768 = vmatprep.subr.mxu0 %v1472
    %1769 = vmatpush1.msra.mxu0 %v1471
    %1770 = vmatprep.subr.mxu0 %v1480
    %1771 = vmatpush1.msra.mxu0 %v1479
    %1772 = vmatprep.subr.mxu0 0.0
    %1773 = vmatpush1.msra.mxu0 0.0
    %1774 = vmatprep.subr.mxu0 0.0
    %1775 = vmatpush1.msra.mxu0 0.0
    %1776 = vmatprep.subr.mxu0 0.0
    %1777 = vmatpush1.msra.mxu0 0.0
    %1778 = vmatprep.subr.mxu0 0.0
    %1779 = vmatpush1.msra.mxu0 0.0
    %1780 = vmatprep.subr.mxu0 0.0
    %1781 = vmatpush1.msra.mxu0 0.0
    %1782 = vmatprep.subr.mxu0 0.0
    %1783 = vmatpush1.msra.mxu0 0.0
    %1784 = vmatprep.subr.mxu0 0.0
    %1785 = vmatpush1.msra.mxu0 0.0
    %1786 = vmatprep.subr.mxu0 0.0
    %1787 = vmatpush1.msra.mxu0 0.0
    %1788 = vmatprep.subr.mxu0 0.0
    %1789 = vmatpush1.msra.mxu0 0.0
    %1790 = vmatprep.subr.mxu0 0.0
    %1791 = vmatpush1.msra.mxu0 0.0
    %1792 = vmatprep.subr.mxu0 0.0
    %1793 = vmatpush1.msra.mxu0 0.0
    %1794 = vmatprep.subr.mxu0 0.0
    %1795 = vmatpush1.msra.mxu0 0.0
    %1796 = vmatprep.subr.mxu0 0.0
    %1797 = vmatpush1.msra.mxu0 0.0
    %1798 = vmatprep.subr.mxu0 0.0
    %1799 = vmatpush1.msra.mxu0 0.0
    %1800 = vmatprep.subr.mxu0 0.0
    %1801 = vmatpush1.msra.mxu0 0.0
    %1802 = vmatprep.subr.mxu0 0.0
    %1803 = vmatpush1.msra.mxu0 0.0
    %1804 = vmatprep.mubr.f32.mxu0 0.0
    %1805 = vmatmul.mubr.f32.gmra.mrb[0].mxu0 %v1096
    %v1806 = vpop.f32.mrb[0].mxu0
    %v1807 = vadd.f32 %v1736, %v1806
    %v1808 = vpop.f32.mrb[0].mxu0
    %v1809 = vadd.f32 %v1738, %v1808
    %1810 = vdwg.mxu0
    %1811 = vmatprep.subr.mxu0 %v1106
    %1812 = vmatpush1.msra.mxu0 %v1105
    %1813 = vmatprep.subr.mxu0 %v1114
    %1814 = vmatpush1.msra.mxu0 %v1113
    %1815 = vmatprep.subr.mxu0 %v1122
    %1816 = vmatpush1.msra.mxu0 %v1121
    %1817 = vmatprep.subr.mxu0 %v1130
    %1818 = vmatpush1.msra.mxu0 %v1129
    %1819 = vmatprep.subr.mxu0 %v1138
    %1820 = vmatpush1.msra.mxu0 %v1137
    %1821 = vmatprep.subr.mxu0 %v1146
    %1822 = vmatpush1.msra.mxu0 %v1145
    %1823 = vmatprep.subr.mxu0 %v1154
    %1824 = vmatpush1.msra.mxu0 %v1153
    %1825 = vmatprep.subr.mxu0 %v1162
    %1826 = vmatpush1.msra.mxu0 %v1161
    %1827 = vmatprep.subr.mxu0 %v1170
    %1828 = vmatpush1.msra.mxu0 %v1169
    %1829 = vmatprep.subr.mxu0 %v1178
    %1830 = vmatpush1.msra.mxu0 %v1177
    %1831 = vmatprep.subr.mxu0 %v1186
    %1832 = vmatpush1.msra.mxu0 %v1185
    %1833 = vmatprep.subr.mxu0 %v1194
    %1834 = vmatpush1.msra.mxu0 %v1193
    %1835 = vmatprep.subr.mxu0 %v1202
    %1836 = vmatpush1.msra.mxu0 %v1201
    %1837 = vmatprep.subr.mxu0 %v1210
    %1838 = vmatpush1.msra.mxu0 %v1209
    %1839 = vmatprep.subr.mxu0 %v1218
    %1840 = vmatpush1.msra.mxu0 %v1217
    %1841 = vmatprep.subr.mxu0 %v1226
    %1842 = vmatpush1.msra.mxu0 %v1225
    %1843 = vmatprep.subr.mxu0 %v1234
    %1844 = vmatpush1.msra.mxu0 %v1233
    %1845 = vmatprep.subr.mxu0 %v1242
    %1846 = vmatpush1.msra.mxu0 %v1241
    %1847 = vmatprep.subr.mxu0 %v1250
    %1848 = vmatpush1.msra.mxu0 %v1249
    %1849 = vmatprep.subr.mxu0 %v1258
    %1850 = vmatpush1.msra.mxu0 %v1257
    %1851 = vmatprep.subr.mxu0 %v1266
    %1852 = vmatpush1.msra.mxu0 %v1265
    %1853 = vmatprep.subr.mxu0 %v1274
    %1854 = vmatpush1.msra.mxu0 %v1273
    %1855 = vmatprep.subr.mxu0 %v1282
    %1856 = vmatpush1.msra.mxu0 %v1281
    %1857 = vmatprep.subr.mxu0 %v1290
    %1858 = vmatpush1.msra.mxu0 %v1289
    %1859 = vmatprep.subr.mxu0 %v1298
    %1860 = vmatpush1.msra.mxu0 %v1297
    %1861 = vmatprep.subr.mxu0 %v1306
    %1862 = vmatpush1.msra.mxu0 %v1305
    %1863 = vmatprep.subr.mxu0 %v1314
    %1864 = vmatpush1.msra.mxu0 %v1313
    %1865 = vmatprep.subr.mxu0 %v1322
    %1866 = vmatpush1.msra.mxu0 %v1321
    %1867 = vmatprep.subr.mxu0 %v1330
    %1868 = vmatpush1.msra.mxu0 %v1329
    %1869 = vmatprep.subr.mxu0 %v1338
    %1870 = vmatpush1.msra.mxu0 %v1337
    %1871 = vmatprep.subr.mxu0 %v1346
    %1872 = vmatpush1.msra.mxu0 %v1345
    %1873 = vmatprep.subr.mxu0 %v1354
    %1874 = vmatpush1.msra.mxu0 %v1353
    %1875 = vmatprep.mubr.f32.mxu0 %v1095
    %1876 = vmatmul.mubr.f32.gmra.mrb[0].mxu0 %v1100
    %v1877 = vpop.f32.mrb[0].mxu0
    %v1878 = vadd.f32 %v1506, %v1877
    %v1879 = vpop.f32.mrb[0].mxu0
    %v1880 = vadd.f32 %v1510, %v1879
    %1881 = vdwg.mxu0
    %1882 = vmatprep.subr.mxu0 %v1362
    %1883 = vmatpush1.msra.mxu0 %v1361
    %1884 = vmatprep.subr.mxu0 %v1370
    %1885 = vmatpush1.msra.mxu0 %v1369
    %1886 = vmatprep.subr.mxu0 %v1378
    %1887 = vmatpush1.msra.mxu0 %v1377
    %1888 = vmatprep.subr.mxu0 %v1386
    %1889 = vmatpush1.msra.mxu0 %v1385
    %1890 = vmatprep.subr.mxu0 %v1394
    %1891 = vmatpush1.msra.mxu0 %v1393
    %1892 = vmatprep.subr.mxu0 %v1402
    %1893 = vmatpush1.msra.mxu0 %v1401
    %1894 = vmatprep.subr.mxu0 %v1410
    %1895 = vmatpush1.msra.mxu0 %v1409
    %1896 = vmatprep.subr.mxu0 %v1418
    %1897 = vmatpush1.msra.mxu0 %v1417
    %1898 = vmatprep.subr.mxu0 %v1426
    %1899 = vmatpush1.msra.mxu0 %v1425
    %1900 = vmatprep.subr.mxu0 %v1434
    %1901 = vmatpush1.msra.mxu0 %v1433
    %1902 = vmatprep.subr.mxu0 %v1442
    %1903 = vmatpush1.msra.mxu0 %v1441
    %1904 = vmatprep.subr.mxu0 %v1450
    %1905 = vmatpush1.msra.mxu0 %v1449
    %1906 = vmatprep.subr.mxu0 %v1458
    %1907 = vmatpush1.msra.mxu0 %v1457
    %1908 = vmatprep.subr.mxu0 %v1466
    %1909 = vmatpush1.msra.mxu0 %v1465
    %1910 = vmatprep.subr.mxu0 %v1474
    %1911 = vmatpush1.msra.mxu0 %v1473
    %1912 = vmatprep.subr.mxu0 %v1482
    %1913 = vmatpush1.msra.mxu0 %v1481
    %1914 = vmatprep.subr.mxu0 0.0
    %1915 = vmatpush1.msra.mxu0 0.0
    %1916 = vmatprep.subr.mxu0 0.0
    %1917 = vmatpush1.msra.mxu0 0.0
    %1918 = vmatprep.subr.mxu0 0.0
    %1919 = vmatpush1.msra.mxu0 0.0
    %1920 = vmatprep.subr.mxu0 0.0
    %1921 = vmatpush1.msra.mxu0 0.0
    %1922 = vmatprep.subr.mxu0 0.0
    %1923 = vmatpush1.msra.mxu0 0.0
    %1924 = vmatprep.subr.mxu0 0.0
    %1925 = vmatpush1.msra.mxu0 0.0
    %1926 = vmatprep.subr.mxu0 0.0
    %1927 = vmatpush1.msra.mxu0 0.0
    %1928 = vmatprep.subr.mxu0 0.0
    %1929 = vmatpush1.msra.mxu0 0.0
    %1930 = vmatprep.subr.mxu0 0.0
    %1931 = vmatpush1.msra.mxu0 0.0
    %1932 = vmatprep.subr.mxu0 0.0
    %1933 = vmatpush1.msra.mxu0 0.0
    %1934 = vmatprep.subr.mxu0 0.0
    %1935 = vmatpush1.msra.mxu0 0.0
    %1936 = vmatprep.subr.mxu0 0.0
    %1937 = vmatpush1.msra.mxu0 0.0
    %1938 = vmatprep.subr.mxu0 0.0
    %1939 = vmatpush1.msra.mxu0 0.0
    %1940 = vmatprep.subr.mxu0 0.0
    %1941 = vmatpush1.msra.mxu0 0.0
    %1942 = vmatprep.subr.mxu0 0.0
    %1943 = vmatpush1.msra.mxu0 0.0
    %1944 = vmatprep.subr.mxu0 0.0
    %1945 = vmatpush1.msra.mxu0 0.0
    %1946 = vmatprep.mubr.f32.mxu0 0.0
    %1947 = vmatmul.mubr.f32.gmra.mrb[0].mxu0 %v1096
    %v1948 = vpop.f32.mrb[0].mxu0
    %v1949 = vadd.f32 %v1878, %v1948
    %v1950 = vpop.f32.mrb[0].mxu0
    %v1951 = vadd.f32 %v1880, %v1950
    %1952 = vdwg.mxu0
    %1953 = vmatprep.subr.mxu0 %v1108
    %1954 = vmatpush1.msra.mxu0 %v1107
    %1955 = vmatprep.subr.mxu0 %v1116
    %1956 = vmatpush1.msra.mxu0 %v1115
    %1957 = vmatprep.subr.mxu0 %v1124
    %1958 = vmatpush1.msra.mxu0 %v1123
    %1959 = vmatprep.subr.mxu0 %v1132
    %1960 = vmatpush1.msra.mxu0 %v1131
    %1961 = vmatprep.subr.mxu0 %v1140
    %1962 = vmatpush1.msra.mxu0 %v1139
    %1963 = vmatprep.subr.mxu0 %v1148
    %1964 = vmatpush1.msra.mxu0 %v1147
    %1965 = vmatprep.subr.mxu0 %v1156
    %1966 = vmatpush1.msra.mxu0 %v1155
    %1967 = vmatprep.subr.mxu0 %v1164
    %1968 = vmatpush1.msra.mxu0 %v1163
    %1969 = vmatprep.subr.mxu0 %v1172
    %1970 = vmatpush1.msra.mxu0 %v1171
    %1971 = vmatprep.subr.mxu0 %v1180
    %1972 = vmatpush1.msra.mxu0 %v1179
    %1973 = vmatprep.subr.mxu0 %v1188
    %1974 = vmatpush1.msra.mxu0 %v1187
    %1975 = vmatprep.subr.mxu0 %v1196
    %1976 = vmatpush1.msra.mxu0 %v1195
    %1977 = vmatprep.subr.mxu0 %v1204
    %1978 = vmatpush1.msra.mxu0 %v1203
    %1979 = vmatprep.subr.mxu0 %v1212
    %1980 = vmatpush1.msra.mxu0 %v1211
    %1981 = vmatprep.subr.mxu0 %v1220
    %1982 = vmatpush1.msra.mxu0 %v1219
    %1983 = vmatprep.subr.mxu0 %v1228
    %1984 = vmatpush1.msra.mxu0 %v1227
    %1985 = vmatprep.subr.mxu0 %v1236
    %1986 = vmatpush1.msra.mxu0 %v1235
    %1987 = vmatprep.subr.mxu0 %v1244
    %1988 = vmatpush1.msra.mxu0 %v1243
    %1989 = vmatprep.subr.mxu0 %v1252
    %1990 = vmatpush1.msra.mxu0 %v1251
    %1991 = vmatprep.subr.mxu0 %v1260
    %1992 = vmatpush1.msra.mxu0 %v1259
    %1993 = vmatprep.subr.mxu0 %v1268
    %1994 = vmatpush1.msra.mxu0 %v1267
    %1995 = vmatprep.subr.mxu0 %v1276
    %1996 = vmatpush1.msra.mxu0 %v1275
    %1997 = vmatprep.subr.mxu0 %v1284
    %1998 = vmatpush1.msra.mxu0 %v1283
    %1999 = vmatprep.subr.mxu0 %v1292
    %2000 = vmatpush1.msra.mxu0 %v1291
    %2001 = vmatprep.subr.mxu0 %v1300
    %2002 = vmatpush1.msra.mxu0 %v1299
    %2003 = vmatprep.subr.mxu0 %v1308
    %2004 = vmatpush1.msra.mxu0 %v1307
    %2005 = vmatprep.subr.mxu0 %v1316
    %2006 = vmatpush1.msra.mxu0 %v1315
    %2007 = vmatprep.subr.mxu0 %v1324
    %2008 = vmatpush1.msra.mxu0 %v1323
    %2009 = vmatprep.subr.mxu0 %v1332
    %2010 = vmatpush1.msra.mxu0 %v1331
    %2011 = vmatprep.subr.mxu0 %v1340
    %2012 = vmatpush1.msra.mxu0 %v1339
    %2013 = vmatprep.subr.mxu0 %v1348
    %2014 = vmatpush1.msra.mxu0 %v1347
    %2015 = vmatprep.subr.mxu0 %v1356
    %2016 = vmatpush1.msra.mxu0 %v1355
    %2017 = vmatprep.mubr.f32.mxu0 %v1095
    %2018 = vmatmul.mubr.f32.gmra.mrb[0].mxu0 %v1100
    %v2019 = vpop.f32.mrb[0].mxu0
    %v2020 = vadd.f32 %v1514, %v2019
    %v2021 = vpop.f32.mrb[0].mxu0
    %v2022 = vadd.f32 %v1518, %v2021
    %2023 = vdwg.mxu0
    %2024 = vmatprep.subr.mxu0 %v1364
    %2025 = vmatpush1.msra.mxu0 %v1363
    %2026 = vmatprep.subr.mxu0 %v1372
    %2027 = vmatpush1.msra.mxu0 %v1371
    %2028 = vmatprep.subr.mxu0 %v1380
    %2029 = vmatpush1.msra.mxu0 %v1379
    %2030 = vmatprep.subr.mxu0 %v1388
    %2031 = vmatpush1.msra.mxu0 %v1387
    %2032 = vmatprep.subr.mxu0 %v1396
    %2033 = vmatpush1.msra.mxu0 %v1395
    %2034 = vmatprep.subr.mxu0 %v1404
    %2035 = vmatpush1.msra.mxu0 %v1403
    %2036 = vmatprep.subr.mxu0 %v1412
    %2037 = vmatpush1.msra.mxu0 %v1411
    %2038 = vmatprep.subr.mxu0 %v1420
    %2039 = vmatpush1.msra.mxu0 %v1419
    %2040 = vmatprep.subr.mxu0 %v1428
    %2041 = vmatpush1.msra.mxu0 %v1427
    %2042 = vmatprep.subr.mxu0 %v1436
    %2043 = vmatpush1.msra.mxu0 %v1435
    %2044 = vmatprep.subr.mxu0 %v1444
    %2045 = vmatpush1.msra.mxu0 %v1443
    %2046 = vmatprep.subr.mxu0 %v1452
    %2047 = vmatpush1.msra.mxu0 %v1451
    %2048 = vmatprep.subr.mxu0 %v1460
    %2049 = vmatpush1.msra.mxu0 %v1459
    %2050 = vmatprep.subr.mxu0 %v1468
    %2051 = vmatpush1.msra.mxu0 %v1467
    %2052 = vmatprep.subr.mxu0 %v1476
    %2053 = vmatpush1.msra.mxu0 %v1475
    %2054 = vmatprep.subr.mxu0 %v1484
    %2055 = vmatpush1.msra.mxu0 %v1483
    %2056 = vmatprep.subr.mxu0 0.0
    %2057 = vmatpush1.msra.mxu0 0.0
    %2058 = vmatprep.subr.mxu0 0.0
    %2059 = vmatpush1.msra.mxu0 0.0
    %2060 = vmatprep.subr.mxu0 0.0
    %2061 = vmatpush1.msra.mxu0 0.0
    %2062 = vmatprep.subr.mxu0 0.0
    %2063 = vmatpush1.msra.mxu0 0.0
    %2064 = vmatprep.subr.mxu0 0.0
    %2065 = vmatpush1.msra.mxu0 0.0
    %2066 = vmatprep.subr.mxu0 0.0
    %2067 = vmatpush1.msra.mxu0 0.0
    %2068 = vmatprep.subr.mxu0 0.0
    %2069 = vmatpush1.msra.mxu0 0.0
    %2070 = vmatprep.subr.mxu0 0.0
    %2071 = vmatpush1.msra.mxu0 0.0
    %2072 = vmatprep.subr.mxu0 0.0
    %2073 = vmatpush1.msra.mxu0 0.0
    %2074 = vmatprep.subr.mxu0 0.0
    %2075 = vmatpush1.msra.mxu0 0.0
    %2076 = vmatprep.subr.mxu0 0.0
    %2077 = vmatpush1.msra.mxu0 0.0
    %2078 = vmatprep.subr.mxu0 0.0
    %2079 = vmatpush1.msra.mxu0 0.0
    %2080 = vmatprep.subr.mxu0 0.0
    %2081 = vmatpush1.msra.mxu0 0.0
    %2082 = vmatprep.subr.mxu0 0.0
    %2083 = vmatpush1.msra.mxu0 0.0
    %2084 = vmatprep.subr.mxu0 0.0
    %2085 = vmatpush1.msra.mxu0 0.0
    %2086 = vmatprep.subr.mxu0 0.0
    %2087 = vmatpush1.msra.mxu0 0.0
    %2088 = vmatprep.mubr.f32.mxu0 0.0
    %2089 = vmatmul.mubr.f32.gmra.mrb[0].mxu0 %v1096
    %v2090 = vpop.f32.mrb[0].mxu0
    %v2091 = vadd.f32 %v2020, %v2090
    %v2092 = vpop.f32.mrb[0].mxu0
    %v2093 = vadd.f32 %v2022, %v2092
    %2094 = vdwg.mxu0
    %v2095 = vxor.u32 %v1665, 2147483648
    %v2096 = vxor.u32 %v1667, 2147483648
    %v2097 = vmul.f32 %v2095, 1.442695
    %v2098 = vpow.pop %v2097
    %v2099 = vmul.f32 %v2096, 1.442695
    %v2100 = vpow.pop %v2099
    %v2101 = vadd.f32 %v2098, 1.0
    %v2102 = vadd.f32 %v2100, 1.0
    %v2103 = vrcp.pop %v2101
    %v2104 = vmul.f32 1.0, %v2103
    %v2105 = vrcp.pop %v2102
    %v2106 = vmul.f32 1.0, %v2105
    %v2107 = vxor.u32 %v1807, 2147483648
    %v2108 = vxor.u32 %v1809, 2147483648
    %v2109 = vmul.f32 %v2107, 1.442695
    %v2110 = vpow.pop %v2109
    %v2111 = vmul.f32 %v2108, 1.442695
    %v2112 = vpow.pop %v2111
    %v2113 = vadd.f32 %v2110, 1.0
    %v2114 = vadd.f32 %v2112, 1.0
    %v2115 = vrcp.pop %v2113
    %v2116 = vmul.f32 1.0, %v2115
    %v2117 = vrcp.pop %v2114
    %v2118 = vmul.f32 1.0, %v2117
    %v2119 = vtanh.pop %v1949
    %v2120 = vtanh.pop %v1951
    %v2121 = vxor.u32 %v2091, 2147483648
    %v2122 = vxor.u32 %v2093, 2147483648
    %v2123 = vmul.f32 %v2121, 1.442695
    %v2124 = vpow.pop %v2123
    %v2125 = vmul.f32 %v2122, 1.442695
    %v2126 = vpow.pop %v2125
    %v2127 = vadd.f32 %v2124, 1.0
    %v2128 = vadd.f32 %v2126, 1.0
    %v2129 = vrcp.pop %v2127
    %v2130 = vmul.f32 1.0, %v2129
    %v2131 = vrcp.pop %v2128
    %v2132 = vmul.f32 1.0, %v2131
    %v2133 = vmul.f32 %v2116, %v1091
    %v2134 = vmul.f32 %v2118, %v1092
    %v2135 = vmul.f32 %v2104, %v2119
    %v2136 = vmul.f32 %v2106, %v2120
    %v2137 = vadd.f32 %v2133, %v2135
    %v2138 = vadd.f32 %v2134, %v2136
    %v2139 = vtanh.pop %v2137
    %v2140 = vtanh.pop %v2138
    %v2141 = vmul.f32 %v2130, %v2139
    %v2142 = vmul.f32 %v2132, %v2140
    %s2143 = scalar_lea.vmem [#allocation8], 16
    %2144 = vst [vmem:[%s2143] sm:$0xff] %v2141
    %2145 = vst [vmem:[%s2143 + $0x8] sm:$0xff] %v2142
    %s2146 = scalar_lea.vmem [#allocation2], 16
    %v2147 = vld [vmem:[%s2146] sm:$0xff]
    %v2148 = vld [vmem:[#allocation5] sm:$0xff]
    %v2149 = vld [vmem:[#allocation5 + $0x8] sm:$0xff]
    %v2150 = vld [vmem:[#allocation5 + $0x10] sm:$0xff]
    %v2151 = vld [vmem:[#allocation5 + $0x18] sm:$0xff]
    %v2152 = vld [vmem:[#allocation5 + $0x20] sm:$0xff]
    %v2153 = vld [vmem:[#allocation5 + $0x28] sm:$0xff]
    %v2154 = vld [vmem:[#allocation5 + $0x30] sm:$0xff]
    %v2155 = vld [vmem:[#allocation5 + $0x38] sm:$0xff]
    %v2156 = vld [vmem:[#allocation5 + $0x40] sm:$0xff]
    %v2157 = vld [vmem:[#allocation5 + $0x48] sm:$0xff]
    %v2158 = vld [vmem:[#allocation5 + $0x50] sm:$0xff]
    %v2159 = vld [vmem:[#allocation5 + $0x58] sm:$0xff]
    %v2160 = vld [vmem:[#allocation5 + $0x60] sm:$0xff]
    %v2161 = vld [vmem:[#allocation5 + $0x68] sm:$0xff]
    %v2162 = vld [vmem:[#allocation5 + $0x70] sm:$0xff]
    %v2163 = vld [vmem:[#allocation5 + $0x78] sm:$0xff]
    %v2164 = vld [vmem:[#allocation5 + $0x80] sm:$0xff]
    %v2165 = vld [vmem:[#allocation5 + $0x88] sm:$0xff]
    %v2166 = vld [vmem:[#allocation5 + $0x90] sm:$0xff]
    %v2167 = vld [vmem:[#allocation5 + $0x98] sm:$0xff]
    %v2168 = vld [vmem:[#allocation5 + $0xa0] sm:$0xff]
    %v2169 = vld [vmem:[#allocation5 + $0xa8] sm:$0xff]
    %v2170 = vld [vmem:[#allocation5 + $0xb0] sm:$0xff]
    %v2171 = vld [vmem:[#allocation5 + $0xb8] sm:$0xff]
    %v2172 = vld [vmem:[#allocation5 + $0xc0] sm:$0xff]
    %v2173 = vld [vmem:[#allocation5 + $0xc8] sm:$0xff]
    %v2174 = vld [vmem:[#allocation5 + $0xd0] sm:$0xff]
    %v2175 = vld [vmem:[#allocation5 + $0xd8] sm:$0xff]
    %v2176 = vld [vmem:[#allocation5 + $0xe0] sm:$0xff]
    %v2177 = vld [vmem:[#allocation5 + $0xe8] sm:$0xff]
    %v2178 = vld [vmem:[#allocation5 + $0xf0] sm:$0xff]
    %v2179 = vld [vmem:[#allocation5 + $0xf8] sm:$0xff]
    %v2180 = vld [vmem:[#allocation5 + $0x100] sm:$0xff]
    %v2181 = vld [vmem:[#allocation5 + $0x108] sm:$0xff]
    %v2182 = vld [vmem:[#allocation5 + $0x110] sm:$0xff]
    %v2183 = vld [vmem:[#allocation5 + $0x118] sm:$0xff]
    %v2184 = vld [vmem:[#allocation5 + $0x120] sm:$0xff]
    %v2185 = vld [vmem:[#allocation5 + $0x128] sm:$0xff]
    %v2186 = vld [vmem:[#allocation5 + $0x130] sm:$0xff]
    %v2187 = vld [vmem:[#allocation5 + $0x138] sm:$0xff]
    %v2188 = vld [vmem:[#allocation5 + $0x140] sm:$0xff]
    %v2189 = vld [vmem:[#allocation5 + $0x148] sm:$0xff]
    %v2190 = vld [vmem:[#allocation5 + $0x150] sm:$0xff]
    %v2191 = vld [vmem:[#allocation5 + $0x158] sm:$0xff]
    %v2192 = vld [vmem:[#allocation5 + $0x160] sm:$0xff]
    %v2193 = vld [vmem:[#allocation5 + $0x168] sm:$0xff]
    %v2194 = vld [vmem:[#allocation5 + $0x170] sm:$0xff]
    %v2195 = vld [vmem:[#allocation5 + $0x178] sm:$0xff]
    %v2196 = vld [vmem:[#allocation5 + $0x180] sm:$0xff]
    %v2197 = vld [vmem:[#allocation5 + $0x188] sm:$0xff]
    %v2198 = vld [vmem:[#allocation5 + $0x190] sm:$0xff]
    %v2199 = vld [vmem:[#allocation5 + $0x198] sm:$0xff]
    %v2200 = vld [vmem:[#allocation5 + $0x1a0] sm:$0xff]
    %v2201 = vld [vmem:[#allocation5 + $0x1a8] sm:$0xff]
    %v2202 = vld [vmem:[#allocation5 + $0x1b0] sm:$0xff]
    %v2203 = vld [vmem:[#allocation5 + $0x1b8] sm:$0xff]
    %v2204 = vld [vmem:[#allocation5 + $0x1c0] sm:$0xff]
    %v2205 = vld [vmem:[#allocation5 + $0x1c8] sm:$0xff]
    %v2206 = vld [vmem:[#allocation5 + $0x1d0] sm:$0xff]
    %v2207 = vld [vmem:[#allocation5 + $0x1d8] sm:$0xff]
    %v2208 = vld [vmem:[#allocation5 + $0x1e0] sm:$0xff]
    %v2209 = vld [vmem:[#allocation5 + $0x1e8] sm:$0xff]
    %v2210 = vld [vmem:[#allocation5 + $0x1f0] sm:$0xff]
    %v2211 = vld [vmem:[#allocation5 + $0x1f8] sm:$0xff]
    %v2212 = vld [vmem:[#allocation5 + $0x200] sm:$0xff]
    %v2213 = vld [vmem:[#allocation5 + $0x208] sm:$0xff]
    %v2214 = vld [vmem:[#allocation5 + $0x210] sm:$0xff]
    %v2215 = vld [vmem:[#allocation5 + $0x218] sm:$0xff]
    %v2216 = vld [vmem:[#allocation5 + $0x220] sm:$0xff]
    %v2217 = vld [vmem:[#allocation5 + $0x228] sm:$0xff]
    %v2218 = vld [vmem:[#allocation5 + $0x230] sm:$0xff]
    %v2219 = vld [vmem:[#allocation5 + $0x238] sm:$0xff]
    %v2220 = vld [vmem:[#allocation5 + $0x240] sm:$0xff]
    %v2221 = vld [vmem:[#allocation5 + $0x248] sm:$0xff]
    %v2222 = vld [vmem:[#allocation5 + $0x250] sm:$0xff]
    %v2223 = vld [vmem:[#allocation5 + $0x258] sm:$0xff]
    %v2224 = vld [vmem:[#allocation5 + $0x260] sm:$0xff]
    %v2225 = vld [vmem:[#allocation5 + $0x268] sm:$0xff]
    %v2226 = vld [vmem:[#allocation5 + $0x270] sm:$0xff]
    %v2227 = vld [vmem:[#allocation5 + $0x278] sm:$0xff]
    %v2228 = vld [vmem:[#allocation5 + $0x280] sm:$0xff]
    %v2229 = vld [vmem:[#allocation5 + $0x288] sm:$0xff]
    %v2230 = vld [vmem:[#allocation5 + $0x290] sm:$0xff]
    %v2231 = vld [vmem:[#allocation5 + $0x298] sm:$0xff]
    %v2232 = vld [vmem:[#allocation5 + $0x2a0] sm:$0xff]
    %v2233 = vld [vmem:[#allocation5 + $0x2a8] sm:$0xff]
    %v2234 = vld [vmem:[#allocation5 + $0x2b0] sm:$0xff]
    %v2235 = vld [vmem:[#allocation5 + $0x2b8] sm:$0xff]
    %v2236 = vld [vmem:[#allocation5 + $0x2c0] sm:$0xff]
    %v2237 = vld [vmem:[#allocation5 + $0x2c8] sm:$0xff]
    %v2238 = vld [vmem:[#allocation5 + $0x2d0] sm:$0xff]
    %v2239 = vld [vmem:[#allocation5 + $0x2d8] sm:$0xff]
    %v2240 = vld [vmem:[#allocation5 + $0x2e0] sm:$0xff]
    %v2241 = vld [vmem:[#allocation5 + $0x2e8] sm:$0xff]
    %v2242 = vld [vmem:[#allocation5 + $0x2f0] sm:$0xff]
    %v2243 = vld [vmem:[#allocation5 + $0x2f8] sm:$0xff]
    %v2244 = vld [vmem:[#allocation5 + $0x300] sm:$0xff]
    %v2245 = vld [vmem:[#allocation5 + $0x308] sm:$0xff]
    %v2246 = vld [vmem:[#allocation5 + $0x310] sm:$0xff]
    %v2247 = vld [vmem:[#allocation5 + $0x318] sm:$0xff]
    %v2248 = vld [vmem:[#allocation5 + $0x320] sm:$0xff]
    %v2249 = vld [vmem:[#allocation5 + $0x328] sm:$0xff]
    %v2250 = vld [vmem:[#allocation5 + $0x330] sm:$0xff]
    %v2251 = vld [vmem:[#allocation5 + $0x338] sm:$0xff]
    %v2252 = vld [vmem:[#allocation5 + $0x340] sm:$0xff]
    %v2253 = vld [vmem:[#allocation5 + $0x348] sm:$0xff]
    %v2254 = vld [vmem:[#allocation5 + $0x350] sm:$0xff]
    %v2255 = vld [vmem:[#allocation5 + $0x358] sm:$0xff]
    %v2256 = vld [vmem:[#allocation5 + $0x360] sm:$0xff]
    %v2257 = vld [vmem:[#allocation5 + $0x368] sm:$0xff]
    %v2258 = vld [vmem:[#allocation5 + $0x370] sm:$0xff]
    %v2259 = vld [vmem:[#allocation5 + $0x378] sm:$0xff]
    %v2260 = vld [vmem:[#allocation5 + $0x380] sm:$0xff]
    %v2261 = vld [vmem:[#allocation5 + $0x388] sm:$0xff]
    %v2262 = vld [vmem:[#allocation5 + $0x390] sm:$0xff]
    %v2263 = vld [vmem:[#allocation5 + $0x398] sm:$0xff]
    %v2264 = vld [vmem:[#allocation5 + $0x3a0] sm:$0xff]
    %v2265 = vld [vmem:[#allocation5 + $0x3a8] sm:$0xff]
    %v2266 = vld [vmem:[#allocation5 + $0x3b0] sm:$0xff]
    %v2267 = vld [vmem:[#allocation5 + $0x3b8] sm:$0xff]
    %v2268 = vld [vmem:[#allocation5 + $0x3c0] sm:$0xff]
    %v2269 = vld [vmem:[#allocation5 + $0x3c8] sm:$0xff]
    %v2270 = vld [vmem:[#allocation5 + $0x3d0] sm:$0xff]
    %v2271 = vld [vmem:[#allocation5 + $0x3d8] sm:$0xff]
    %v2272 = vld [vmem:[#allocation5 + $0x3e0] sm:$0xff]
    %v2273 = vld [vmem:[#allocation5 + $0x3e8] sm:$0xff]
    %v2274 = vld [vmem:[#allocation5 + $0x3f0] sm:$0xff]
    %v2275 = vld [vmem:[#allocation5 + $0x3f8] sm:$0xff]
    %v2276 = vld [vmem:[#allocation5 + $0x400] sm:$0xff]
    %v2277 = vld [vmem:[#allocation5 + $0x408] sm:$0xff]
    %v2278 = vld [vmem:[#allocation5 + $0x410] sm:$0xff]
    %v2279 = vld [vmem:[#allocation5 + $0x418] sm:$0xff]
    %v2280 = vld [vmem:[#allocation5 + $0x420] sm:$0xff]
    %v2281 = vld [vmem:[#allocation5 + $0x428] sm:$0xff]
    %v2282 = vld [vmem:[#allocation5 + $0x430] sm:$0xff]
    %v2283 = vld [vmem:[#allocation5 + $0x438] sm:$0xff]
    %v2284 = vld [vmem:[#allocation5 + $0x440] sm:$0xff]
    %v2285 = vld [vmem:[#allocation5 + $0x448] sm:$0xff]
    %v2286 = vld [vmem:[#allocation5 + $0x450] sm:$0xff]
    %v2287 = vld [vmem:[#allocation5 + $0x458] sm:$0xff]
    %v2288 = vld [vmem:[#allocation5 + $0x460] sm:$0xff]
    %v2289 = vld [vmem:[#allocation5 + $0x468] sm:$0xff]
    %v2290 = vld [vmem:[#allocation5 + $0x470] sm:$0xff]
    %v2291 = vld [vmem:[#allocation5 + $0x478] sm:$0xff]
    %v2292 = vld [vmem:[#allocation5 + $0x480] sm:$0xff]
    %v2293 = vld [vmem:[#allocation5 + $0x488] sm:$0xff]
    %v2294 = vld [vmem:[#allocation5 + $0x490] sm:$0xff]
    %v2295 = vld [vmem:[#allocation5 + $0x498] sm:$0xff]
    %v2296 = vld [vmem:[#allocation5 + $0x4a0] sm:$0xff]
    %v2297 = vld [vmem:[#allocation5 + $0x4a8] sm:$0xff]
    %v2298 = vld [vmem:[#allocation5 + $0x4b0] sm:$0xff]
    %v2299 = vld [vmem:[#allocation5 + $0x4b8] sm:$0xff]
    %v2300 = vld [vmem:[#allocation5 + $0x4c0] sm:$0xff]
    %v2301 = vld [vmem:[#allocation5 + $0x4c8] sm:$0xff]
    %v2302 = vld [vmem:[#allocation5 + $0x4d0] sm:$0xff]
    %v2303 = vld [vmem:[#allocation5 + $0x4d8] sm:$0xff]
    %v2304 = vld [vmem:[#allocation5 + $0x4e0] sm:$0xff]
    %v2305 = vld [vmem:[#allocation5 + $0x4e8] sm:$0xff]
    %v2306 = vld [vmem:[#allocation5 + $0x4f0] sm:$0xff]
    %v2307 = vld [vmem:[#allocation5 + $0x4f8] sm:$0xff]
    %v2308 = vld [vmem:[#allocation5 + $0x500] sm:$0xff]
    %v2309 = vld [vmem:[#allocation5 + $0x508] sm:$0xff]
    %v2310 = vld [vmem:[#allocation5 + $0x510] sm:$0xff]
    %v2311 = vld [vmem:[#allocation5 + $0x518] sm:$0xff]
    %v2312 = vld [vmem:[#allocation5 + $0x520] sm:$0xff]
    %v2313 = vld [vmem:[#allocation5 + $0x528] sm:$0xff]
    %v2314 = vld [vmem:[#allocation5 + $0x530] sm:$0xff]
    %v2315 = vld [vmem:[#allocation5 + $0x538] sm:$0xff]
    %v2316 = vld [vmem:[#allocation5 + $0x540] sm:$0xff]
    %v2317 = vld [vmem:[#allocation5 + $0x548] sm:$0xff]
    %v2318 = vld [vmem:[#allocation5 + $0x550] sm:$0xff]
    %v2319 = vld [vmem:[#allocation5 + $0x558] sm:$0xff]
    %v2320 = vld [vmem:[#allocation5 + $0x560] sm:$0xff]
    %v2321 = vld [vmem:[#allocation5 + $0x568] sm:$0xff]
    %v2322 = vld [vmem:[#allocation5 + $0x570] sm:$0xff]
    %v2323 = vld [vmem:[#allocation5 + $0x578] sm:$0xff]
    %v2324 = vld [vmem:[#allocation5 + $0x580] sm:$0xff]
    %v2325 = vld [vmem:[#allocation5 + $0x588] sm:$0xff]
    %v2326 = vld [vmem:[#allocation5 + $0x590] sm:$0xff]
    %v2327 = vld [vmem:[#allocation5 + $0x598] sm:$0xff]
    %v2328 = vld [vmem:[#allocation5 + $0x5a0] sm:$0xff]
    %v2329 = vld [vmem:[#allocation5 + $0x5a8] sm:$0xff]
    %v2330 = vld [vmem:[#allocation5 + $0x5b0] sm:$0xff]
    %v2331 = vld [vmem:[#allocation5 + $0x5b8] sm:$0xff]
    %v2332 = vld [vmem:[#allocation5 + $0x5c0] sm:$0xff]
    %v2333 = vld [vmem:[#allocation5 + $0x5c8] sm:$0xff]
    %v2334 = vld [vmem:[#allocation5 + $0x5d0] sm:$0xff]
    %v2335 = vld [vmem:[#allocation5 + $0x5d8] sm:$0xff]
    %v2336 = vld [vmem:[#allocation5 + $0x5e0] sm:$0xff]
    %v2337 = vld [vmem:[#allocation5 + $0x5e8] sm:$0xff]
    %v2338 = vld [vmem:[#allocation5 + $0x5f0] sm:$0xff]
    %v2339 = vld [vmem:[#allocation5 + $0x5f8] sm:$0xff]
    %v2340 = vld [vmem:[#allocation5 + $0x600] sm:$0xff]
    %v2341 = vld [vmem:[#allocation5 + $0x608] sm:$0xff]
    %v2342 = vld [vmem:[#allocation5 + $0x610] sm:$0xff]
    %v2343 = vld [vmem:[#allocation5 + $0x618] sm:$0xff]
    %v2344 = vld [vmem:[#allocation5 + $0x620] sm:$0xff]
    %v2345 = vld [vmem:[#allocation5 + $0x628] sm:$0xff]
    %v2346 = vld [vmem:[#allocation5 + $0x630] sm:$0xff]
    %v2347 = vld [vmem:[#allocation5 + $0x638] sm:$0xff]
    %v2348 = vld [vmem:[#allocation5 + $0x640] sm:$0xff]
    %v2349 = vld [vmem:[#allocation5 + $0x648] sm:$0xff]
    %v2350 = vld [vmem:[#allocation5 + $0x650] sm:$0xff]
    %v2351 = vld [vmem:[#allocation5 + $0x658] sm:$0xff]
    %v2352 = vld [vmem:[#allocation5 + $0x660] sm:$0xff]
    %v2353 = vld [vmem:[#allocation5 + $0x668] sm:$0xff]
    %v2354 = vld [vmem:[#allocation5 + $0x670] sm:$0xff]
    %v2355 = vld [vmem:[#allocation5 + $0x678] sm:$0xff]
    %v2356 = vld [vmem:[#allocation5 + $0x680] sm:$0xff]
    %v2357 = vld [vmem:[#allocation5 + $0x688] sm:$0xff]
    %v2358 = vld [vmem:[#allocation5 + $0x690] sm:$0xff]
    %v2359 = vld [vmem:[#allocation5 + $0x698] sm:$0xff]
    %v2360 = vld [vmem:[#allocation5 + $0x6a0] sm:$0xff]
    %v2361 = vld [vmem:[#allocation5 + $0x6a8] sm:$0xff]
    %v2362 = vld [vmem:[#allocation5 + $0x6b0] sm:$0xff]
    %v2363 = vld [vmem:[#allocation5 + $0x6b8] sm:$0xff]
    %v2364 = vld [vmem:[#allocation5 + $0x6c0] sm:$0xff]
    %v2365 = vld [vmem:[#allocation5 + $0x6c8] sm:$0xff]
    %v2366 = vld [vmem:[#allocation5 + $0x6d0] sm:$0xff]
    %v2367 = vld [vmem:[#allocation5 + $0x6d8] sm:$0xff]
    %v2368 = vld [vmem:[#allocation5 + $0x6e0] sm:$0xff]
    %v2369 = vld [vmem:[#allocation5 + $0x6e8] sm:$0xff]
    %v2370 = vld [vmem:[#allocation5 + $0x6f0] sm:$0xff]
    %v2371 = vld [vmem:[#allocation5 + $0x6f8] sm:$0xff]
    %v2372 = vld [vmem:[#allocation5 + $0x700] sm:$0xff]
    %v2373 = vld [vmem:[#allocation5 + $0x708] sm:$0xff]
    %v2374 = vld [vmem:[#allocation5 + $0x710] sm:$0xff]
    %v2375 = vld [vmem:[#allocation5 + $0x718] sm:$0xff]
    %v2376 = vld [vmem:[#allocation5 + $0x720] sm:$0xff]
    %v2377 = vld [vmem:[#allocation5 + $0x728] sm:$0xff]
    %v2378 = vld [vmem:[#allocation5 + $0x730] sm:$0xff]
    %v2379 = vld [vmem:[#allocation5 + $0x738] sm:$0xff]
    %v2380 = vld [vmem:[#allocation5 + $0x740] sm:$0xff]
    %v2381 = vld [vmem:[#allocation5 + $0x748] sm:$0xff]
    %v2382 = vld [vmem:[#allocation5 + $0x750] sm:$0xff]
    %v2383 = vld [vmem:[#allocation5 + $0x758] sm:$0xff]
    %v2384 = vld [vmem:[#allocation5 + $0x760] sm:$0xff]
    %v2385 = vld [vmem:[#allocation5 + $0x768] sm:$0xff]
    %v2386 = vld [vmem:[#allocation5 + $0x770] sm:$0xff]
    %v2387 = vld [vmem:[#allocation5 + $0x778] sm:$0xff]
    %v2388 = vld [vmem:[#allocation5 + $0x780] sm:$0xff]
    %v2389 = vld [vmem:[#allocation5 + $0x788] sm:$0xff]
    %v2390 = vld [vmem:[#allocation5 + $0x790] sm:$0xff]
    %v2391 = vld [vmem:[#allocation5 + $0x798] sm:$0xff]
    %v2392 = vld [vmem:[#allocation5 + $0x7a0] sm:$0xff]
    %v2393 = vld [vmem:[#allocation5 + $0x7a8] sm:$0xff]
    %v2394 = vld [vmem:[#allocation5 + $0x7b0] sm:$0xff]
    %v2395 = vld [vmem:[#allocation5 + $0x7b8] sm:$0xff]
    %v2396 = vld [vmem:[#allocation5 + $0x7c0] sm:$0xff]
    %v2397 = vld [vmem:[#allocation5 + $0x7c8] sm:$0xff]
    %v2398 = vld [vmem:[#allocation5 + $0x7d0] sm:$0xff]
    %v2399 = vld [vmem:[#allocation5 + $0x7d8] sm:$0xff]
    %v2400 = vld [vmem:[#allocation5 + $0x7e0] sm:$0xff]
    %v2401 = vld [vmem:[#allocation5 + $0x7e8] sm:$0xff]
    %v2402 = vld [vmem:[#allocation5 + $0x7f0] sm:$0xff]
    %v2403 = vld [vmem:[#allocation5 + $0x7f8] sm:$0xff]
    %v2404 = vld [vmem:[#allocation5 + $0x800] sm:$0xff]
    %v2405 = vld [vmem:[#allocation5 + $0x808] sm:$0xff]
    %v2406 = vld [vmem:[#allocation5 + $0x810] sm:$0xff]
    %v2407 = vld [vmem:[#allocation5 + $0x818] sm:$0xff]
    %v2408 = vld [vmem:[#allocation5 + $0x820] sm:$0xff]
    %v2409 = vld [vmem:[#allocation5 + $0x828] sm:$0xff]
    %v2410 = vld [vmem:[#allocation5 + $0x830] sm:$0xff]
    %v2411 = vld [vmem:[#allocation5 + $0x838] sm:$0xff]
    %v2412 = vld [vmem:[#allocation5 + $0x840] sm:$0xff]
    %v2413 = vld [vmem:[#allocation5 + $0x848] sm:$0xff]
    %v2414 = vld [vmem:[#allocation5 + $0x850] sm:$0xff]
    %v2415 = vld [vmem:[#allocation5 + $0x858] sm:$0xff]
    %v2416 = vld [vmem:[#allocation5 + $0x860] sm:$0xff]
    %v2417 = vld [vmem:[#allocation5 + $0x868] sm:$0xff]
    %v2418 = vld [vmem:[#allocation5 + $0x870] sm:$0xff]
    %v2419 = vld [vmem:[#allocation5 + $0x878] sm:$0xff]
    %v2420 = vld [vmem:[#allocation5 + $0x880] sm:$0xff]
    %v2421 = vld [vmem:[#allocation5 + $0x888] sm:$0xff]
    %v2422 = vld [vmem:[#allocation5 + $0x890] sm:$0xff]
    %v2423 = vld [vmem:[#allocation5 + $0x898] sm:$0xff]
    %v2424 = vld [vmem:[#allocation5 + $0x8a0] sm:$0xff]
    %v2425 = vld [vmem:[#allocation5 + $0x8a8] sm:$0xff]
    %v2426 = vld [vmem:[#allocation5 + $0x8b0] sm:$0xff]
    %v2427 = vld [vmem:[#allocation5 + $0x8b8] sm:$0xff]
    %v2428 = vld [vmem:[#allocation5 + $0x8c0] sm:$0xff]
    %v2429 = vld [vmem:[#allocation5 + $0x8c8] sm:$0xff]
    %v2430 = vld [vmem:[#allocation5 + $0x8d0] sm:$0xff]
    %v2431 = vld [vmem:[#allocation5 + $0x8d8] sm:$0xff]
    %v2432 = vld [vmem:[#allocation5 + $0x8e0] sm:$0xff]
    %v2433 = vld [vmem:[#allocation5 + $0x8e8] sm:$0xff]
    %v2434 = vld [vmem:[#allocation5 + $0x8f0] sm:$0xff]
    %v2435 = vld [vmem:[#allocation5 + $0x8f8] sm:$0xff]
    %v2436 = vld [vmem:[#allocation5 + $0x900] sm:$0xff]
    %v2437 = vld [vmem:[#allocation5 + $0x908] sm:$0xff]
    %v2438 = vld [vmem:[#allocation5 + $0x910] sm:$0xff]
    %v2439 = vld [vmem:[#allocation5 + $0x918] sm:$0xff]
    %v2440 = vld [vmem:[#allocation5 + $0x920] sm:$0xff]
    %v2441 = vld [vmem:[#allocation5 + $0x928] sm:$0xff]
    %v2442 = vld [vmem:[#allocation5 + $0x930] sm:$0xff]
    %v2443 = vld [vmem:[#allocation5 + $0x938] sm:$0xff]
    %v2444 = vld [vmem:[#allocation5 + $0x940] sm:$0xff]
    %v2445 = vld [vmem:[#allocation5 + $0x948] sm:$0xff]
    %v2446 = vld [vmem:[#allocation5 + $0x950] sm:$0xff]
    %v2447 = vld [vmem:[#allocation5 + $0x958] sm:$0xff]
    %v2448 = vld [vmem:[#allocation5 + $0x960] sm:$0xff]
    %v2449 = vld [vmem:[#allocation5 + $0x968] sm:$0xff]
    %v2450 = vld [vmem:[#allocation5 + $0x970] sm:$0xff]
    %v2451 = vld [vmem:[#allocation5 + $0x978] sm:$0xff]
    %v2452 = vld [vmem:[#allocation5 + $0x980] sm:$0xff]
    %v2453 = vld [vmem:[#allocation5 + $0x988] sm:$0xff]
    %v2454 = vld [vmem:[#allocation5 + $0x990] sm:$0xff]
    %v2455 = vld [vmem:[#allocation5 + $0x998] sm:$0xff]
    %v2456 = vld [vmem:[#allocation5 + $0x9a0] sm:$0xff]
    %v2457 = vld [vmem:[#allocation5 + $0x9a8] sm:$0xff]
    %v2458 = vld [vmem:[#allocation5 + $0x9b0] sm:$0xff]
    %v2459 = vld [vmem:[#allocation5 + $0x9b8] sm:$0xff]
    %v2460 = vld [vmem:[#allocation5 + $0x9c0] sm:$0xff]
    %v2461 = vld [vmem:[#allocation5 + $0x9c8] sm:$0xff]
    %v2462 = vld [vmem:[#allocation5 + $0x9d0] sm:$0xff]
    %v2463 = vld [vmem:[#allocation5 + $0x9d8] sm:$0xff]
    %v2464 = vld [vmem:[#allocation5 + $0x9e0] sm:$0xff]
    %v2465 = vld [vmem:[#allocation5 + $0x9e8] sm:$0xff]
    %v2466 = vld [vmem:[#allocation5 + $0x9f0] sm:$0xff]
    %v2467 = vld [vmem:[#allocation5 + $0x9f8] sm:$0xff]
    %v2468 = vld [vmem:[#allocation5 + $0xa00] sm:$0xff]
    %v2469 = vld [vmem:[#allocation5 + $0xa08] sm:$0xff]
    %v2470 = vld [vmem:[#allocation5 + $0xa10] sm:$0xff]
    %v2471 = vld [vmem:[#allocation5 + $0xa18] sm:$0xff]
    %v2472 = vld [vmem:[#allocation5 + $0xa20] sm:$0xff]
    %v2473 = vld [vmem:[#allocation5 + $0xa28] sm:$0xff]
    %v2474 = vld [vmem:[#allocation5 + $0xa30] sm:$0xff]
    %v2475 = vld [vmem:[#allocation5 + $0xa38] sm:$0xff]
    %v2476 = vld [vmem:[#allocation5 + $0xa40] sm:$0xff]
    %v2477 = vld [vmem:[#allocation5 + $0xa48] sm:$0xff]
    %v2478 = vld [vmem:[#allocation5 + $0xa50] sm:$0xff]
    %v2479 = vld [vmem:[#allocation5 + $0xa58] sm:$0xff]
    %v2480 = vld [vmem:[#allocation5 + $0xa60] sm:$0xff]
    %v2481 = vld [vmem:[#allocation5 + $0xa68] sm:$0xff]
    %v2482 = vld [vmem:[#allocation5 + $0xa70] sm:$0xff]
    %v2483 = vld [vmem:[#allocation5 + $0xa78] sm:$0xff]
    %v2484 = vld [vmem:[#allocation5 + $0xa80] sm:$0xff]
    %v2485 = vld [vmem:[#allocation5 + $0xa88] sm:$0xff]
    %v2486 = vld [vmem:[#allocation5 + $0xa90] sm:$0xff]
    %v2487 = vld [vmem:[#allocation5 + $0xa98] sm:$0xff]
    %v2488 = vld [vmem:[#allocation5 + $0xaa0] sm:$0xff]
    %v2489 = vld [vmem:[#allocation5 + $0xaa8] sm:$0xff]
    %v2490 = vld [vmem:[#allocation5 + $0xab0] sm:$0xff]
    %v2491 = vld [vmem:[#allocation5 + $0xab8] sm:$0xff]
    %v2492 = vld [vmem:[#allocation5 + $0xac0] sm:$0xff]
    %v2493 = vld [vmem:[#allocation5 + $0xac8] sm:$0xff]
    %v2494 = vld [vmem:[#allocation5 + $0xad0] sm:$0xff]
    %v2495 = vld [vmem:[#allocation5 + $0xad8] sm:$0xff]
    %v2496 = vld [vmem:[#allocation5 + $0xae0] sm:$0xff]
    %v2497 = vld [vmem:[#allocation5 + $0xae8] sm:$0xff]
    %v2498 = vld [vmem:[#allocation5 + $0xaf0] sm:$0xff]
    %v2499 = vld [vmem:[#allocation5 + $0xaf8] sm:$0xff]
    %v2500 = vld [vmem:[#allocation5 + $0xb00] sm:$0xff]
    %v2501 = vld [vmem:[#allocation5 + $0xb08] sm:$0xff]
    %v2502 = vld [vmem:[#allocation5 + $0xb10] sm:$0xff]
    %v2503 = vld [vmem:[#allocation5 + $0xb18] sm:$0xff]
    %v2504 = vld [vmem:[#allocation5 + $0xb20] sm:$0xff]
    %v2505 = vld [vmem:[#allocation5 + $0xb28] sm:$0xff]
    %v2506 = vld [vmem:[#allocation5 + $0xb30] sm:$0xff]
    %v2507 = vld [vmem:[#allocation5 + $0xb38] sm:$0xff]
    %v2508 = vld [vmem:[#allocation5 + $0xb40] sm:$0xff]
    %v2509 = vld [vmem:[#allocation5 + $0xb48] sm:$0xff]
    %v2510 = vld [vmem:[#allocation5 + $0xb50] sm:$0xff]
    %v2511 = vld [vmem:[#allocation5 + $0xb58] sm:$0xff]
    %v2512 = vld [vmem:[#allocation5 + $0xb60] sm:$0xff]
    %v2513 = vld [vmem:[#allocation5 + $0xb68] sm:$0xff]
    %v2514 = vld [vmem:[#allocation5 + $0xb70] sm:$0xff]
    %v2515 = vld [vmem:[#allocation5 + $0xb78] sm:$0xff]
    %v2516 = vld [vmem:[#allocation5 + $0xb80] sm:$0xff]
    %v2517 = vld [vmem:[#allocation5 + $0xb88] sm:$0xff]
    %v2518 = vld [vmem:[#allocation5 + $0xb90] sm:$0xff]
    %v2519 = vld [vmem:[#allocation5 + $0xb98] sm:$0xff]
    %v2520 = vld [vmem:[#allocation5 + $0xba0] sm:$0xff]
    %v2521 = vld [vmem:[#allocation5 + $0xba8] sm:$0xff]
    %v2522 = vld [vmem:[#allocation5 + $0xbb0] sm:$0xff]
    %v2523 = vld [vmem:[#allocation5 + $0xbb8] sm:$0xff]
    %v2524 = vld [vmem:[#allocation5 + $0xbc0] sm:$0xff]
    %v2525 = vld [vmem:[#allocation5 + $0xbc8] sm:$0xff]
    %v2526 = vld [vmem:[#allocation5 + $0xbd0] sm:$0xff]
    %v2527 = vld [vmem:[#allocation5 + $0xbd8] sm:$0xff]
    %v2528 = vld [vmem:[#allocation5 + $0xbe0] sm:$0xff]
    %v2529 = vld [vmem:[#allocation5 + $0xbe8] sm:$0xff]
    %v2530 = vld [vmem:[#allocation5 + $0xbf0] sm:$0xff]
    %v2531 = vld [vmem:[#allocation5 + $0xbf8] sm:$0xff]
    %v2532 = vld [vmem:[#allocation7] sm:$0xff]
    %v2534 = vlaneseq
    %v2535 = vshrl.u32 %v2534, 7
    %v2536 = vsub.s32 0, %v2535
    %v2537 = vrot.slane %v2532, %v2536
    %v2538 = vlaneseq
    %v2539 = vshrl.u32 %v2538, 7
    %v2540 = vsub.s32 1, %v2539
    %v2541 = vrot.slane %v2532, %v2540
    %v2542 = vlaneseq
    %v2543 = vshrl.u32 %v2542, 7
    %v2544 = vsub.s32 2, %v2543
    %v2545 = vrot.slane %v2532, %v2544
    %v2546 = vlaneseq
    %v2547 = vshrl.u32 %v2546, 7
    %v2548 = vsub.s32 3, %v2547
    %v2549 = vrot.slane %v2532, %v2548
    %v2550 = vlaneseq
    %v2551 = vshrl.u32 %v2550, 7
    %v2552 = vsub.s32 4, %v2551
    %v2553 = vrot.slane %v2532, %v2552
    %v2554 = vlaneseq
    %v2555 = vshrl.u32 %v2554, 7
    %v2556 = vsub.s32 5, %v2555
    %v2557 = vrot.slane %v2532, %v2556
    %v2558 = vlaneseq
    %v2559 = vshrl.u32 %v2558, 7
    %v2560 = vsub.s32 6, %v2559
    %v2561 = vrot.slane %v2532, %v2560
    %v2562 = vlaneseq
    %v2563 = vshrl.u32 %v2562, 7
    %v2564 = vsub.s32 7, %v2563
    %v2565 = vrot.slane %v2532, %v2564
    %2574 = vmatprep.subr.mxu0 %v2149
    %2575 = vmatpush1.msra.mxu0 %v2148
    %2576 = vmatprep.subr.mxu0 %v2157
    %2577 = vmatpush1.msra.mxu0 %v2156
    %2578 = vmatprep.subr.mxu0 %v2165
    %2579 = vmatpush1.msra.mxu0 %v2164
    %2580 = vmatprep.subr.mxu0 %v2173
    %2581 = vmatpush1.msra.mxu0 %v2172
    %2582 = vmatprep.subr.mxu0 %v2181
    %2583 = vmatpush1.msra.mxu0 %v2180
    %2584 = vmatprep.subr.mxu0 %v2189
    %2585 = vmatpush1.msra.mxu0 %v2188
    %2586 = vmatprep.subr.mxu0 %v2197
    %2587 = vmatpush1.msra.mxu0 %v2196
    %2588 = vmatprep.subr.mxu0 %v2205
    %2589 = vmatpush1.msra.mxu0 %v2204
    %2590 = vmatprep.subr.mxu0 %v2213
    %2591 = vmatpush1.msra.mxu0 %v2212
    %2592 = vmatprep.subr.mxu0 %v2221
    %2593 = vmatpush1.msra.mxu0 %v2220
    %2594 = vmatprep.subr.mxu0 %v2229
    %2595 = vmatpush1.msra.mxu0 %v2228
    %2596 = vmatprep.subr.mxu0 %v2237
    %2597 = vmatpush1.msra.mxu0 %v2236
    %2598 = vmatprep.subr.mxu0 %v2245
    %2599 = vmatpush1.msra.mxu0 %v2244
    %2600 = vmatprep.subr.mxu0 %v2253
    %2601 = vmatpush1.msra.mxu0 %v2252
    %2602 = vmatprep.subr.mxu0 %v2261
    %2603 = vmatpush1.msra.mxu0 %v2260
    %2604 = vmatprep.subr.mxu0 %v2269
    %2605 = vmatpush1.msra.mxu0 %v2268
    %2606 = vmatprep.subr.mxu0 %v2277
    %2607 = vmatpush1.msra.mxu0 %v2276
    %2608 = vmatprep.subr.mxu0 %v2285
    %2609 = vmatpush1.msra.mxu0 %v2284
    %2610 = vmatprep.subr.mxu0 %v2293
    %2611 = vmatpush1.msra.mxu0 %v2292
    %2612 = vmatprep.subr.mxu0 %v2301
    %2613 = vmatpush1.msra.mxu0 %v2300
    %2614 = vmatprep.subr.mxu0 %v2309
    %2615 = vmatpush1.msra.mxu0 %v2308
    %2616 = vmatprep.subr.mxu0 %v2317
    %2617 = vmatpush1.msra.mxu0 %v2316
    %2618 = vmatprep.subr.mxu0 %v2325
    %2619 = vmatpush1.msra.mxu0 %v2324
    %2620 = vmatprep.subr.mxu0 %v2333
    %2621 = vmatpush1.msra.mxu0 %v2332
    %2622 = vmatprep.subr.mxu0 %v2341
    %2623 = vmatpush1.msra.mxu0 %v2340
    %2624 = vmatprep.subr.mxu0 %v2349
    %2625 = vmatpush1.msra.mxu0 %v2348
    %2626 = vmatprep.subr.mxu0 %v2357
    %2627 = vmatpush1.msra.mxu0 %v2356
    %2628 = vmatprep.subr.mxu0 %v2365
    %2629 = vmatpush1.msra.mxu0 %v2364
    %2630 = vmatprep.subr.mxu0 %v2373
    %2631 = vmatpush1.msra.mxu0 %v2372
    %2632 = vmatprep.subr.mxu0 %v2381
    %2633 = vmatpush1.msra.mxu0 %v2380
    %2634 = vmatprep.subr.mxu0 %v2389
    %2635 = vmatpush1.msra.mxu0 %v2388
    %2636 = vmatprep.subr.mxu0 %v2397
    %2637 = vmatpush1.msra.mxu0 %v2396
    %2638 = vmatprep.mubr.f32.mxu0 %v2141
    %2639 = vmatmul.mubr.f32.gmra.mrb[0].mxu0 %v2147
    %v2640 = vpop.f32.mrb[0].mxu0
    %v2641 = vadd.f32 %v2537, %v2640
    %v2642 = vpop.f32.mrb[0].mxu0
    %v2643 = vadd.f32 %v2541, %v2642
    %2644 = vdwg.mxu0
    %2645 = vmatprep.subr.mxu0 %v2405
    %2646 = vmatpush1.msra.mxu0 %v2404
    %2647 = vmatprep.subr.mxu0 %v2413
    %2648 = vmatpush1.msra.mxu0 %v2412
    %2649 = vmatprep.subr.mxu0 %v2421
    %2650 = vmatpush1.msra.mxu0 %v2420
    %2651 = vmatprep.subr.mxu0 %v2429
    %2652 = vmatpush1.msra.mxu0 %v2428
    %2653 = vmatprep.subr.mxu0 %v2437
    %2654 = vmatpush1.msra.mxu0 %v2436
    %2655 = vmatprep.subr.mxu0 %v2445
    %2656 = vmatpush1.msra.mxu0 %v2444
    %2657 = vmatprep.subr.mxu0 %v2453
    %2658 = vmatpush1.msra.mxu0 %v2452
    %2659 = vmatprep.subr.mxu0 %v2461
    %2660 = vmatpush1.msra.mxu0 %v2460
    %2661 = vmatprep.subr.mxu0 %v2469
    %2662 = vmatpush1.msra.mxu0 %v2468
    %2663 = vmatprep.subr.mxu0 %v2477
    %2664 = vmatpush1.msra.mxu0 %v2476
    %2665 = vmatprep.subr.mxu0 %v2485
    %2666 = vmatpush1.msra.mxu0 %v2484
    %2667 = vmatprep.subr.mxu0 %v2493
    %2668 = vmatpush1.msra.mxu0 %v2492
    %2669 = vmatprep.subr.mxu0 %v2501
    %2670 = vmatpush1.msra.mxu0 %v2500
    %2671 = vmatprep.subr.mxu0 %v2509
    %2672 = vmatpush1.msra.mxu0 %v2508
    %2673 = vmatprep.subr.mxu0 %v2517
    %2674 = vmatpush1.msra.mxu0 %v2516
    %2675 = vmatprep.subr.mxu0 %v2525
    %2676 = vmatpush1.msra.mxu0 %v2524
    %2677 = vmatprep.subr.mxu0 0.0
    %2678 = vmatpush1.msra.mxu0 0.0
    %2679 = vmatprep.subr.mxu0 0.0
    %2680 = vmatpush1.msra.mxu0 0.0
    %2681 = vmatprep.subr.mxu0 0.0
    %2682 = vmatpush1.msra.mxu0 0.0
    %2683 = vmatprep.subr.mxu0 0.0
    %2684 = vmatpush1.msra.mxu0 0.0
    %2685 = vmatprep.subr.mxu0 0.0
    %2686 = vmatpush1.msra.mxu0 0.0
    %2687 = vmatprep.subr.mxu0 0.0
    %2688 = vmatpush1.msra.mxu0 0.0
    %2689 = vmatprep.subr.mxu0 0.0
    %2690 = vmatpush1.msra.mxu0 0.0
    %2691 = vmatprep.subr.mxu0 0.0
    %2692 = vmatpush1.msra.mxu0 0.0
    %2693 = vmatprep.subr.mxu0 0.0
    %2694 = vmatpush1.msra.mxu0 0.0
    %2695 = vmatprep.subr.mxu0 0.0
    %2696 = vmatpush1.msra.mxu0 0.0
    %2697 = vmatprep.subr.mxu0 0.0
    %2698 = vmatpush1.msra.mxu0 0.0
    %2699 = vmatprep.subr.mxu0 0.0
    %2700 = vmatpush1.msra.mxu0 0.0
    %2701 = vmatprep.subr.mxu0 0.0
    %2702 = vmatpush1.msra.mxu0 0.0
    %2703 = vmatprep.subr.mxu0 0.0
    %2704 = vmatpush1.msra.mxu0 0.0
    %2705 = vmatprep.subr.mxu0 0.0
    %2706 = vmatpush1.msra.mxu0 0.0
    %2707 = vmatprep.subr.mxu0 0.0
    %2708 = vmatpush1.msra.mxu0 0.0
    %2709 = vmatprep.mubr.f32.mxu0 0.0
    %2710 = vmatmul.mubr.f32.gmra.mrb[0].mxu0 %v2142
    %v2711 = vpop.f32.mrb[0].mxu0
    %v2712 = vadd.f32 %v2641, %v2711
    %v2713 = vpop.f32.mrb[0].mxu0
    %v2714 = vadd.f32 %v2643, %v2713
    %2715 = vdwg.mxu0
    %2716 = vmatprep.subr.mxu0 %v2151
    %2717 = vmatpush1.msra.mxu0 %v2150
    %2718 = vmatprep.subr.mxu0 %v2159
    %2719 = vmatpush1.msra.mxu0 %v2158
    %2720 = vmatprep.subr.mxu0 %v2167
    %2721 = vmatpush1.msra.mxu0 %v2166
    %2722 = vmatprep.subr.mxu0 %v2175
    %2723 = vmatpush1.msra.mxu0 %v2174
    %2724 = vmatprep.subr.mxu0 %v2183
    %2725 = vmatpush1.msra.mxu0 %v2182
    %2726 = vmatprep.subr.mxu0 %v2191
    %2727 = vmatpush1.msra.mxu0 %v2190
    %2728 = vmatprep.subr.mxu0 %v2199
    %2729 = vmatpush1.msra.mxu0 %v2198
    %2730 = vmatprep.subr.mxu0 %v2207
    %2731 = vmatpush1.msra.mxu0 %v2206
    %2732 = vmatprep.subr.mxu0 %v2215
    %2733 = vmatpush1.msra.mxu0 %v2214
    %2734 = vmatprep.subr.mxu0 %v2223
    %2735 = vmatpush1.msra.mxu0 %v2222
    %2736 = vmatprep.subr.mxu0 %v2231
    %2737 = vmatpush1.msra.mxu0 %v2230
    %2738 = vmatprep.subr.mxu0 %v2239
    %2739 = vmatpush1.msra.mxu0 %v2238
    %2740 = vmatprep.subr.mxu0 %v2247
    %2741 = vmatpush1.msra.mxu0 %v2246
    %2742 = vmatprep.subr.mxu0 %v2255
    %2743 = vmatpush1.msra.mxu0 %v2254
    %2744 = vmatprep.subr.mxu0 %v2263
    %2745 = vmatpush1.msra.mxu0 %v2262
    %2746 = vmatprep.subr.mxu0 %v2271
    %2747 = vmatpush1.msra.mxu0 %v2270
    %2748 = vmatprep.subr.mxu0 %v2279
    %2749 = vmatpush1.msra.mxu0 %v2278
    %2750 = vmatprep.subr.mxu0 %v2287
    %2751 = vmatpush1.msra.mxu0 %v2286
    %2752 = vmatprep.subr.mxu0 %v2295
    %2753 = vmatpush1.msra.mxu0 %v2294
    %2754 = vmatprep.subr.mxu0 %v2303
    %2755 = vmatpush1.msra.mxu0 %v2302
    %2756 = vmatprep.subr.mxu0 %v2311
    %2757 = vmatpush1.msra.mxu0 %v2310
    %2758 = vmatprep.subr.mxu0 %v2319
    %2759 = vmatpush1.msra.mxu0 %v2318
    %2760 = vmatprep.subr.mxu0 %v2327
    %2761 = vmatpush1.msra.mxu0 %v2326
    %2762 = vmatprep.subr.mxu0 %v2335
    %2763 = vmatpush1.msra.mxu0 %v2334
    %2764 = vmatprep.subr.mxu0 %v2343
    %2765 = vmatpush1.msra.mxu0 %v2342
    %2766 = vmatprep.subr.mxu0 %v2351
    %2767 = vmatpush1.msra.mxu0 %v2350
    %2768 = vmatprep.subr.mxu0 %v2359
    %2769 = vmatpush1.msra.mxu0 %v2358
    %2770 = vmatprep.subr.mxu0 %v2367
    %2771 = vmatpush1.msra.mxu0 %v2366
    %2772 = vmatprep.subr.mxu0 %v2375
    %2773 = vmatpush1.msra.mxu0 %v2374
    %2774 = vmatprep.subr.mxu0 %v2383
    %2775 = vmatpush1.msra.mxu0 %v2382
    %2776 = vmatprep.subr.mxu0 %v2391
    %2777 = vmatpush1.msra.mxu0 %v2390
    %2778 = vmatprep.subr.mxu0 %v2399
    %2779 = vmatpush1.msra.mxu0 %v2398
    %2780 = vmatprep.mubr.f32.mxu0 %v2141
    %2781 = vmatmul.mubr.f32.gmra.mrb[0].mxu0 %v2147
    %v2782 = vpop.f32.mrb[0].mxu0
    %v2783 = vadd.f32 %v2545, %v2782
    %v2784 = vpop.f32.mrb[0].mxu0
    %v2785 = vadd.f32 %v2549, %v2784
    %2786 = vdwg.mxu0
    %2787 = vmatprep.subr.mxu0 %v2407
    %2788 = vmatpush1.msra.mxu0 %v2406
    %2789 = vmatprep.subr.mxu0 %v2415
    %2790 = vmatpush1.msra.mxu0 %v2414
    %2791 = vmatprep.subr.mxu0 %v2423
    %2792 = vmatpush1.msra.mxu0 %v2422
    %2793 = vmatprep.subr.mxu0 %v2431
    %2794 = vmatpush1.msra.mxu0 %v2430
    %2795 = vmatprep.subr.mxu0 %v2439
    %2796 = vmatpush1.msra.mxu0 %v2438
    %2797 = vmatprep.subr.mxu0 %v2447
    %2798 = vmatpush1.msra.mxu0 %v2446
    %2799 = vmatprep.subr.mxu0 %v2455
    %2800 = vmatpush1.msra.mxu0 %v2454
    %2801 = vmatprep.subr.mxu0 %v2463
    %2802 = vmatpush1.msra.mxu0 %v2462
    %2803 = vmatprep.subr.mxu0 %v2471
    %2804 = vmatpush1.msra.mxu0 %v2470
    %2805 = vmatprep.subr.mxu0 %v2479
    %2806 = vmatpush1.msra.mxu0 %v2478
    %2807 = vmatprep.subr.mxu0 %v2487
    %2808 = vmatpush1.msra.mxu0 %v2486
    %2809 = vmatprep.subr.mxu0 %v2495
    %2810 = vmatpush1.msra.mxu0 %v2494
    %2811 = vmatprep.subr.mxu0 %v2503
    %2812 = vmatpush1.msra.mxu0 %v2502
    %2813 = vmatprep.subr.mxu0 %v2511
    %2814 = vmatpush1.msra.mxu0 %v2510
    %2815 = vmatprep.subr.mxu0 %v2519
    %2816 = vmatpush1.msra.mxu0 %v2518
    %2817 = vmatprep.subr.mxu0 %v2527
    %2818 = vmatpush1.msra.mxu0 %v2526
    %2819 = vmatprep.subr.mxu0 0.0
    %2820 = vmatpush1.msra.mxu0 0.0
    %2821 = vmatprep.subr.mxu0 0.0
    %2822 = vmatpush1.msra.mxu0 0.0
    %2823 = vmatprep.subr.mxu0 0.0
    %2824 = vmatpush1.msra.mxu0 0.0
    %2825 = vmatprep.subr.mxu0 0.0
    %2826 = vmatpush1.msra.mxu0 0.0
    %2827 = vmatprep.subr.mxu0 0.0
    %2828 = vmatpush1.msra.mxu0 0.0
    %2829 = vmatprep.subr.mxu0 0.0
    %2830 = vmatpush1.msra.mxu0 0.0
    %2831 = vmatprep.subr.mxu0 0.0
    %2832 = vmatpush1.msra.mxu0 0.0
    %2833 = vmatprep.subr.mxu0 0.0
    %2834 = vmatpush1.msra.mxu0 0.0
    %2835 = vmatprep.subr.mxu0 0.0
    %2836 = vmatpush1.msra.mxu0 0.0
    %2837 = vmatprep.subr.mxu0 0.0
    %2838 = vmatpush1.msra.mxu0 0.0
    %2839 = vmatprep.subr.mxu0 0.0
    %2840 = vmatpush1.msra.mxu0 0.0
    %2841 = vmatprep.subr.mxu0 0.0
    %2842 = vmatpush1.msra.mxu0 0.0
    %2843 = vmatprep.subr.mxu0 0.0
    %2844 = vmatpush1.msra.mxu0 0.0
    %2845 = vmatprep.subr.mxu0 0.0
    %2846 = vmatpush1.msra.mxu0 0.0
    %2847 = vmatprep.subr.mxu0 0.0
    %2848 = vmatpush1.msra.mxu0 0.0
    %2849 = vmatprep.subr.mxu0 0.0
    %2850 = vmatpush1.msra.mxu0 0.0
    %2851 = vmatprep.mubr.f32.mxu0 0.0
    %2852 = vmatmul.mubr.f32.gmra.mrb[0].mxu0 %v2142
    %v2853 = vpop.f32.mrb[0].mxu0
    %v2854 = vadd.f32 %v2783, %v2853
    %v2855 = vpop.f32.mrb[0].mxu0
    %v2856 = vadd.f32 %v2785, %v2855
    %2857 = vdwg.mxu0
    %2858 = vmatprep.subr.mxu0 %v2153
    %2859 = vmatpush1.msra.mxu0 %v2152
    %2860 = vmatprep.subr.mxu0 %v2161
    %2861 = vmatpush1.msra.mxu0 %v2160
    %2862 = vmatprep.subr.mxu0 %v2169
    %2863 = vmatpush1.msra.mxu0 %v2168
    %2864 = vmatprep.subr.mxu0 %v2177
    %2865 = vmatpush1.msra.mxu0 %v2176
    %2866 = vmatprep.subr.mxu0 %v2185
    %2867 = vmatpush1.msra.mxu0 %v2184
    %2868 = vmatprep.subr.mxu0 %v2193
    %2869 = vmatpush1.msra.mxu0 %v2192
    %2870 = vmatprep.subr.mxu0 %v2201
    %2871 = vmatpush1.msra.mxu0 %v2200
    %2872 = vmatprep.subr.mxu0 %v2209
    %2873 = vmatpush1.msra.mxu0 %v2208
    %2874 = vmatprep.subr.mxu0 %v2217
    %2875 = vmatpush1.msra.mxu0 %v2216
    %2876 = vmatprep.subr.mxu0 %v2225
    %2877 = vmatpush1.msra.mxu0 %v2224
    %2878 = vmatprep.subr.mxu0 %v2233
    %2879 = vmatpush1.msra.mxu0 %v2232
    %2880 = vmatprep.subr.mxu0 %v2241
    %2881 = vmatpush1.msra.mxu0 %v2240
    %2882 = vmatprep.subr.mxu0 %v2249
    %2883 = vmatpush1.msra.mxu0 %v2248
    %2884 = vmatprep.subr.mxu0 %v2257
    %2885 = vmatpush1.msra.mxu0 %v2256
    %2886 = vmatprep.subr.mxu0 %v2265
    %2887 = vmatpush1.msra.mxu0 %v2264
    %2888 = vmatprep.subr.mxu0 %v2273
    %2889 = vmatpush1.msra.mxu0 %v2272
    %2890 = vmatprep.subr.mxu0 %v2281
    %2891 = vmatpush1.msra.mxu0 %v2280
    %2892 = vmatprep.subr.mxu0 %v2289
    %2893 = vmatpush1.msra.mxu0 %v2288
    %2894 = vmatprep.subr.mxu0 %v2297
    %2895 = vmatpush1.msra.mxu0 %v2296
    %2896 = vmatprep.subr.mxu0 %v2305
    %2897 = vmatpush1.msra.mxu0 %v2304
    %2898 = vmatprep.subr.mxu0 %v2313
    %2899 = vmatpush1.msra.mxu0 %v2312
    %2900 = vmatprep.subr.mxu0 %v2321
    %2901 = vmatpush1.msra.mxu0 %v2320
    %2902 = vmatprep.subr.mxu0 %v2329
    %2903 = vmatpush1.msra.mxu0 %v2328
    %2904 = vmatprep.subr.mxu0 %v2337
    %2905 = vmatpush1.msra.mxu0 %v2336
    %2906 = vmatprep.subr.mxu0 %v2345
    %2907 = vmatpush1.msra.mxu0 %v2344
    %2908 = vmatprep.subr.mxu0 %v2353
    %2909 = vmatpush1.msra.mxu0 %v2352
    %2910 = vmatprep.subr.mxu0 %v2361
    %2911 = vmatpush1.msra.mxu0 %v2360
    %2912 = vmatprep.subr.mxu0 %v2369
    %2913 = vmatpush1.msra.mxu0 %v2368
    %2914 = vmatprep.subr.mxu0 %v2377
    %2915 = vmatpush1.msra.mxu0 %v2376
    %2916 = vmatprep.subr.mxu0 %v2385
    %2917 = vmatpush1.msra.mxu0 %v2384
    %2918 = vmatprep.subr.mxu0 %v2393
    %2919 = vmatpush1.msra.mxu0 %v2392
    %2920 = vmatprep.subr.mxu0 %v2401
    %2921 = vmatpush1.msra.mxu0 %v2400
    %2922 = vmatprep.mubr.f32.mxu0 %v2141
    %2923 = vmatmul.mubr.f32.gmra.mrb[0].mxu0 %v2147
    %v2924 = vpop.f32.mrb[0].mxu0
    %v2925 = vadd.f32 %v2553, %v2924
    %v2926 = vpop.f32.mrb[0].mxu0
    %v2927 = vadd.f32 %v2557, %v2926
    %2928 = vdwg.mxu0
    %2929 = vmatprep.subr.mxu0 %v2409
    %2930 = vmatpush1.msra.mxu0 %v2408
    %2931 = vmatprep.subr.mxu0 %v2417
    %2932 = vmatpush1.msra.mxu0 %v2416
    %2933 = vmatprep.subr.mxu0 %v2425
    %2934 = vmatpush1.msra.mxu0 %v2424
    %2935 = vmatprep.subr.mxu0 %v2433
    %2936 = vmatpush1.msra.mxu0 %v2432
    %2937 = vmatprep.subr.mxu0 %v2441
    %2938 = vmatpush1.msra.mxu0 %v2440
    %2939 = vmatprep.subr.mxu0 %v2449
    %2940 = vmatpush1.msra.mxu0 %v2448
    %2941 = vmatprep.subr.mxu0 %v2457
    %2942 = vmatpush1.msra.mxu0 %v2456
    %2943 = vmatprep.subr.mxu0 %v2465
    %2944 = vmatpush1.msra.mxu0 %v2464
    %2945 = vmatprep.subr.mxu0 %v2473
    %2946 = vmatpush1.msra.mxu0 %v2472
    %2947 = vmatprep.subr.mxu0 %v2481
    %2948 = vmatpush1.msra.mxu0 %v2480
    %2949 = vmatprep.subr.mxu0 %v2489
    %2950 = vmatpush1.msra.mxu0 %v2488
    %2951 = vmatprep.subr.mxu0 %v2497
    %2952 = vmatpush1.msra.mxu0 %v2496
    %2953 = vmatprep.subr.mxu0 %v2505
    %2954 = vmatpush1.msra.mxu0 %v2504
    %2955 = vmatprep.subr.mxu0 %v2513
    %2956 = vmatpush1.msra.mxu0 %v2512
    %2957 = vmatprep.subr.mxu0 %v2521
    %2958 = vmatpush1.msra.mxu0 %v2520
    %2959 = vmatprep.subr.mxu0 %v2529
    %2960 = vmatpush1.msra.mxu0 %v2528
    %2961 = vmatprep.subr.mxu0 0.0
    %2962 = vmatpush1.msra.mxu0 0.0
    %2963 = vmatprep.subr.mxu0 0.0
    %2964 = vmatpush1.msra.mxu0 0.0
    %2965 = vmatprep.subr.mxu0 0.0
    %2966 = vmatpush1.msra.mxu0 0.0
    %2967 = vmatprep.subr.mxu0 0.0
    %2968 = vmatpush1.msra.mxu0 0.0
    %2969 = vmatprep.subr.mxu0 0.0
    %2970 = vmatpush1.msra.mxu0 0.0
    %2971 = vmatprep.subr.mxu0 0.0
    %2972 = vmatpush1.msra.mxu0 0.0
    %2973 = vmatprep.subr.mxu0 0.0
    %2974 = vmatpush1.msra.mxu0 0.0
    %2975 = vmatprep.subr.mxu0 0.0
    %2976 = vmatpush1.msra.mxu0 0.0
    %2977 = vmatprep.subr.mxu0 0.0
    %2978 = vmatpush1.msra.mxu0 0.0
    %2979 = vmatprep.subr.mxu0 0.0
    %2980 = vmatpush1.msra.mxu0 0.0
    %2981 = vmatprep.subr.mxu0 0.0
    %2982 = vmatpush1.msra.mxu0 0.0
    %2983 = vmatprep.subr.mxu0 0.0
    %2984 = vmatpush1.msra.mxu0 0.0
    %2985 = vmatprep.subr.mxu0 0.0
    %2986 = vmatpush1.msra.mxu0 0.0
    %2987 = vmatprep.subr.mxu0 0.0
    %2988 = vmatpush1.msra.mxu0 0.0
    %2989 = vmatprep.subr.mxu0 0.0
    %2990 = vmatpush1.msra.mxu0 0.0
    %2991 = vmatprep.subr.mxu0 0.0
    %2992 = vmatpush1.msra.mxu0 0.0
    %2993 = vmatprep.mubr.f32.mxu0 0.0
    %2994 = vmatmul.mubr.f32.gmra.mrb[0].mxu0 %v2142
    %v2995 = vpop.f32.mrb[0].mxu0
    %v2996 = vadd.f32 %v2925, %v2995
    %v2997 = vpop.f32.mrb[0].mxu0
    %v2998 = vadd.f32 %v2927, %v2997
    %2999 = vdwg.mxu0
    %3000 = vmatprep.subr.mxu0 %v2155
    %3001 = vmatpush1.msra.mxu0 %v2154
    %3002 = vmatprep.subr.mxu0 %v2163
    %3003 = vmatpush1.msra.mxu0 %v2162
    %3004 = vmatprep.subr.mxu0 %v2171
    %3005 = vmatpush1.msra.mxu0 %v2170
    %3006 = vmatprep.subr.mxu0 %v2179
    %3007 = vmatpush1.msra.mxu0 %v2178
    %3008 = vmatprep.subr.mxu0 %v2187
    %3009 = vmatpush1.msra.mxu0 %v2186
    %3010 = vmatprep.subr.mxu0 %v2195
    %3011 = vmatpush1.msra.mxu0 %v2194
    %3012 = vmatprep.subr.mxu0 %v2203
    %3013 = vmatpush1.msra.mxu0 %v2202
    %3014 = vmatprep.subr.mxu0 %v2211
    %3015 = vmatpush1.msra.mxu0 %v2210
    %3016 = vmatprep.subr.mxu0 %v2219
    %3017 = vmatpush1.msra.mxu0 %v2218
    %3018 = vmatprep.subr.mxu0 %v2227
    %3019 = vmatpush1.msra.mxu0 %v2226
    %3020 = vmatprep.subr.mxu0 %v2235
    %3021 = vmatpush1.msra.mxu0 %v2234
    %3022 = vmatprep.subr.mxu0 %v2243
    %3023 = vmatpush1.msra.mxu0 %v2242
    %3024 = vmatprep.subr.mxu0 %v2251
    %3025 = vmatpush1.msra.mxu0 %v2250
    %3026 = vmatprep.subr.mxu0 %v2259
    %3027 = vmatpush1.msra.mxu0 %v2258
    %3028 = vmatprep.subr.mxu0 %v2267
    %3029 = vmatpush1.msra.mxu0 %v2266
    %3030 = vmatprep.subr.mxu0 %v2275
    %3031 = vmatpush1.msra.mxu0 %v2274
    %3032 = vmatprep.subr.mxu0 %v2283
    %3033 = vmatpush1.msra.mxu0 %v2282
    %3034 = vmatprep.subr.mxu0 %v2291
    %3035 = vmatpush1.msra.mxu0 %v2290
    %3036 = vmatprep.subr.mxu0 %v2299
    %3037 = vmatpush1.msra.mxu0 %v2298
    %3038 = vmatprep.subr.mxu0 %v2307
    %3039 = vmatpush1.msra.mxu0 %v2306
    %3040 = vmatprep.subr.mxu0 %v2315
    %3041 = vmatpush1.msra.mxu0 %v2314
    %3042 = vmatprep.subr.mxu0 %v2323
    %3043 = vmatpush1.msra.mxu0 %v2322
    %3044 = vmatprep.subr.mxu0 %v2331
    %3045 = vmatpush1.msra.mxu0 %v2330
    %3046 = vmatprep.subr.mxu0 %v2339
    %3047 = vmatpush1.msra.mxu0 %v2338
    %3048 = vmatprep.subr.mxu0 %v2347
    %3049 = vmatpush1.msra.mxu0 %v2346
    %3050 = vmatprep.subr.mxu0 %v2355
    %3051 = vmatpush1.msra.mxu0 %v2354
    %3052 = vmatprep.subr.mxu0 %v2363
    %3053 = vmatpush1.msra.mxu0 %v2362
    %3054 = vmatprep.subr.mxu0 %v2371
    %3055 = vmatpush1.msra.mxu0 %v2370
    %3056 = vmatprep.subr.mxu0 %v2379
    %3057 = vmatpush1.msra.mxu0 %v2378
    %3058 = vmatprep.subr.mxu0 %v2387
    %3059 = vmatpush1.msra.mxu0 %v2386
    %3060 = vmatprep.subr.mxu0 %v2395
    %3061 = vmatpush1.msra.mxu0 %v2394
    %3062 = vmatprep.subr.mxu0 %v2403
    %3063 = vmatpush1.msra.mxu0 %v2402
    %3064 = vmatprep.mubr.f32.mxu0 %v2141
    %3065 = vmatmul.mubr.f32.gmra.mrb[0].mxu0 %v2147
    %v3066 = vpop.f32.mrb[0].mxu0
    %v3067 = vadd.f32 %v2561, %v3066
    %v3068 = vpop.f32.mrb[0].mxu0
    %v3069 = vadd.f32 %v2565, %v3068
    %3070 = vdwg.mxu0
    %3071 = vmatprep.subr.mxu0 %v2411
    %3072 = vmatpush1.msra.mxu0 %v2410
    %3073 = vmatprep.subr.mxu0 %v2419
    %3074 = vmatpush1.msra.mxu0 %v2418
    %3075 = vmatprep.subr.mxu0 %v2427
    %3076 = vmatpush1.msra.mxu0 %v2426
    %3077 = vmatprep.subr.mxu0 %v2435
    %3078 = vmatpush1.msra.mxu0 %v2434
    %3079 = vmatprep.subr.mxu0 %v2443
    %3080 = vmatpush1.msra.mxu0 %v2442
    %3081 = vmatprep.subr.mxu0 %v2451
    %3082 = vmatpush1.msra.mxu0 %v2450
    %3083 = vmatprep.subr.mxu0 %v2459
    %3084 = vmatpush1.msra.mxu0 %v2458
    %3085 = vmatprep.subr.mxu0 %v2467
    %3086 = vmatpush1.msra.mxu0 %v2466
    %3087 = vmatprep.subr.mxu0 %v2475
    %3088 = vmatpush1.msra.mxu0 %v2474
    %3089 = vmatprep.subr.mxu0 %v2483
    %3090 = vmatpush1.msra.mxu0 %v2482
    %3091 = vmatprep.subr.mxu0 %v2491
    %3092 = vmatpush1.msra.mxu0 %v2490
    %3093 = vmatprep.subr.mxu0 %v2499
    %3094 = vmatpush1.msra.mxu0 %v2498
    %3095 = vmatprep.subr.mxu0 %v2507
    %3096 = vmatpush1.msra.mxu0 %v2506
    %3097 = vmatprep.subr.mxu0 %v2515
    %3098 = vmatpush1.msra.mxu0 %v2514
    %3099 = vmatprep.subr.mxu0 %v2523
    %3100 = vmatpush1.msra.mxu0 %v2522
    %3101 = vmatprep.subr.mxu0 %v2531
    %3102 = vmatpush1.msra.mxu0 %v2530
    %3103 = vmatprep.subr.mxu0 0.0
    %3104 = vmatpush1.msra.mxu0 0.0
    %3105 = vmatprep.subr.mxu0 0.0
    %3106 = vmatpush1.msra.mxu0 0.0
    %3107 = vmatprep.subr.mxu0 0.0
    %3108 = vmatpush1.msra.mxu0 0.0
    %3109 = vmatprep.subr.mxu0 0.0
    %3110 = vmatpush1.msra.mxu0 0.0
    %3111 = vmatprep.subr.mxu0 0.0
    %3112 = vmatpush1.msra.mxu0 0.0
    %3113 = vmatprep.subr.mxu0 0.0
    %3114 = vmatpush1.msra.mxu0 0.0
    %3115 = vmatprep.subr.mxu0 0.0
    %3116 = vmatpush1.msra.mxu0 0.0
    %3117 = vmatprep.subr.mxu0 0.0
    %3118 = vmatpush1.msra.mxu0 0.0
    %3119 = vmatprep.subr.mxu0 0.0
    %3120 = vmatpush1.msra.mxu0 0.0
    %3121 = vmatprep.subr.mxu0 0.0
    %3122 = vmatpush1.msra.mxu0 0.0
    %3123 = vmatprep.subr.mxu0 0.0
    %3124 = vmatpush1.msra.mxu0 0.0
    %3125 = vmatprep.subr.mxu0 0.0
    %3126 = vmatpush1.msra.mxu0 0.0
    %3127 = vmatprep.subr.mxu0 0.0
    %3128 = vmatpush1.msra.mxu0 0.0
    %3129 = vmatprep.subr.mxu0 0.0
    %3130 = vmatpush1.msra.mxu0 0.0
    %3131 = vmatprep.subr.mxu0 0.0
    %3132 = vmatpush1.msra.mxu0 0.0
    %3133 = vmatprep.subr.mxu0 0.0
    %3134 = vmatpush1.msra.mxu0 0.0
    %3135 = vmatprep.mubr.f32.mxu0 0.0
    %3136 = vmatmul.mubr.f32.gmra.mrb[0].mxu0 %v2142
    %v3137 = vpop.f32.mrb[0].mxu0
    %v3138 = vadd.f32 %v3067, %v3137
    %v3139 = vpop.f32.mrb[0].mxu0
    %v3140 = vadd.f32 %v3069, %v3139
    %3141 = vdwg.mxu0
    %v3142 = vxor.u32 %v2712, 2147483648
    %v3143 = vxor.u32 %v2714, 2147483648
    %v3144 = vmul.f32 %v3142, 1.442695
    %v3145 = vpow.pop %v3144
    %v3146 = vmul.f32 %v3143, 1.442695
    %v3147 = vpow.pop %v3146
    %v3148 = vadd.f32 %v3145, 1.0
    %v3149 = vadd.f32 %v3147, 1.0
    %v3150 = vrcp.pop %v3148
    %v3151 = vmul.f32 1.0, %v3150
    %v3152 = vrcp.pop %v3149
    %v3153 = vmul.f32 1.0, %v3152
    %v3154 = vxor.u32 %v2854, 2147483648
    %v3155 = vxor.u32 %v2856, 2147483648
    %v3156 = vmul.f32 %v3154, 1.442695
    %v3157 = vpow.pop %v3156
    %v3158 = vmul.f32 %v3155, 1.442695
    %v3159 = vpow.pop %v3158
    %v3160 = vadd.f32 %v3157, 1.0
    %v3161 = vadd.f32 %v3159, 1.0
    %v3162 = vrcp.pop %v3160
    %v3163 = vmul.f32 1.0, %v3162
    %v3164 = vrcp.pop %v3161
    %v3165 = vmul.f32 1.0, %v3164
    %v3166 = vtanh.pop %v2996
    %v3167 = vtanh.pop %v2998
    %v3168 = vxor.u32 %v3138, 2147483648
    %v3169 = vxor.u32 %v3140, 2147483648
    %v3170 = vmul.f32 %v3168, 1.442695
    %v3171 = vpow.pop %v3170
    %v3172 = vmul.f32 %v3169, 1.442695
    %v3173 = vpow.pop %v3172
    %v3174 = vadd.f32 %v3171, 1.0
    %v3175 = vadd.f32 %v3173, 1.0
    %v3176 = vrcp.pop %v3174
    %v3177 = vmul.f32 1.0, %v3176
    %v3178 = vrcp.pop %v3175
    %v3179 = vmul.f32 1.0, %v3178
    %v3180 = vmul.f32 %v3163, %v2137
    %v3181 = vmul.f32 %v3165, %v2138
    %v3182 = vmul.f32 %v3151, %v3166
    %v3183 = vmul.f32 %v3153, %v3167
    %v3184 = vadd.f32 %v3180, %v3182
    %v3185 = vadd.f32 %v3181, %v3183
    %v3186 = vtanh.pop %v3184
    %v3187 = vtanh.pop %v3185
    %v3188 = vmul.f32 %v3177, %v3186
    %v3189 = vmul.f32 %v3179, %v3187
    %s3190 = scalar_lea.vmem [#allocation8], 32
    %3191 = vst [vmem:[%s3190] sm:$0xff] %v3188
    %3192 = vst [vmem:[%s3190 + $0x8] sm:$0xff] %v3189
    %s3193 = scalar_lea.vmem [#allocation2], 24
    %v3194 = vld [vmem:[%s3193] sm:$0xff]
    %v3195 = vld [vmem:[#allocation5] sm:$0xff]
    %v3196 = vld [vmem:[#allocation5 + $0x8] sm:$0xff]
    %v3197 = vld [vmem:[#allocation5 + $0x10] sm:$0xff]
    %v3198 = vld [vmem:[#allocation5 + $0x18] sm:$0xff]
    %v3199 = vld [vmem:[#allocation5 + $0x20] sm:$0xff]
    %v3200 = vld [vmem:[#allocation5 + $0x28] sm:$0xff]
    %v3201 = vld [vmem:[#allocation5 + $0x30] sm:$0xff]
    %v3202 = vld [vmem:[#allocation5 + $0x38] sm:$0xff]
    %v3203 = vld [vmem:[#allocation5 + $0x40] sm:$0xff]
    %v3204 = vld [vmem:[#allocation5 + $0x48] sm:$0xff]
    %v3205 = vld [vmem:[#allocation5 + $0x50] sm:$0xff]
    %v3206 = vld [vmem:[#allocation5 + $0x58] sm:$0xff]
    %v3207 = vld [vmem:[#allocation5 + $0x60] sm:$0xff]
    %v3208 = vld [vmem:[#allocation5 + $0x68] sm:$0xff]
    %v3209 = vld [vmem:[#allocation5 + $0x70] sm:$0xff]
    %v3210 = vld [vmem:[#allocation5 + $0x78] sm:$0xff]
    %v3211 = vld [vmem:[#allocation5 + $0x80] sm:$0xff]
    %v3212 = vld [vmem:[#allocation5 + $0x88] sm:$0xff]
    %v3213 = vld [vmem:[#allocation5 + $0x90] sm:$0xff]
    %v3214 = vld [vmem:[#allocation5 + $0x98] sm:$0xff]
    %v3215 = vld [vmem:[#allocation5 + $0xa0] sm:$0xff]
    %v3216 = vld [vmem:[#allocation5 + $0xa8] sm:$0xff]
    %v3217 = vld [vmem:[#allocation5 + $0xb0] sm:$0xff]
    %v3218 = vld [vmem:[#allocation5 + $0xb8] sm:$0xff]
    %v3219 = vld [vmem:[#allocation5 + $0xc0] sm:$0xff]
    %v3220 = vld [vmem:[#allocation5 + $0xc8] sm:$0xff]
    %v3221 = vld [vmem:[#allocation5 + $0xd0] sm:$0xff]
    %v3222 = vld [vmem:[#allocation5 + $0xd8] sm:$0xff]
    %v3223 = vld [vmem:[#allocation5 + $0xe0] sm:$0xff]
    %v3224 = vld [vmem:[#allocation5 + $0xe8] sm:$0xff]
    %v3225 = vld [vmem:[#allocation5 + $0xf0] sm:$0xff]
    %v3226 = vld [vmem:[#allocation5 + $0xf8] sm:$0xff]
    %v3227 = vld [vmem:[#allocation5 + $0x100] sm:$0xff]
    %v3228 = vld [vmem:[#allocation5 + $0x108] sm:$0xff]
    %v3229 = vld [vmem:[#allocation5 + $0x110] sm:$0xff]
    %v3230 = vld [vmem:[#allocation5 + $0x118] sm:$0xff]
    %v3231 = vld [vmem:[#allocation5 + $0x120] sm:$0xff]
    %v3232 = vld [vmem:[#allocation5 + $0x128] sm:$0xff]
    %v3233 = vld [vmem:[#allocation5 + $0x130] sm:$0xff]
    %v3234 = vld [vmem:[#allocation5 + $0x138] sm:$0xff]
    %v3235 = vld [vmem:[#allocation5 + $0x140] sm:$0xff]
    %v3236 = vld [vmem:[#allocation5 + $0x148] sm:$0xff]
    %v3237 = vld [vmem:[#allocation5 + $0x150] sm:$0xff]
    %v3238 = vld [vmem:[#allocation5 + $0x158] sm:$0xff]
    %v3239 = vld [vmem:[#allocation5 + $0x160] sm:$0xff]
    %v3240 = vld [vmem:[#allocation5 + $0x168] sm:$0xff]
    %v3241 = vld [vmem:[#allocation5 + $0x170] sm:$0xff]
    %v3242 = vld [vmem:[#allocation5 + $0x178] sm:$0xff]
    %v3243 = vld [vmem:[#allocation5 + $0x180] sm:$0xff]
    %v3244 = vld [vmem:[#allocation5 + $0x188] sm:$0xff]
    %v3245 = vld [vmem:[#allocation5 + $0x190] sm:$0xff]
    %v3246 = vld [vmem:[#allocation5 + $0x198] sm:$0xff]
    %v3247 = vld [vmem:[#allocation5 + $0x1a0] sm:$0xff]
    %v3248 = vld [vmem:[#allocation5 + $0x1a8] sm:$0xff]
    %v3249 = vld [vmem:[#allocation5 + $0x1b0] sm:$0xff]
    %v3250 = vld [vmem:[#allocation5 + $0x1b8] sm:$0xff]
    %v3251 = vld [vmem:[#allocation5 + $0x1c0] sm:$0xff]
    %v3252 = vld [vmem:[#allocation5 + $0x1c8] sm:$0xff]
    %v3253 = vld [vmem:[#allocation5 + $0x1d0] sm:$0xff]
    %v3254 = vld [vmem:[#allocation5 + $0x1d8] sm:$0xff]
    %v3255 = vld [vmem:[#allocation5 + $0x1e0] sm:$0xff]
    %v3256 = vld [vmem:[#allocation5 + $0x1e8] sm:$0xff]
    %v3257 = vld [vmem:[#allocation5 + $0x1f0] sm:$0xff]
    %v3258 = vld [vmem:[#allocation5 + $0x1f8] sm:$0xff]
    %v3259 = vld [vmem:[#allocation5 + $0x200] sm:$0xff]
    %v3260 = vld [vmem:[#allocation5 + $0x208] sm:$0xff]
    %v3261 = vld [vmem:[#allocation5 + $0x210] sm:$0xff]
    %v3262 = vld [vmem:[#allocation5 + $0x218] sm:$0xff]
    %v3263 = vld [vmem:[#allocation5 + $0x220] sm:$0xff]
    %v3264 = vld [vmem:[#allocation5 + $0x228] sm:$0xff]
    %v3265 = vld [vmem:[#allocation5 + $0x230] sm:$0xff]
    %v3266 = vld [vmem:[#allocation5 + $0x238] sm:$0xff]
    %v3267 = vld [vmem:[#allocation5 + $0x240] sm:$0xff]
    %v3268 = vld [vmem:[#allocation5 + $0x248] sm:$0xff]
    %v3269 = vld [vmem:[#allocation5 + $0x250] sm:$0xff]
    %v3270 = vld [vmem:[#allocation5 + $0x258] sm:$0xff]
    %v3271 = vld [vmem:[#allocation5 + $0x260] sm:$0xff]
    %v3272 = vld [vmem:[#allocation5 + $0x268] sm:$0xff]
    %v3273 = vld [vmem:[#allocation5 + $0x270] sm:$0xff]
    %v3274 = vld [vmem:[#allocation5 + $0x278] sm:$0xff]
    %v3275 = vld [vmem:[#allocation5 + $0x280] sm:$0xff]
    %v3276 = vld [vmem:[#allocation5 + $0x288] sm:$0xff]
    %v3277 = vld [vmem:[#allocation5 + $0x290] sm:$0xff]
    %v3278 = vld [vmem:[#allocation5 + $0x298] sm:$0xff]
    %v3279 = vld [vmem:[#allocation5 + $0x2a0] sm:$0xff]
    %v3280 = vld [vmem:[#allocation5 + $0x2a8] sm:$0xff]
    %v3281 = vld [vmem:[#allocation5 + $0x2b0] sm:$0xff]
    %v3282 = vld [vmem:[#allocation5 + $0x2b8] sm:$0xff]
    %v3283 = vld [vmem:[#allocation5 + $0x2c0] sm:$0xff]
    %v3284 = vld [vmem:[#allocation5 + $0x2c8] sm:$0xff]
    %v3285 = vld [vmem:[#allocation5 + $0x2d0] sm:$0xff]
    %v3286 = vld [vmem:[#allocation5 + $0x2d8] sm:$0xff]
    %v3287 = vld [vmem:[#allocation5 + $0x2e0] sm:$0xff]
    %v3288 = vld [vmem:[#allocation5 + $0x2e8] sm:$0xff]
    %v3289 = vld [vmem:[#allocation5 + $0x2f0] sm:$0xff]
    %v3290 = vld [vmem:[#allocation5 + $0x2f8] sm:$0xff]
    %v3291 = vld [vmem:[#allocation5 + $0x300] sm:$0xff]
    %v3292 = vld [vmem:[#allocation5 + $0x308] sm:$0xff]
    %v3293 = vld [vmem:[#allocation5 + $0x310] sm:$0xff]
    %v3294 = vld [vmem:[#allocation5 + $0x318] sm:$0xff]
    %v3295 = vld [vmem:[#allocation5 + $0x320] sm:$0xff]
    %v3296 = vld [vmem:[#allocation5 + $0x328] sm:$0xff]
    %v3297 = vld [vmem:[#allocation5 + $0x330] sm:$0xff]
    %v3298 = vld [vmem:[#allocation5 + $0x338] sm:$0xff]
    %v3299 = vld [vmem:[#allocation5 + $0x340] sm:$0xff]
    %v3300 = vld [vmem:[#allocation5 + $0x348] sm:$0xff]
    %v3301 = vld [vmem:[#allocation5 + $0x350] sm:$0xff]
    %v3302 = vld [vmem:[#allocation5 + $0x358] sm:$0xff]
    %v3303 = vld [vmem:[#allocation5 + $0x360] sm:$0xff]
    %v3304 = vld [vmem:[#allocation5 + $0x368] sm:$0xff]
    %v3305 = vld [vmem:[#allocation5 + $0x370] sm:$0xff]
    %v3306 = vld [vmem:[#allocation5 + $0x378] sm:$0xff]
    %v3307 = vld [vmem:[#allocation5 + $0x380] sm:$0xff]
    %v3308 = vld [vmem:[#allocation5 + $0x388] sm:$0xff]
    %v3309 = vld [vmem:[#allocation5 + $0x390] sm:$0xff]
    %v3310 = vld [vmem:[#allocation5 + $0x398] sm:$0xff]
    %v3311 = vld [vmem:[#allocation5 + $0x3a0] sm:$0xff]
    %v3312 = vld [vmem:[#allocation5 + $0x3a8] sm:$0xff]
    %v3313 = vld [vmem:[#allocation5 + $0x3b0] sm:$0xff]
    %v3314 = vld [vmem:[#allocation5 + $0x3b8] sm:$0xff]
    %v3315 = vld [vmem:[#allocation5 + $0x3c0] sm:$0xff]
    %v3316 = vld [vmem:[#allocation5 + $0x3c8] sm:$0xff]
    %v3317 = vld [vmem:[#allocation5 + $0x3d0] sm:$0xff]
    %v3318 = vld [vmem:[#allocation5 + $0x3d8] sm:$0xff]
    %v3319 = vld [vmem:[#allocation5 + $0x3e0] sm:$0xff]
    %v3320 = vld [vmem:[#allocation5 + $0x3e8] sm:$0xff]
    %v3321 = vld [vmem:[#allocation5 + $0x3f0] sm:$0xff]
    %v3322 = vld [vmem:[#allocation5 + $0x3f8] sm:$0xff]
    %v3323 = vld [vmem:[#allocation5 + $0x400] sm:$0xff]
    %v3324 = vld [vmem:[#allocation5 + $0x408] sm:$0xff]
    %v3325 = vld [vmem:[#allocation5 + $0x410] sm:$0xff]
    %v3326 = vld [vmem:[#allocation5 + $0x418] sm:$0xff]
    %v3327 = vld [vmem:[#allocation5 + $0x420] sm:$0xff]
    %v3328 = vld [vmem:[#allocation5 + $0x428] sm:$0xff]
    %v3329 = vld [vmem:[#allocation5 + $0x430] sm:$0xff]
    %v3330 = vld [vmem:[#allocation5 + $0x438] sm:$0xff]
    %v3331 = vld [vmem:[#allocation5 + $0x440] sm:$0xff]
    %v3332 = vld [vmem:[#allocation5 + $0x448] sm:$0xff]
    %v3333 = vld [vmem:[#allocation5 + $0x450] sm:$0xff]
    %v3334 = vld [vmem:[#allocation5 + $0x458] sm:$0xff]
    %v3335 = vld [vmem:[#allocation5 + $0x460] sm:$0xff]
    %v3336 = vld [vmem:[#allocation5 + $0x468] sm:$0xff]
    %v3337 = vld [vmem:[#allocation5 + $0x470] sm:$0xff]
    %v3338 = vld [vmem:[#allocation5 + $0x478] sm:$0xff]
    %v3339 = vld [vmem:[#allocation5 + $0x480] sm:$0xff]
    %v3340 = vld [vmem:[#allocation5 + $0x488] sm:$0xff]
    %v3341 = vld [vmem:[#allocation5 + $0x490] sm:$0xff]
    %v3342 = vld [vmem:[#allocation5 + $0x498] sm:$0xff]
    %v3343 = vld [vmem:[#allocation5 + $0x4a0] sm:$0xff]
    %v3344 = vld [vmem:[#allocation5 + $0x4a8] sm:$0xff]
    %v3345 = vld [vmem:[#allocation5 + $0x4b0] sm:$0xff]
    %v3346 = vld [vmem:[#allocation5 + $0x4b8] sm:$0xff]
    %v3347 = vld [vmem:[#allocation5 + $0x4c0] sm:$0xff]
    %v3348 = vld [vmem:[#allocation5 + $0x4c8] sm:$0xff]
    %v3349 = vld [vmem:[#allocation5 + $0x4d0] sm:$0xff]
    %v3350 = vld [vmem:[#allocation5 + $0x4d8] sm:$0xff]
    %v3351 = vld [vmem:[#allocation5 + $0x4e0] sm:$0xff]
    %v3352 = vld [vmem:[#allocation5 + $0x4e8] sm:$0xff]
    %v3353 = vld [vmem:[#allocation5 + $0x4f0] sm:$0xff]
    %v3354 = vld [vmem:[#allocation5 + $0x4f8] sm:$0xff]
    %v3355 = vld [vmem:[#allocation5 + $0x500] sm:$0xff]
    %v3356 = vld [vmem:[#allocation5 + $0x508] sm:$0xff]
    %v3357 = vld [vmem:[#allocation5 + $0x510] sm:$0xff]
    %v3358 = vld [vmem:[#allocation5 + $0x518] sm:$0xff]
    %v3359 = vld [vmem:[#allocation5 + $0x520] sm:$0xff]
    %v3360 = vld [vmem:[#allocation5 + $0x528] sm:$0xff]
    %v3361 = vld [vmem:[#allocation5 + $0x530] sm:$0xff]
    %v3362 = vld [vmem:[#allocation5 + $0x538] sm:$0xff]
    %v3363 = vld [vmem:[#allocation5 + $0x540] sm:$0xff]
    %v3364 = vld [vmem:[#allocation5 + $0x548] sm:$0xff]
    %v3365 = vld [vmem:[#allocation5 + $0x550] sm:$0xff]
    %v3366 = vld [vmem:[#allocation5 + $0x558] sm:$0xff]
    %v3367 = vld [vmem:[#allocation5 + $0x560] sm:$0xff]
    %v3368 = vld [vmem:[#allocation5 + $0x568] sm:$0xff]
    %v3369 = vld [vmem:[#allocation5 + $0x570] sm:$0xff]
    %v3370 = vld [vmem:[#allocation5 + $0x578] sm:$0xff]
    %v3371 = vld [vmem:[#allocation5 + $0x580] sm:$0xff]
    %v3372 = vld [vmem:[#allocation5 + $0x588] sm:$0xff]
    %v3373 = vld [vmem:[#allocation5 + $0x590] sm:$0xff]
    %v3374 = vld [vmem:[#allocation5 + $0x598] sm:$0xff]
    %v3375 = vld [vmem:[#allocation5 + $0x5a0] sm:$0xff]
    %v3376 = vld [vmem:[#allocation5 + $0x5a8] sm:$0xff]
    %v3377 = vld [vmem:[#allocation5 + $0x5b0] sm:$0xff]
    %v3378 = vld [vmem:[#allocation5 + $0x5b8] sm:$0xff]
    %v3379 = vld [vmem:[#allocation5 + $0x5c0] sm:$0xff]
    %v3380 = vld [vmem:[#allocation5 + $0x5c8] sm:$0xff]
    %v3381 = vld [vmem:[#allocation5 + $0x5d0] sm:$0xff]
    %v3382 = vld [vmem:[#allocation5 + $0x5d8] sm:$0xff]
    %v3383 = vld [vmem:[#allocation5 + $0x5e0] sm:$0xff]
    %v3384 = vld [vmem:[#allocation5 + $0x5e8] sm:$0xff]
    %v3385 = vld [vmem:[#allocation5 + $0x5f0] sm:$0xff]
    %v3386 = vld [vmem:[#allocation5 + $0x5f8] sm:$0xff]
    %v3387 = vld [vmem:[#allocation5 + $0x600] sm:$0xff]
    %v3388 = vld [vmem:[#allocation5 + $0x608] sm:$0xff]
    %v3389 = vld [vmem:[#allocation5 + $0x610] sm:$0xff]
    %v3390 = vld [vmem:[#allocation5 + $0x618] sm:$0xff]
    %v3391 = vld [vmem:[#allocation5 + $0x620] sm:$0xff]
    %v3392 = vld [vmem:[#allocation5 + $0x628] sm:$0xff]
    %v3393 = vld [vmem:[#allocation5 + $0x630] sm:$0xff]
    %v3394 = vld [vmem:[#allocation5 + $0x638] sm:$0xff]
    %v3395 = vld [vmem:[#allocation5 + $0x640] sm:$0xff]
    %v3396 = vld [vmem:[#allocation5 + $0x648] sm:$0xff]
    %v3397 = vld [vmem:[#allocation5 + $0x650] sm:$0xff]
    %v3398 = vld [vmem:[#allocation5 + $0x658] sm:$0xff]
    %v3399 = vld [vmem:[#allocation5 + $0x660] sm:$0xff]
    %v3400 = vld [vmem:[#allocation5 + $0x668] sm:$0xff]
    %v3401 = vld [vmem:[#allocation5 + $0x670] sm:$0xff]
    %v3402 = vld [vmem:[#allocation5 + $0x678] sm:$0xff]
    %v3403 = vld [vmem:[#allocation5 + $0x680] sm:$0xff]
    %v3404 = vld [vmem:[#allocation5 + $0x688] sm:$0xff]
    %v3405 = vld [vmem:[#allocation5 + $0x690] sm:$0xff]
    %v3406 = vld [vmem:[#allocation5 + $0x698] sm:$0xff]
    %v3407 = vld [vmem:[#allocation5 + $0x6a0] sm:$0xff]
    %v3408 = vld [vmem:[#allocation5 + $0x6a8] sm:$0xff]
    %v3409 = vld [vmem:[#allocation5 + $0x6b0] sm:$0xff]
    %v3410 = vld [vmem:[#allocation5 + $0x6b8] sm:$0xff]
    %v3411 = vld [vmem:[#allocation5 + $0x6c0] sm:$0xff]
    %v3412 = vld [vmem:[#allocation5 + $0x6c8] sm:$0xff]
    %v3413 = vld [vmem:[#allocation5 + $0x6d0] sm:$0xff]
    %v3414 = vld [vmem:[#allocation5 + $0x6d8] sm:$0xff]
    %v3415 = vld [vmem:[#allocation5 + $0x6e0] sm:$0xff]
    %v3416 = vld [vmem:[#allocation5 + $0x6e8] sm:$0xff]
    %v3417 = vld [vmem:[#allocation5 + $0x6f0] sm:$0xff]
    %v3418 = vld [vmem:[#allocation5 + $0x6f8] sm:$0xff]
    %v3419 = vld [vmem:[#allocation5 + $0x700] sm:$0xff]
    %v3420 = vld [vmem:[#allocation5 + $0x708] sm:$0xff]
    %v3421 = vld [vmem:[#allocation5 + $0x710] sm:$0xff]
    %v3422 = vld [vmem:[#allocation5 + $0x718] sm:$0xff]
    %v3423 = vld [vmem:[#allocation5 + $0x720] sm:$0xff]
    %v3424 = vld [vmem:[#allocation5 + $0x728] sm:$0xff]
    %v3425 = vld [vmem:[#allocation5 + $0x730] sm:$0xff]
    %v3426 = vld [vmem:[#allocation5 + $0x738] sm:$0xff]
    %v3427 = vld [vmem:[#allocation5 + $0x740] sm:$0xff]
    %v3428 = vld [vmem:[#allocation5 + $0x748] sm:$0xff]
    %v3429 = vld [vmem:[#allocation5 + $0x750] sm:$0xff]
    %v3430 = vld [vmem:[#allocation5 + $0x758] sm:$0xff]
    %v3431 = vld [vmem:[#allocation5 + $0x760] sm:$0xff]
    %v3432 = vld [vmem:[#allocation5 + $0x768] sm:$0xff]
    %v3433 = vld [vmem:[#allocation5 + $0x770] sm:$0xff]
    %v3434 = vld [vmem:[#allocation5 + $0x778] sm:$0xff]
    %v3435 = vld [vmem:[#allocation5 + $0x780] sm:$0xff]
    %v3436 = vld [vmem:[#allocation5 + $0x788] sm:$0xff]
    %v3437 = vld [vmem:[#allocation5 + $0x790] sm:$0xff]
    %v3438 = vld [vmem:[#allocation5 + $0x798] sm:$0xff]
    %v3439 = vld [vmem:[#allocation5 + $0x7a0] sm:$0xff]
    %v3440 = vld [vmem:[#allocation5 + $0x7a8] sm:$0xff]
    %v3441 = vld [vmem:[#allocation5 + $0x7b0] sm:$0xff]
    %v3442 = vld [vmem:[#allocation5 + $0x7b8] sm:$0xff]
    %v3443 = vld [vmem:[#allocation5 + $0x7c0] sm:$0xff]
    %v3444 = vld [vmem:[#allocation5 + $0x7c8] sm:$0xff]
    %v3445 = vld [vmem:[#allocation5 + $0x7d0] sm:$0xff]
    %v3446 = vld [vmem:[#allocation5 + $0x7d8] sm:$0xff]
    %v3447 = vld [vmem:[#allocation5 + $0x7e0] sm:$0xff]
    %v3448 = vld [vmem:[#allocation5 + $0x7e8] sm:$0xff]
    %v3449 = vld [vmem:[#allocation5 + $0x7f0] sm:$0xff]
    %v3450 = vld [vmem:[#allocation5 + $0x7f8] sm:$0xff]
    %v3451 = vld [vmem:[#allocation5 + $0x800] sm:$0xff]
    %v3452 = vld [vmem:[#allocation5 + $0x808] sm:$0xff]
    %v3453 = vld [vmem:[#allocation5 + $0x810] sm:$0xff]
    %v3454 = vld [vmem:[#allocation5 + $0x818] sm:$0xff]
    %v3455 = vld [vmem:[#allocation5 + $0x820] sm:$0xff]
    %v3456 = vld [vmem:[#allocation5 + $0x828] sm:$0xff]
    %v3457 = vld [vmem:[#allocation5 + $0x830] sm:$0xff]
    %v3458 = vld [vmem:[#allocation5 + $0x838] sm:$0xff]
    %v3459 = vld [vmem:[#allocation5 + $0x840] sm:$0xff]
    %v3460 = vld [vmem:[#allocation5 + $0x848] sm:$0xff]
    %v3461 = vld [vmem:[#allocation5 + $0x850] sm:$0xff]
    %v3462 = vld [vmem:[#allocation5 + $0x858] sm:$0xff]
    %v3463 = vld [vmem:[#allocation5 + $0x860] sm:$0xff]
    %v3464 = vld [vmem:[#allocation5 + $0x868] sm:$0xff]
    %v3465 = vld [vmem:[#allocation5 + $0x870] sm:$0xff]
    %v3466 = vld [vmem:[#allocation5 + $0x878] sm:$0xff]
    %v3467 = vld [vmem:[#allocation5 + $0x880] sm:$0xff]
    %v3468 = vld [vmem:[#allocation5 + $0x888] sm:$0xff]
    %v3469 = vld [vmem:[#allocation5 + $0x890] sm:$0xff]
    %v3470 = vld [vmem:[#allocation5 + $0x898] sm:$0xff]
    %v3471 = vld [vmem:[#allocation5 + $0x8a0] sm:$0xff]
    %v3472 = vld [vmem:[#allocation5 + $0x8a8] sm:$0xff]
    %v3473 = vld [vmem:[#allocation5 + $0x8b0] sm:$0xff]
    %v3474 = vld [vmem:[#allocation5 + $0x8b8] sm:$0xff]
    %v3475 = vld [vmem:[#allocation5 + $0x8c0] sm:$0xff]
    %v3476 = vld [vmem:[#allocation5 + $0x8c8] sm:$0xff]
    %v3477 = vld [vmem:[#allocation5 + $0x8d0] sm:$0xff]
    %v3478 = vld [vmem:[#allocation5 + $0x8d8] sm:$0xff]
    %v3479 = vld [vmem:[#allocation5 + $0x8e0] sm:$0xff]
    %v3480 = vld [vmem:[#allocation5 + $0x8e8] sm:$0xff]
    %v3481 = vld [vmem:[#allocation5 + $0x8f0] sm:$0xff]
    %v3482 = vld [vmem:[#allocation5 + $0x8f8] sm:$0xff]
    %v3483 = vld [vmem:[#allocation5 + $0x900] sm:$0xff]
    %v3484 = vld [vmem:[#allocation5 + $0x908] sm:$0xff]
    %v3485 = vld [vmem:[#allocation5 + $0x910] sm:$0xff]
    %v3486 = vld [vmem:[#allocation5 + $0x918] sm:$0xff]
    %v3487 = vld [vmem:[#allocation5 + $0x920] sm:$0xff]
    %v3488 = vld [vmem:[#allocation5 + $0x928] sm:$0xff]
    %v3489 = vld [vmem:[#allocation5 + $0x930] sm:$0xff]
    %v3490 = vld [vmem:[#allocation5 + $0x938] sm:$0xff]
    %v3491 = vld [vmem:[#allocation5 + $0x940] sm:$0xff]
    %v3492 = vld [vmem:[#allocation5 + $0x948] sm:$0xff]
    %v3493 = vld [vmem:[#allocation5 + $0x950] sm:$0xff]
    %v3494 = vld [vmem:[#allocation5 + $0x958] sm:$0xff]
    %v3495 = vld [vmem:[#allocation5 + $0x960] sm:$0xff]
    %v3496 = vld [vmem:[#allocation5 + $0x968] sm:$0xff]
    %v3497 = vld [vmem:[#allocation5 + $0x970] sm:$0xff]
    %v3498 = vld [vmem:[#allocation5 + $0x978] sm:$0xff]
    %v3499 = vld [vmem:[#allocation5 + $0x980] sm:$0xff]
    %v3500 = vld [vmem:[#allocation5 + $0x988] sm:$0xff]
    %v3501 = vld [vmem:[#allocation5 + $0x990] sm:$0xff]
    %v3502 = vld [vmem:[#allocation5 + $0x998] sm:$0xff]
    %v3503 = vld [vmem:[#allocation5 + $0x9a0] sm:$0xff]
    %v3504 = vld [vmem:[#allocation5 + $0x9a8] sm:$0xff]
    %v3505 = vld [vmem:[#allocation5 + $0x9b0] sm:$0xff]
    %v3506 = vld [vmem:[#allocation5 + $0x9b8] sm:$0xff]
    %v3507 = vld [vmem:[#allocation5 + $0x9c0] sm:$0xff]
    %v3508 = vld [vmem:[#allocation5 + $0x9c8] sm:$0xff]
    %v3509 = vld [vmem:[#allocation5 + $0x9d0] sm:$0xff]
    %v3510 = vld [vmem:[#allocation5 + $0x9d8] sm:$0xff]
    %v3511 = vld [vmem:[#allocation5 + $0x9e0] sm:$0xff]
    %v3512 = vld [vmem:[#allocation5 + $0x9e8] sm:$0xff]
    %v3513 = vld [vmem:[#allocation5 + $0x9f0] sm:$0xff]
    %v3514 = vld [vmem:[#allocation5 + $0x9f8] sm:$0xff]
    %v3515 = vld [vmem:[#allocation5 + $0xa00] sm:$0xff]
    %v3516 = vld [vmem:[#allocation5 + $0xa08] sm:$0xff]
    %v3517 = vld [vmem:[#allocation5 + $0xa10] sm:$0xff]
    %v3518 = vld [vmem:[#allocation5 + $0xa18] sm:$0xff]
    %v3519 = vld [vmem:[#allocation5 + $0xa20] sm:$0xff]
    %v3520 = vld [vmem:[#allocation5 + $0xa28] sm:$0xff]
    %v3521 = vld [vmem:[#allocation5 + $0xa30] sm:$0xff]
    %v3522 = vld [vmem:[#allocation5 + $0xa38] sm:$0xff]
    %v3523 = vld [vmem:[#allocation5 + $0xa40] sm:$0xff]
    %v3524 = vld [vmem:[#allocation5 + $0xa48] sm:$0xff]
    %v3525 = vld [vmem:[#allocation5 + $0xa50] sm:$0xff]
    %v3526 = vld [vmem:[#allocation5 + $0xa58] sm:$0xff]
    %v3527 = vld [vmem:[#allocation5 + $0xa60] sm:$0xff]
    %v3528 = vld [vmem:[#allocation5 + $0xa68] sm:$0xff]
    %v3529 = vld [vmem:[#allocation5 + $0xa70] sm:$0xff]
    %v3530 = vld [vmem:[#allocation5 + $0xa78] sm:$0xff]
    %v3531 = vld [vmem:[#allocation5 + $0xa80] sm:$0xff]
    %v3532 = vld [vmem:[#allocation5 + $0xa88] sm:$0xff]
    %v3533 = vld [vmem:[#allocation5 + $0xa90] sm:$0xff]
    %v3534 = vld [vmem:[#allocation5 + $0xa98] sm:$0xff]
    %v3535 = vld [vmem:[#allocation5 + $0xaa0] sm:$0xff]
    %v3536 = vld [vmem:[#allocation5 + $0xaa8] sm:$0xff]
    %v3537 = vld [vmem:[#allocation5 + $0xab0] sm:$0xff]
    %v3538 = vld [vmem:[#allocation5 + $0xab8] sm:$0xff]
    %v3539 = vld [vmem:[#allocation5 + $0xac0] sm:$0xff]
    %v3540 = vld [vmem:[#allocation5 + $0xac8] sm:$0xff]
    %v3541 = vld [vmem:[#allocation5 + $0xad0] sm:$0xff]
    %v3542 = vld [vmem:[#allocation5 + $0xad8] sm:$0xff]
    %v3543 = vld [vmem:[#allocation5 + $0xae0] sm:$0xff]
    %v3544 = vld [vmem:[#allocation5 + $0xae8] sm:$0xff]
    %v3545 = vld [vmem:[#allocation5 + $0xaf0] sm:$0xff]
    %v3546 = vld [vmem:[#allocation5 + $0xaf8] sm:$0xff]
    %v3547 = vld [vmem:[#allocation5 + $0xb00] sm:$0xff]
    %v3548 = vld [vmem:[#allocation5 + $0xb08] sm:$0xff]
    %v3549 = vld [vmem:[#allocation5 + $0xb10] sm:$0xff]
    %v3550 = vld [vmem:[#allocation5 + $0xb18] sm:$0xff]
    %v3551 = vld [vmem:[#allocation5 + $0xb20] sm:$0xff]
    %v3552 = vld [vmem:[#allocation5 + $0xb28] sm:$0xff]
    %v3553 = vld [vmem:[#allocation5 + $0xb30] sm:$0xff]
    %v3554 = vld [vmem:[#allocation5 + $0xb38] sm:$0xff]
    %v3555 = vld [vmem:[#allocation5 + $0xb40] sm:$0xff]
    %v3556 = vld [vmem:[#allocation5 + $0xb48] sm:$0xff]
    %v3557 = vld [vmem:[#allocation5 + $0xb50] sm:$0xff]
    %v3558 = vld [vmem:[#allocation5 + $0xb58] sm:$0xff]
    %v3559 = vld [vmem:[#allocation5 + $0xb60] sm:$0xff]
    %v3560 = vld [vmem:[#allocation5 + $0xb68] sm:$0xff]
    %v3561 = vld [vmem:[#allocation5 + $0xb70] sm:$0xff]
    %v3562 = vld [vmem:[#allocation5 + $0xb78] sm:$0xff]
    %v3563 = vld [vmem:[#allocation5 + $0xb80] sm:$0xff]
    %v3564 = vld [vmem:[#allocation5 + $0xb88] sm:$0xff]
    %v3565 = vld [vmem:[#allocation5 + $0xb90] sm:$0xff]
    %v3566 = vld [vmem:[#allocation5 + $0xb98] sm:$0xff]
    %v3567 = vld [vmem:[#allocation5 + $0xba0] sm:$0xff]
    %v3568 = vld [vmem:[#allocation5 + $0xba8] sm:$0xff]
    %v3569 = vld [vmem:[#allocation5 + $0xbb0] sm:$0xff]
    %v3570 = vld [vmem:[#allocation5 + $0xbb8] sm:$0xff]
    %v3571 = vld [vmem:[#allocation5 + $0xbc0] sm:$0xff]
    %v3572 = vld [vmem:[#allocation5 + $0xbc8] sm:$0xff]
    %v3573 = vld [vmem:[#allocation5 + $0xbd0] sm:$0xff]
    %v3574 = vld [vmem:[#allocation5 + $0xbd8] sm:$0xff]
    %v3575 = vld [vmem:[#allocation5 + $0xbe0] sm:$0xff]
    %v3576 = vld [vmem:[#allocation5 + $0xbe8] sm:$0xff]
    %v3577 = vld [vmem:[#allocation5 + $0xbf0] sm:$0xff]
    %v3578 = vld [vmem:[#allocation5 + $0xbf8] sm:$0xff]
    %v3579 = vld [vmem:[#allocation7] sm:$0xff]
    %v3581 = vlaneseq
    %v3582 = vshrl.u32 %v3581, 7
    %v3583 = vsub.s32 0, %v3582
    %v3584 = vrot.slane %v3579, %v3583
    %v3585 = vlaneseq
    %v3586 = vshrl.u32 %v3585, 7
    %v3587 = vsub.s32 1, %v3586
    %v3588 = vrot.slane %v3579, %v3587
    %v3589 = vlaneseq
    %v3590 = vshrl.u32 %v3589, 7
    %v3591 = vsub.s32 2, %v3590
    %v3592 = vrot.slane %v3579, %v3591
    %v3593 = vlaneseq
    %v3594 = vshrl.u32 %v3593, 7
    %v3595 = vsub.s32 3, %v3594
    %v3596 = vrot.slane %v3579, %v3595
    %v3597 = vlaneseq
    %v3598 = vshrl.u32 %v3597, 7
    %v3599 = vsub.s32 4, %v3598
    %v3600 = vrot.slane %v3579, %v3599
    %v3601 = vlaneseq
    %v3602 = vshrl.u32 %v3601, 7
    %v3603 = vsub.s32 5, %v3602
    %v3604 = vrot.slane %v3579, %v3603
    %v3605 = vlaneseq
    %v3606 = vshrl.u32 %v3605, 7
    %v3607 = vsub.s32 6, %v3606
    %v3608 = vrot.slane %v3579, %v3607
    %v3609 = vlaneseq
    %v3610 = vshrl.u32 %v3609, 7
    %v3611 = vsub.s32 7, %v3610
    %v3612 = vrot.slane %v3579, %v3611
    %3621 = vmatprep.subr.mxu0 %v3196
    %3622 = vmatpush1.msra.mxu0 %v3195
    %3623 = vmatprep.subr.mxu0 %v3204
    %3624 = vmatpush1.msra.mxu0 %v3203
    %3625 = vmatprep.subr.mxu0 %v3212
    %3626 = vmatpush1.msra.mxu0 %v3211
    %3627 = vmatprep.subr.mxu0 %v3220
    %3628 = vmatpush1.msra.mxu0 %v3219
    %3629 = vmatprep.subr.mxu0 %v3228
    %3630 = vmatpush1.msra.mxu0 %v3227
    %3631 = vmatprep.subr.mxu0 %v3236
    %3632 = vmatpush1.msra.mxu0 %v3235
    %3633 = vmatprep.subr.mxu0 %v3244
    %3634 = vmatpush1.msra.mxu0 %v3243
    %3635 = vmatprep.subr.mxu0 %v3252
    %3636 = vmatpush1.msra.mxu0 %v3251
    %3637 = vmatprep.subr.mxu0 %v3260
    %3638 = vmatpush1.msra.mxu0 %v3259
    %3639 = vmatprep.subr.mxu0 %v3268
    %3640 = vmatpush1.msra.mxu0 %v3267
    %3641 = vmatprep.subr.mxu0 %v3276
    %3642 = vmatpush1.msra.mxu0 %v3275
    %3643 = vmatprep.subr.mxu0 %v3284
    %3644 = vmatpush1.msra.mxu0 %v3283
    %3645 = vmatprep.subr.mxu0 %v3292
    %3646 = vmatpush1.msra.mxu0 %v3291
    %3647 = vmatprep.subr.mxu0 %v3300
    %3648 = vmatpush1.msra.mxu0 %v3299
    %3649 = vmatprep.subr.mxu0 %v3308
    %3650 = vmatpush1.msra.mxu0 %v3307
    %3651 = vmatprep.subr.mxu0 %v3316
    %3652 = vmatpush1.msra.mxu0 %v3315
    %3653 = vmatprep.subr.mxu0 %v3324
    %3654 = vmatpush1.msra.mxu0 %v3323
    %3655 = vmatprep.subr.mxu0 %v3332
    %3656 = vmatpush1.msra.mxu0 %v3331
    %3657 = vmatprep.subr.mxu0 %v3340
    %3658 = vmatpush1.msra.mxu0 %v3339
    %3659 = vmatprep.subr.mxu0 %v3348
    %3660 = vmatpush1.msra.mxu0 %v3347
    %3661 = vmatprep.subr.mxu0 %v3356
    %3662 = vmatpush1.msra.mxu0 %v3355
    %3663 = vmatprep.subr.mxu0 %v3364
    %3664 = vmatpush1.msra.mxu0 %v3363
    %3665 = vmatprep.subr.mxu0 %v3372
    %3666 = vmatpush1.msra.mxu0 %v3371
    %3667 = vmatprep.subr.mxu0 %v3380
    %3668 = vmatpush1.msra.mxu0 %v3379
    %3669 = vmatprep.subr.mxu0 %v3388
    %3670 = vmatpush1.msra.mxu0 %v3387
    %3671 = vmatprep.subr.mxu0 %v3396
    %3672 = vmatpush1.msra.mxu0 %v3395
    %3673 = vmatprep.subr.mxu0 %v3404
    %3674 = vmatpush1.msra.mxu0 %v3403
    %3675 = vmatprep.subr.mxu0 %v3412
    %3676 = vmatpush1.msra.mxu0 %v3411
    %3677 = vmatprep.subr.mxu0 %v3420
    %3678 = vmatpush1.msra.mxu0 %v3419
    %3679 = vmatprep.subr.mxu0 %v3428
    %3680 = vmatpush1.msra.mxu0 %v3427
    %3681 = vmatprep.subr.mxu0 %v3436
    %3682 = vmatpush1.msra.mxu0 %v3435
    %3683 = vmatprep.subr.mxu0 %v3444
    %3684 = vmatpush1.msra.mxu0 %v3443
    %3685 = vmatprep.mubr.f32.mxu0 %v3188
    %3686 = vmatmul.mubr.f32.gmra.mrb[0].mxu0 %v3194
    %v3687 = vpop.f32.mrb[0].mxu0
    %v3688 = vadd.f32 %v3584, %v3687
    %v3689 = vpop.f32.mrb[0].mxu0
    %v3690 = vadd.f32 %v3588, %v3689
    %3691 = vdwg.mxu0
    %3692 = vmatprep.subr.mxu0 %v3452
    %3693 = vmatpush1.msra.mxu0 %v3451
    %3694 = vmatprep.subr.mxu0 %v3460
    %3695 = vmatpush1.msra.mxu0 %v3459
    %3696 = vmatprep.subr.mxu0 %v3468
    %3697 = vmatpush1.msra.mxu0 %v3467
    %3698 = vmatprep.subr.mxu0 %v3476
    %3699 = vmatpush1.msra.mxu0 %v3475
    %3700 = vmatprep.subr.mxu0 %v3484
    %3701 = vmatpush1.msra.mxu0 %v3483
    %3702 = vmatprep.subr.mxu0 %v3492
    %3703 = vmatpush1.msra.mxu0 %v3491
    %3704 = vmatprep.subr.mxu0 %v3500
    %3705 = vmatpush1.msra.mxu0 %v3499
    %3706 = vmatprep.subr.mxu0 %v3508
    %3707 = vmatpush1.msra.mxu0 %v3507
    %3708 = vmatprep.subr.mxu0 %v3516
    %3709 = vmatpush1.msra.mxu0 %v3515
    %3710 = vmatprep.subr.mxu0 %v3524
    %3711 = vmatpush1.msra.mxu0 %v3523
    %3712 = vmatprep.subr.mxu0 %v3532
    %3713 = vmatpush1.msra.mxu0 %v3531
    %3714 = vmatprep.subr.mxu0 %v3540
    %3715 = vmatpush1.msra.mxu0 %v3539
    %3716 = vmatprep.subr.mxu0 %v3548
    %3717 = vmatpush1.msra.mxu0 %v3547
    %3718 = vmatprep.subr.mxu0 %v3556
    %3719 = vmatpush1.msra.mxu0 %v3555
    %3720 = vmatprep.subr.mxu0 %v3564
    %3721 = vmatpush1.msra.mxu0 %v3563
    %3722 = vmatprep.subr.mxu0 %v3572
    %3723 = vmatpush1.msra.mxu0 %v3571
    %3724 = vmatprep.subr.mxu0 0.0
    %3725 = vmatpush1.msra.mxu0 0.0
    %3726 = vmatprep.subr.mxu0 0.0
    %3727 = vmatpush1.msra.mxu0 0.0
    %3728 = vmatprep.subr.mxu0 0.0
    %3729 = vmatpush1.msra.mxu0 0.0
    %3730 = vmatprep.subr.mxu0 0.0
    %3731 = vmatpush1.msra.mxu0 0.0
    %3732 = vmatprep.subr.mxu0 0.0
    %3733 = vmatpush1.msra.mxu0 0.0
    %3734 = vmatprep.subr.mxu0 0.0
    %3735 = vmatpush1.msra.mxu0 0.0
    %3736 = vmatprep.subr.mxu0 0.0
    %3737 = vmatpush1.msra.mxu0 0.0
    %3738 = vmatprep.subr.mxu0 0.0
    %3739 = vmatpush1.msra.mxu0 0.0
    %3740 = vmatprep.subr.mxu0 0.0
    %3741 = vmatpush1.msra.mxu0 0.0
    %3742 = vmatprep.subr.mxu0 0.0
    %3743 = vmatpush1.msra.mxu0 0.0
    %3744 = vmatprep.subr.mxu0 0.0
    %3745 = vmatpush1.msra.mxu0 0.0
    %3746 = vmatprep.subr.mxu0 0.0
    %3747 = vmatpush1.msra.mxu0 0.0
    %3748 = vmatprep.subr.mxu0 0.0
    %3749 = vmatpush1.msra.mxu0 0.0
    %3750 = vmatprep.subr.mxu0 0.0
    %3751 = vmatpush1.msra.mxu0 0.0
    %3752 = vmatprep.subr.mxu0 0.0
    %3753 = vmatpush1.msra.mxu0 0.0
    %3754 = vmatprep.subr.mxu0 0.0
    %3755 = vmatpush1.msra.mxu0 0.0
    %3756 = vmatprep.mubr.f32.mxu0 0.0
    %3757 = vmatmul.mubr.f32.gmra.mrb[0].mxu0 %v3189
    %v3758 = vpop.f32.mrb[0].mxu0
    %v3759 = vadd.f32 %v3688, %v3758
    %v3760 = vpop.f32.mrb[0].mxu0
    %v3761 = vadd.f32 %v3690, %v3760
    %3762 = vdwg.mxu0
    %3763 = vmatprep.subr.mxu0 %v3198
    %3764 = vmatpush1.msra.mxu0 %v3197
    %3765 = vmatprep.subr.mxu0 %v3206
    %3766 = vmatpush1.msra.mxu0 %v3205
    %3767 = vmatprep.subr.mxu0 %v3214
    %3768 = vmatpush1.msra.mxu0 %v3213
    %3769 = vmatprep.subr.mxu0 %v3222
    %3770 = vmatpush1.msra.mxu0 %v3221
    %3771 = vmatprep.subr.mxu0 %v3230
    %3772 = vmatpush1.msra.mxu0 %v3229
    %3773 = vmatprep.subr.mxu0 %v3238
    %3774 = vmatpush1.msra.mxu0 %v3237
    %3775 = vmatprep.subr.mxu0 %v3246
    %3776 = vmatpush1.msra.mxu0 %v3245
    %3777 = vmatprep.subr.mxu0 %v3254
    %3778 = vmatpush1.msra.mxu0 %v3253
    %3779 = vmatprep.subr.mxu0 %v3262
    %3780 = vmatpush1.msra.mxu0 %v3261
    %3781 = vmatprep.subr.mxu0 %v3270
    %3782 = vmatpush1.msra.mxu0 %v3269
    %3783 = vmatprep.subr.mxu0 %v3278
    %3784 = vmatpush1.msra.mxu0 %v3277
    %3785 = vmatprep.subr.mxu0 %v3286
    %3786 = vmatpush1.msra.mxu0 %v3285
    %3787 = vmatprep.subr.mxu0 %v3294
    %3788 = vmatpush1.msra.mxu0 %v3293
    %3789 = vmatprep.subr.mxu0 %v3302
    %3790 = vmatpush1.msra.mxu0 %v3301
    %3791 = vmatprep.subr.mxu0 %v3310
    %3792 = vmatpush1.msra.mxu0 %v3309
    %3793 = vmatprep.subr.mxu0 %v3318
    %3794 = vmatpush1.msra.mxu0 %v3317
    %3795 = vmatprep.subr.mxu0 %v3326
    %3796 = vmatpush1.msra.mxu0 %v3325
    %3797 = vmatprep.subr.mxu0 %v3334
    %3798 = vmatpush1.msra.mxu0 %v3333
    %3799 = vmatprep.subr.mxu0 %v3342
    %3800 = vmatpush1.msra.mxu0 %v3341
    %3801 = vmatprep.subr.mxu0 %v3350
    %3802 = vmatpush1.msra.mxu0 %v3349
    %3803 = vmatprep.subr.mxu0 %v3358
    %3804 = vmatpush1.msra.mxu0 %v3357
    %3805 = vmatprep.subr.mxu0 %v3366
    %3806 = vmatpush1.msra.mxu0 %v3365
    %3807 = vmatprep.subr.mxu0 %v3374
    %3808 = vmatpush1.msra.mxu0 %v3373
    %3809 = vmatprep.subr.mxu0 %v3382
    %3810 = vmatpush1.msra.mxu0 %v3381
    %3811 = vmatprep.subr.mxu0 %v3390
    %3812 = vmatpush1.msra.mxu0 %v3389
    %3813 = vmatprep.subr.mxu0 %v3398
    %3814 = vmatpush1.msra.mxu0 %v3397
    %3815 = vmatprep.subr.mxu0 %v3406
    %3816 = vmatpush1.msra.mxu0 %v3405
    %3817 = vmatprep.subr.mxu0 %v3414
    %3818 = vmatpush1.msra.mxu0 %v3413
    %3819 = vmatprep.subr.mxu0 %v3422
    %3820 = vmatpush1.msra.mxu0 %v3421
    %3821 = vmatprep.subr.mxu0 %v3430
    %3822 = vmatpush1.msra.mxu0 %v3429
    %3823 = vmatprep.subr.mxu0 %v3438
    %3824 = vmatpush1.msra.mxu0 %v3437
    %3825 = vmatprep.subr.mxu0 %v3446
    %3826 = vmatpush1.msra.mxu0 %v3445
    %3827 = vmatprep.mubr.f32.mxu0 %v3188
    %3828 = vmatmul.mubr.f32.gmra.mrb[0].mxu0 %v3194
    %v3829 = vpop.f32.mrb[0].mxu0
    %v3830 = vadd.f32 %v3592, %v3829
    %v3831 = vpop.f32.mrb[0].mxu0
    %v3832 = vadd.f32 %v3596, %v3831
    %3833 = vdwg.mxu0
    %3834 = vmatprep.subr.mxu0 %v3454
    %3835 = vmatpush1.msra.mxu0 %v3453
    %3836 = vmatprep.subr.mxu0 %v3462
    %3837 = vmatpush1.msra.mxu0 %v3461
    %3838 = vmatprep.subr.mxu0 %v3470
    %3839 = vmatpush1.msra.mxu0 %v3469
    %3840 = vmatprep.subr.mxu0 %v3478
    %3841 = vmatpush1.msra.mxu0 %v3477
    %3842 = vmatprep.subr.mxu0 %v3486
    %3843 = vmatpush1.msra.mxu0 %v3485
    %3844 = vmatprep.subr.mxu0 %v3494
    %3845 = vmatpush1.msra.mxu0 %v3493
    %3846 = vmatprep.subr.mxu0 %v3502
    %3847 = vmatpush1.msra.mxu0 %v3501
    %3848 = vmatprep.subr.mxu0 %v3510
    %3849 = vmatpush1.msra.mxu0 %v3509
    %3850 = vmatprep.subr.mxu0 %v3518
    %3851 = vmatpush1.msra.mxu0 %v3517
    %3852 = vmatprep.subr.mxu0 %v3526
    %3853 = vmatpush1.msra.mxu0 %v3525
    %3854 = vmatprep.subr.mxu0 %v3534
    %3855 = vmatpush1.msra.mxu0 %v3533
    %3856 = vmatprep.subr.mxu0 %v3542
    %3857 = vmatpush1.msra.mxu0 %v3541
    %3858 = vmatprep.subr.mxu0 %v3550
    %3859 = vmatpush1.msra.mxu0 %v3549
    %3860 = vmatprep.subr.mxu0 %v3558
    %3861 = vmatpush1.msra.mxu0 %v3557
    %3862 = vmatprep.subr.mxu0 %v3566
    %3863 = vmatpush1.msra.mxu0 %v3565
    %3864 = vmatprep.subr.mxu0 %v3574
    %3865 = vmatpush1.msra.mxu0 %v3573
    %3866 = vmatprep.subr.mxu0 0.0
    %3867 = vmatpush1.msra.mxu0 0.0
    %3868 = vmatprep.subr.mxu0 0.0
    %3869 = vmatpush1.msra.mxu0 0.0
    %3870 = vmatprep.subr.mxu0 0.0
    %3871 = vmatpush1.msra.mxu0 0.0
    %3872 = vmatprep.subr.mxu0 0.0
    %3873 = vmatpush1.msra.mxu0 0.0
    %3874 = vmatprep.subr.mxu0 0.0
    %3875 = vmatpush1.msra.mxu0 0.0
    %3876 = vmatprep.subr.mxu0 0.0
    %3877 = vmatpush1.msra.mxu0 0.0
    %3878 = vmatprep.subr.mxu0 0.0
    %3879 = vmatpush1.msra.mxu0 0.0
    %3880 = vmatprep.subr.mxu0 0.0
    %3881 = vmatpush1.msra.mxu0 0.0
    %3882 = vmatprep.subr.mxu0 0.0
    %3883 = vmatpush1.msra.mxu0 0.0
    %3884 = vmatprep.subr.mxu0 0.0
    %3885 = vmatpush1.msra.mxu0 0.0
    %3886 = vmatprep.subr.mxu0 0.0
    %3887 = vmatpush1.msra.mxu0 0.0
    %3888 = vmatprep.subr.mxu0 0.0
    %3889 = vmatpush1.msra.mxu0 0.0
    %3890 = vmatprep.subr.mxu0 0.0
    %3891 = vmatpush1.msra.mxu0 0.0
    %3892 = vmatprep.subr.mxu0 0.0
    %3893 = vmatpush1.msra.mxu0 0.0
    %3894 = vmatprep.subr.mxu0 0.0
    %3895 = vmatpush1.msra.mxu0 0.0
    %3896 = vmatprep.subr.mxu0 0.0
    %3897 = vmatpush1.msra.mxu0 0.0
    %3898 = vmatprep.mubr.f32.mxu0 0.0
    %3899 = vmatmul.mubr.f32.gmra.mrb[0].mxu0 %v3189
    %v3900 = vpop.f32.mrb[0].mxu0
    %v3901 = vadd.f32 %v3830, %v3900
    %v3902 = vpop.f32.mrb[0].mxu0
    %v3903 = vadd.f32 %v3832, %v3902
    %3904 = vdwg.mxu0
    %3905 = vmatprep.subr.mxu0 %v3200
    %3906 = vmatpush1.msra.mxu0 %v3199
    %3907 = vmatprep.subr.mxu0 %v3208
    %3908 = vmatpush1.msra.mxu0 %v3207
    %3909 = vmatprep.subr.mxu0 %v3216
    %3910 = vmatpush1.msra.mxu0 %v3215
    %3911 = vmatprep.subr.mxu0 %v3224
    %3912 = vmatpush1.msra.mxu0 %v3223
    %3913 = vmatprep.subr.mxu0 %v3232
    %3914 = vmatpush1.msra.mxu0 %v3231
    %3915 = vmatprep.subr.mxu0 %v3240
    %3916 = vmatpush1.msra.mxu0 %v3239
    %3917 = vmatprep.subr.mxu0 %v3248
    %3918 = vmatpush1.msra.mxu0 %v3247
    %3919 = vmatprep.subr.mxu0 %v3256
    %3920 = vmatpush1.msra.mxu0 %v3255
    %3921 = vmatprep.subr.mxu0 %v3264
    %3922 = vmatpush1.msra.mxu0 %v3263
    %3923 = vmatprep.subr.mxu0 %v3272
    %3924 = vmatpush1.msra.mxu0 %v3271
    %3925 = vmatprep.subr.mxu0 %v3280
    %3926 = vmatpush1.msra.mxu0 %v3279
    %3927 = vmatprep.subr.mxu0 %v3288
    %3928 = vmatpush1.msra.mxu0 %v3287
    %3929 = vmatprep.subr.mxu0 %v3296
    %3930 = vmatpush1.msra.mxu0 %v3295
    %3931 = vmatprep.subr.mxu0 %v3304
    %3932 = vmatpush1.msra.mxu0 %v3303
    %3933 = vmatprep.subr.mxu0 %v3312
    %3934 = vmatpush1.msra.mxu0 %v3311
    %3935 = vmatprep.subr.mxu0 %v3320
    %3936 = vmatpush1.msra.mxu0 %v3319
    %3937 = vmatprep.subr.mxu0 %v3328
    %3938 = vmatpush1.msra.mxu0 %v3327
    %3939 = vmatprep.subr.mxu0 %v3336
    %3940 = vmatpush1.msra.mxu0 %v3335
    %3941 = vmatprep.subr.mxu0 %v3344
    %3942 = vmatpush1.msra.mxu0 %v3343
    %3943 = vmatprep.subr.mxu0 %v3352
    %3944 = vmatpush1.msra.mxu0 %v3351
    %3945 = vmatprep.subr.mxu0 %v3360
    %3946 = vmatpush1.msra.mxu0 %v3359
    %3947 = vmatprep.subr.mxu0 %v3368
    %3948 = vmatpush1.msra.mxu0 %v3367
    %3949 = vmatprep.subr.mxu0 %v3376
    %3950 = vmatpush1.msra.mxu0 %v3375
    %3951 = vmatprep.subr.mxu0 %v3384
    %3952 = vmatpush1.msra.mxu0 %v3383
    %3953 = vmatprep.subr.mxu0 %v3392
    %3954 = vmatpush1.msra.mxu0 %v3391
    %3955 = vmatprep.subr.mxu0 %v3400
    %3956 = vmatpush1.msra.mxu0 %v3399
    %3957 = vmatprep.subr.mxu0 %v3408
    %3958 = vmatpush1.msra.mxu0 %v3407
    %3959 = vmatprep.subr.mxu0 %v3416
    %3960 = vmatpush1.msra.mxu0 %v3415
    %3961 = vmatprep.subr.mxu0 %v3424
    %3962 = vmatpush1.msra.mxu0 %v3423
    %3963 = vmatprep.subr.mxu0 %v3432
    %3964 = vmatpush1.msra.mxu0 %v3431
    %3965 = vmatprep.subr.mxu0 %v3440
    %3966 = vmatpush1.msra.mxu0 %v3439
    %3967 = vmatprep.subr.mxu0 %v3448
    %3968 = vmatpush1.msra.mxu0 %v3447
    %3969 = vmatprep.mubr.f32.mxu0 %v3188
    %3970 = vmatmul.mubr.f32.gmra.mrb[0].mxu0 %v3194
    %v3971 = vpop.f32.mrb[0].mxu0
    %v3972 = vadd.f32 %v3600, %v3971
    %v3973 = vpop.f32.mrb[0].mxu0
    %v3974 = vadd.f32 %v3604, %v3973
    %3975 = vdwg.mxu0
    %3976 = vmatprep.subr.mxu0 %v3456
    %3977 = vmatpush1.msra.mxu0 %v3455
    %3978 = vmatprep.subr.mxu0 %v3464
    %3979 = vmatpush1.msra.mxu0 %v3463
    %3980 = vmatprep.subr.mxu0 %v3472
    %3981 = vmatpush1.msra.mxu0 %v3471
    %3982 = vmatprep.subr.mxu0 %v3480
    %3983 = vmatpush1.msra.mxu0 %v3479
    %3984 = vmatprep.subr.mxu0 %v3488
    %3985 = vmatpush1.msra.mxu0 %v3487
    %3986 = vmatprep.subr.mxu0 %v3496
    %3987 = vmatpush1.msra.mxu0 %v3495
    %3988 = vmatprep.subr.mxu0 %v3504
    %3989 = vmatpush1.msra.mxu0 %v3503
    %3990 = vmatprep.subr.mxu0 %v3512
    %3991 = vmatpush1.msra.mxu0 %v3511
    %3992 = vmatprep.subr.mxu0 %v3520
    %3993 = vmatpush1.msra.mxu0 %v3519
    %3994 = vmatprep.subr.mxu0 %v3528
    %3995 = vmatpush1.msra.mxu0 %v3527
    %3996 = vmatprep.subr.mxu0 %v3536
    %3997 = vmatpush1.msra.mxu0 %v3535
    %3998 = vmatprep.subr.mxu0 %v3544
    %3999 = vmatpush1.msra.mxu0 %v3543
    %4000 = vmatprep.subr.mxu0 %v3552
    %4001 = vmatpush1.msra.mxu0 %v3551
    %4002 = vmatprep.subr.mxu0 %v3560
    %4003 = vmatpush1.msra.mxu0 %v3559
    %4004 = vmatprep.subr.mxu0 %v3568
    %4005 = vmatpush1.msra.mxu0 %v3567
    %4006 = vmatprep.subr.mxu0 %v3576
    %4007 = vmatpush1.msra.mxu0 %v3575
    %4008 = vmatprep.subr.mxu0 0.0
    %4009 = vmatpush1.msra.mxu0 0.0
    %4010 = vmatprep.subr.mxu0 0.0
    %4011 = vmatpush1.msra.mxu0 0.0
    %4012 = vmatprep.subr.mxu0 0.0
    %4013 = vmatpush1.msra.mxu0 0.0
    %4014 = vmatprep.subr.mxu0 0.0
    %4015 = vmatpush1.msra.mxu0 0.0
    %4016 = vmatprep.subr.mxu0 0.0
    %4017 = vmatpush1.msra.mxu0 0.0
    %4018 = vmatprep.subr.mxu0 0.0
    %4019 = vmatpush1.msra.mxu0 0.0
    %4020 = vmatprep.subr.mxu0 0.0
    %4021 = vmatpush1.msra.mxu0 0.0
    %4022 = vmatprep.subr.mxu0 0.0
    %4023 = vmatpush1.msra.mxu0 0.0
    %4024 = vmatprep.subr.mxu0 0.0
    %4025 = vmatpush1.msra.mxu0 0.0
    %4026 = vmatprep.subr.mxu0 0.0
    %4027 = vmatpush1.msra.mxu0 0.0
    %4028 = vmatprep.subr.mxu0 0.0
    %4029 = vmatpush1.msra.mxu0 0.0
    %4030 = vmatprep.subr.mxu0 0.0
    %4031 = vmatpush1.msra.mxu0 0.0
    %4032 = vmatprep.subr.mxu0 0.0
    %4033 = vmatpush1.msra.mxu0 0.0
    %4034 = vmatprep.subr.mxu0 0.0
    %4035 = vmatpush1.msra.mxu0 0.0
    %4036 = vmatprep.subr.mxu0 0.0
    %4037 = vmatpush1.msra.mxu0 0.0
    %4038 = vmatprep.subr.mxu0 0.0
    %4039 = vmatpush1.msra.mxu0 0.0
    %4040 = vmatprep.mubr.f32.mxu0 0.0
    %4041 = vmatmul.mubr.f32.gmra.mrb[0].mxu0 %v3189
    %v4042 = vpop.f32.mrb[0].mxu0
    %v4043 = vadd.f32 %v3972, %v4042
    %v4044 = vpop.f32.mrb[0].mxu0
    %v4045 = vadd.f32 %v3974, %v4044
    %4046 = vdwg.mxu0
    %4047 = vmatprep.subr.mxu0 %v3202
    %4048 = vmatpush1.msra.mxu0 %v3201
    %4049 = vmatprep.subr.mxu0 %v3210
    %4050 = vmatpush1.msra.mxu0 %v3209
    %4051 = vmatprep.subr.mxu0 %v3218
    %4052 = vmatpush1.msra.mxu0 %v3217
    %4053 = vmatprep.subr.mxu0 %v3226
    %4054 = vmatpush1.msra.mxu0 %v3225
    %4055 = vmatprep.subr.mxu0 %v3234
    %4056 = vmatpush1.msra.mxu0 %v3233
    %4057 = vmatprep.subr.mxu0 %v3242
    %4058 = vmatpush1.msra.mxu0 %v3241
    %4059 = vmatprep.subr.mxu0 %v3250
    %4060 = vmatpush1.msra.mxu0 %v3249
    %4061 = vmatprep.subr.mxu0 %v3258
    %4062 = vmatpush1.msra.mxu0 %v3257
    %4063 = vmatprep.subr.mxu0 %v3266
    %4064 = vmatpush1.msra.mxu0 %v3265
    %4065 = vmatprep.subr.mxu0 %v3274
    %4066 = vmatpush1.msra.mxu0 %v3273
    %4067 = vmatprep.subr.mxu0 %v3282
    %4068 = vmatpush1.msra.mxu0 %v3281
    %4069 = vmatprep.subr.mxu0 %v3290
    %4070 = vmatpush1.msra.mxu0 %v3289
    %4071 = vmatprep.subr.mxu0 %v3298
    %4072 = vmatpush1.msra.mxu0 %v3297
    %4073 = vmatprep.subr.mxu0 %v3306
    %4074 = vmatpush1.msra.mxu0 %v3305
    %4075 = vmatprep.subr.mxu0 %v3314
    %4076 = vmatpush1.msra.mxu0 %v3313
    %4077 = vmatprep.subr.mxu0 %v3322
    %4078 = vmatpush1.msra.mxu0 %v3321
    %4079 = vmatprep.subr.mxu0 %v3330
    %4080 = vmatpush1.msra.mxu0 %v3329
    %4081 = vmatprep.subr.mxu0 %v3338
    %4082 = vmatpush1.msra.mxu0 %v3337
    %4083 = vmatprep.subr.mxu0 %v3346
    %4084 = vmatpush1.msra.mxu0 %v3345
    %4085 = vmatprep.subr.mxu0 %v3354
    %4086 = vmatpush1.msra.mxu0 %v3353
    %4087 = vmatprep.subr.mxu0 %v3362
    %4088 = vmatpush1.msra.mxu0 %v3361
    %4089 = vmatprep.subr.mxu0 %v3370
    %4090 = vmatpush1.msra.mxu0 %v3369
    %4091 = vmatprep.subr.mxu0 %v3378
    %4092 = vmatpush1.msra.mxu0 %v3377
    %4093 = vmatprep.subr.mxu0 %v3386
    %4094 = vmatpush1.msra.mxu0 %v3385
    %4095 = vmatprep.subr.mxu0 %v3394
    %4096 = vmatpush1.msra.mxu0 %v3393
    %4097 = vmatprep.subr.mxu0 %v3402
    %4098 = vmatpush1.msra.mxu0 %v3401
    %4099 = vmatprep.subr.mxu0 %v3410
    %4100 = vmatpush1.msra.mxu0 %v3409
    %4101 = vmatprep.subr.mxu0 %v3418
    %4102 = vmatpush1.msra.mxu0 %v3417
    %4103 = vmatprep.subr.mxu0 %v3426
    %4104 = vmatpush1.msra.mxu0 %v3425
    %4105 = vmatprep.subr.mxu0 %v3434
    %4106 = vmatpush1.msra.mxu0 %v3433
    %4107 = vmatprep.subr.mxu0 %v3442
    %4108 = vmatpush1.msra.mxu0 %v3441
    %4109 = vmatprep.subr.mxu0 %v3450
    %4110 = vmatpush1.msra.mxu0 %v3449
    %4111 = vmatprep.mubr.f32.mxu0 %v3188
    %4112 = vmatmul.mubr.f32.gmra.mrb[0].mxu0 %v3194
    %v4113 = vpop.f32.mrb[0].mxu0
    %v4114 = vadd.f32 %v3608, %v4113
    %v4115 = vpop.f32.mrb[0].mxu0
    %v4116 = vadd.f32 %v3612, %v4115
    %4117 = vdwg.mxu0
    %4118 = vmatprep.subr.mxu0 %v3458
    %4119 = vmatpush1.msra.mxu0 %v3457
    %4120 = vmatprep.subr.mxu0 %v3466
    %4121 = vmatpush1.msra.mxu0 %v3465
    %4122 = vmatprep.subr.mxu0 %v3474
    %4123 = vmatpush1.msra.mxu0 %v3473
    %4124 = vmatprep.subr.mxu0 %v3482
    %4125 = vmatpush1.msra.mxu0 %v3481
    %4126 = vmatprep.subr.mxu0 %v3490
    %4127 = vmatpush1.msra.mxu0 %v3489
    %4128 = vmatprep.subr.mxu0 %v3498
    %4129 = vmatpush1.msra.mxu0 %v3497
    %4130 = vmatprep.subr.mxu0 %v3506
    %4131 = vmatpush1.msra.mxu0 %v3505
    %4132 = vmatprep.subr.mxu0 %v3514
    %4133 = vmatpush1.msra.mxu0 %v3513
    %4134 = vmatprep.subr.mxu0 %v3522
    %4135 = vmatpush1.msra.mxu0 %v3521
    %4136 = vmatprep.subr.mxu0 %v3530
    %4137 = vmatpush1.msra.mxu0 %v3529
    %4138 = vmatprep.subr.mxu0 %v3538
    %4139 = vmatpush1.msra.mxu0 %v3537
    %4140 = vmatprep.subr.mxu0 %v3546
    %4141 = vmatpush1.msra.mxu0 %v3545
    %4142 = vmatprep.subr.mxu0 %v3554
    %4143 = vmatpush1.msra.mxu0 %v3553
    %4144 = vmatprep.subr.mxu0 %v3562
    %4145 = vmatpush1.msra.mxu0 %v3561
    %4146 = vmatprep.subr.mxu0 %v3570
    %4147 = vmatpush1.msra.mxu0 %v3569
    %4148 = vmatprep.subr.mxu0 %v3578
    %4149 = vmatpush1.msra.mxu0 %v3577
    %4150 = vmatprep.subr.mxu0 0.0
    %4151 = vmatpush1.msra.mxu0 0.0
    %4152 = vmatprep.subr.mxu0 0.0
    %4153 = vmatpush1.msra.mxu0 0.0
    %4154 = vmatprep.subr.mxu0 0.0
    %4155 = vmatpush1.msra.mxu0 0.0
    %4156 = vmatprep.subr.mxu0 0.0
    %4157 = vmatpush1.msra.mxu0 0.0
    %4158 = vmatprep.subr.mxu0 0.0
    %4159 = vmatpush1.msra.mxu0 0.0
    %4160 = vmatprep.subr.mxu0 0.0
    %4161 = vmatpush1.msra.mxu0 0.0
    %4162 = vmatprep.subr.mxu0 0.0
    %4163 = vmatpush1.msra.mxu0 0.0
    %4164 = vmatprep.subr.mxu0 0.0
    %4165 = vmatpush1.msra.mxu0 0.0
    %4166 = vmatprep.subr.mxu0 0.0
    %4167 = vmatpush1.msra.mxu0 0.0
    %4168 = vmatprep.subr.mxu0 0.0
    %4169 = vmatpush1.msra.mxu0 0.0
    %4170 = vmatprep.subr.mxu0 0.0
    %4171 = vmatpush1.msra.mxu0 0.0
    %4172 = vmatprep.subr.mxu0 0.0
    %4173 = vmatpush1.msra.mxu0 0.0
    %4174 = vmatprep.subr.mxu0 0.0
    %4175 = vmatpush1.msra.mxu0 0.0
    %4176 = vmatprep.subr.mxu0 0.0
    %4177 = vmatpush1.msra.mxu0 0.0
    %4178 = vmatprep.subr.mxu0 0.0
    %4179 = vmatpush1.msra.mxu0 0.0
    %4180 = vmatprep.subr.mxu0 0.0
    %4181 = vmatpush1.msra.mxu0 0.0
    %4182 = vmatprep.mubr.f32.mxu0 0.0
    %4183 = vmatmul.mubr.f32.gmra.mrb[0].mxu0 %v3189
    %v4184 = vpop.f32.mrb[0].mxu0
    %v4185 = vadd.f32 %v4114, %v4184
    %v4186 = vpop.f32.mrb[0].mxu0
    %v4187 = vadd.f32 %v4116, %v4186
    %4188 = vdwg.mxu0
    %v4189 = vxor.u32 %v3759, 2147483648
    %v4190 = vxor.u32 %v3761, 2147483648
    %v4191 = vmul.f32 %v4189, 1.442695
    %v4192 = vpow.pop %v4191
    %v4193 = vmul.f32 %v4190, 1.442695
    %v4194 = vpow.pop %v4193
    %v4195 = vadd.f32 %v4192, 1.0
    %v4196 = vadd.f32 %v4194, 1.0
    %v4197 = vrcp.pop %v4195
    %v4198 = vmul.f32 1.0, %v4197
    %v4199 = vrcp.pop %v4196
    %v4200 = vmul.f32 1.0, %v4199
    %v4201 = vxor.u32 %v3901, 2147483648
    %v4202 = vxor.u32 %v3903, 2147483648
    %v4203 = vmul.f32 %v4201, 1.442695
    %v4204 = vpow.pop %v4203
    %v4205 = vmul.f32 %v4202, 1.442695
    %v4206 = vpow.pop %v4205
    %v4207 = vadd.f32 %v4204, 1.0
    %v4208 = vadd.f32 %v4206, 1.0
    %v4209 = vrcp.pop %v4207
    %v4210 = vmul.f32 1.0, %v4209
    %v4211 = vrcp.pop %v4208
    %v4212 = vmul.f32 1.0, %v4211
    %v4213 = vtanh.pop %v4043
    %v4214 = vtanh.pop %v4045
    %v4215 = vxor.u32 %v4185, 2147483648
    %v4216 = vxor.u32 %v4187, 2147483648
    %v4217 = vmul.f32 %v4215, 1.442695
    %v4218 = vpow.pop %v4217
    %v4219 = vmul.f32 %v4216, 1.442695
    %v4220 = vpow.pop %v4219
    %v4221 = vadd.f32 %v4218, 1.0
    %v4222 = vadd.f32 %v4220, 1.0
    %v4223 = vrcp.pop %v4221
    %v4224 = vmul.f32 1.0, %v4223
    %v4225 = vrcp.pop %v4222
    %v4226 = vmul.f32 1.0, %v4225
    %v4227 = vmul.f32 %v4210, %v3184
    %v4228 = vmul.f32 %v4212, %v3185
    %v4229 = vmul.f32 %v4198, %v4213
    %v4230 = vmul.f32 %v4200, %v4214
    %v4231 = vadd.f32 %v4227, %v4229
    %v4232 = vadd.f32 %v4228, %v4230
    %v4233 = vtanh.pop %v4231
    %v4234 = vtanh.pop %v4232
    %v4235 = vmul.f32 %v4224, %v4233
    %v4236 = vmul.f32 %v4226, %v4234
    %s4237 = scalar_lea.vmem [#allocation8], 48
    %4238 = vst [vmem:[%s4237] sm:$0xff] %v4235
    %4239 = vst [vmem:[%s4237 + $0x8] sm:$0xff] %v4236
    %s4240 = scalar_lea.vmem [#allocation2], 32
    %v4241 = vld [vmem:[%s4240] sm:$0xff]
    %v4242 = vld [vmem:[#allocation5] sm:$0xff]
    %v4243 = vld [vmem:[#allocation5 + $0x8] sm:$0xff]
    %v4244 = vld [vmem:[#allocation5 + $0x10] sm:$0xff]
    %v4245 = vld [vmem:[#allocation5 + $0x18] sm:$0xff]
    %v4246 = vld [vmem:[#allocation5 + $0x20] sm:$0xff]
    %v4247 = vld [vmem:[#allocation5 + $0x28] sm:$0xff]
    %v4248 = vld [vmem:[#allocation5 + $0x30] sm:$0xff]
    %v4249 = vld [vmem:[#allocation5 + $0x38] sm:$0xff]
    %v4250 = vld [vmem:[#allocation5 + $0x40] sm:$0xff]
    %v4251 = vld [vmem:[#allocation5 + $0x48] sm:$0xff]
    %v4252 = vld [vmem:[#allocation5 + $0x50] sm:$0xff]
    %v4253 = vld [vmem:[#allocation5 + $0x58] sm:$0xff]
    %v4254 = vld [vmem:[#allocation5 + $0x60] sm:$0xff]
    %v4255 = vld [vmem:[#allocation5 + $0x68] sm:$0xff]
    %v4256 = vld [vmem:[#allocation5 + $0x70] sm:$0xff]
    %v4257 = vld [vmem:[#allocation5 + $0x78] sm:$0xff]
    %v4258 = vld [vmem:[#allocation5 + $0x80] sm:$0xff]
    %v4259 = vld [vmem:[#allocation5 + $0x88] sm:$0xff]
    %v4260 = vld [vmem:[#allocation5 + $0x90] sm:$0xff]
    %v4261 = vld [vmem:[#allocation5 + $0x98] sm:$0xff]
    %v4262 = vld [vmem:[#allocation5 + $0xa0] sm:$0xff]
    %v4263 = vld [vmem:[#allocation5 + $0xa8] sm:$0xff]
    %v4264 = vld [vmem:[#allocation5 + $0xb0] sm:$0xff]
    %v4265 = vld [vmem:[#allocation5 + $0xb8] sm:$0xff]
    %v4266 = vld [vmem:[#allocation5 + $0xc0] sm:$0xff]
    %v4267 = vld [vmem:[#allocation5 + $0xc8] sm:$0xff]
    %v4268 = vld [vmem:[#allocation5 + $0xd0] sm:$0xff]
    %v4269 = vld [vmem:[#allocation5 + $0xd8] sm:$0xff]
    %v4270 = vld [vmem:[#allocation5 + $0xe0] sm:$0xff]
    %v4271 = vld [vmem:[#allocation5 + $0xe8] sm:$0xff]
    %v4272 = vld [vmem:[#allocation5 + $0xf0] sm:$0xff]
    %v4273 = vld [vmem:[#allocation5 + $0xf8] sm:$0xff]
    %v4274 = vld [vmem:[#allocation5 + $0x100] sm:$0xff]
    %v4275 = vld [vmem:[#allocation5 + $0x108] sm:$0xff]
    %v4276 = vld [vmem:[#allocation5 + $0x110] sm:$0xff]
    %v4277 = vld [vmem:[#allocation5 + $0x118] sm:$0xff]
    %v4278 = vld [vmem:[#allocation5 + $0x120] sm:$0xff]
    %v4279 = vld [vmem:[#allocation5 + $0x128] sm:$0xff]
    %v4280 = vld [vmem:[#allocation5 + $0x130] sm:$0xff]
    %v4281 = vld [vmem:[#allocation5 + $0x138] sm:$0xff]
    %v4282 = vld [vmem:[#allocation5 + $0x140] sm:$0xff]
    %v4283 = vld [vmem:[#allocation5 + $0x148] sm:$0xff]
    %v4284 = vld [vmem:[#allocation5 + $0x150] sm:$0xff]
    %v4285 = vld [vmem:[#allocation5 + $0x158] sm:$0xff]
    %v4286 = vld [vmem:[#allocation5 + $0x160] sm:$0xff]
    %v4287 = vld [vmem:[#allocation5 + $0x168] sm:$0xff]
    %v4288 = vld [vmem:[#allocation5 + $0x170] sm:$0xff]
    %v4289 = vld [vmem:[#allocation5 + $0x178] sm:$0xff]
    %v4290 = vld [vmem:[#allocation5 + $0x180] sm:$0xff]
    %v4291 = vld [vmem:[#allocation5 + $0x188] sm:$0xff]
    %v4292 = vld [vmem:[#allocation5 + $0x190] sm:$0xff]
    %v4293 = vld [vmem:[#allocation5 + $0x198] sm:$0xff]
    %v4294 = vld [vmem:[#allocation5 + $0x1a0] sm:$0xff]
    %v4295 = vld [vmem:[#allocation5 + $0x1a8] sm:$0xff]
    %v4296 = vld [vmem:[#allocation5 + $0x1b0] sm:$0xff]
    %v4297 = vld [vmem:[#allocation5 + $0x1b8] sm:$0xff]
    %v4298 = vld [vmem:[#allocation5 + $0x1c0] sm:$0xff]
    %v4299 = vld [vmem:[#allocation5 + $0x1c8] sm:$0xff]
    %v4300 = vld [vmem:[#allocation5 + $0x1d0] sm:$0xff]
    %v4301 = vld [vmem:[#allocation5 + $0x1d8] sm:$0xff]
    %v4302 = vld [vmem:[#allocation5 + $0x1e0] sm:$0xff]
    %v4303 = vld [vmem:[#allocation5 + $0x1e8] sm:$0xff]
    %v4304 = vld [vmem:[#allocation5 + $0x1f0] sm:$0xff]
    %v4305 = vld [vmem:[#allocation5 + $0x1f8] sm:$0xff]
    %v4306 = vld [vmem:[#allocation5 + $0x200] sm:$0xff]
    %v4307 = vld [vmem:[#allocation5 + $0x208] sm:$0xff]
    %v4308 = vld [vmem:[#allocation5 + $0x210] sm:$0xff]
    %v4309 = vld [vmem:[#allocation5 + $0x218] sm:$0xff]
    %v4310 = vld [vmem:[#allocation5 + $0x220] sm:$0xff]
    %v4311 = vld [vmem:[#allocation5 + $0x228] sm:$0xff]
    %v4312 = vld [vmem:[#allocation5 + $0x230] sm:$0xff]
    %v4313 = vld [vmem:[#allocation5 + $0x238] sm:$0xff]
    %v4314 = vld [vmem:[#allocation5 + $0x240] sm:$0xff]
    %v4315 = vld [vmem:[#allocation5 + $0x248] sm:$0xff]
    %v4316 = vld [vmem:[#allocation5 + $0x250] sm:$0xff]
    %v4317 = vld [vmem:[#allocation5 + $0x258] sm:$0xff]
    %v4318 = vld [vmem:[#allocation5 + $0x260] sm:$0xff]
    %v4319 = vld [vmem:[#allocation5 + $0x268] sm:$0xff]
    %v4320 = vld [vmem:[#allocation5 + $0x270] sm:$0xff]
    %v4321 = vld [vmem:[#allocation5 + $0x278] sm:$0xff]
    %v4322 = vld [vmem:[#allocation5 + $0x280] sm:$0xff]
    %v4323 = vld [vmem:[#allocation5 + $0x288] sm:$0xff]
    %v4324 = vld [vmem:[#allocation5 + $0x290] sm:$0xff]
    %v4325 = vld [vmem:[#allocation5 + $0x298] sm:$0xff]
    %v4326 = vld [vmem:[#allocation5 + $0x2a0] sm:$0xff]
    %v4327 = vld [vmem:[#allocation5 + $0x2a8] sm:$0xff]
    %v4328 = vld [vmem:[#allocation5 + $0x2b0] sm:$0xff]
    %v4329 = vld [vmem:[#allocation5 + $0x2b8] sm:$0xff]
    %v4330 = vld [vmem:[#allocation5 + $0x2c0] sm:$0xff]
    %v4331 = vld [vmem:[#allocation5 + $0x2c8] sm:$0xff]
    %v4332 = vld [vmem:[#allocation5 + $0x2d0] sm:$0xff]
    %v4333 = vld [vmem:[#allocation5 + $0x2d8] sm:$0xff]
    %v4334 = vld [vmem:[#allocation5 + $0x2e0] sm:$0xff]
    %v4335 = vld [vmem:[#allocation5 + $0x2e8] sm:$0xff]
    %v4336 = vld [vmem:[#allocation5 + $0x2f0] sm:$0xff]
    %v4337 = vld [vmem:[#allocation5 + $0x2f8] sm:$0xff]
    %v4338 = vld [vmem:[#allocation5 + $0x300] sm:$0xff]
    %v4339 = vld [vmem:[#allocation5 + $0x308] sm:$0xff]
    %v4340 = vld [vmem:[#allocation5 + $0x310] sm:$0xff]
    %v4341 = vld [vmem:[#allocation5 + $0x318] sm:$0xff]
    %v4342 = vld [vmem:[#allocation5 + $0x320] sm:$0xff]
    %v4343 = vld [vmem:[#allocation5 + $0x328] sm:$0xff]
    %v4344 = vld [vmem:[#allocation5 + $0x330] sm:$0xff]
    %v4345 = vld [vmem:[#allocation5 + $0x338] sm:$0xff]
    %v4346 = vld [vmem:[#allocation5 + $0x340] sm:$0xff]
    %v4347 = vld [vmem:[#allocation5 + $0x348] sm:$0xff]
    %v4348 = vld [vmem:[#allocation5 + $0x350] sm:$0xff]
    %v4349 = vld [vmem:[#allocation5 + $0x358] sm:$0xff]
    %v4350 = vld [vmem:[#allocation5 + $0x360] sm:$0xff]
    %v4351 = vld [vmem:[#allocation5 + $0x368] sm:$0xff]
    %v4352 = vld [vmem:[#allocation5 + $0x370] sm:$0xff]
    %v4353 = vld [vmem:[#allocation5 + $0x378] sm:$0xff]
    %v4354 = vld [vmem:[#allocation5 + $0x380] sm:$0xff]
    %v4355 = vld [vmem:[#allocation5 + $0x388] sm:$0xff]
    %v4356 = vld [vmem:[#allocation5 + $0x390] sm:$0xff]
    %v4357 = vld [vmem:[#allocation5 + $0x398] sm:$0xff]
    %v4358 = vld [vmem:[#allocation5 + $0x3a0] sm:$0xff]
    %v4359 = vld [vmem:[#allocation5 + $0x3a8] sm:$0xff]
    %v4360 = vld [vmem:[#allocation5 + $0x3b0] sm:$0xff]
    %v4361 = vld [vmem:[#allocation5 + $0x3b8] sm:$0xff]
    %v4362 = vld [vmem:[#allocation5 + $0x3c0] sm:$0xff]
    %v4363 = vld [vmem:[#allocation5 + $0x3c8] sm:$0xff]
    %v4364 = vld [vmem:[#allocation5 + $0x3d0] sm:$0xff]
    %v4365 = vld [vmem:[#allocation5 + $0x3d8] sm:$0xff]
    %v4366 = vld [vmem:[#allocation5 + $0x3e0] sm:$0xff]
    %v4367 = vld [vmem:[#allocation5 + $0x3e8] sm:$0xff]
    %v4368 = vld [vmem:[#allocation5 + $0x3f0] sm:$0xff]
    %v4369 = vld [vmem:[#allocation5 + $0x3f8] sm:$0xff]
    %v4370 = vld [vmem:[#allocation5 + $0x400] sm:$0xff]
    %v4371 = vld [vmem:[#allocation5 + $0x408] sm:$0xff]
    %v4372 = vld [vmem:[#allocation5 + $0x410] sm:$0xff]
    %v4373 = vld [vmem:[#allocation5 + $0x418] sm:$0xff]
    %v4374 = vld [vmem:[#allocation5 + $0x420] sm:$0xff]
    %v4375 = vld [vmem:[#allocation5 + $0x428] sm:$0xff]
    %v4376 = vld [vmem:[#allocation5 + $0x430] sm:$0xff]
    %v4377 = vld [vmem:[#allocation5 + $0x438] sm:$0xff]
    %v4378 = vld [vmem:[#allocation5 + $0x440] sm:$0xff]
    %v4379 = vld [vmem:[#allocation5 + $0x448] sm:$0xff]
    %v4380 = vld [vmem:[#allocation5 + $0x450] sm:$0xff]
    %v4381 = vld [vmem:[#allocation5 + $0x458] sm:$0xff]
    %v4382 = vld [vmem:[#allocation5 + $0x460] sm:$0xff]
    %v4383 = vld [vmem:[#allocation5 + $0x468] sm:$0xff]
    %v4384 = vld [vmem:[#allocation5 + $0x470] sm:$0xff]
    %v4385 = vld [vmem:[#allocation5 + $0x478] sm:$0xff]
    %v4386 = vld [vmem:[#allocation5 + $0x480] sm:$0xff]
    %v4387 = vld [vmem:[#allocation5 + $0x488] sm:$0xff]
    %v4388 = vld [vmem:[#allocation5 + $0x490] sm:$0xff]
    %v4389 = vld [vmem:[#allocation5 + $0x498] sm:$0xff]
    %v4390 = vld [vmem:[#allocation5 + $0x4a0] sm:$0xff]
    %v4391 = vld [vmem:[#allocation5 + $0x4a8] sm:$0xff]
    %v4392 = vld [vmem:[#allocation5 + $0x4b0] sm:$0xff]
    %v4393 = vld [vmem:[#allocation5 + $0x4b8] sm:$0xff]
    %v4394 = vld [vmem:[#allocation5 + $0x4c0] sm:$0xff]
    %v4395 = vld [vmem:[#allocation5 + $0x4c8] sm:$0xff]
    %v4396 = vld [vmem:[#allocation5 + $0x4d0] sm:$0xff]
    %v4397 = vld [vmem:[#allocation5 + $0x4d8] sm:$0xff]
    %v4398 = vld [vmem:[#allocation5 + $0x4e0] sm:$0xff]
    %v4399 = vld [vmem:[#allocation5 + $0x4e8] sm:$0xff]
    %v4400 = vld [vmem:[#allocation5 + $0x4f0] sm:$0xff]
    %v4401 = vld [vmem:[#allocation5 + $0x4f8] sm:$0xff]
    %v4402 = vld [vmem:[#allocation5 + $0x500] sm:$0xff]
    %v4403 = vld [vmem:[#allocation5 + $0x508] sm:$0xff]
    %v4404 = vld [vmem:[#allocation5 + $0x510] sm:$0xff]
    %v4405 = vld [vmem:[#allocation5 + $0x518] sm:$0xff]
    %v4406 = vld [vmem:[#allocation5 + $0x520] sm:$0xff]
    %v4407 = vld [vmem:[#allocation5 + $0x528] sm:$0xff]
    %v4408 = vld [vmem:[#allocation5 + $0x530] sm:$0xff]
    %v4409 = vld [vmem:[#allocation5 + $0x538] sm:$0xff]
    %v4410 = vld [vmem:[#allocation5 + $0x540] sm:$0xff]
    %v4411 = vld [vmem:[#allocation5 + $0x548] sm:$0xff]
    %v4412 = vld [vmem:[#allocation5 + $0x550] sm:$0xff]
    %v4413 = vld [vmem:[#allocation5 + $0x558] sm:$0xff]
    %v4414 = vld [vmem:[#allocation5 + $0x560] sm:$0xff]
    %v4415 = vld [vmem:[#allocation5 + $0x568] sm:$0xff]
    %v4416 = vld [vmem:[#allocation5 + $0x570] sm:$0xff]
    %v4417 = vld [vmem:[#allocation5 + $0x578] sm:$0xff]
    %v4418 = vld [vmem:[#allocation5 + $0x580] sm:$0xff]
    %v4419 = vld [vmem:[#allocation5 + $0x588] sm:$0xff]
    %v4420 = vld [vmem:[#allocation5 + $0x590] sm:$0xff]
    %v4421 = vld [vmem:[#allocation5 + $0x598] sm:$0xff]
    %v4422 = vld [vmem:[#allocation5 + $0x5a0] sm:$0xff]
    %v4423 = vld [vmem:[#allocation5 + $0x5a8] sm:$0xff]
    %v4424 = vld [vmem:[#allocation5 + $0x5b0] sm:$0xff]
    %v4425 = vld [vmem:[#allocation5 + $0x5b8] sm:$0xff]
    %v4426 = vld [vmem:[#allocation5 + $0x5c0] sm:$0xff]
    %v4427 = vld [vmem:[#allocation5 + $0x5c8] sm:$0xff]
    %v4428 = vld [vmem:[#allocation5 + $0x5d0] sm:$0xff]
    %v4429 = vld [vmem:[#allocation5 + $0x5d8] sm:$0xff]
    %v4430 = vld [vmem:[#allocation5 + $0x5e0] sm:$0xff]
    %v4431 = vld [vmem:[#allocation5 + $0x5e8] sm:$0xff]
    %v4432 = vld [vmem:[#allocation5 + $0x5f0] sm:$0xff]
    %v4433 = vld [vmem:[#allocation5 + $0x5f8] sm:$0xff]
    %v4434 = vld [vmem:[#allocation5 + $0x600] sm:$0xff]
    %v4435 = vld [vmem:[#allocation5 + $0x608] sm:$0xff]
    %v4436 = vld [vmem:[#allocation5 + $0x610] sm:$0xff]
    %v4437 = vld [vmem:[#allocation5 + $0x618] sm:$0xff]
    %v4438 = vld [vmem:[#allocation5 + $0x620] sm:$0xff]
    %v4439 = vld [vmem:[#allocation5 + $0x628] sm:$0xff]
    %v4440 = vld [vmem:[#allocation5 + $0x630] sm:$0xff]
    %v4441 = vld [vmem:[#allocation5 + $0x638] sm:$0xff]
    %v4442 = vld [vmem:[#allocation5 + $0x640] sm:$0xff]
    %v4443 = vld [vmem:[#allocation5 + $0x648] sm:$0xff]
    %v4444 = vld [vmem:[#allocation5 + $0x650] sm:$0xff]
    %v4445 = vld [vmem:[#allocation5 + $0x658] sm:$0xff]
    %v4446 = vld [vmem:[#allocation5 + $0x660] sm:$0xff]
    %v4447 = vld [vmem:[#allocation5 + $0x668] sm:$0xff]
    %v4448 = vld [vmem:[#allocation5 + $0x670] sm:$0xff]
    %v4449 = vld [vmem:[#allocation5 + $0x678] sm:$0xff]
    %v4450 = vld [vmem:[#allocation5 + $0x680] sm:$0xff]
    %v4451 = vld [vmem:[#allocation5 + $0x688] sm:$0xff]
    %v4452 = vld [vmem:[#allocation5 + $0x690] sm:$0xff]
    %v4453 = vld [vmem:[#allocation5 + $0x698] sm:$0xff]
    %v4454 = vld [vmem:[#allocation5 + $0x6a0] sm:$0xff]
    %v4455 = vld [vmem:[#allocation5 + $0x6a8] sm:$0xff]
    %v4456 = vld [vmem:[#allocation5 + $0x6b0] sm:$0xff]
    %v4457 = vld [vmem:[#allocation5 + $0x6b8] sm:$0xff]
    %v4458 = vld [vmem:[#allocation5 + $0x6c0] sm:$0xff]
    %v4459 = vld [vmem:[#allocation5 + $0x6c8] sm:$0xff]
    %v4460 = vld [vmem:[#allocation5 + $0x6d0] sm:$0xff]
    %v4461 = vld [vmem:[#allocation5 + $0x6d8] sm:$0xff]
    %v4462 = vld [vmem:[#allocation5 + $0x6e0] sm:$0xff]
    %v4463 = vld [vmem:[#allocation5 + $0x6e8] sm:$0xff]
    %v4464 = vld [vmem:[#allocation5 + $0x6f0] sm:$0xff]
    %v4465 = vld [vmem:[#allocation5 + $0x6f8] sm:$0xff]
    %v4466 = vld [vmem:[#allocation5 + $0x700] sm:$0xff]
    %v4467 = vld [vmem:[#allocation5 + $0x708] sm:$0xff]
    %v4468 = vld [vmem:[#allocation5 + $0x710] sm:$0xff]
    %v4469 = vld [vmem:[#allocation5 + $0x718] sm:$0xff]
    %v4470 = vld [vmem:[#allocation5 + $0x720] sm:$0xff]
    %v4471 = vld [vmem:[#allocation5 + $0x728] sm:$0xff]
    %v4472 = vld [vmem:[#allocation5 + $0x730] sm:$0xff]
    %v4473 = vld [vmem:[#allocation5 + $0x738] sm:$0xff]
    %v4474 = vld [vmem:[#allocation5 + $0x740] sm:$0xff]
    %v4475 = vld [vmem:[#allocation5 + $0x748] sm:$0xff]
    %v4476 = vld [vmem:[#allocation5 + $0x750] sm:$0xff]
    %v4477 = vld [vmem:[#allocation5 + $0x758] sm:$0xff]
    %v4478 = vld [vmem:[#allocation5 + $0x760] sm:$0xff]
    %v4479 = vld [vmem:[#allocation5 + $0x768] sm:$0xff]
    %v4480 = vld [vmem:[#allocation5 + $0x770] sm:$0xff]
    %v4481 = vld [vmem:[#allocation5 + $0x778] sm:$0xff]
    %v4482 = vld [vmem:[#allocation5 + $0x780] sm:$0xff]
    %v4483 = vld [vmem:[#allocation5 + $0x788] sm:$0xff]
    %v4484 = vld [vmem:[#allocation5 + $0x790] sm:$0xff]
    %v4485 = vld [vmem:[#allocation5 + $0x798] sm:$0xff]
    %v4486 = vld [vmem:[#allocation5 + $0x7a0] sm:$0xff]
    %v4487 = vld [vmem:[#allocation5 + $0x7a8] sm:$0xff]
    %v4488 = vld [vmem:[#allocation5 + $0x7b0] sm:$0xff]
    %v4489 = vld [vmem:[#allocation5 + $0x7b8] sm:$0xff]
    %v4490 = vld [vmem:[#allocation5 + $0x7c0] sm:$0xff]
    %v4491 = vld [vmem:[#allocation5 + $0x7c8] sm:$0xff]
    %v4492 = vld [vmem:[#allocation5 + $0x7d0] sm:$0xff]
    %v4493 = vld [vmem:[#allocation5 + $0x7d8] sm:$0xff]
    %v4494 = vld [vmem:[#allocation5 + $0x7e0] sm:$0xff]
    %v4495 = vld [vmem:[#allocation5 + $0x7e8] sm:$0xff]
    %v4496 = vld [vmem:[#allocation5 + $0x7f0] sm:$0xff]
    %v4497 = vld [vmem:[#allocation5 + $0x7f8] sm:$0xff]
    %v4498 = vld [vmem:[#allocation5 + $0x800] sm:$0xff]
    %v4499 = vld [vmem:[#allocation5 + $0x808] sm:$0xff]
    %v4500 = vld [vmem:[#allocation5 + $0x810] sm:$0xff]
    %v4501 = vld [vmem:[#allocation5 + $0x818] sm:$0xff]
    %v4502 = vld [vmem:[#allocation5 + $0x820] sm:$0xff]
    %v4503 = vld [vmem:[#allocation5 + $0x828] sm:$0xff]
    %v4504 = vld [vmem:[#allocation5 + $0x830] sm:$0xff]
    %v4505 = vld [vmem:[#allocation5 + $0x838] sm:$0xff]
    %v4506 = vld [vmem:[#allocation5 + $0x840] sm:$0xff]
    %v4507 = vld [vmem:[#allocation5 + $0x848] sm:$0xff]
    %v4508 = vld [vmem:[#allocation5 + $0x850] sm:$0xff]
    %v4509 = vld [vmem:[#allocation5 + $0x858] sm:$0xff]
    %v4510 = vld [vmem:[#allocation5 + $0x860] sm:$0xff]
    %v4511 = vld [vmem:[#allocation5 + $0x868] sm:$0xff]
    %v4512 = vld [vmem:[#allocation5 + $0x870] sm:$0xff]
    %v4513 = vld [vmem:[#allocation5 + $0x878] sm:$0xff]
    %v4514 = vld [vmem:[#allocation5 + $0x880] sm:$0xff]
    %v4515 = vld [vmem:[#allocation5 + $0x888] sm:$0xff]
    %v4516 = vld [vmem:[#allocation5 + $0x890] sm:$0xff]
    %v4517 = vld [vmem:[#allocation5 + $0x898] sm:$0xff]
    %v4518 = vld [vmem:[#allocation5 + $0x8a0] sm:$0xff]
    %v4519 = vld [vmem:[#allocation5 + $0x8a8] sm:$0xff]
    %v4520 = vld [vmem:[#allocation5 + $0x8b0] sm:$0xff]
    %v4521 = vld [vmem:[#allocation5 + $0x8b8] sm:$0xff]
    %v4522 = vld [vmem:[#allocation5 + $0x8c0] sm:$0xff]
    %v4523 = vld [vmem:[#allocation5 + $0x8c8] sm:$0xff]
    %v4524 = vld [vmem:[#allocation5 + $0x8d0] sm:$0xff]
    %v4525 = vld [vmem:[#allocation5 + $0x8d8] sm:$0xff]
    %v4526 = vld [vmem:[#allocation5 + $0x8e0] sm:$0xff]
    %v4527 = vld [vmem:[#allocation5 + $0x8e8] sm:$0xff]
    %v4528 = vld [vmem:[#allocation5 + $0x8f0] sm:$0xff]
    %v4529 = vld [vmem:[#allocation5 + $0x8f8] sm:$0xff]
    %v4530 = vld [vmem:[#allocation5 + $0x900] sm:$0xff]
    %v4531 = vld [vmem:[#allocation5 + $0x908] sm:$0xff]
    %v4532 = vld [vmem:[#allocation5 + $0x910] sm:$0xff]
    %v4533 = vld [vmem:[#allocation5 + $0x918] sm:$0xff]
    %v4534 = vld [vmem:[#allocation5 + $0x920] sm:$0xff]
    %v4535 = vld [vmem:[#allocation5 + $0x928] sm:$0xff]
    %v4536 = vld [vmem:[#allocation5 + $0x930] sm:$0xff]
    %v4537 = vld [vmem:[#allocation5 + $0x938] sm:$0xff]
    %v4538 = vld [vmem:[#allocation5 + $0x940] sm:$0xff]
    %v4539 = vld [vmem:[#allocation5 + $0x948] sm:$0xff]
    %v4540 = vld [vmem:[#allocation5 + $0x950] sm:$0xff]
    %v4541 = vld [vmem:[#allocation5 + $0x958] sm:$0xff]
    %v4542 = vld [vmem:[#allocation5 + $0x960] sm:$0xff]
    %v4543 = vld [vmem:[#allocation5 + $0x968] sm:$0xff]
    %v4544 = vld [vmem:[#allocation5 + $0x970] sm:$0xff]
    %v4545 = vld [vmem:[#allocation5 + $0x978] sm:$0xff]
    %v4546 = vld [vmem:[#allocation5 + $0x980] sm:$0xff]
    %v4547 = vld [vmem:[#allocation5 + $0x988] sm:$0xff]
    %v4548 = vld [vmem:[#allocation5 + $0x990] sm:$0xff]
    %v4549 = vld [vmem:[#allocation5 + $0x998] sm:$0xff]
    %v4550 = vld [vmem:[#allocation5 + $0x9a0] sm:$0xff]
    %v4551 = vld [vmem:[#allocation5 + $0x9a8] sm:$0xff]
    %v4552 = vld [vmem:[#allocation5 + $0x9b0] sm:$0xff]
    %v4553 = vld [vmem:[#allocation5 + $0x9b8] sm:$0xff]
    %v4554 = vld [vmem:[#allocation5 + $0x9c0] sm:$0xff]
    %v4555 = vld [vmem:[#allocation5 + $0x9c8] sm:$0xff]
    %v4556 = vld [vmem:[#allocation5 + $0x9d0] sm:$0xff]
    %v4557 = vld [vmem:[#allocation5 + $0x9d8] sm:$0xff]
    %v4558 = vld [vmem:[#allocation5 + $0x9e0] sm:$0xff]
    %v4559 = vld [vmem:[#allocation5 + $0x9e8] sm:$0xff]
    %v4560 = vld [vmem:[#allocation5 + $0x9f0] sm:$0xff]
    %v4561 = vld [vmem:[#allocation5 + $0x9f8] sm:$0xff]
    %v4562 = vld [vmem:[#allocation5 + $0xa00] sm:$0xff]
    %v4563 = vld [vmem:[#allocation5 + $0xa08] sm:$0xff]
    %v4564 = vld [vmem:[#allocation5 + $0xa10] sm:$0xff]
    %v4565 = vld [vmem:[#allocation5 + $0xa18] sm:$0xff]
    %v4566 = vld [vmem:[#allocation5 + $0xa20] sm:$0xff]
    %v4567 = vld [vmem:[#allocation5 + $0xa28] sm:$0xff]
    %v4568 = vld [vmem:[#allocation5 + $0xa30] sm:$0xff]
    %v4569 = vld [vmem:[#allocation5 + $0xa38] sm:$0xff]
    %v4570 = vld [vmem:[#allocation5 + $0xa40] sm:$0xff]
    %v4571 = vld [vmem:[#allocation5 + $0xa48] sm:$0xff]
    %v4572 = vld [vmem:[#allocation5 + $0xa50] sm:$0xff]
    %v4573 = vld [vmem:[#allocation5 + $0xa58] sm:$0xff]
    %v4574 = vld [vmem:[#allocation5 + $0xa60] sm:$0xff]
    %v4575 = vld [vmem:[#allocation5 + $0xa68] sm:$0xff]
    %v4576 = vld [vmem:[#allocation5 + $0xa70] sm:$0xff]
    %v4577 = vld [vmem:[#allocation5 + $0xa78] sm:$0xff]
    %v4578 = vld [vmem:[#allocation5 + $0xa80] sm:$0xff]
    %v4579 = vld [vmem:[#allocation5 + $0xa88] sm:$0xff]
    %v4580 = vld [vmem:[#allocation5 + $0xa90] sm:$0xff]
    %v4581 = vld [vmem:[#allocation5 + $0xa98] sm:$0xff]
    %v4582 = vld [vmem:[#allocation5 + $0xaa0] sm:$0xff]
    %v4583 = vld [vmem:[#allocation5 + $0xaa8] sm:$0xff]
    %v4584 = vld [vmem:[#allocation5 + $0xab0] sm:$0xff]
    %v4585 = vld [vmem:[#allocation5 + $0xab8] sm:$0xff]
    %v4586 = vld [vmem:[#allocation5 + $0xac0] sm:$0xff]
    %v4587 = vld [vmem:[#allocation5 + $0xac8] sm:$0xff]
    %v4588 = vld [vmem:[#allocation5 + $0xad0] sm:$0xff]
    %v4589 = vld [vmem:[#allocation5 + $0xad8] sm:$0xff]
    %v4590 = vld [vmem:[#allocation5 + $0xae0] sm:$0xff]
    %v4591 = vld [vmem:[#allocation5 + $0xae8] sm:$0xff]
    %v4592 = vld [vmem:[#allocation5 + $0xaf0] sm:$0xff]
    %v4593 = vld [vmem:[#allocation5 + $0xaf8] sm:$0xff]
    %v4594 = vld [vmem:[#allocation5 + $0xb00] sm:$0xff]
    %v4595 = vld [vmem:[#allocation5 + $0xb08] sm:$0xff]
    %v4596 = vld [vmem:[#allocation5 + $0xb10] sm:$0xff]
    %v4597 = vld [vmem:[#allocation5 + $0xb18] sm:$0xff]
    %v4598 = vld [vmem:[#allocation5 + $0xb20] sm:$0xff]
    %v4599 = vld [vmem:[#allocation5 + $0xb28] sm:$0xff]
    %v4600 = vld [vmem:[#allocation5 + $0xb30] sm:$0xff]
    %v4601 = vld [vmem:[#allocation5 + $0xb38] sm:$0xff]
    %v4602 = vld [vmem:[#allocation5 + $0xb40] sm:$0xff]
    %v4603 = vld [vmem:[#allocation5 + $0xb48] sm:$0xff]
    %v4604 = vld [vmem:[#allocation5 + $0xb50] sm:$0xff]
    %v4605 = vld [vmem:[#allocation5 + $0xb58] sm:$0xff]
    %v4606 = vld [vmem:[#allocation5 + $0xb60] sm:$0xff]
    %v4607 = vld [vmem:[#allocation5 + $0xb68] sm:$0xff]
    %v4608 = vld [vmem:[#allocation5 + $0xb70] sm:$0xff]
    %v4609 = vld [vmem:[#allocation5 + $0xb78] sm:$0xff]
    %v4610 = vld [vmem:[#allocation5 + $0xb80] sm:$0xff]
    %v4611 = vld [vmem:[#allocation5 + $0xb88] sm:$0xff]
    %v4612 = vld [vmem:[#allocation5 + $0xb90] sm:$0xff]
    %v4613 = vld [vmem:[#allocation5 + $0xb98] sm:$0xff]
    %v4614 = vld [vmem:[#allocation5 + $0xba0] sm:$0xff]
    %v4615 = vld [vmem:[#allocation5 + $0xba8] sm:$0xff]
    %v4616 = vld [vmem:[#allocation5 + $0xbb0] sm:$0xff]
    %v4617 = vld [vmem:[#allocation5 + $0xbb8] sm:$0xff]
    %v4618 = vld [vmem:[#allocation5 + $0xbc0] sm:$0xff]
    %v4619 = vld [vmem:[#allocation5 + $0xbc8] sm:$0xff]
    %v4620 = vld [vmem:[#allocation5 + $0xbd0] sm:$0xff]
    %v4621 = vld [vmem:[#allocation5 + $0xbd8] sm:$0xff]
    %v4622 = vld [vmem:[#allocation5 + $0xbe0] sm:$0xff]
    %v4623 = vld [vmem:[#allocation5 + $0xbe8] sm:$0xff]
    %v4624 = vld [vmem:[#allocation5 + $0xbf0] sm:$0xff]
    %v4625 = vld [vmem:[#allocation5 + $0xbf8] sm:$0xff]
    %v4626 = vld [vmem:[#allocation7] sm:$0xff]
    %v4628 = vlaneseq
    %v4629 = vshrl.u32 %v4628, 7
    %v4630 = vsub.s32 0, %v4629
    %v4631 = vrot.slane %v4626, %v4630
    %v4632 = vlaneseq
    %v4633 = vshrl.u32 %v4632, 7
    %v4634 = vsub.s32 1, %v4633
    %v4635 = vrot.slane %v4626, %v4634
    %v4636 = vlaneseq
    %v4637 = vshrl.u32 %v4636, 7
    %v4638 = vsub.s32 2, %v4637
    %v4639 = vrot.slane %v4626, %v4638
    %v4640 = vlaneseq
    %v4641 = vshrl.u32 %v4640, 7
    %v4642 = vsub.s32 3, %v4641
    %v4643 = vrot.slane %v4626, %v4642
    %v4644 = vlaneseq
    %v4645 = vshrl.u32 %v4644, 7
    %v4646 = vsub.s32 4, %v4645
    %v4647 = vrot.slane %v4626, %v4646
    %v4648 = vlaneseq
    %v4649 = vshrl.u32 %v4648, 7
    %v4650 = vsub.s32 5, %v4649
    %v4651 = vrot.slane %v4626, %v4650
    %v4652 = vlaneseq
    %v4653 = vshrl.u32 %v4652, 7
    %v4654 = vsub.s32 6, %v4653
    %v4655 = vrot.slane %v4626, %v4654
    %v4656 = vlaneseq
    %v4657 = vshrl.u32 %v4656, 7
    %v4658 = vsub.s32 7, %v4657
    %v4659 = vrot.slane %v4626, %v4658
    %4668 = vmatprep.subr.mxu0 %v4243
    %4669 = vmatpush1.msra.mxu0 %v4242
    %4670 = vmatprep.subr.mxu0 %v4251
    %4671 = vmatpush1.msra.mxu0 %v4250
    %4672 = vmatprep.subr.mxu0 %v4259
    %4673 = vmatpush1.msra.mxu0 %v4258
    %4674 = vmatprep.subr.mxu0 %v4267
    %4675 = vmatpush1.msra.mxu0 %v4266
    %4676 = vmatprep.subr.mxu0 %v4275
    %4677 = vmatpush1.msra.mxu0 %v4274
    %4678 = vmatprep.subr.mxu0 %v4283
    %4679 = vmatpush1.msra.mxu0 %v4282
    %4680 = vmatprep.subr.mxu0 %v4291
    %4681 = vmatpush1.msra.mxu0 %v4290
    %4682 = vmatprep.subr.mxu0 %v4299
    %4683 = vmatpush1.msra.mxu0 %v4298
    %4684 = vmatprep.subr.mxu0 %v4307
    %4685 = vmatpush1.msra.mxu0 %v4306
    %4686 = vmatprep.subr.mxu0 %v4315
    %4687 = vmatpush1.msra.mxu0 %v4314
    %4688 = vmatprep.subr.mxu0 %v4323
    %4689 = vmatpush1.msra.mxu0 %v4322
    %4690 = vmatprep.subr.mxu0 %v4331
    %4691 = vmatpush1.msra.mxu0 %v4330
    %4692 = vmatprep.subr.mxu0 %v4339
    %4693 = vmatpush1.msra.mxu0 %v4338
    %4694 = vmatprep.subr.mxu0 %v4347
    %4695 = vmatpush1.msra.mxu0 %v4346
    %4696 = vmatprep.subr.mxu0 %v4355
    %4697 = vmatpush1.msra.mxu0 %v4354
    %4698 = vmatprep.subr.mxu0 %v4363
    %4699 = vmatpush1.msra.mxu0 %v4362
    %4700 = vmatprep.subr.mxu0 %v4371
    %4701 = vmatpush1.msra.mxu0 %v4370
    %4702 = vmatprep.subr.mxu0 %v4379
    %4703 = vmatpush1.msra.mxu0 %v4378
    %4704 = vmatprep.subr.mxu0 %v4387
    %4705 = vmatpush1.msra.mxu0 %v4386
    %4706 = vmatprep.subr.mxu0 %v4395
    %4707 = vmatpush1.msra.mxu0 %v4394
    %4708 = vmatprep.subr.mxu0 %v4403
    %4709 = vmatpush1.msra.mxu0 %v4402
    %4710 = vmatprep.subr.mxu0 %v4411
    %4711 = vmatpush1.msra.mxu0 %v4410
    %4712 = vmatprep.subr.mxu0 %v4419
    %4713 = vmatpush1.msra.mxu0 %v4418
    %4714 = vmatprep.subr.mxu0 %v4427
    %4715 = vmatpush1.msra.mxu0 %v4426
    %4716 = vmatprep.subr.mxu0 %v4435
    %4717 = vmatpush1.msra.mxu0 %v4434
    %4718 = vmatprep.subr.mxu0 %v4443
    %4719 = vmatpush1.msra.mxu0 %v4442
    %4720 = vmatprep.subr.mxu0 %v4451
    %4721 = vmatpush1.msra.mxu0 %v4450
    %4722 = vmatprep.subr.mxu0 %v4459
    %4723 = vmatpush1.msra.mxu0 %v4458
    %4724 = vmatprep.subr.mxu0 %v4467
    %4725 = vmatpush1.msra.mxu0 %v4466
    %4726 = vmatprep.subr.mxu0 %v4475
    %4727 = vmatpush1.msra.mxu0 %v4474
    %4728 = vmatprep.subr.mxu0 %v4483
    %4729 = vmatpush1.msra.mxu0 %v4482
    %4730 = vmatprep.subr.mxu0 %v4491
    %4731 = vmatpush1.msra.mxu0 %v4490
    %4732 = vmatprep.mubr.f32.mxu0 %v4235
    %4733 = vmatmul.mubr.f32.gmra.mrb[0].mxu0 %v4241
    %v4734 = vpop.f32.mrb[0].mxu0
    %v4735 = vadd.f32 %v4631, %v4734
    %v4736 = vpop.f32.mrb[0].mxu0
    %v4737 = vadd.f32 %v4635, %v4736
    %4738 = vdwg.mxu0
    %4739 = vmatprep.subr.mxu0 %v4499
    %4740 = vmatpush1.msra.mxu0 %v4498
    %4741 = vmatprep.subr.mxu0 %v4507
    %4742 = vmatpush1.msra.mxu0 %v4506
    %4743 = vmatprep.subr.mxu0 %v4515
    %4744 = vmatpush1.msra.mxu0 %v4514
    %4745 = vmatprep.subr.mxu0 %v4523
    %4746 = vmatpush1.msra.mxu0 %v4522
    %4747 = vmatprep.subr.mxu0 %v4531
    %4748 = vmatpush1.msra.mxu0 %v4530
    %4749 = vmatprep.subr.mxu0 %v4539
    %4750 = vmatpush1.msra.mxu0 %v4538
    %4751 = vmatprep.subr.mxu0 %v4547
    %4752 = vmatpush1.msra.mxu0 %v4546
    %4753 = vmatprep.subr.mxu0 %v4555
    %4754 = vmatpush1.msra.mxu0 %v4554
    %4755 = vmatprep.subr.mxu0 %v4563
    %4756 = vmatpush1.msra.mxu0 %v4562
    %4757 = vmatprep.subr.mxu0 %v4571
    %4758 = vmatpush1.msra.mxu0 %v4570
    %4759 = vmatprep.subr.mxu0 %v4579
    %4760 = vmatpush1.msra.mxu0 %v4578
    %4761 = vmatprep.subr.mxu0 %v4587
    %4762 = vmatpush1.msra.mxu0 %v4586
    %4763 = vmatprep.subr.mxu0 %v4595
    %4764 = vmatpush1.msra.mxu0 %v4594
    %4765 = vmatprep.subr.mxu0 %v4603
    %4766 = vmatpush1.msra.mxu0 %v4602
    %4767 = vmatprep.subr.mxu0 %v4611
    %4768 = vmatpush1.msra.mxu0 %v4610
    %4769 = vmatprep.subr.mxu0 %v4619
    %4770 = vmatpush1.msra.mxu0 %v4618
    %4771 = vmatprep.subr.mxu0 0.0
    %4772 = vmatpush1.msra.mxu0 0.0
    %4773 = vmatprep.subr.mxu0 0.0
    %4774 = vmatpush1.msra.mxu0 0.0
    %4775 = vmatprep.subr.mxu0 0.0
    %4776 = vmatpush1.msra.mxu0 0.0
    %4777 = vmatprep.subr.mxu0 0.0
    %4778 = vmatpush1.msra.mxu0 0.0
    %4779 = vmatprep.subr.mxu0 0.0
    %4780 = vmatpush1.msra.mxu0 0.0
    %4781 = vmatprep.subr.mxu0 0.0
    %4782 = vmatpush1.msra.mxu0 0.0
    %4783 = vmatprep.subr.mxu0 0.0
    %4784 = vmatpush1.msra.mxu0 0.0
    %4785 = vmatprep.subr.mxu0 0.0
    %4786 = vmatpush1.msra.mxu0 0.0
    %4787 = vmatprep.subr.mxu0 0.0
    %4788 = vmatpush1.msra.mxu0 0.0
    %4789 = vmatprep.subr.mxu0 0.0
    %4790 = vmatpush1.msra.mxu0 0.0
    %4791 = vmatprep.subr.mxu0 0.0
    %4792 = vmatpush1.msra.mxu0 0.0
    %4793 = vmatprep.subr.mxu0 0.0
    %4794 = vmatpush1.msra.mxu0 0.0
    %4795 = vmatprep.subr.mxu0 0.0
    %4796 = vmatpush1.msra.mxu0 0.0
    %4797 = vmatprep.subr.mxu0 0.0
    %4798 = vmatpush1.msra.mxu0 0.0
    %4799 = vmatprep.subr.mxu0 0.0
    %4800 = vmatpush1.msra.mxu0 0.0
    %4801 = vmatprep.subr.mxu0 0.0
    %4802 = vmatpush1.msra.mxu0 0.0
    %4803 = vmatprep.mubr.f32.mxu0 0.0
    %4804 = vmatmul.mubr.f32.gmra.mrb[0].mxu0 %v4236
    %v4805 = vpop.f32.mrb[0].mxu0
    %v4806 = vadd.f32 %v4735, %v4805
    %v4807 = vpop.f32.mrb[0].mxu0
    %v4808 = vadd.f32 %v4737, %v4807
    %4809 = vdwg.mxu0
    %4810 = vmatprep.subr.mxu0 %v4245
    %4811 = vmatpush1.msra.mxu0 %v4244
    %4812 = vmatprep.subr.mxu0 %v4253
    %4813 = vmatpush1.msra.mxu0 %v4252
    %4814 = vmatprep.subr.mxu0 %v4261
    %4815 = vmatpush1.msra.mxu0 %v4260
    %4816 = vmatprep.subr.mxu0 %v4269
    %4817 = vmatpush1.msra.mxu0 %v4268
    %4818 = vmatprep.subr.mxu0 %v4277
    %4819 = vmatpush1.msra.mxu0 %v4276
    %4820 = vmatprep.subr.mxu0 %v4285
    %4821 = vmatpush1.msra.mxu0 %v4284
    %4822 = vmatprep.subr.mxu0 %v4293
    %4823 = vmatpush1.msra.mxu0 %v4292
    %4824 = vmatprep.subr.mxu0 %v4301
    %4825 = vmatpush1.msra.mxu0 %v4300
    %4826 = vmatprep.subr.mxu0 %v4309
    %4827 = vmatpush1.msra.mxu0 %v4308
    %4828 = vmatprep.subr.mxu0 %v4317
    %4829 = vmatpush1.msra.mxu0 %v4316
    %4830 = vmatprep.subr.mxu0 %v4325
    %4831 = vmatpush1.msra.mxu0 %v4324
    %4832 = vmatprep.subr.mxu0 %v4333
    %4833 = vmatpush1.msra.mxu0 %v4332
    %4834 = vmatprep.subr.mxu0 %v4341
    %4835 = vmatpush1.msra.mxu0 %v4340
    %4836 = vmatprep.subr.mxu0 %v4349
    %4837 = vmatpush1.msra.mxu0 %v4348
    %4838 = vmatprep.subr.mxu0 %v4357
    %4839 = vmatpush1.msra.mxu0 %v4356
    %4840 = vmatprep.subr.mxu0 %v4365
    %4841 = vmatpush1.msra.mxu0 %v4364
    %4842 = vmatprep.subr.mxu0 %v4373
    %4843 = vmatpush1.msra.mxu0 %v4372
    %4844 = vmatprep.subr.mxu0 %v4381
    %4845 = vmatpush1.msra.mxu0 %v4380
    %4846 = vmatprep.subr.mxu0 %v4389
    %4847 = vmatpush1.msra.mxu0 %v4388
    %4848 = vmatprep.subr.mxu0 %v4397
    %4849 = vmatpush1.msra.mxu0 %v4396
    %4850 = vmatprep.subr.mxu0 %v4405
    %4851 = vmatpush1.msra.mxu0 %v4404
    %4852 = vmatprep.subr.mxu0 %v4413
    %4853 = vmatpush1.msra.mxu0 %v4412
    %4854 = vmatprep.subr.mxu0 %v4421
    %4855 = vmatpush1.msra.mxu0 %v4420
    %4856 = vmatprep.subr.mxu0 %v4429
    %4857 = vmatpush1.msra.mxu0 %v4428
    %4858 = vmatprep.subr.mxu0 %v4437
    %4859 = vmatpush1.msra.mxu0 %v4436
    %4860 = vmatprep.subr.mxu0 %v4445
    %4861 = vmatpush1.msra.mxu0 %v4444
    %4862 = vmatprep.subr.mxu0 %v4453
    %4863 = vmatpush1.msra.mxu0 %v4452
    %4864 = vmatprep.subr.mxu0 %v4461
    %4865 = vmatpush1.msra.mxu0 %v4460
    %4866 = vmatprep.subr.mxu0 %v4469
    %4867 = vmatpush1.msra.mxu0 %v4468
    %4868 = vmatprep.subr.mxu0 %v4477
    %4869 = vmatpush1.msra.mxu0 %v4476
    %4870 = vmatprep.subr.mxu0 %v4485
    %4871 = vmatpush1.msra.mxu0 %v4484
    %4872 = vmatprep.subr.mxu0 %v4493
    %4873 = vmatpush1.msra.mxu0 %v4492
    %4874 = vmatprep.mubr.f32.mxu0 %v4235
    %4875 = vmatmul.mubr.f32.gmra.mrb[0].mxu0 %v4241
    %v4876 = vpop.f32.mrb[0].mxu0
    %v4877 = vadd.f32 %v4639, %v4876
    %v4878 = vpop.f32.mrb[0].mxu0
    %v4879 = vadd.f32 %v4643, %v4878
    %4880 = vdwg.mxu0
    %4881 = vmatprep.subr.mxu0 %v4501
    %4882 = vmatpush1.msra.mxu0 %v4500
    %4883 = vmatprep.subr.mxu0 %v4509
    %4884 = vmatpush1.msra.mxu0 %v4508
    %4885 = vmatprep.subr.mxu0 %v4517
    %4886 = vmatpush1.msra.mxu0 %v4516
    %4887 = vmatprep.subr.mxu0 %v4525
    %4888 = vmatpush1.msra.mxu0 %v4524
    %4889 = vmatprep.subr.mxu0 %v4533
    %4890 = vmatpush1.msra.mxu0 %v4532
    %4891 = vmatprep.subr.mxu0 %v4541
    %4892 = vmatpush1.msra.mxu0 %v4540
    %4893 = vmatprep.subr.mxu0 %v4549
    %4894 = vmatpush1.msra.mxu0 %v4548
    %4895 = vmatprep.subr.mxu0 %v4557
    %4896 = vmatpush1.msra.mxu0 %v4556
    %4897 = vmatprep.subr.mxu0 %v4565
    %4898 = vmatpush1.msra.mxu0 %v4564
    %4899 = vmatprep.subr.mxu0 %v4573
    %4900 = vmatpush1.msra.mxu0 %v4572
    %4901 = vmatprep.subr.mxu0 %v4581
    %4902 = vmatpush1.msra.mxu0 %v4580
    %4903 = vmatprep.subr.mxu0 %v4589
    %4904 = vmatpush1.msra.mxu0 %v4588
    %4905 = vmatprep.subr.mxu0 %v4597
    %4906 = vmatpush1.msra.mxu0 %v4596
    %4907 = vmatprep.subr.mxu0 %v4605
    %4908 = vmatpush1.msra.mxu0 %v4604
    %4909 = vmatprep.subr.mxu0 %v4613
    %4910 = vmatpush1.msra.mxu0 %v4612
    %4911 = vmatprep.subr.mxu0 %v4621
    %4912 = vmatpush1.msra.mxu0 %v4620
    %4913 = vmatprep.subr.mxu0 0.0
    %4914 = vmatpush1.msra.mxu0 0.0
    %4915 = vmatprep.subr.mxu0 0.0
    %4916 = vmatpush1.msra.mxu0 0.0
    %4917 = vmatprep.subr.mxu0 0.0
    %4918 = vmatpush1.msra.mxu0 0.0
    %4919 = vmatprep.subr.mxu0 0.0
    %4920 = vmatpush1.msra.mxu0 0.0
    %4921 = vmatprep.subr.mxu0 0.0
    %4922 = vmatpush1.msra.mxu0 0.0
    %4923 = vmatprep.subr.mxu0 0.0
    %4924 = vmatpush1.msra.mxu0 0.0
    %4925 = vmatprep.subr.mxu0 0.0
    %4926 = vmatpush1.msra.mxu0 0.0
    %4927 = vmatprep.subr.mxu0 0.0
    %4928 = vmatpush1.msra.mxu0 0.0
    %4929 = vmatprep.subr.mxu0 0.0
    %4930 = vmatpush1.msra.mxu0 0.0
    %4931 = vmatprep.subr.mxu0 0.0
    %4932 = vmatpush1.msra.mxu0 0.0
    %4933 = vmatprep.subr.mxu0 0.0
    %4934 = vmatpush1.msra.mxu0 0.0
    %4935 = vmatprep.subr.mxu0 0.0
    %4936 = vmatpush1.msra.mxu0 0.0
    %4937 = vmatprep.subr.mxu0 0.0
    %4938 = vmatpush1.msra.mxu0 0.0
    %4939 = vmatprep.subr.mxu0 0.0
    %4940 = vmatpush1.msra.mxu0 0.0
    %4941 = vmatprep.subr.mxu0 0.0
    %4942 = vmatpush1.msra.mxu0 0.0
    %4943 = vmatprep.subr.mxu0 0.0
    %4944 = vmatpush1.msra.mxu0 0.0
    %4945 = vmatprep.mubr.f32.mxu0 0.0
    %4946 = vmatmul.mubr.f32.gmra.mrb[0].mxu0 %v4236
    %v4947 = vpop.f32.mrb[0].mxu0
    %v4948 = vadd.f32 %v4877, %v4947
    %v4949 = vpop.f32.mrb[0].mxu0
    %v4950 = vadd.f32 %v4879, %v4949
    %4951 = vdwg.mxu0
    %4952 = vmatprep.subr.mxu0 %v4247
    %4953 = vmatpush1.msra.mxu0 %v4246
    %4954 = vmatprep.subr.mxu0 %v4255
    %4955 = vmatpush1.msra.mxu0 %v4254
    %4956 = vmatprep.subr.mxu0 %v4263
    %4957 = vmatpush1.msra.mxu0 %v4262
    %4958 = vmatprep.subr.mxu0 %v4271
    %4959 = vmatpush1.msra.mxu0 %v4270
    %4960 = vmatprep.subr.mxu0 %v4279
    %4961 = vmatpush1.msra.mxu0 %v4278
    %4962 = vmatprep.subr.mxu0 %v4287
    %4963 = vmatpush1.msra.mxu0 %v4286
    %4964 = vmatprep.subr.mxu0 %v4295
    %4965 = vmatpush1.msra.mxu0 %v4294
    %4966 = vmatprep.subr.mxu0 %v4303
    %4967 = vmatpush1.msra.mxu0 %v4302
    %4968 = vmatprep.subr.mxu0 %v4311
    %4969 = vmatpush1.msra.mxu0 %v4310
    %4970 = vmatprep.subr.mxu0 %v4319
    %4971 = vmatpush1.msra.mxu0 %v4318
    %4972 = vmatprep.subr.mxu0 %v4327
    %4973 = vmatpush1.msra.mxu0 %v4326
    %4974 = vmatprep.subr.mxu0 %v4335
    %4975 = vmatpush1.msra.mxu0 %v4334
    %4976 = vmatprep.subr.mxu0 %v4343
    %4977 = vmatpush1.msra.mxu0 %v4342
    %4978 = vmatprep.subr.mxu0 %v4351
    %4979 = vmatpush1.msra.mxu0 %v4350
    %4980 = vmatprep.subr.mxu0 %v4359
    %4981 = vmatpush1.msra.mxu0 %v4358
    %4982 = vmatprep.subr.mxu0 %v4367
    %4983 = vmatpush1.msra.mxu0 %v4366
    %4984 = vmatprep.subr.mxu0 %v4375
    %4985 = vmatpush1.msra.mxu0 %v4374
    %4986 = vmatprep.subr.mxu0 %v4383
    %4987 = vmatpush1.msra.mxu0 %v4382
    %4988 = vmatprep.subr.mxu0 %v4391
    %4989 = vmatpush1.msra.mxu0 %v4390
    %4990 = vmatprep.subr.mxu0 %v4399
    %4991 = vmatpush1.msra.mxu0 %v4398
    %4992 = vmatprep.subr.mxu0 %v4407
    %4993 = vmatpush1.msra.mxu0 %v4406
    %4994 = vmatprep.subr.mxu0 %v4415
    %4995 = vmatpush1.msra.mxu0 %v4414
    %4996 = vmatprep.subr.mxu0 %v4423
    %4997 = vmatpush1.msra.mxu0 %v4422
    %4998 = vmatprep.subr.mxu0 %v4431
    %4999 = vmatpush1.msra.mxu0 %v4430
    %5000 = vmatprep.subr.mxu0 %v4439
    %5001 = vmatpush1.msra.mxu0 %v4438
    %5002 = vmatprep.subr.mxu0 %v4447
    %5003 = vmatpush1.msra.mxu0 %v4446
    %5004 = vmatprep.subr.mxu0 %v4455
    %5005 = vmatpush1.msra.mxu0 %v4454
    %5006 = vmatprep.subr.mxu0 %v4463
    %5007 = vmatpush1.msra.mxu0 %v4462
    %5008 = vmatprep.subr.mxu0 %v4471
    %5009 = vmatpush1.msra.mxu0 %v4470
    %5010 = vmatprep.subr.mxu0 %v4479
    %5011 = vmatpush1.msra.mxu0 %v4478
    %5012 = vmatprep.subr.mxu0 %v4487
    %5013 = vmatpush1.msra.mxu0 %v4486
    %5014 = vmatprep.subr.mxu0 %v4495
    %5015 = vmatpush1.msra.mxu0 %v4494
    %5016 = vmatprep.mubr.f32.mxu0 %v4235
    %5017 = vmatmul.mubr.f32.gmra.mrb[0].mxu0 %v4241
    %v5018 = vpop.f32.mrb[0].mxu0
    %v5019 = vadd.f32 %v4647, %v5018
    %v5020 = vpop.f32.mrb[0].mxu0
    %v5021 = vadd.f32 %v4651, %v5020
    %5022 = vdwg.mxu0
    %5023 = vmatprep.subr.mxu0 %v4503
    %5024 = vmatpush1.msra.mxu0 %v4502
    %5025 = vmatprep.subr.mxu0 %v4511
    %5026 = vmatpush1.msra.mxu0 %v4510
    %5027 = vmatprep.subr.mxu0 %v4519
    %5028 = vmatpush1.msra.mxu0 %v4518
    %5029 = vmatprep.subr.mxu0 %v4527
    %5030 = vmatpush1.msra.mxu0 %v4526
    %5031 = vmatprep.subr.mxu0 %v4535
    %5032 = vmatpush1.msra.mxu0 %v4534
    %5033 = vmatprep.subr.mxu0 %v4543
    %5034 = vmatpush1.msra.mxu0 %v4542
    %5035 = vmatprep.subr.mxu0 %v4551
    %5036 = vmatpush1.msra.mxu0 %v4550
    %5037 = vmatprep.subr.mxu0 %v4559
    %5038 = vmatpush1.msra.mxu0 %v4558
    %5039 = vmatprep.subr.mxu0 %v4567
    %5040 = vmatpush1.msra.mxu0 %v4566
    %5041 = vmatprep.subr.mxu0 %v4575
    %5042 = vmatpush1.msra.mxu0 %v4574
    %5043 = vmatprep.subr.mxu0 %v4583
    %5044 = vmatpush1.msra.mxu0 %v4582
    %5045 = vmatprep.subr.mxu0 %v4591
    %5046 = vmatpush1.msra.mxu0 %v4590
    %5047 = vmatprep.subr.mxu0 %v4599
    %5048 = vmatpush1.msra.mxu0 %v4598
    %5049 = vmatprep.subr.mxu0 %v4607
    %5050 = vmatpush1.msra.mxu0 %v4606
    %5051 = vmatprep.subr.mxu0 %v4615
    %5052 = vmatpush1.msra.mxu0 %v4614
    %5053 = vmatprep.subr.mxu0 %v4623
    %5054 = vmatpush1.msra.mxu0 %v4622
    %5055 = vmatprep.subr.mxu0 0.0
    %5056 = vmatpush1.msra.mxu0 0.0
    %5057 = vmatprep.subr.mxu0 0.0
    %5058 = vmatpush1.msra.mxu0 0.0
    %5059 = vmatprep.subr.mxu0 0.0
    %5060 = vmatpush1.msra.mxu0 0.0
    %5061 = vmatprep.subr.mxu0 0.0
    %5062 = vmatpush1.msra.mxu0 0.0
    %5063 = vmatprep.subr.mxu0 0.0
    %5064 = vmatpush1.msra.mxu0 0.0
    %5065 = vmatprep.subr.mxu0 0.0
    %5066 = vmatpush1.msra.mxu0 0.0
    %5067 = vmatprep.subr.mxu0 0.0
    %5068 = vmatpush1.msra.mxu0 0.0
    %5069 = vmatprep.subr.mxu0 0.0
    %5070 = vmatpush1.msra.mxu0 0.0
    %5071 = vmatprep.subr.mxu0 0.0
    %5072 = vmatpush1.msra.mxu0 0.0
    %5073 = vmatprep.subr.mxu0 0.0
    %5074 = vmatpush1.msra.mxu0 0.0
    %5075 = vmatprep.subr.mxu0 0.0
    %5076 = vmatpush1.msra.mxu0 0.0
    %5077 = vmatprep.subr.mxu0 0.0
    %5078 = vmatpush1.msra.mxu0 0.0
    %5079 = vmatprep.subr.mxu0 0.0
    %5080 = vmatpush1.msra.mxu0 0.0
    %5081 = vmatprep.subr.mxu0 0.0
    %5082 = vmatpush1.msra.mxu0 0.0
    %5083 = vmatprep.subr.mxu0 0.0
    %5084 = vmatpush1.msra.mxu0 0.0
    %5085 = vmatprep.subr.mxu0 0.0
    %5086 = vmatpush1.msra.mxu0 0.0
    %5087 = vmatprep.mubr.f32.mxu0 0.0
    %5088 = vmatmul.mubr.f32.gmra.mrb[0].mxu0 %v4236
    %v5089 = vpop.f32.mrb[0].mxu0
    %v5090 = vadd.f32 %v5019, %v5089
    %v5091 = vpop.f32.mrb[0].mxu0
    %v5092 = vadd.f32 %v5021, %v5091
    %5093 = vdwg.mxu0
    %5094 = vmatprep.subr.mxu0 %v4249
    %5095 = vmatpush1.msra.mxu0 %v4248
    %5096 = vmatprep.subr.mxu0 %v4257
    %5097 = vmatpush1.msra.mxu0 %v4256
    %5098 = vmatprep.subr.mxu0 %v4265
    %5099 = vmatpush1.msra.mxu0 %v4264
    %5100 = vmatprep.subr.mxu0 %v4273
    %5101 = vmatpush1.msra.mxu0 %v4272
    %5102 = vmatprep.subr.mxu0 %v4281
    %5103 = vmatpush1.msra.mxu0 %v4280
    %5104 = vmatprep.subr.mxu0 %v4289
    %5105 = vmatpush1.msra.mxu0 %v4288
    %5106 = vmatprep.subr.mxu0 %v4297
    %5107 = vmatpush1.msra.mxu0 %v4296
    %5108 = vmatprep.subr.mxu0 %v4305
    %5109 = vmatpush1.msra.mxu0 %v4304
    %5110 = vmatprep.subr.mxu0 %v4313
    %5111 = vmatpush1.msra.mxu0 %v4312
    %5112 = vmatprep.subr.mxu0 %v4321
    %5113 = vmatpush1.msra.mxu0 %v4320
    %5114 = vmatprep.subr.mxu0 %v4329
    %5115 = vmatpush1.msra.mxu0 %v4328
    %5116 = vmatprep.subr.mxu0 %v4337
    %5117 = vmatpush1.msra.mxu0 %v4336
    %5118 = vmatprep.subr.mxu0 %v4345
    %5119 = vmatpush1.msra.mxu0 %v4344
    %5120 = vmatprep.subr.mxu0 %v4353
    %5121 = vmatpush1.msra.mxu0 %v4352
    %5122 = vmatprep.subr.mxu0 %v4361
    %5123 = vmatpush1.msra.mxu0 %v4360
    %5124 = vmatprep.subr.mxu0 %v4369
    %5125 = vmatpush1.msra.mxu0 %v4368
    %5126 = vmatprep.subr.mxu0 %v4377
    %5127 = vmatpush1.msra.mxu0 %v4376
    %5128 = vmatprep.subr.mxu0 %v4385
    %5129 = vmatpush1.msra.mxu0 %v4384
    %5130 = vmatprep.subr.mxu0 %v4393
    %5131 = vmatpush1.msra.mxu0 %v4392
    %5132 = vmatprep.subr.mxu0 %v4401
    %5133 = vmatpush1.msra.mxu0 %v4400
    %5134 = vmatprep.subr.mxu0 %v4409
    %5135 = vmatpush1.msra.mxu0 %v4408
    %5136 = vmatprep.subr.mxu0 %v4417
    %5137 = vmatpush1.msra.mxu0 %v4416
    %5138 = vmatprep.subr.mxu0 %v4425
    %5139 = vmatpush1.msra.mxu0 %v4424
    %5140 = vmatprep.subr.mxu0 %v4433
    %5141 = vmatpush1.msra.mxu0 %v4432
    %5142 = vmatprep.subr.mxu0 %v4441
    %5143 = vmatpush1.msra.mxu0 %v4440
    %5144 = vmatprep.subr.mxu0 %v4449
    %5145 = vmatpush1.msra.mxu0 %v4448
    %5146 = vmatprep.subr.mxu0 %v4457
    %5147 = vmatpush1.msra.mxu0 %v4456
    %5148 = vmatprep.subr.mxu0 %v4465
    %5149 = vmatpush1.msra.mxu0 %v4464
    %5150 = vmatprep.subr.mxu0 %v4473
    %5151 = vmatpush1.msra.mxu0 %v4472
    %5152 = vmatprep.subr.mxu0 %v4481
    %5153 = vmatpush1.msra.mxu0 %v4480
    %5154 = vmatprep.subr.mxu0 %v4489
    %5155 = vmatpush1.msra.mxu0 %v4488
    %5156 = vmatprep.subr.mxu0 %v4497
    %5157 = vmatpush1.msra.mxu0 %v4496
    %5158 = vmatprep.mubr.f32.mxu0 %v4235
    %5159 = vmatmul.mubr.f32.gmra.mrb[0].mxu0 %v4241
    %v5160 = vpop.f32.mrb[0].mxu0
    %v5161 = vadd.f32 %v4655, %v5160
    %v5162 = vpop.f32.mrb[0].mxu0
    %v5163 = vadd.f32 %v4659, %v5162
    %5164 = vdwg.mxu0
    %5165 = vmatprep.subr.mxu0 %v4505
    %5166 = vmatpush1.msra.mxu0 %v4504
    %5167 = vmatprep.subr.mxu0 %v4513
    %5168 = vmatpush1.msra.mxu0 %v4512
    %5169 = vmatprep.subr.mxu0 %v4521
    %5170 = vmatpush1.msra.mxu0 %v4520
    %5171 = vmatprep.subr.mxu0 %v4529
    %5172 = vmatpush1.msra.mxu0 %v4528
    %5173 = vmatprep.subr.mxu0 %v4537
    %5174 = vmatpush1.msra.mxu0 %v4536
    %5175 = vmatprep.subr.mxu0 %v4545
    %5176 = vmatpush1.msra.mxu0 %v4544
    %5177 = vmatprep.subr.mxu0 %v4553
    %5178 = vmatpush1.msra.mxu0 %v4552
    %5179 = vmatprep.subr.mxu0 %v4561
    %5180 = vmatpush1.msra.mxu0 %v4560
    %5181 = vmatprep.subr.mxu0 %v4569
    %5182 = vmatpush1.msra.mxu0 %v4568
    %5183 = vmatprep.subr.mxu0 %v4577
    %5184 = vmatpush1.msra.mxu0 %v4576
    %5185 = vmatprep.subr.mxu0 %v4585
    %5186 = vmatpush1.msra.mxu0 %v4584
    %5187 = vmatprep.subr.mxu0 %v4593
    %5188 = vmatpush1.msra.mxu0 %v4592
    %5189 = vmatprep.subr.mxu0 %v4601
    %5190 = vmatpush1.msra.mxu0 %v4600
    %5191 = vmatprep.subr.mxu0 %v4609
    %5192 = vmatpush1.msra.mxu0 %v4608
    %5193 = vmatprep.subr.mxu0 %v4617
    %5194 = vmatpush1.msra.mxu0 %v4616
    %5195 = vmatprep.subr.mxu0 %v4625
    %5196 = vmatpush1.msra.mxu0 %v4624
    %5197 = vmatprep.subr.mxu0 0.0
    %5198 = vmatpush1.msra.mxu0 0.0
    %5199 = vmatprep.subr.mxu0 0.0
    %5200 = vmatpush1.msra.mxu0 0.0
    %5201 = vmatprep.subr.mxu0 0.0
    %5202 = vmatpush1.msra.mxu0 0.0
    %5203 = vmatprep.subr.mxu0 0.0
    %5204 = vmatpush1.msra.mxu0 0.0
    %5205 = vmatprep.subr.mxu0 0.0
    %5206 = vmatpush1.msra.mxu0 0.0
    %5207 = vmatprep.subr.mxu0 0.0
    %5208 = vmatpush1.msra.mxu0 0.0
    %5209 = vmatprep.subr.mxu0 0.0
    %5210 = vmatpush1.msra.mxu0 0.0
    %5211 = vmatprep.subr.mxu0 0.0
    %5212 = vmatpush1.msra.mxu0 0.0
    %5213 = vmatprep.subr.mxu0 0.0
    %5214 = vmatpush1.msra.mxu0 0.0
    %5215 = vmatprep.subr.mxu0 0.0
    %5216 = vmatpush1.msra.mxu0 0.0
    %5217 = vmatprep.subr.mxu0 0.0
    %5218 = vmatpush1.msra.mxu0 0.0
    %5219 = vmatprep.subr.mxu0 0.0
    %5220 = vmatpush1.msra.mxu0 0.0
    %5221 = vmatprep.subr.mxu0 0.0
    %5222 = vmatpush1.msra.mxu0 0.0
    %5223 = vmatprep.subr.mxu0 0.0
    %5224 = vmatpush1.msra.mxu0 0.0
    %5225 = vmatprep.subr.mxu0 0.0
    %5226 = vmatpush1.msra.mxu0 0.0
    %5227 = vmatprep.subr.mxu0 0.0
    %5228 = vmatpush1.msra.mxu0 0.0
    %5229 = vmatprep.mubr.f32.mxu0 0.0
    %5230 = vmatmul.mubr.f32.gmra.mrb[0].mxu0 %v4236
    %v5231 = vpop.f32.mrb[0].mxu0
    %v5232 = vadd.f32 %v5161, %v5231
    %v5233 = vpop.f32.mrb[0].mxu0
    %v5234 = vadd.f32 %v5163, %v5233
    %5235 = vdwg.mxu0
    %v5236 = vxor.u32 %v4806, 2147483648
    %v5237 = vxor.u32 %v4808, 2147483648
    %v5238 = vmul.f32 %v5236, 1.442695
    %v5239 = vpow.pop %v5238
    %v5240 = vmul.f32 %v5237, 1.442695
    %v5241 = vpow.pop %v5240
    %v5242 = vadd.f32 %v5239, 1.0
    %v5243 = vadd.f32 %v5241, 1.0
    %v5244 = vrcp.pop %v5242
    %v5245 = vmul.f32 1.0, %v5244
    %v5246 = vrcp.pop %v5243
    %v5247 = vmul.f32 1.0, %v5246
    %v5248 = vxor.u32 %v4948, 2147483648
    %v5249 = vxor.u32 %v4950, 2147483648
    %v5250 = vmul.f32 %v5248, 1.442695
    %v5251 = vpow.pop %v5250
    %v5252 = vmul.f32 %v5249, 1.442695
    %v5253 = vpow.pop %v5252
    %v5254 = vadd.f32 %v5251, 1.0
    %v5255 = vadd.f32 %v5253, 1.0
    %v5256 = vrcp.pop %v5254
    %v5257 = vmul.f32 1.0, %v5256
    %v5258 = vrcp.pop %v5255
    %v5259 = vmul.f32 1.0, %v5258
    %v5260 = vtanh.pop %v5090
    %v5261 = vtanh.pop %v5092
    %v5262 = vxor.u32 %v5232, 2147483648
    %v5263 = vxor.u32 %v5234, 2147483648
    %v5264 = vmul.f32 %v5262, 1.442695
    %v5265 = vpow.pop %v5264
    %v5266 = vmul.f32 %v5263, 1.442695
    %v5267 = vpow.pop %v5266
    %v5268 = vadd.f32 %v5265, 1.0
    %v5269 = vadd.f32 %v5267, 1.0
    %v5270 = vrcp.pop %v5268
    %v5271 = vmul.f32 1.0, %v5270
    %v5272 = vrcp.pop %v5269
    %v5273 = vmul.f32 1.0, %v5272
    %v5274 = vmul.f32 %v5257, %v4231
    %v5275 = vmul.f32 %v5259, %v4232
    %v5276 = vmul.f32 %v5245, %v5260
    %v5277 = vmul.f32 %v5247, %v5261
    %v5278 = vadd.f32 %v5274, %v5276
    %v5279 = vadd.f32 %v5275, %v5277
    %v5280 = vtanh.pop %v5278
    %v5281 = vtanh.pop %v5279
    %v5282 = vmul.f32 %v5271, %v5280
    %v5283 = vmul.f32 %v5273, %v5281
    %s5284 = scalar_lea.vmem [#allocation8], 64
    %5285 = vst [vmem:[%s5284] sm:$0xff] %v5282
    %5286 = vst [vmem:[%s5284 + $0x8] sm:$0xff] %v5283
    %s5287 = scalar_lea.vmem [#allocation2], 40
    %v5288 = vld [vmem:[%s5287] sm:$0xff]
    %v5289 = vld [vmem:[#allocation5] sm:$0xff]
    %v5290 = vld [vmem:[#allocation5 + $0x8] sm:$0xff]
    %v5291 = vld [vmem:[#allocation5 + $0x10] sm:$0xff]
    %v5292 = vld [vmem:[#allocation5 + $0x18] sm:$0xff]
    %v5293 = vld [vmem:[#allocation5 + $0x20] sm:$0xff]
    %v5294 = vld [vmem:[#allocation5 + $0x28] sm:$0xff]
    %v5295 = vld [vmem:[#allocation5 + $0x30] sm:$0xff]
    %v5296 = vld [vmem:[#allocation5 + $0x38] sm:$0xff]
    %v5297 = vld [vmem:[#allocation5 + $0x40] sm:$0xff]
    %v5298 = vld [vmem:[#allocation5 + $0x48] sm:$0xff]
    %v5299 = vld [vmem:[#allocation5 + $0x50] sm:$0xff]
    %v5300 = vld [vmem:[#allocation5 + $0x58] sm:$0xff]
    %v5301 = vld [vmem:[#allocation5 + $0x60] sm:$0xff]
    %v5302 = vld [vmem:[#allocation5 + $0x68] sm:$0xff]
    %v5303 = vld [vmem:[#allocation5 + $0x70] sm:$0xff]
    %v5304 = vld [vmem:[#allocation5 + $0x78] sm:$0xff]
    %v5305 = vld [vmem:[#allocation5 + $0x80] sm:$0xff]
    %v5306 = vld [vmem:[#allocation5 + $0x88] sm:$0xff]
    %v5307 = vld [vmem:[#allocation5 + $0x90] sm:$0xff]
    %v5308 = vld [vmem:[#allocation5 + $0x98] sm:$0xff]
    %v5309 = vld [vmem:[#allocation5 + $0xa0] sm:$0xff]
    %v5310 = vld [vmem:[#allocation5 + $0xa8] sm:$0xff]
    %v5311 = vld [vmem:[#allocation5 + $0xb0] sm:$0xff]
    %v5312 = vld [vmem:[#allocation5 + $0xb8] sm:$0xff]
    %v5313 = vld [vmem:[#allocation5 + $0xc0] sm:$0xff]
    %v5314 = vld [vmem:[#allocation5 + $0xc8] sm:$0xff]
    %v5315 = vld [vmem:[#allocation5 + $0xd0] sm:$0xff]
    %v5316 = vld [vmem:[#allocation5 + $0xd8] sm:$0xff]
    %v5317 = vld [vmem:[#allocation5 + $0xe0] sm:$0xff]
    %v5318 = vld [vmem:[#allocation5 + $0xe8] sm:$0xff]
    %v5319 = vld [vmem:[#allocation5 + $0xf0] sm:$0xff]
    %v5320 = vld [vmem:[#allocation5 + $0xf8] sm:$0xff]
    %v5321 = vld [vmem:[#allocation5 + $0x100] sm:$0xff]
    %v5322 = vld [vmem:[#allocation5 + $0x108] sm:$0xff]
    %v5323 = vld [vmem:[#allocation5 + $0x110] sm:$0xff]
    %v5324 = vld [vmem:[#allocation5 + $0x118] sm:$0xff]
    %v5325 = vld [vmem:[#allocation5 + $0x120] sm:$0xff]
    %v5326 = vld [vmem:[#allocation5 + $0x128] sm:$0xff]
    %v5327 = vld [vmem:[#allocation5 + $0x130] sm:$0xff]
    %v5328 = vld [vmem:[#allocation5 + $0x138] sm:$0xff]
    %v5329 = vld [vmem:[#allocation5 + $0x140] sm:$0xff]
    %v5330 = vld [vmem:[#allocation5 + $0x148] sm:$0xff]
    %v5331 = vld [vmem:[#allocation5 + $0x150] sm:$0xff]
    %v5332 = vld [vmem:[#allocation5 + $0x158] sm:$0xff]
    %v5333 = vld [vmem:[#allocation5 + $0x160] sm:$0xff]
    %v5334 = vld [vmem:[#allocation5 + $0x168] sm:$0xff]
    %v5335 = vld [vmem:[#allocation5 + $0x170] sm:$0xff]
    %v5336 = vld [vmem:[#allocation5 + $0x178] sm:$0xff]
    %v5337 = vld [vmem:[#allocation5 + $0x180] sm:$0xff]
    %v5338 = vld [vmem:[#allocation5 + $0x188] sm:$0xff]
    %v5339 = vld [vmem:[#allocation5 + $0x190] sm:$0xff]
    %v5340 = vld [vmem:[#allocation5 + $0x198] sm:$0xff]
    %v5341 = vld [vmem:[#allocation5 + $0x1a0] sm:$0xff]
    %v5342 = vld [vmem:[#allocation5 + $0x1a8] sm:$0xff]
    %v5343 = vld [vmem:[#allocation5 + $0x1b0] sm:$0xff]
    %v5344 = vld [vmem:[#allocation5 + $0x1b8] sm:$0xff]
    %v5345 = vld [vmem:[#allocation5 + $0x1c0] sm:$0xff]
    %v5346 = vld [vmem:[#allocation5 + $0x1c8] sm:$0xff]
    %v5347 = vld [vmem:[#allocation5 + $0x1d0] sm:$0xff]
    %v5348 = vld [vmem:[#allocation5 + $0x1d8] sm:$0xff]
    %v5349 = vld [vmem:[#allocation5 + $0x1e0] sm:$0xff]
    %v5350 = vld [vmem:[#allocation5 + $0x1e8] sm:$0xff]
    %v5351 = vld [vmem:[#allocation5 + $0x1f0] sm:$0xff]
    %v5352 = vld [vmem:[#allocation5 + $0x1f8] sm:$0xff]
    %v5353 = vld [vmem:[#allocation5 + $0x200] sm:$0xff]
    %v5354 = vld [vmem:[#allocation5 + $0x208] sm:$0xff]
    %v5355 = vld [vmem:[#allocation5 + $0x210] sm:$0xff]
    %v5356 = vld [vmem:[#allocation5 + $0x218] sm:$0xff]
    %v5357 = vld [vmem:[#allocation5 + $0x220] sm:$0xff]
    %v5358 = vld [vmem:[#allocation5 + $0x228] sm:$0xff]
    %v5359 = vld [vmem:[#allocation5 + $0x230] sm:$0xff]
    %v5360 = vld [vmem:[#allocation5 + $0x238] sm:$0xff]
    %v5361 = vld [vmem:[#allocation5 + $0x240] sm:$0xff]
    %v5362 = vld [vmem:[#allocation5 + $0x248] sm:$0xff]
    %v5363 = vld [vmem:[#allocation5 + $0x250] sm:$0xff]
    %v5364 = vld [vmem:[#allocation5 + $0x258] sm:$0xff]
    %v5365 = vld [vmem:[#allocation5 + $0x260] sm:$0xff]
    %v5366 = vld [vmem:[#allocation5 + $0x268] sm:$0xff]
    %v5367 = vld [vmem:[#allocation5 + $0x270] sm:$0xff]
    %v5368 = vld [vmem:[#allocation5 + $0x278] sm:$0xff]
    %v5369 = vld [vmem:[#allocation5 + $0x280] sm:$0xff]
    %v5370 = vld [vmem:[#allocation5 + $0x288] sm:$0xff]
    %v5371 = vld [vmem:[#allocation5 + $0x290] sm:$0xff]
    %v5372 = vld [vmem:[#allocation5 + $0x298] sm:$0xff]
    %v5373 = vld [vmem:[#allocation5 + $0x2a0] sm:$0xff]
    %v5374 = vld [vmem:[#allocation5 + $0x2a8] sm:$0xff]
    %v5375 = vld [vmem:[#allocation5 + $0x2b0] sm:$0xff]
    %v5376 = vld [vmem:[#allocation5 + $0x2b8] sm:$0xff]
    %v5377 = vld [vmem:[#allocation5 + $0x2c0] sm:$0xff]
    %v5378 = vld [vmem:[#allocation5 + $0x2c8] sm:$0xff]
    %v5379 = vld [vmem:[#allocation5 + $0x2d0] sm:$0xff]
    %v5380 = vld [vmem:[#allocation5 + $0x2d8] sm:$0xff]
    %v5381 = vld [vmem:[#allocation5 + $0x2e0] sm:$0xff]
    %v5382 = vld [vmem:[#allocation5 + $0x2e8] sm:$0xff]
    %v5383 = vld [vmem:[#allocation5 + $0x2f0] sm:$0xff]
    %v5384 = vld [vmem:[#allocation5 + $0x2f8] sm:$0xff]
    %v5385 = vld [vmem:[#allocation5 + $0x300] sm:$0xff]
    %v5386 = vld [vmem:[#allocation5 + $0x308] sm:$0xff]
    %v5387 = vld [vmem:[#allocation5 + $0x310] sm:$0xff]
    %v5388 = vld [vmem:[#allocation5 + $0x318] sm:$0xff]
    %v5389 = vld [vmem:[#allocation5 + $0x320] sm:$0xff]
    %v5390 = vld [vmem:[#allocation5 + $0x328] sm:$0xff]
    %v5391 = vld [vmem:[#allocation5 + $0x330] sm:$0xff]
    %v5392 = vld [vmem:[#allocation5 + $0x338] sm:$0xff]
    %v5393 = vld [vmem:[#allocation5 + $0x340] sm:$0xff]
    %v5394 = vld [vmem:[#allocation5 + $0x348] sm:$0xff]
    %v5395 = vld [vmem:[#allocation5 + $0x350] sm:$0xff]
    %v5396 = vld [vmem:[#allocation5 + $0x358] sm:$0xff]
    %v5397 = vld [vmem:[#allocation5 + $0x360] sm:$0xff]
    %v5398 = vld [vmem:[#allocation5 + $0x368] sm:$0xff]
    %v5399 = vld [vmem:[#allocation5 + $0x370] sm:$0xff]
    %v5400 = vld [vmem:[#allocation5 + $0x378] sm:$0xff]
    %v5401 = vld [vmem:[#allocation5 + $0x380] sm:$0xff]
    %v5402 = vld [vmem:[#allocation5 + $0x388] sm:$0xff]
    %v5403 = vld [vmem:[#allocation5 + $0x390] sm:$0xff]
    %v5404 = vld [vmem:[#allocation5 + $0x398] sm:$0xff]
    %v5405 = vld [vmem:[#allocation5 + $0x3a0] sm:$0xff]
    %v5406 = vld [vmem:[#allocation5 + $0x3a8] sm:$0xff]
    %v5407 = vld [vmem:[#allocation5 + $0x3b0] sm:$0xff]
    %v5408 = vld [vmem:[#allocation5 + $0x3b8] sm:$0xff]
    %v5409 = vld [vmem:[#allocation5 + $0x3c0] sm:$0xff]
    %v5410 = vld [vmem:[#allocation5 + $0x3c8] sm:$0xff]
    %v5411 = vld [vmem:[#allocation5 + $0x3d0] sm:$0xff]
    %v5412 = vld [vmem:[#allocation5 + $0x3d8] sm:$0xff]
    %v5413 = vld [vmem:[#allocation5 + $0x3e0] sm:$0xff]
    %v5414 = vld [vmem:[#allocation5 + $0x3e8] sm:$0xff]
    %v5415 = vld [vmem:[#allocation5 + $0x3f0] sm:$0xff]
    %v5416 = vld [vmem:[#allocation5 + $0x3f8] sm:$0xff]
    %v5417 = vld [vmem:[#allocation5 + $0x400] sm:$0xff]
    %v5418 = vld [vmem:[#allocation5 + $0x408] sm:$0xff]
    %v5419 = vld [vmem:[#allocation5 + $0x410] sm:$0xff]
    %v5420 = vld [vmem:[#allocation5 + $0x418] sm:$0xff]
    %v5421 = vld [vmem:[#allocation5 + $0x420] sm:$0xff]
    %v5422 = vld [vmem:[#allocation5 + $0x428] sm:$0xff]
    %v5423 = vld [vmem:[#allocation5 + $0x430] sm:$0xff]
    %v5424 = vld [vmem:[#allocation5 + $0x438] sm:$0xff]
    %v5425 = vld [vmem:[#allocation5 + $0x440] sm:$0xff]
    %v5426 = vld [vmem:[#allocation5 + $0x448] sm:$0xff]
    %v5427 = vld [vmem:[#allocation5 + $0x450] sm:$0xff]
    %v5428 = vld [vmem:[#allocation5 + $0x458] sm:$0xff]
    %v5429 = vld [vmem:[#allocation5 + $0x460] sm:$0xff]
    %v5430 = vld [vmem:[#allocation5 + $0x468] sm:$0xff]
    %v5431 = vld [vmem:[#allocation5 + $0x470] sm:$0xff]
    %v5432 = vld [vmem:[#allocation5 + $0x478] sm:$0xff]
    %v5433 = vld [vmem:[#allocation5 + $0x480] sm:$0xff]
    %v5434 = vld [vmem:[#allocation5 + $0x488] sm:$0xff]
    %v5435 = vld [vmem:[#allocation5 + $0x490] sm:$0xff]
    %v5436 = vld [vmem:[#allocation5 + $0x498] sm:$0xff]
    %v5437 = vld [vmem:[#allocation5 + $0x4a0] sm:$0xff]
    %v5438 = vld [vmem:[#allocation5 + $0x4a8] sm:$0xff]
    %v5439 = vld [vmem:[#allocation5 + $0x4b0] sm:$0xff]
    %v5440 = vld [vmem:[#allocation5 + $0x4b8] sm:$0xff]
    %v5441 = vld [vmem:[#allocation5 + $0x4c0] sm:$0xff]
    %v5442 = vld [vmem:[#allocation5 + $0x4c8] sm:$0xff]
    %v5443 = vld [vmem:[#allocation5 + $0x4d0] sm:$0xff]
    %v5444 = vld [vmem:[#allocation5 + $0x4d8] sm:$0xff]
    %v5445 = vld [vmem:[#allocation5 + $0x4e0] sm:$0xff]
    %v5446 = vld [vmem:[#allocation5 + $0x4e8] sm:$0xff]
    %v5447 = vld [vmem:[#allocation5 + $0x4f0] sm:$0xff]
    %v5448 = vld [vmem:[#allocation5 + $0x4f8] sm:$0xff]
    %v5449 = vld [vmem:[#allocation5 + $0x500] sm:$0xff]
    %v5450 = vld [vmem:[#allocation5 + $0x508] sm:$0xff]
    %v5451 = vld [vmem:[#allocation5 + $0x510] sm:$0xff]
    %v5452 = vld [vmem:[#allocation5 + $0x518] sm:$0xff]
    %v5453 = vld [vmem:[#allocation5 + $0x520] sm:$0xff]
    %v5454 = vld [vmem:[#allocation5 + $0x528] sm:$0xff]
    %v5455 = vld [vmem:[#allocation5 + $0x530] sm:$0xff]
    %v5456 = vld [vmem:[#allocation5 + $0x538] sm:$0xff]
    %v5457 = vld [vmem:[#allocation5 + $0x540] sm:$0xff]
    %v5458 = vld [vmem:[#allocation5 + $0x548] sm:$0xff]
    %v5459 = vld [vmem:[#allocation5 + $0x550] sm:$0xff]
    %v5460 = vld [vmem:[#allocation5 + $0x558] sm:$0xff]
    %v5461 = vld [vmem:[#allocation5 + $0x560] sm:$0xff]
    %v5462 = vld [vmem:[#allocation5 + $0x568] sm:$0xff]
    %v5463 = vld [vmem:[#allocation5 + $0x570] sm:$0xff]
    %v5464 = vld [vmem:[#allocation5 + $0x578] sm:$0xff]
    %v5465 = vld [vmem:[#allocation5 + $0x580] sm:$0xff]
    %v5466 = vld [vmem:[#allocation5 + $0x588] sm:$0xff]
    %v5467 = vld [vmem:[#allocation5 + $0x590] sm:$0xff]
    %v5468 = vld [vmem:[#allocation5 + $0x598] sm:$0xff]
    %v5469 = vld [vmem:[#allocation5 + $0x5a0] sm:$0xff]
    %v5470 = vld [vmem:[#allocation5 + $0x5a8] sm:$0xff]
    %v5471 = vld [vmem:[#allocation5 + $0x5b0] sm:$0xff]
    %v5472 = vld [vmem:[#allocation5 + $0x5b8] sm:$0xff]
    %v5473 = vld [vmem:[#allocation5 + $0x5c0] sm:$0xff]
    %v5474 = vld [vmem:[#allocation5 + $0x5c8] sm:$0xff]
    %v5475 = vld [vmem:[#allocation5 + $0x5d0] sm:$0xff]
    %v5476 = vld [vmem:[#allocation5 + $0x5d8] sm:$0xff]
    %v5477 = vld [vmem:[#allocation5 + $0x5e0] sm:$0xff]
    %v5478 = vld [vmem:[#allocation5 + $0x5e8] sm:$0xff]
    %v5479 = vld [vmem:[#allocation5 + $0x5f0] sm:$0xff]
    %v5480 = vld [vmem:[#allocation5 + $0x5f8] sm:$0xff]
    %v5481 = vld [vmem:[#allocation5 + $0x600] sm:$0xff]
    %v5482 = vld [vmem:[#allocation5 + $0x608] sm:$0xff]
    %v5483 = vld [vmem:[#allocation5 + $0x610] sm:$0xff]
    %v5484 = vld [vmem:[#allocation5 + $0x618] sm:$0xff]
    %v5485 = vld [vmem:[#allocation5 + $0x620] sm:$0xff]
    %v5486 = vld [vmem:[#allocation5 + $0x628] sm:$0xff]
    %v5487 = vld [vmem:[#allocation5 + $0x630] sm:$0xff]
    %v5488 = vld [vmem:[#allocation5 + $0x638] sm:$0xff]
    %v5489 = vld [vmem:[#allocation5 + $0x640] sm:$0xff]
    %v5490 = vld [vmem:[#allocation5 + $0x648] sm:$0xff]
    %v5491 = vld [vmem:[#allocation5 + $0x650] sm:$0xff]
    %v5492 = vld [vmem:[#allocation5 + $0x658] sm:$0xff]
    %v5493 = vld [vmem:[#allocation5 + $0x660] sm:$0xff]
    %v5494 = vld [vmem:[#allocation5 + $0x668] sm:$0xff]
    %v5495 = vld [vmem:[#allocation5 + $0x670] sm:$0xff]
    %v5496 = vld [vmem:[#allocation5 + $0x678] sm:$0xff]
    %v5497 = vld [vmem:[#allocation5 + $0x680] sm:$0xff]
    %v5498 = vld [vmem:[#allocation5 + $0x688] sm:$0xff]
    %v5499 = vld [vmem:[#allocation5 + $0x690] sm:$0xff]
    %v5500 = vld [vmem:[#allocation5 + $0x698] sm:$0xff]
    %v5501 = vld [vmem:[#allocation5 + $0x6a0] sm:$0xff]
    %v5502 = vld [vmem:[#allocation5 + $0x6a8] sm:$0xff]
    %v5503 = vld [vmem:[#allocation5 + $0x6b0] sm:$0xff]
    %v5504 = vld [vmem:[#allocation5 + $0x6b8] sm:$0xff]
    %v5505 = vld [vmem:[#allocation5 + $0x6c0] sm:$0xff]
    %v5506 = vld [vmem:[#allocation5 + $0x6c8] sm:$0xff]
    %v5507 = vld [vmem:[#allocation5 + $0x6d0] sm:$0xff]
    %v5508 = vld [vmem:[#allocation5 + $0x6d8] sm:$0xff]
    %v5509 = vld [vmem:[#allocation5 + $0x6e0] sm:$0xff]
    %v5510 = vld [vmem:[#allocation5 + $0x6e8] sm:$0xff]
    %v5511 = vld [vmem:[#allocation5 + $0x6f0] sm:$0xff]
    %v5512 = vld [vmem:[#allocation5 + $0x6f8] sm:$0xff]
    %v5513 = vld [vmem:[#allocation5 + $0x700] sm:$0xff]
    %v5514 = vld [vmem:[#allocation5 + $0x708] sm:$0xff]
    %v5515 = vld [vmem:[#allocation5 + $0x710] sm:$0xff]
    %v5516 = vld [vmem:[#allocation5 + $0x718] sm:$0xff]
    %v5517 = vld [vmem:[#allocation5 + $0x720] sm:$0xff]
    %v5518 = vld [vmem:[#allocation5 + $0x728] sm:$0xff]
    %v5519 = vld [vmem:[#allocation5 + $0x730] sm:$0xff]
    %v5520 = vld [vmem:[#allocation5 + $0x738] sm:$0xff]
    %v5521 = vld [vmem:[#allocation5 + $0x740] sm:$0xff]
    %v5522 = vld [vmem:[#allocation5 + $0x748] sm:$0xff]
    %v5523 = vld [vmem:[#allocation5 + $0x750] sm:$0xff]
    %v5524 = vld [vmem:[#allocation5 + $0x758] sm:$0xff]
    %v5525 = vld [vmem:[#allocation5 + $0x760] sm:$0xff]
    %v5526 = vld [vmem:[#allocation5 + $0x768] sm:$0xff]
    %v5527 = vld [vmem:[#allocation5 + $0x770] sm:$0xff]
    %v5528 = vld [vmem:[#allocation5 + $0x778] sm:$0xff]
    %v5529 = vld [vmem:[#allocation5 + $0x780] sm:$0xff]
    %v5530 = vld [vmem:[#allocation5 + $0x788] sm:$0xff]
    %v5531 = vld [vmem:[#allocation5 + $0x790] sm:$0xff]
    %v5532 = vld [vmem:[#allocation5 + $0x798] sm:$0xff]
    %v5533 = vld [vmem:[#allocation5 + $0x7a0] sm:$0xff]
    %v5534 = vld [vmem:[#allocation5 + $0x7a8] sm:$0xff]
    %v5535 = vld [vmem:[#allocation5 + $0x7b0] sm:$0xff]
    %v5536 = vld [vmem:[#allocation5 + $0x7b8] sm:$0xff]
    %v5537 = vld [vmem:[#allocation5 + $0x7c0] sm:$0xff]
    %v5538 = vld [vmem:[#allocation5 + $0x7c8] sm:$0xff]
    %v5539 = vld [vmem:[#allocation5 + $0x7d0] sm:$0xff]
    %v5540 = vld [vmem:[#allocation5 + $0x7d8] sm:$0xff]
    %v5541 = vld [vmem:[#allocation5 + $0x7e0] sm:$0xff]
    %v5542 = vld [vmem:[#allocation5 + $0x7e8] sm:$0xff]
    %v5543 = vld [vmem:[#allocation5 + $0x7f0] sm:$0xff]
    %v5544 = vld [vmem:[#allocation5 + $0x7f8] sm:$0xff]
    %v5545 = vld [vmem:[#allocation5 + $0x800] sm:$0xff]
    %v5546 = vld [vmem:[#allocation5 + $0x808] sm:$0xff]
    %v5547 = vld [vmem:[#allocation5 + $0x810] sm:$0xff]
    %v5548 = vld [vmem:[#allocation5 + $0x818] sm:$0xff]
    %v5549 = vld [vmem:[#allocation5 + $0x820] sm:$0xff]
    %v5550 = vld [vmem:[#allocation5 + $0x828] sm:$0xff]
    %v5551 = vld [vmem:[#allocation5 + $0x830] sm:$0xff]
    %v5552 = vld [vmem:[#allocation5 + $0x838] sm:$0xff]
    %v5553 = vld [vmem:[#allocation5 + $0x840] sm:$0xff]
    %v5554 = vld [vmem:[#allocation5 + $0x848] sm:$0xff]
    %v5555 = vld [vmem:[#allocation5 + $0x850] sm:$0xff]
    %v5556 = vld [vmem:[#allocation5 + $0x858] sm:$0xff]
    %v5557 = vld [vmem:[#allocation5 + $0x860] sm:$0xff]
    %v5558 = vld [vmem:[#allocation5 + $0x868] sm:$0xff]
    %v5559 = vld [vmem:[#allocation5 + $0x870] sm:$0xff]
    %v5560 = vld [vmem:[#allocation5 + $0x878] sm:$0xff]
    %v5561 = vld [vmem:[#allocation5 + $0x880] sm:$0xff]
    %v5562 = vld [vmem:[#allocation5 + $0x888] sm:$0xff]
    %v5563 = vld [vmem:[#allocation5 + $0x890] sm:$0xff]
    %v5564 = vld [vmem:[#allocation5 + $0x898] sm:$0xff]
    %v5565 = vld [vmem:[#allocation5 + $0x8a0] sm:$0xff]
    %v5566 = vld [vmem:[#allocation5 + $0x8a8] sm:$0xff]
    %v5567 = vld [vmem:[#allocation5 + $0x8b0] sm:$0xff]
    %v5568 = vld [vmem:[#allocation5 + $0x8b8] sm:$0xff]
    %v5569 = vld [vmem:[#allocation5 + $0x8c0] sm:$0xff]
    %v5570 = vld [vmem:[#allocation5 + $0x8c8] sm:$0xff]
    %v5571 = vld [vmem:[#allocation5 + $0x8d0] sm:$0xff]
    %v5572 = vld [vmem:[#allocation5 + $0x8d8] sm:$0xff]
    %v5573 = vld [vmem:[#allocation5 + $0x8e0] sm:$0xff]
    %v5574 = vld [vmem:[#allocation5 + $0x8e8] sm:$0xff]
    %v5575 = vld [vmem:[#allocation5 + $0x8f0] sm:$0xff]
    %v5576 = vld [vmem:[#allocation5 + $0x8f8] sm:$0xff]
    %v5577 = vld [vmem:[#allocation5 + $0x900] sm:$0xff]
    %v5578 = vld [vmem:[#allocation5 + $0x908] sm:$0xff]
    %v5579 = vld [vmem:[#allocation5 + $0x910] sm:$0xff]
    %v5580 = vld [vmem:[#allocation5 + $0x918] sm:$0xff]
    %v5581 = vld [vmem:[#allocation5 + $0x920] sm:$0xff]
    %v5582 = vld [vmem:[#allocation5 + $0x928] sm:$0xff]
    %v5583 = vld [vmem:[#allocation5 + $0x930] sm:$0xff]
    %v5584 = vld [vmem:[#allocation5 + $0x938] sm:$0xff]
    %v5585 = vld [vmem:[#allocation5 + $0x940] sm:$0xff]
    %v5586 = vld [vmem:[#allocation5 + $0x948] sm:$0xff]
    %v5587 = vld [vmem:[#allocation5 + $0x950] sm:$0xff]
    %v5588 = vld [vmem:[#allocation5 + $0x958] sm:$0xff]
    %v5589 = vld [vmem:[#allocation5 + $0x960] sm:$0xff]
    %v5590 = vld [vmem:[#allocation5 + $0x968] sm:$0xff]
    %v5591 = vld [vmem:[#allocation5 + $0x970] sm:$0xff]
    %v5592 = vld [vmem:[#allocation5 + $0x978] sm:$0xff]
    %v5593 = vld [vmem:[#allocation5 + $0x980] sm:$0xff]
    %v5594 = vld [vmem:[#allocation5 + $0x988] sm:$0xff]
    %v5595 = vld [vmem:[#allocation5 + $0x990] sm:$0xff]
    %v5596 = vld [vmem:[#allocation5 + $0x998] sm:$0xff]
    %v5597 = vld [vmem:[#allocation5 + $0x9a0] sm:$0xff]
    %v5598 = vld [vmem:[#allocation5 + $0x9a8] sm:$0xff]
    %v5599 = vld [vmem:[#allocation5 + $0x9b0] sm:$0xff]
    %v5600 = vld [vmem:[#allocation5 + $0x9b8] sm:$0xff]
    %v5601 = vld [vmem:[#allocation5 + $0x9c0] sm:$0xff]
    %v5602 = vld [vmem:[#allocation5 + $0x9c8] sm:$0xff]
    %v5603 = vld [vmem:[#allocation5 + $0x9d0] sm:$0xff]
    %v5604 = vld [vmem:[#allocation5 + $0x9d8] sm:$0xff]
    %v5605 = vld [vmem:[#allocation5 + $0x9e0] sm:$0xff]
    %v5606 = vld [vmem:[#allocation5 + $0x9e8] sm:$0xff]
    %v5607 = vld [vmem:[#allocation5 + $0x9f0] sm:$0xff]
    %v5608 = vld [vmem:[#allocation5 + $0x9f8] sm:$0xff]
    %v5609 = vld [vmem:[#allocation5 + $0xa00] sm:$0xff]
    %v5610 = vld [vmem:[#allocation5 + $0xa08] sm:$0xff]
    %v5611 = vld [vmem:[#allocation5 + $0xa10] sm:$0xff]
    %v5612 = vld [vmem:[#allocation5 + $0xa18] sm:$0xff]
    %v5613 = vld [vmem:[#allocation5 + $0xa20] sm:$0xff]
    %v5614 = vld [vmem:[#allocation5 + $0xa28] sm:$0xff]
    %v5615 = vld [vmem:[#allocation5 + $0xa30] sm:$0xff]
    %v5616 = vld [vmem:[#allocation5 + $0xa38] sm:$0xff]
    %v5617 = vld [vmem:[#allocation5 + $0xa40] sm:$0xff]
    %v5618 = vld [vmem:[#allocation5 + $0xa48] sm:$0xff]
    %v5619 = vld [vmem:[#allocation5 + $0xa50] sm:$0xff]
    %v5620 = vld [vmem:[#allocation5 + $0xa58] sm:$0xff]
    %v5621 = vld [vmem:[#allocation5 + $0xa60] sm:$0xff]
    %v5622 = vld [vmem:[#allocation5 + $0xa68] sm:$0xff]
    %v5623 = vld [vmem:[#allocation5 + $0xa70] sm:$0xff]
    %v5624 = vld [vmem:[#allocation5 + $0xa78] sm:$0xff]
    %v5625 = vld [vmem:[#allocation5 + $0xa80] sm:$0xff]
    %v5626 = vld [vmem:[#allocation5 + $0xa88] sm:$0xff]
    %v5627 = vld [vmem:[#allocation5 + $0xa90] sm:$0xff]
    %v5628 = vld [vmem:[#allocation5 + $0xa98] sm:$0xff]
    %v5629 = vld [vmem:[#allocation5 + $0xaa0] sm:$0xff]
    %v5630 = vld [vmem:[#allocation5 + $0xaa8] sm:$0xff]
    %v5631 = vld [vmem:[#allocation5 + $0xab0] sm:$0xff]
    %v5632 = vld [vmem:[#allocation5 + $0xab8] sm:$0xff]
    %v5633 = vld [vmem:[#allocation5 + $0xac0] sm:$0xff]
    %v5634 = vld [vmem:[#allocation5 + $0xac8] sm:$0xff]
    %v5635 = vld [vmem:[#allocation5 + $0xad0] sm:$0xff]
    %v5636 = vld [vmem:[#allocation5 + $0xad8] sm:$0xff]
    %v5637 = vld [vmem:[#allocation5 + $0xae0] sm:$0xff]
    %v5638 = vld [vmem:[#allocation5 + $0xae8] sm:$0xff]
    %v5639 = vld [vmem:[#allocation5 + $0xaf0] sm:$0xff]
    %v5640 = vld [vmem:[#allocation5 + $0xaf8] sm:$0xff]
    %v5641 = vld [vmem:[#allocation5 + $0xb00] sm:$0xff]
    %v5642 = vld [vmem:[#allocation5 + $0xb08] sm:$0xff]
    %v5643 = vld [vmem:[#allocation5 + $0xb10] sm:$0xff]
    %v5644 = vld [vmem:[#allocation5 + $0xb18] sm:$0xff]
    %v5645 = vld [vmem:[#allocation5 + $0xb20] sm:$0xff]
    %v5646 = vld [vmem:[#allocation5 + $0xb28] sm:$0xff]
    %v5647 = vld [vmem:[#allocation5 + $0xb30] sm:$0xff]
    %v5648 = vld [vmem:[#allocation5 + $0xb38] sm:$0xff]
    %v5649 = vld [vmem:[#allocation5 + $0xb40] sm:$0xff]
    %v5650 = vld [vmem:[#allocation5 + $0xb48] sm:$0xff]
    %v5651 = vld [vmem:[#allocation5 + $0xb50] sm:$0xff]
    %v5652 = vld [vmem:[#allocation5 + $0xb58] sm:$0xff]
    %v5653 = vld [vmem:[#allocation5 + $0xb60] sm:$0xff]
    %v5654 = vld [vmem:[#allocation5 + $0xb68] sm:$0xff]
    %v5655 = vld [vmem:[#allocation5 + $0xb70] sm:$0xff]
    %v5656 = vld [vmem:[#allocation5 + $0xb78] sm:$0xff]
    %v5657 = vld [vmem:[#allocation5 + $0xb80] sm:$0xff]
    %v5658 = vld [vmem:[#allocation5 + $0xb88] sm:$0xff]
    %v5659 = vld [vmem:[#allocation5 + $0xb90] sm:$0xff]
    %v5660 = vld [vmem:[#allocation5 + $0xb98] sm:$0xff]
    %v5661 = vld [vmem:[#allocation5 + $0xba0] sm:$0xff]
    %v5662 = vld [vmem:[#allocation5 + $0xba8] sm:$0xff]
    %v5663 = vld [vmem:[#allocation5 + $0xbb0] sm:$0xff]
    %v5664 = vld [vmem:[#allocation5 + $0xbb8] sm:$0xff]
    %v5665 = vld [vmem:[#allocation5 + $0xbc0] sm:$0xff]
    %v5666 = vld [vmem:[#allocation5 + $0xbc8] sm:$0xff]
    %v5667 = vld [vmem:[#allocation5 + $0xbd0] sm:$0xff]
    %v5668 = vld [vmem:[#allocation5 + $0xbd8] sm:$0xff]
    %v5669 = vld [vmem:[#allocation5 + $0xbe0] sm:$0xff]
    %v5670 = vld [vmem:[#allocation5 + $0xbe8] sm:$0xff]
    %v5671 = vld [vmem:[#allocation5 + $0xbf0] sm:$0xff]
    %v5672 = vld [vmem:[#allocation5 + $0xbf8] sm:$0xff]
    %v5673 = vld [vmem:[#allocation7] sm:$0xff]
    %v5675 = vlaneseq
    %v5676 = vshrl.u32 %v5675, 7
    %v5677 = vsub.s32 0, %v5676
    %v5678 = vrot.slane %v5673, %v5677
    %v5679 = vlaneseq
    %v5680 = vshrl.u32 %v5679, 7
    %v5681 = vsub.s32 1, %v5680
    %v5682 = vrot.slane %v5673, %v5681
    %v5683 = vlaneseq
    %v5684 = vshrl.u32 %v5683, 7
    %v5685 = vsub.s32 2, %v5684
    %v5686 = vrot.slane %v5673, %v5685
    %v5687 = vlaneseq
    %v5688 = vshrl.u32 %v5687, 7
    %v5689 = vsub.s32 3, %v5688
    %v5690 = vrot.slane %v5673, %v5689
    %v5691 = vlaneseq
    %v5692 = vshrl.u32 %v5691, 7
    %v5693 = vsub.s32 4, %v5692
    %v5694 = vrot.slane %v5673, %v5693
    %v5695 = vlaneseq
    %v5696 = vshrl.u32 %v5695, 7
    %v5697 = vsub.s32 5, %v5696
    %v5698 = vrot.slane %v5673, %v5697
    %v5699 = vlaneseq
    %v5700 = vshrl.u32 %v5699, 7
    %v5701 = vsub.s32 6, %v5700
    %v5702 = vrot.slane %v5673, %v5701
    %v5703 = vlaneseq
    %v5704 = vshrl.u32 %v5703, 7
    %v5705 = vsub.s32 7, %v5704
    %v5706 = vrot.slane %v5673, %v5705
    %5715 = vmatprep.subr.mxu0 %v5290
    %5716 = vmatpush1.msra.mxu0 %v5289
    %5717 = vmatprep.subr.mxu0 %v5298
    %5718 = vmatpush1.msra.mxu0 %v5297
    %5719 = vmatprep.subr.mxu0 %v5306
    %5720 = vmatpush1.msra.mxu0 %v5305
    %5721 = vmatprep.subr.mxu0 %v5314
    %5722 = vmatpush1.msra.mxu0 %v5313
    %5723 = vmatprep.subr.mxu0 %v5322
    %5724 = vmatpush1.msra.mxu0 %v5321
    %5725 = vmatprep.subr.mxu0 %v5330
    %5726 = vmatpush1.msra.mxu0 %v5329
    %5727 = vmatprep.subr.mxu0 %v5338
    %5728 = vmatpush1.msra.mxu0 %v5337
    %5729 = vmatprep.subr.mxu0 %v5346
    %5730 = vmatpush1.msra.mxu0 %v5345
    %5731 = vmatprep.subr.mxu0 %v5354
    %5732 = vmatpush1.msra.mxu0 %v5353
    %5733 = vmatprep.subr.mxu0 %v5362
    %5734 = vmatpush1.msra.mxu0 %v5361
    %5735 = vmatprep.subr.mxu0 %v5370
    %5736 = vmatpush1.msra.mxu0 %v5369
    %5737 = vmatprep.subr.mxu0 %v5378
    %5738 = vmatpush1.msra.mxu0 %v5377
    %5739 = vmatprep.subr.mxu0 %v5386
    %5740 = vmatpush1.msra.mxu0 %v5385
    %5741 = vmatprep.subr.mxu0 %v5394
    %5742 = vmatpush1.msra.mxu0 %v5393
    %5743 = vmatprep.subr.mxu0 %v5402
    %5744 = vmatpush1.msra.mxu0 %v5401
    %5745 = vmatprep.subr.mxu0 %v5410
    %5746 = vmatpush1.msra.mxu0 %v5409
    %5747 = vmatprep.subr.mxu0 %v5418
    %5748 = vmatpush1.msra.mxu0 %v5417
    %5749 = vmatprep.subr.mxu0 %v5426
    %5750 = vmatpush1.msra.mxu0 %v5425
    %5751 = vmatprep.subr.mxu0 %v5434
    %5752 = vmatpush1.msra.mxu0 %v5433
    %5753 = vmatprep.subr.mxu0 %v5442
    %5754 = vmatpush1.msra.mxu0 %v5441
    %5755 = vmatprep.subr.mxu0 %v5450
    %5756 = vmatpush1.msra.mxu0 %v5449
    %5757 = vmatprep.subr.mxu0 %v5458
    %5758 = vmatpush1.msra.mxu0 %v5457
    %5759 = vmatprep.subr.mxu0 %v5466
    %5760 = vmatpush1.msra.mxu0 %v5465
    %5761 = vmatprep.subr.mxu0 %v5474
    %5762 = vmatpush1.msra.mxu0 %v5473
    %5763 = vmatprep.subr.mxu0 %v5482
    %5764 = vmatpush1.msra.mxu0 %v5481
    %5765 = vmatprep.subr.mxu0 %v5490
    %5766 = vmatpush1.msra.mxu0 %v5489
    %5767 = vmatprep.subr.mxu0 %v5498
    %5768 = vmatpush1.msra.mxu0 %v5497
    %5769 = vmatprep.subr.mxu0 %v5506
    %5770 = vmatpush1.msra.mxu0 %v5505
    %5771 = vmatprep.subr.mxu0 %v5514
    %5772 = vmatpush1.msra.mxu0 %v5513
    %5773 = vmatprep.subr.mxu0 %v5522
    %5774 = vmatpush1.msra.mxu0 %v5521
    %5775 = vmatprep.subr.mxu0 %v5530
    %5776 = vmatpush1.msra.mxu0 %v5529
    %5777 = vmatprep.subr.mxu0 %v5538
    %5778 = vmatpush1.msra.mxu0 %v5537
    %5779 = vmatprep.mubr.f32.mxu0 %v5282
    %5780 = vmatmul.mubr.f32.gmra.mrb[0].mxu0 %v5288
    %v5781 = vpop.f32.mrb[0].mxu0
    %v5782 = vadd.f32 %v5678, %v5781
    %v5783 = vpop.f32.mrb[0].mxu0
    %v5784 = vadd.f32 %v5682, %v5783
    %5785 = vdwg.mxu0
    %5786 = vmatprep.subr.mxu0 %v5546
    %5787 = vmatpush1.msra.mxu0 %v5545
    %5788 = vmatprep.subr.mxu0 %v5554
    %5789 = vmatpush1.msra.mxu0 %v5553
    %5790 = vmatprep.subr.mxu0 %v5562
    %5791 = vmatpush1.msra.mxu0 %v5561
    %5792 = vmatprep.subr.mxu0 %v5570
    %5793 = vmatpush1.msra.mxu0 %v5569
    %5794 = vmatprep.subr.mxu0 %v5578
    %5795 = vmatpush1.msra.mxu0 %v5577
    %5796 = vmatprep.subr.mxu0 %v5586
    %5797 = vmatpush1.msra.mxu0 %v5585
    %5798 = vmatprep.subr.mxu0 %v5594
    %5799 = vmatpush1.msra.mxu0 %v5593
    %5800 = vmatprep.subr.mxu0 %v5602
    %5801 = vmatpush1.msra.mxu0 %v5601
    %5802 = vmatprep.subr.mxu0 %v5610
    %5803 = vmatpush1.msra.mxu0 %v5609
    %5804 = vmatprep.subr.mxu0 %v5618
    %5805 = vmatpush1.msra.mxu0 %v5617
    %5806 = vmatprep.subr.mxu0 %v5626
    %5807 = vmatpush1.msra.mxu0 %v5625
    %5808 = vmatprep.subr.mxu0 %v5634
    %5809 = vmatpush1.msra.mxu0 %v5633
    %5810 = vmatprep.subr.mxu0 %v5642
    %5811 = vmatpush1.msra.mxu0 %v5641
    %5812 = vmatprep.subr.mxu0 %v5650
    %5813 = vmatpush1.msra.mxu0 %v5649
    %5814 = vmatprep.subr.mxu0 %v5658
    %5815 = vmatpush1.msra.mxu0 %v5657
    %5816 = vmatprep.subr.mxu0 %v5666
    %5817 = vmatpush1.msra.mxu0 %v5665
    %5818 = vmatprep.subr.mxu0 0.0
    %5819 = vmatpush1.msra.mxu0 0.0
    %5820 = vmatprep.subr.mxu0 0.0
    %5821 = vmatpush1.msra.mxu0 0.0
    %5822 = vmatprep.subr.mxu0 0.0
    %5823 = vmatpush1.msra.mxu0 0.0
    %5824 = vmatprep.subr.mxu0 0.0
    %5825 = vmatpush1.msra.mxu0 0.0
    %5826 = vmatprep.subr.mxu0 0.0
    %5827 = vmatpush1.msra.mxu0 0.0
    %5828 = vmatprep.subr.mxu0 0.0
    %5829 = vmatpush1.msra.mxu0 0.0
    %5830 = vmatprep.subr.mxu0 0.0
    %5831 = vmatpush1.msra.mxu0 0.0
    %5832 = vmatprep.subr.mxu0 0.0
    %5833 = vmatpush1.msra.mxu0 0.0
    %5834 = vmatprep.subr.mxu0 0.0
    %5835 = vmatpush1.msra.mxu0 0.0
    %5836 = vmatprep.subr.mxu0 0.0
    %5837 = vmatpush1.msra.mxu0 0.0
    %5838 = vmatprep.subr.mxu0 0.0
    %5839 = vmatpush1.msra.mxu0 0.0
    %5840 = vmatprep.subr.mxu0 0.0
    %5841 = vmatpush1.msra.mxu0 0.0
    %5842 = vmatprep.subr.mxu0 0.0
    %5843 = vmatpush1.msra.mxu0 0.0
    %5844 = vmatprep.subr.mxu0 0.0
    %5845 = vmatpush1.msra.mxu0 0.0
    %5846 = vmatprep.subr.mxu0 0.0
    %5847 = vmatpush1.msra.mxu0 0.0
    %5848 = vmatprep.subr.mxu0 0.0
    %5849 = vmatpush1.msra.mxu0 0.0
    %5850 = vmatprep.mubr.f32.mxu0 0.0
    %5851 = vmatmul.mubr.f32.gmra.mrb[0].mxu0 %v5283
    %v5852 = vpop.f32.mrb[0].mxu0
    %v5853 = vadd.f32 %v5782, %v5852
    %v5854 = vpop.f32.mrb[0].mxu0
    %v5855 = vadd.f32 %v5784, %v5854
    %5856 = vdwg.mxu0
    %5857 = vmatprep.subr.mxu0 %v5292
    %5858 = vmatpush1.msra.mxu0 %v5291
    %5859 = vmatprep.subr.mxu0 %v5300
    %5860 = vmatpush1.msra.mxu0 %v5299
    %5861 = vmatprep.subr.mxu0 %v5308
    %5862 = vmatpush1.msra.mxu0 %v5307
    %5863 = vmatprep.subr.mxu0 %v5316
    %5864 = vmatpush1.msra.mxu0 %v5315
    %5865 = vmatprep.subr.mxu0 %v5324
    %5866 = vmatpush1.msra.mxu0 %v5323
    %5867 = vmatprep.subr.mxu0 %v5332
    %5868 = vmatpush1.msra.mxu0 %v5331
    %5869 = vmatprep.subr.mxu0 %v5340
    %5870 = vmatpush1.msra.mxu0 %v5339
    %5871 = vmatprep.subr.mxu0 %v5348
    %5872 = vmatpush1.msra.mxu0 %v5347
    %5873 = vmatprep.subr.mxu0 %v5356
    %5874 = vmatpush1.msra.mxu0 %v5355
    %5875 = vmatprep.subr.mxu0 %v5364
    %5876 = vmatpush1.msra.mxu0 %v5363
    %5877 = vmatprep.subr.mxu0 %v5372
    %5878 = vmatpush1.msra.mxu0 %v5371
    %5879 = vmatprep.subr.mxu0 %v5380
    %5880 = vmatpush1.msra.mxu0 %v5379
    %5881 = vmatprep.subr.mxu0 %v5388
    %5882 = vmatpush1.msra.mxu0 %v5387
    %5883 = vmatprep.subr.mxu0 %v5396
    %5884 = vmatpush1.msra.mxu0 %v5395
    %5885 = vmatprep.subr.mxu0 %v5404
    %5886 = vmatpush1.msra.mxu0 %v5403
    %5887 = vmatprep.subr.mxu0 %v5412
    %5888 = vmatpush1.msra.mxu0 %v5411
    %5889 = vmatprep.subr.mxu0 %v5420
    %5890 = vmatpush1.msra.mxu0 %v5419
    %5891 = vmatprep.subr.mxu0 %v5428
    %5892 = vmatpush1.msra.mxu0 %v5427
    %5893 = vmatprep.subr.mxu0 %v5436
    %5894 = vmatpush1.msra.mxu0 %v5435
    %5895 = vmatprep.subr.mxu0 %v5444
    %5896 = vmatpush1.msra.mxu0 %v5443
    %5897 = vmatprep.subr.mxu0 %v5452
    %5898 = vmatpush1.msra.mxu0 %v5451
    %5899 = vmatprep.subr.mxu0 %v5460
    %5900 = vmatpush1.msra.mxu0 %v5459
    %5901 = vmatprep.subr.mxu0 %v5468
    %5902 = vmatpush1.msra.mxu0 %v5467
    %5903 = vmatprep.subr.mxu0 %v5476
    %5904 = vmatpush1.msra.mxu0 %v5475
    %5905 = vmatprep.subr.mxu0 %v5484
    %5906 = vmatpush1.msra.mxu0 %v5483
    %5907 = vmatprep.subr.mxu0 %v5492
    %5908 = vmatpush1.msra.mxu0 %v5491
    %5909 = vmatprep.subr.mxu0 %v5500
    %5910 = vmatpush1.msra.mxu0 %v5499
    %5911 = vmatprep.subr.mxu0 %v5508
    %5912 = vmatpush1.msra.mxu0 %v5507
    %5913 = vmatprep.subr.mxu0 %v5516
    %5914 = vmatpush1.msra.mxu0 %v5515
    %5915 = vmatprep.subr.mxu0 %v5524
    %5916 = vmatpush1.msra.mxu0 %v5523
    %5917 = vmatprep.subr.mxu0 %v5532
    %5918 = vmatpush1.msra.mxu0 %v5531
    %5919 = vmatprep.subr.mxu0 %v5540
    %5920 = vmatpush1.msra.mxu0 %v5539
    %5921 = vmatprep.mubr.f32.mxu0 %v5282
    %5922 = vmatmul.mubr.f32.gmra.mrb[0].mxu0 %v5288
    %v5923 = vpop.f32.mrb[0].mxu0
    %v5924 = vadd.f32 %v5686, %v5923
    %v5925 = vpop.f32.mrb[0].mxu0
    %v5926 = vadd.f32 %v5690, %v5925
    %5927 = vdwg.mxu0
    %5928 = vmatprep.subr.mxu0 %v5548
    %5929 = vmatpush1.msra.mxu0 %v5547
    %5930 = vmatprep.subr.mxu0 %v5556
    %5931 = vmatpush1.msra.mxu0 %v5555
    %5932 = vmatprep.subr.mxu0 %v5564
    %5933 = vmatpush1.msra.mxu0 %v5563
    %5934 = vmatprep.subr.mxu0 %v5572
    %5935 = vmatpush1.msra.mxu0 %v5571
    %5936 = vmatprep.subr.mxu0 %v5580
    %5937 = vmatpush1.msra.mxu0 %v5579
    %5938 = vmatprep.subr.mxu0 %v5588
    %5939 = vmatpush1.msra.mxu0 %v5587
    %5940 = vmatprep.subr.mxu0 %v5596
    %5941 = vmatpush1.msra.mxu0 %v5595
    %5942 = vmatprep.subr.mxu0 %v5604
    %5943 = vmatpush1.msra.mxu0 %v5603
    %5944 = vmatprep.subr.mxu0 %v5612
    %5945 = vmatpush1.msra.mxu0 %v5611
    %5946 = vmatprep.subr.mxu0 %v5620
    %5947 = vmatpush1.msra.mxu0 %v5619
    %5948 = vmatprep.subr.mxu0 %v5628
    %5949 = vmatpush1.msra.mxu0 %v5627
    %5950 = vmatprep.subr.mxu0 %v5636
    %5951 = vmatpush1.msra.mxu0 %v5635
    %5952 = vmatprep.subr.mxu0 %v5644
    %5953 = vmatpush1.msra.mxu0 %v5643
    %5954 = vmatprep.subr.mxu0 %v5652
    %5955 = vmatpush1.msra.mxu0 %v5651
    %5956 = vmatprep.subr.mxu0 %v5660
    %5957 = vmatpush1.msra.mxu0 %v5659
    %5958 = vmatprep.subr.mxu0 %v5668
    %5959 = vmatpush1.msra.mxu0 %v5667
    %5960 = vmatprep.subr.mxu0 0.0
    %5961 = vmatpush1.msra.mxu0 0.0
    %5962 = vmatprep.subr.mxu0 0.0
    %5963 = vmatpush1.msra.mxu0 0.0
    %5964 = vmatprep.subr.mxu0 0.0
    %5965 = vmatpush1.msra.mxu0 0.0
    %5966 = vmatprep.subr.mxu0 0.0
    %5967 = vmatpush1.msra.mxu0 0.0
    %5968 = vmatprep.subr.mxu0 0.0
    %5969 = vmatpush1.msra.mxu0 0.0
    %5970 = vmatprep.subr.mxu0 0.0
    %5971 = vmatpush1.msra.mxu0 0.0
    %5972 = vmatprep.subr.mxu0 0.0
    %5973 = vmatpush1.msra.mxu0 0.0
    %5974 = vmatprep.subr.mxu0 0.0
    %5975 = vmatpush1.msra.mxu0 0.0
    %5976 = vmatprep.subr.mxu0 0.0
    %5977 = vmatpush1.msra.mxu0 0.0
    %5978 = vmatprep.subr.mxu0 0.0
    %5979 = vmatpush1.msra.mxu0 0.0
    %5980 = vmatprep.subr.mxu0 0.0
    %5981 = vmatpush1.msra.mxu0 0.0
    %5982 = vmatprep.subr.mxu0 0.0
    %5983 = vmatpush1.msra.mxu0 0.0
    %5984 = vmatprep.subr.mxu0 0.0
    %5985 = vmatpush1.msra.mxu0 0.0
    %5986 = vmatprep.subr.mxu0 0.0
    %5987 = vmatpush1.msra.mxu0 0.0
    %5988 = vmatprep.subr.mxu0 0.0
    %5989 = vmatpush1.msra.mxu0 0.0
    %5990 = vmatprep.subr.mxu0 0.0
    %5991 = vmatpush1.msra.mxu0 0.0
    %5992 = vmatprep.mubr.f32.mxu0 0.0
    %5993 = vmatmul.mubr.f32.gmra.mrb[0].mxu0 %v5283
    %v5994 = vpop.f32.mrb[0].mxu0
    %v5995 = vadd.f32 %v5924, %v5994
    %v5996 = vpop.f32.mrb[0].mxu0
    %v5997 = vadd.f32 %v5926, %v5996
    %5998 = vdwg.mxu0
    %5999 = vmatprep.subr.mxu0 %v5294
    %6000 = vmatpush1.msra.mxu0 %v5293
    %6001 = vmatprep.subr.mxu0 %v5302
    %6002 = vmatpush1.msra.mxu0 %v5301
    %6003 = vmatprep.subr.mxu0 %v5310
    %6004 = vmatpush1.msra.mxu0 %v5309
    %6005 = vmatprep.subr.mxu0 %v5318
    %6006 = vmatpush1.msra.mxu0 %v5317
    %6007 = vmatprep.subr.mxu0 %v5326
    %6008 = vmatpush1.msra.mxu0 %v5325
    %6009 = vmatprep.subr.mxu0 %v5334
    %6010 = vmatpush1.msra.mxu0 %v5333
    %6011 = vmatprep.subr.mxu0 %v5342
    %6012 = vmatpush1.msra.mxu0 %v5341
    %6013 = vmatprep.subr.mxu0 %v5350
    %6014 = vmatpush1.msra.mxu0 %v5349
    %6015 = vmatprep.subr.mxu0 %v5358
    %6016 = vmatpush1.msra.mxu0 %v5357
    %6017 = vmatprep.subr.mxu0 %v5366
    %6018 = vmatpush1.msra.mxu0 %v5365
    %6019 = vmatprep.subr.mxu0 %v5374
    %6020 = vmatpush1.msra.mxu0 %v5373
    %6021 = vmatprep.subr.mxu0 %v5382
    %6022 = vmatpush1.msra.mxu0 %v5381
    %6023 = vmatprep.subr.mxu0 %v5390
    %6024 = vmatpush1.msra.mxu0 %v5389
    %6025 = vmatprep.subr.mxu0 %v5398
    %6026 = vmatpush1.msra.mxu0 %v5397
    %6027 = vmatprep.subr.mxu0 %v5406
    %6028 = vmatpush1.msra.mxu0 %v5405
    %6029 = vmatprep.subr.mxu0 %v5414
    %6030 = vmatpush1.msra.mxu0 %v5413
    %6031 = vmatprep.subr.mxu0 %v5422
    %6032 = vmatpush1.msra.mxu0 %v5421
    %6033 = vmatprep.subr.mxu0 %v5430
    %6034 = vmatpush1.msra.mxu0 %v5429
    %6035 = vmatprep.subr.mxu0 %v5438
    %6036 = vmatpush1.msra.mxu0 %v5437
    %6037 = vmatprep.subr.mxu0 %v5446
    %6038 = vmatpush1.msra.mxu0 %v5445
    %6039 = vmatprep.subr.mxu0 %v5454
    %6040 = vmatpush1.msra.mxu0 %v5453
    %6041 = vmatprep.subr.mxu0 %v5462
    %6042 = vmatpush1.msra.mxu0 %v5461
    %6043 = vmatprep.subr.mxu0 %v5470
    %6044 = vmatpush1.msra.mxu0 %v5469
    %6045 = vmatprep.subr.mxu0 %v5478
    %6046 = vmatpush1.msra.mxu0 %v5477
    %6047 = vmatprep.subr.mxu0 %v5486
    %6048 = vmatpush1.msra.mxu0 %v5485
    %6049 = vmatprep.subr.mxu0 %v5494
    %6050 = vmatpush1.msra.mxu0 %v5493
    %6051 = vmatprep.subr.mxu0 %v5502
    %6052 = vmatpush1.msra.mxu0 %v5501
    %6053 = vmatprep.subr.mxu0 %v5510
    %6054 = vmatpush1.msra.mxu0 %v5509
    %6055 = vmatprep.subr.mxu0 %v5518
    %6056 = vmatpush1.msra.mxu0 %v5517
    %6057 = vmatprep.subr.mxu0 %v5526
    %6058 = vmatpush1.msra.mxu0 %v5525
    %6059 = vmatprep.subr.mxu0 %v5534
    %6060 = vmatpush1.msra.mxu0 %v5533
    %6061 = vmatprep.subr.mxu0 %v5542
    %6062 = vmatpush1.msra.mxu0 %v5541
    %6063 = vmatprep.mubr.f32.mxu0 %v5282
    %6064 = vmatmul.mubr.f32.gmra.mrb[0].mxu0 %v5288
    %v6065 = vpop.f32.mrb[0].mxu0
    %v6066 = vadd.f32 %v5694, %v6065
    %v6067 = vpop.f32.mrb[0].mxu0
    %v6068 = vadd.f32 %v5698, %v6067
    %6069 = vdwg.mxu0
    %6070 = vmatprep.subr.mxu0 %v5550
    %6071 = vmatpush1.msra.mxu0 %v5549
    %6072 = vmatprep.subr.mxu0 %v5558
    %6073 = vmatpush1.msra.mxu0 %v5557
    %6074 = vmatprep.subr.mxu0 %v5566
    %6075 = vmatpush1.msra.mxu0 %v5565
    %6076 = vmatprep.subr.mxu0 %v5574
    %6077 = vmatpush1.msra.mxu0 %v5573
    %6078 = vmatprep.subr.mxu0 %v5582
    %6079 = vmatpush1.msra.mxu0 %v5581
    %6080 = vmatprep.subr.mxu0 %v5590
    %6081 = vmatpush1.msra.mxu0 %v5589
    %6082 = vmatprep.subr.mxu0 %v5598
    %6083 = vmatpush1.msra.mxu0 %v5597
    %6084 = vmatprep.subr.mxu0 %v5606
    %6085 = vmatpush1.msra.mxu0 %v5605
    %6086 = vmatprep.subr.mxu0 %v5614
    %6087 = vmatpush1.msra.mxu0 %v5613
    %6088 = vmatprep.subr.mxu0 %v5622
    %6089 = vmatpush1.msra.mxu0 %v5621
    %6090 = vmatprep.subr.mxu0 %v5630
    %6091 = vmatpush1.msra.mxu0 %v5629
    %6092 = vmatprep.subr.mxu0 %v5638
    %6093 = vmatpush1.msra.mxu0 %v5637
    %6094 = vmatprep.subr.mxu0 %v5646
    %6095 = vmatpush1.msra.mxu0 %v5645
    %6096 = vmatprep.subr.mxu0 %v5654
    %6097 = vmatpush1.msra.mxu0 %v5653
    %6098 = vmatprep.subr.mxu0 %v5662
    %6099 = vmatpush1.msra.mxu0 %v5661
    %6100 = vmatprep.subr.mxu0 %v5670
    %6101 = vmatpush1.msra.mxu0 %v5669
    %6102 = vmatprep.subr.mxu0 0.0
    %6103 = vmatpush1.msra.mxu0 0.0
    %6104 = vmatprep.subr.mxu0 0.0
    %6105 = vmatpush1.msra.mxu0 0.0
    %6106 = vmatprep.subr.mxu0 0.0
    %6107 = vmatpush1.msra.mxu0 0.0
    %6108 = vmatprep.subr.mxu0 0.0
    %6109 = vmatpush1.msra.mxu0 0.0
    %6110 = vmatprep.subr.mxu0 0.0
    %6111 = vmatpush1.msra.mxu0 0.0
    %6112 = vmatprep.subr.mxu0 0.0
    %6113 = vmatpush1.msra.mxu0 0.0
    %6114 = vmatprep.subr.mxu0 0.0
    %6115 = vmatpush1.msra.mxu0 0.0
    %6116 = vmatprep.subr.mxu0 0.0
    %6117 = vmatpush1.msra.mxu0 0.0
    %6118 = vmatprep.subr.mxu0 0.0
    %6119 = vmatpush1.msra.mxu0 0.0
    %6120 = vmatprep.subr.mxu0 0.0
    %6121 = vmatpush1.msra.mxu0 0.0
    %6122 = vmatprep.subr.mxu0 0.0
    %6123 = vmatpush1.msra.mxu0 0.0
    %6124 = vmatprep.subr.mxu0 0.0
    %6125 = vmatpush1.msra.mxu0 0.0
    %6126 = vmatprep.subr.mxu0 0.0
    %6127 = vmatpush1.msra.mxu0 0.0
    %6128 = vmatprep.subr.mxu0 0.0
    %6129 = vmatpush1.msra.mxu0 0.0
    %6130 = vmatprep.subr.mxu0 0.0
    %6131 = vmatpush1.msra.mxu0 0.0
    %6132 = vmatprep.subr.mxu0 0.0
    %6133 = vmatpush1.msra.mxu0 0.0
    %6134 = vmatprep.mubr.f32.mxu0 0.0
    %6135 = vmatmul.mubr.f32.gmra.mrb[0].mxu0 %v5283
    %v6136 = vpop.f32.mrb[0].mxu0
    %v6137 = vadd.f32 %v6066, %v6136
    %v6138 = vpop.f32.mrb[0].mxu0
    %v6139 = vadd.f32 %v6068, %v6138
    %6140 = vdwg.mxu0
    %6141 = vmatprep.subr.mxu0 %v5296
    %6142 = vmatpush1.msra.mxu0 %v5295
    %6143 = vmatprep.subr.mxu0 %v5304
    %6144 = vmatpush1.msra.mxu0 %v5303
    %6145 = vmatprep.subr.mxu0 %v5312
    %6146 = vmatpush1.msra.mxu0 %v5311
    %6147 = vmatprep.subr.mxu0 %v5320
    %6148 = vmatpush1.msra.mxu0 %v5319
    %6149 = vmatprep.subr.mxu0 %v5328
    %6150 = vmatpush1.msra.mxu0 %v5327
    %6151 = vmatprep.subr.mxu0 %v5336
    %6152 = vmatpush1.msra.mxu0 %v5335
    %6153 = vmatprep.subr.mxu0 %v5344
    %6154 = vmatpush1.msra.mxu0 %v5343
    %6155 = vmatprep.subr.mxu0 %v5352
    %6156 = vmatpush1.msra.mxu0 %v5351
    %6157 = vmatprep.subr.mxu0 %v5360
    %6158 = vmatpush1.msra.mxu0 %v5359
    %6159 = vmatprep.subr.mxu0 %v5368
    %6160 = vmatpush1.msra.mxu0 %v5367
    %6161 = vmatprep.subr.mxu0 %v5376
    %6162 = vmatpush1.msra.mxu0 %v5375
    %6163 = vmatprep.subr.mxu0 %v5384
    %6164 = vmatpush1.msra.mxu0 %v5383
    %6165 = vmatprep.subr.mxu0 %v5392
    %6166 = vmatpush1.msra.mxu0 %v5391
    %6167 = vmatprep.subr.mxu0 %v5400
    %6168 = vmatpush1.msra.mxu0 %v5399
    %6169 = vmatprep.subr.mxu0 %v5408
    %6170 = vmatpush1.msra.mxu0 %v5407
    %6171 = vmatprep.subr.mxu0 %v5416
    %6172 = vmatpush1.msra.mxu0 %v5415
    %6173 = vmatprep.subr.mxu0 %v5424
    %6174 = vmatpush1.msra.mxu0 %v5423
    %6175 = vmatprep.subr.mxu0 %v5432
    %6176 = vmatpush1.msra.mxu0 %v5431
    %6177 = vmatprep.subr.mxu0 %v5440
    %6178 = vmatpush1.msra.mxu0 %v5439
    %6179 = vmatprep.subr.mxu0 %v5448
    %6180 = vmatpush1.msra.mxu0 %v5447
    %6181 = vmatprep.subr.mxu0 %v5456
    %6182 = vmatpush1.msra.mxu0 %v5455
    %6183 = vmatprep.subr.mxu0 %v5464
    %6184 = vmatpush1.msra.mxu0 %v5463
    %6185 = vmatprep.subr.mxu0 %v5472
    %6186 = vmatpush1.msra.mxu0 %v5471
    %6187 = vmatprep.subr.mxu0 %v5480
    %6188 = vmatpush1.msra.mxu0 %v5479
    %6189 = vmatprep.subr.mxu0 %v5488
    %6190 = vmatpush1.msra.mxu0 %v5487
    %6191 = vmatprep.subr.mxu0 %v5496
    %6192 = vmatpush1.msra.mxu0 %v5495
    %6193 = vmatprep.subr.mxu0 %v5504
    %6194 = vmatpush1.msra.mxu0 %v5503
    %6195 = vmatprep.subr.mxu0 %v5512
    %6196 = vmatpush1.msra.mxu0 %v5511
    %6197 = vmatprep.subr.mxu0 %v5520
    %6198 = vmatpush1.msra.mxu0 %v5519
    %6199 = vmatprep.subr.mxu0 %v5528
    %6200 = vmatpush1.msra.mxu0 %v5527
    %6201 = vmatprep.subr.mxu0 %v5536
    %6202 = vmatpush1.msra.mxu0 %v5535
    %6203 = vmatprep.subr.mxu0 %v5544
    %6204 = vmatpush1.msra.mxu0 %v5543
    %6205 = vmatprep.mubr.f32.mxu0 %v5282
    %6206 = vmatmul.mubr.f32.gmra.mrb[0].mxu0 %v5288
    %v6207 = vpop.f32.mrb[0].mxu0
    %v6208 = vadd.f32 %v5702, %v6207
    %v6209 = vpop.f32.mrb[0].mxu0
    %v6210 = vadd.f32 %v5706, %v6209
    %6211 = vdwg.mxu0
    %6212 = vmatprep.subr.mxu0 %v5552
    %6213 = vmatpush1.msra.mxu0 %v5551
    %6214 = vmatprep.subr.mxu0 %v5560
    %6215 = vmatpush1.msra.mxu0 %v5559
    %6216 = vmatprep.subr.mxu0 %v5568
    %6217 = vmatpush1.msra.mxu0 %v5567
    %6218 = vmatprep.subr.mxu0 %v5576
    %6219 = vmatpush1.msra.mxu0 %v5575
    %6220 = vmatprep.subr.mxu0 %v5584
    %6221 = vmatpush1.msra.mxu0 %v5583
    %6222 = vmatprep.subr.mxu0 %v5592
    %6223 = vmatpush1.msra.mxu0 %v5591
    %6224 = vmatprep.subr.mxu0 %v5600
    %6225 = vmatpush1.msra.mxu0 %v5599
    %6226 = vmatprep.subr.mxu0 %v5608
    %6227 = vmatpush1.msra.mxu0 %v5607
    %6228 = vmatprep.subr.mxu0 %v5616
    %6229 = vmatpush1.msra.mxu0 %v5615
    %6230 = vmatprep.subr.mxu0 %v5624
    %6231 = vmatpush1.msra.mxu0 %v5623
    %6232 = vmatprep.subr.mxu0 %v5632
    %6233 = vmatpush1.msra.mxu0 %v5631
    %6234 = vmatprep.subr.mxu0 %v5640
    %6235 = vmatpush1.msra.mxu0 %v5639
    %6236 = vmatprep.subr.mxu0 %v5648
    %6237 = vmatpush1.msra.mxu0 %v5647
    %6238 = vmatprep.subr.mxu0 %v5656
    %6239 = vmatpush1.msra.mxu0 %v5655
    %6240 = vmatprep.subr.mxu0 %v5664
    %6241 = vmatpush1.msra.mxu0 %v5663
    %6242 = vmatprep.subr.mxu0 %v5672
    %6243 = vmatpush1.msra.mxu0 %v5671
    %6244 = vmatprep.subr.mxu0 0.0
    %6245 = vmatpush1.msra.mxu0 0.0
    %6246 = vmatprep.subr.mxu0 0.0
    %6247 = vmatpush1.msra.mxu0 0.0
    %6248 = vmatprep.subr.mxu0 0.0
    %6249 = vmatpush1.msra.mxu0 0.0
    %6250 = vmatprep.subr.mxu0 0.0
    %6251 = vmatpush1.msra.mxu0 0.0
    %6252 = vmatprep.subr.mxu0 0.0
    %6253 = vmatpush1.msra.mxu0 0.0
    %6254 = vmatprep.subr.mxu0 0.0
    %6255 = vmatpush1.msra.mxu0 0.0
    %6256 = vmatprep.subr.mxu0 0.0
    %6257 = vmatpush1.msra.mxu0 0.0
    %6258 = vmatprep.subr.mxu0 0.0
    %6259 = vmatpush1.msra.mxu0 0.0
    %6260 = vmatprep.subr.mxu0 0.0
    %6261 = vmatpush1.msra.mxu0 0.0
    %6262 = vmatprep.subr.mxu0 0.0
    %6263 = vmatpush1.msra.mxu0 0.0
    %6264 = vmatprep.subr.mxu0 0.0
    %6265 = vmatpush1.msra.mxu0 0.0
    %6266 = vmatprep.subr.mxu0 0.0
    %6267 = vmatpush1.msra.mxu0 0.0
    %6268 = vmatprep.subr.mxu0 0.0
    %6269 = vmatpush1.msra.mxu0 0.0
    %6270 = vmatprep.subr.mxu0 0.0
    %6271 = vmatpush1.msra.mxu0 0.0
    %6272 = vmatprep.subr.mxu0 0.0
    %6273 = vmatpush1.msra.mxu0 0.0
    %6274 = vmatprep.subr.mxu0 0.0
    %6275 = vmatpush1.msra.mxu0 0.0
    %6276 = vmatprep.mubr.f32.mxu0 0.0
    %6277 = vmatmul.mubr.f32.gmra.mrb[0].mxu0 %v5283
    %v6278 = vpop.f32.mrb[0].mxu0
    %v6279 = vadd.f32 %v6208, %v6278
    %v6280 = vpop.f32.mrb[0].mxu0
    %v6281 = vadd.f32 %v6210, %v6280
    %6282 = vdwg.mxu0
    %v6283 = vxor.u32 %v5853, 2147483648
    %v6284 = vxor.u32 %v5855, 2147483648
    %v6285 = vmul.f32 %v6283, 1.442695
    %v6286 = vpow.pop %v6285
    %v6287 = vmul.f32 %v6284, 1.442695
    %v6288 = vpow.pop %v6287
    %v6289 = vadd.f32 %v6286, 1.0
    %v6290 = vadd.f32 %v6288, 1.0
    %v6291 = vrcp.pop %v6289
    %v6292 = vmul.f32 1.0, %v6291
    %v6293 = vrcp.pop %v6290
    %v6294 = vmul.f32 1.0, %v6293
    %v6295 = vxor.u32 %v5995, 2147483648
    %v6296 = vxor.u32 %v5997, 2147483648
    %v6297 = vmul.f32 %v6295, 1.442695
    %v6298 = vpow.pop %v6297
    %v6299 = vmul.f32 %v6296, 1.442695
    %v6300 = vpow.pop %v6299
    %v6301 = vadd.f32 %v6298, 1.0
    %v6302 = vadd.f32 %v6300, 1.0
    %v6303 = vrcp.pop %v6301
    %v6304 = vmul.f32 1.0, %v6303
    %v6305 = vrcp.pop %v6302
    %v6306 = vmul.f32 1.0, %v6305
    %v6307 = vtanh.pop %v6137
    %v6308 = vtanh.pop %v6139
    %v6309 = vxor.u32 %v6279, 2147483648
    %v6310 = vxor.u32 %v6281, 2147483648
    %v6311 = vmul.f32 %v6309, 1.442695
    %v6312 = vpow.pop %v6311
    %v6313 = vmul.f32 %v6310, 1.442695
    %v6314 = vpow.pop %v6313
    %v6315 = vadd.f32 %v6312, 1.0
    %v6316 = vadd.f32 %v6314, 1.0
    %v6317 = vrcp.pop %v6315
    %v6318 = vmul.f32 1.0, %v6317
    %v6319 = vrcp.pop %v6316
    %v6320 = vmul.f32 1.0, %v6319
    %v6321 = vmul.f32 %v6304, %v5278
    %v6322 = vmul.f32 %v6306, %v5279
    %v6323 = vmul.f32 %v6292, %v6307
    %v6324 = vmul.f32 %v6294, %v6308
    %v6325 = vadd.f32 %v6321, %v6323
    %v6326 = vadd.f32 %v6322, %v6324
    %v6327 = vtanh.pop %v6325
    %v6328 = vtanh.pop %v6326
    %v6329 = vmul.f32 %v6318, %v6327
    %v6330 = vmul.f32 %v6320, %v6328
    %s6331 = scalar_lea.vmem [#allocation8], 80
    %6332 = vst [vmem:[%s6331] sm:$0xff] %v6329
    %6333 = vst [vmem:[%s6331 + $0x8] sm:$0xff] %v6330
    %s6334 = scalar_lea.vmem [#allocation2], 48
    %v6335 = vld [vmem:[%s6334] sm:$0xff]
    %v6336 = vld [vmem:[#allocation5] sm:$0xff]
    %v6337 = vld [vmem:[#allocation5 + $0x8] sm:$0xff]
    %v6338 = vld [vmem:[#allocation5 + $0x10] sm:$0xff]
    %v6339 = vld [vmem:[#allocation5 + $0x18] sm:$0xff]
    %v6340 = vld [vmem:[#allocation5 + $0x20] sm:$0xff]
    %v6341 = vld [vmem:[#allocation5 + $0x28] sm:$0xff]
    %v6342 = vld [vmem:[#allocation5 + $0x30] sm:$0xff]
    %v6343 = vld [vmem:[#allocation5 + $0x38] sm:$0xff]
    %v6344 = vld [vmem:[#allocation5 + $0x40] sm:$0xff]
    %v6345 = vld [vmem:[#allocation5 + $0x48] sm:$0xff]
    %v6346 = vld [vmem:[#allocation5 + $0x50] sm:$0xff]
    %v6347 = vld [vmem:[#allocation5 + $0x58] sm:$0xff]
    %v6348 = vld [vmem:[#allocation5 + $0x60] sm:$0xff]
    %v6349 = vld [vmem:[#allocation5 + $0x68] sm:$0xff]
    %v6350 = vld [vmem:[#allocation5 + $0x70] sm:$0xff]
    %v6351 = vld [vmem:[#allocation5 + $0x78] sm:$0xff]
    %v6352 = vld [vmem:[#allocation5 + $0x80] sm:$0xff]
    %v6353 = vld [vmem:[#allocation5 + $0x88] sm:$0xff]
    %v6354 = vld [vmem:[#allocation5 + $0x90] sm:$0xff]
    %v6355 = vld [vmem:[#allocation5 + $0x98] sm:$0xff]
    %v6356 = vld [vmem:[#allocation5 + $0xa0] sm:$0xff]
    %v6357 = vld [vmem:[#allocation5 + $0xa8] sm:$0xff]
    %v6358 = vld [vmem:[#allocation5 + $0xb0] sm:$0xff]
    %v6359 = vld [vmem:[#allocation5 + $0xb8] sm:$0xff]
    %v6360 = vld [vmem:[#allocation5 + $0xc0] sm:$0xff]
    %v6361 = vld [vmem:[#allocation5 + $0xc8] sm:$0xff]
    %v6362 = vld [vmem:[#allocation5 + $0xd0] sm:$0xff]
    %v6363 = vld [vmem:[#allocation5 + $0xd8] sm:$0xff]
    %v6364 = vld [vmem:[#allocation5 + $0xe0] sm:$0xff]
    %v6365 = vld [vmem:[#allocation5 + $0xe8] sm:$0xff]
    %v6366 = vld [vmem:[#allocation5 + $0xf0] sm:$0xff]
    %v6367 = vld [vmem:[#allocation5 + $0xf8] sm:$0xff]
    %v6368 = vld [vmem:[#allocation5 + $0x100] sm:$0xff]
    %v6369 = vld [vmem:[#allocation5 + $0x108] sm:$0xff]
    %v6370 = vld [vmem:[#allocation5 + $0x110] sm:$0xff]
    %v6371 = vld [vmem:[#allocation5 + $0x118] sm:$0xff]
    %v6372 = vld [vmem:[#allocation5 + $0x120] sm:$0xff]
    %v6373 = vld [vmem:[#allocation5 + $0x128] sm:$0xff]
    %v6374 = vld [vmem:[#allocation5 + $0x130] sm:$0xff]
    %v6375 = vld [vmem:[#allocation5 + $0x138] sm:$0xff]
    %v6376 = vld [vmem:[#allocation5 + $0x140] sm:$0xff]
    %v6377 = vld [vmem:[#allocation5 + $0x148] sm:$0xff]
    %v6378 = vld [vmem:[#allocation5 + $0x150] sm:$0xff]
    %v6379 = vld [vmem:[#allocation5 + $0x158] sm:$0xff]
    %v6380 = vld [vmem:[#allocation5 + $0x160] sm:$0xff]
    %v6381 = vld [vmem:[#allocation5 + $0x168] sm:$0xff]
    %v6382 = vld [vmem:[#allocation5 + $0x170] sm:$0xff]
    %v6383 = vld [vmem:[#allocation5 + $0x178] sm:$0xff]
    %v6384 = vld [vmem:[#allocation5 + $0x180] sm:$0xff]
    %v6385 = vld [vmem:[#allocation5 + $0x188] sm:$0xff]
    %v6386 = vld [vmem:[#allocation5 + $0x190] sm:$0xff]
    %v6387 = vld [vmem:[#allocation5 + $0x198] sm:$0xff]
    %v6388 = vld [vmem:[#allocation5 + $0x1a0] sm:$0xff]
    %v6389 = vld [vmem:[#allocation5 + $0x1a8] sm:$0xff]
    %v6390 = vld [vmem:[#allocation5 + $0x1b0] sm:$0xff]
    %v6391 = vld [vmem:[#allocation5 + $0x1b8] sm:$0xff]
    %v6392 = vld [vmem:[#allocation5 + $0x1c0] sm:$0xff]
    %v6393 = vld [vmem:[#allocation5 + $0x1c8] sm:$0xff]
    %v6394 = vld [vmem:[#allocation5 + $0x1d0] sm:$0xff]
    %v6395 = vld [vmem:[#allocation5 + $0x1d8] sm:$0xff]
    %v6396 = vld [vmem:[#allocation5 + $0x1e0] sm:$0xff]
    %v6397 = vld [vmem:[#allocation5 + $0x1e8] sm:$0xff]
    %v6398 = vld [vmem:[#allocation5 + $0x1f0] sm:$0xff]
    %v6399 = vld [vmem:[#allocation5 + $0x1f8] sm:$0xff]
    %v6400 = vld [vmem:[#allocation5 + $0x200] sm:$0xff]
    %v6401 = vld [vmem:[#allocation5 + $0x208] sm:$0xff]
    %v6402 = vld [vmem:[#allocation5 + $0x210] sm:$0xff]
    %v6403 = vld [vmem:[#allocation5 + $0x218] sm:$0xff]
    %v6404 = vld [vmem:[#allocation5 + $0x220] sm:$0xff]
    %v6405 = vld [vmem:[#allocation5 + $0x228] sm:$0xff]
    %v6406 = vld [vmem:[#allocation5 + $0x230] sm:$0xff]
    %v6407 = vld [vmem:[#allocation5 + $0x238] sm:$0xff]
    %v6408 = vld [vmem:[#allocation5 + $0x240] sm:$0xff]
    %v6409 = vld [vmem:[#allocation5 + $0x248] sm:$0xff]
    %v6410 = vld [vmem:[#allocation5 + $0x250] sm:$0xff]
    %v6411 = vld [vmem:[#allocation5 + $0x258] sm:$0xff]
    %v6412 = vld [vmem:[#allocation5 + $0x260] sm:$0xff]
    %v6413 = vld [vmem:[#allocation5 + $0x268] sm:$0xff]
    %v6414 = vld [vmem:[#allocation5 + $0x270] sm:$0xff]
    %v6415 = vld [vmem:[#allocation5 + $0x278] sm:$0xff]
    %v6416 = vld [vmem:[#allocation5 + $0x280] sm:$0xff]
    %v6417 = vld [vmem:[#allocation5 + $0x288] sm:$0xff]
    %v6418 = vld [vmem:[#allocation5 + $0x290] sm:$0xff]
    %v6419 = vld [vmem:[#allocation5 + $0x298] sm:$0xff]
    %v6420 = vld [vmem:[#allocation5 + $0x2a0] sm:$0xff]
    %v6421 = vld [vmem:[#allocation5 + $0x2a8] sm:$0xff]
    %v6422 = vld [vmem:[#allocation5 + $0x2b0] sm:$0xff]
    %v6423 = vld [vmem:[#allocation5 + $0x2b8] sm:$0xff]
    %v6424 = vld [vmem:[#allocation5 + $0x2c0] sm:$0xff]
    %v6425 = vld [vmem:[#allocation5 + $0x2c8] sm:$0xff]
    %v6426 = vld [vmem:[#allocation5 + $0x2d0] sm:$0xff]
    %v6427 = vld [vmem:[#allocation5 + $0x2d8] sm:$0xff]
    %v6428 = vld [vmem:[#allocation5 + $0x2e0] sm:$0xff]
    %v6429 = vld [vmem:[#allocation5 + $0x2e8] sm:$0xff]
    %v6430 = vld [vmem:[#allocation5 + $0x2f0] sm:$0xff]
    %v6431 = vld [vmem:[#allocation5 + $0x2f8] sm:$0xff]
    %v6432 = vld [vmem:[#allocation5 + $0x300] sm:$0xff]
    %v6433 = vld [vmem:[#allocation5 + $0x308] sm:$0xff]
    %v6434 = vld [vmem:[#allocation5 + $0x310] sm:$0xff]
    %v6435 = vld [vmem:[#allocation5 + $0x318] sm:$0xff]
    %v6436 = vld [vmem:[#allocation5 + $0x320] sm:$0xff]
    %v6437 = vld [vmem:[#allocation5 + $0x328] sm:$0xff]
    %v6438 = vld [vmem:[#allocation5 + $0x330] sm:$0xff]
    %v6439 = vld [vmem:[#allocation5 + $0x338] sm:$0xff]
    %v6440 = vld [vmem:[#allocation5 + $0x340] sm:$0xff]
    %v6441 = vld [vmem:[#allocation5 + $0x348] sm:$0xff]
    %v6442 = vld [vmem:[#allocation5 + $0x350] sm:$0xff]
    %v6443 = vld [vmem:[#allocation5 + $0x358] sm:$0xff]
    %v6444 = vld [vmem:[#allocation5 + $0x360] sm:$0xff]
    %v6445 = vld [vmem:[#allocation5 + $0x368] sm:$0xff]
    %v6446 = vld [vmem:[#allocation5 + $0x370] sm:$0xff]
    %v6447 = vld [vmem:[#allocation5 + $0x378] sm:$0xff]
    %v6448 = vld [vmem:[#allocation5 + $0x380] sm:$0xff]
    %v6449 = vld [vmem:[#allocation5 + $0x388] sm:$0xff]
    %v6450 = vld [vmem:[#allocation5 + $0x390] sm:$0xff]
    %v6451 = vld [vmem:[#allocation5 + $0x398] sm:$0xff]
    %v6452 = vld [vmem:[#allocation5 + $0x3a0] sm:$0xff]
    %v6453 = vld [vmem:[#allocation5 + $0x3a8] sm:$0xff]
    %v6454 = vld [vmem:[#allocation5 + $0x3b0] sm:$0xff]
    %v6455 = vld [vmem:[#allocation5 + $0x3b8] sm:$0xff]
    %v6456 = vld [vmem:[#allocation5 + $0x3c0] sm:$0xff]
    %v6457 = vld [vmem:[#allocation5 + $0x3c8] sm:$0xff]
    %v6458 = vld [vmem:[#allocation5 + $0x3d0] sm:$0xff]
    %v6459 = vld [vmem:[#allocation5 + $0x3d8] sm:$0xff]
    %v6460 = vld [vmem:[#allocation5 + $0x3e0] sm:$0xff]
    %v6461 = vld [vmem:[#allocation5 + $0x3e8] sm:$0xff]
    %v6462 = vld [vmem:[#allocation5 + $0x3f0] sm:$0xff]
    %v6463 = vld [vmem:[#allocation5 + $0x3f8] sm:$0xff]
    %v6464 = vld [vmem:[#allocation5 + $0x400] sm:$0xff]
    %v6465 = vld [vmem:[#allocation5 + $0x408] sm:$0xff]
    %v6466 = vld [vmem:[#allocation5 + $0x410] sm:$0xff]
    %v6467 = vld [vmem:[#allocation5 + $0x418] sm:$0xff]
    %v6468 = vld [vmem:[#allocation5 + $0x420] sm:$0xff]
    %v6469 = vld [vmem:[#allocation5 + $0x428] sm:$0xff]
    %v6470 = vld [vmem:[#allocation5 + $0x430] sm:$0xff]
    %v6471 = vld [vmem:[#allocation5 + $0x438] sm:$0xff]
    %v6472 = vld [vmem:[#allocation5 + $0x440] sm:$0xff]
    %v6473 = vld [vmem:[#allocation5 + $0x448] sm:$0xff]
    %v6474 = vld [vmem:[#allocation5 + $0x450] sm:$0xff]
    %v6475 = vld [vmem:[#allocation5 + $0x458] sm:$0xff]
    %v6476 = vld [vmem:[#allocation5 + $0x460] sm:$0xff]
    %v6477 = vld [vmem:[#allocation5 + $0x468] sm:$0xff]
    %v6478 = vld [vmem:[#allocation5 + $0x470] sm:$0xff]
    %v6479 = vld [vmem:[#allocation5 + $0x478] sm:$0xff]
    %v6480 = vld [vmem:[#allocation5 + $0x480] sm:$0xff]
    %v6481 = vld [vmem:[#allocation5 + $0x488] sm:$0xff]
    %v6482 = vld [vmem:[#allocation5 + $0x490] sm:$0xff]
    %v6483 = vld [vmem:[#allocation5 + $0x498] sm:$0xff]
    %v6484 = vld [vmem:[#allocation5 + $0x4a0] sm:$0xff]
    %v6485 = vld [vmem:[#allocation5 + $0x4a8] sm:$0xff]
    %v6486 = vld [vmem:[#allocation5 + $0x4b0] sm:$0xff]
    %v6487 = vld [vmem:[#allocation5 + $0x4b8] sm:$0xff]
    %v6488 = vld [vmem:[#allocation5 + $0x4c0] sm:$0xff]
    %v6489 = vld [vmem:[#allocation5 + $0x4c8] sm:$0xff]
    %v6490 = vld [vmem:[#allocation5 + $0x4d0] sm:$0xff]
    %v6491 = vld [vmem:[#allocation5 + $0x4d8] sm:$0xff]
    %v6492 = vld [vmem:[#allocation5 + $0x4e0] sm:$0xff]
    %v6493 = vld [vmem:[#allocation5 + $0x4e8] sm:$0xff]
    %v6494 = vld [vmem:[#allocation5 + $0x4f0] sm:$0xff]
    %v6495 = vld [vmem:[#allocation5 + $0x4f8] sm:$0xff]
    %v6496 = vld [vmem:[#allocation5 + $0x500] sm:$0xff]
    %v6497 = vld [vmem:[#allocation5 + $0x508] sm:$0xff]
    %v6498 = vld [vmem:[#allocation5 + $0x510] sm:$0xff]
    %v6499 = vld [vmem:[#allocation5 + $0x518] sm:$0xff]
    %v6500 = vld [vmem:[#allocation5 + $0x520] sm:$0xff]
    %v6501 = vld [vmem:[#allocation5 + $0x528] sm:$0xff]
    %v6502 = vld [vmem:[#allocation5 + $0x530] sm:$0xff]
    %v6503 = vld [vmem:[#allocation5 + $0x538] sm:$0xff]
    %v6504 = vld [vmem:[#allocation5 + $0x540] sm:$0xff]
    %v6505 = vld [vmem:[#allocation5 + $0x548] sm:$0xff]
    %v6506 = vld [vmem:[#allocation5 + $0x550] sm:$0xff]
    %v6507 = vld [vmem:[#allocation5 + $0x558] sm:$0xff]
    %v6508 = vld [vmem:[#allocation5 + $0x560] sm:$0xff]
    %v6509 = vld [vmem:[#allocation5 + $0x568] sm:$0xff]
    %v6510 = vld [vmem:[#allocation5 + $0x570] sm:$0xff]
    %v6511 = vld [vmem:[#allocation5 + $0x578] sm:$0xff]
    %v6512 = vld [vmem:[#allocation5 + $0x580] sm:$0xff]
    %v6513 = vld [vmem:[#allocation5 + $0x588] sm:$0xff]
    %v6514 = vld [vmem:[#allocation5 + $0x590] sm:$0xff]
    %v6515 = vld [vmem:[#allocation5 + $0x598] sm:$0xff]
    %v6516 = vld [vmem:[#allocation5 + $0x5a0] sm:$0xff]
    %v6517 = vld [vmem:[#allocation5 + $0x5a8] sm:$0xff]
    %v6518 = vld [vmem:[#allocation5 + $0x5b0] sm:$0xff]
    %v6519 = vld [vmem:[#allocation5 + $0x5b8] sm:$0xff]
    %v6520 = vld [vmem:[#allocation5 + $0x5c0] sm:$0xff]
    %v6521 = vld [vmem:[#allocation5 + $0x5c8] sm:$0xff]
    %v6522 = vld [vmem:[#allocation5 + $0x5d0] sm:$0xff]
    %v6523 = vld [vmem:[#allocation5 + $0x5d8] sm:$0xff]
    %v6524 = vld [vmem:[#allocation5 + $0x5e0] sm:$0xff]
    %v6525 = vld [vmem:[#allocation5 + $0x5e8] sm:$0xff]
    %v6526 = vld [vmem:[#allocation5 + $0x5f0] sm:$0xff]
    %v6527 = vld [vmem:[#allocation5 + $0x5f8] sm:$0xff]
    %v6528 = vld [vmem:[#allocation5 + $0x600] sm:$0xff]
    %v6529 = vld [vmem:[#allocation5 + $0x608] sm:$0xff]
    %v6530 = vld [vmem:[#allocation5 + $0x610] sm:$0xff]
    %v6531 = vld [vmem:[#allocation5 + $0x618] sm:$0xff]
    %v6532 = vld [vmem:[#allocation5 + $0x620] sm:$0xff]
    %v6533 = vld [vmem:[#allocation5 + $0x628] sm:$0xff]
    %v6534 = vld [vmem:[#allocation5 + $0x630] sm:$0xff]
    %v6535 = vld [vmem:[#allocation5 + $0x638] sm:$0xff]
    %v6536 = vld [vmem:[#allocation5 + $0x640] sm:$0xff]
    %v6537 = vld [vmem:[#allocation5 + $0x648] sm:$0xff]
    %v6538 = vld [vmem:[#allocation5 + $0x650] sm:$0xff]
    %v6539 = vld [vmem:[#allocation5 + $0x658] sm:$0xff]
    %v6540 = vld [vmem:[#allocation5 + $0x660] sm:$0xff]
    %v6541 = vld [vmem:[#allocation5 + $0x668] sm:$0xff]
    %v6542 = vld [vmem:[#allocation5 + $0x670] sm:$0xff]
    %v6543 = vld [vmem:[#allocation5 + $0x678] sm:$0xff]
    %v6544 = vld [vmem:[#allocation5 + $0x680] sm:$0xff]
    %v6545 = vld [vmem:[#allocation5 + $0x688] sm:$0xff]
    %v6546 = vld [vmem:[#allocation5 + $0x690] sm:$0xff]
    %v6547 = vld [vmem:[#allocation5 + $0x698] sm:$0xff]
    %v6548 = vld [vmem:[#allocation5 + $0x6a0] sm:$0xff]
    %v6549 = vld [vmem:[#allocation5 + $0x6a8] sm:$0xff]
    %v6550 = vld [vmem:[#allocation5 + $0x6b0] sm:$0xff]
    %v6551 = vld [vmem:[#allocation5 + $0x6b8] sm:$0xff]
    %v6552 = vld [vmem:[#allocation5 + $0x6c0] sm:$0xff]
    %v6553 = vld [vmem:[#allocation5 + $0x6c8] sm:$0xff]
    %v6554 = vld [vmem:[#allocation5 + $0x6d0] sm:$0xff]
    %v6555 = vld [vmem:[#allocation5 + $0x6d8] sm:$0xff]
    %v6556 = vld [vmem:[#allocation5 + $0x6e0] sm:$0xff]
    %v6557 = vld [vmem:[#allocation5 + $0x6e8] sm:$0xff]
    %v6558 = vld [vmem:[#allocation5 + $0x6f0] sm:$0xff]
    %v6559 = vld [vmem:[#allocation5 + $0x6f8] sm:$0xff]
    %v6560 = vld [vmem:[#allocation5 + $0x700] sm:$0xff]
    %v6561 = vld [vmem:[#allocation5 + $0x708] sm:$0xff]
    %v6562 = vld [vmem:[#allocation5 + $0x710] sm:$0xff]
    %v6563 = vld [vmem:[#allocation5 + $0x718] sm:$0xff]
    %v6564 = vld [vmem:[#allocation5 + $0x720] sm:$0xff]
    %v6565 = vld [vmem:[#allocation5 + $0x728] sm:$0xff]
    %v6566 = vld [vmem:[#allocation5 + $0x730] sm:$0xff]
    %v6567 = vld [vmem:[#allocation5 + $0x738] sm:$0xff]
    %v6568 = vld [vmem:[#allocation5 + $0x740] sm:$0xff]
    %v6569 = vld [vmem:[#allocation5 + $0x748] sm:$0xff]
    %v6570 = vld [vmem:[#allocation5 + $0x750] sm:$0xff]
    %v6571 = vld [vmem:[#allocation5 + $0x758] sm:$0xff]
    %v6572 = vld [vmem:[#allocation5 + $0x760] sm:$0xff]
    %v6573 = vld [vmem:[#allocation5 + $0x768] sm:$0xff]
    %v6574 = vld [vmem:[#allocation5 + $0x770] sm:$0xff]
    %v6575 = vld [vmem:[#allocation5 + $0x778] sm:$0xff]
    %v6576 = vld [vmem:[#allocation5 + $0x780] sm:$0xff]
    %v6577 = vld [vmem:[#allocation5 + $0x788] sm:$0xff]
    %v6578 = vld [vmem:[#allocation5 + $0x790] sm:$0xff]
    %v6579 = vld [vmem:[#allocation5 + $0x798] sm:$0xff]
    %v6580 = vld [vmem:[#allocation5 + $0x7a0] sm:$0xff]
    %v6581 = vld [vmem:[#allocation5 + $0x7a8] sm:$0xff]
    %v6582 = vld [vmem:[#allocation5 + $0x7b0] sm:$0xff]
    %v6583 = vld [vmem:[#allocation5 + $0x7b8] sm:$0xff]
    %v6584 = vld [vmem:[#allocation5 + $0x7c0] sm:$0xff]
    %v6585 = vld [vmem:[#allocation5 + $0x7c8] sm:$0xff]
    %v6586 = vld [vmem:[#allocation5 + $0x7d0] sm:$0xff]
    %v6587 = vld [vmem:[#allocation5 + $0x7d8] sm:$0xff]
    %v6588 = vld [vmem:[#allocation5 + $0x7e0] sm:$0xff]
    %v6589 = vld [vmem:[#allocation5 + $0x7e8] sm:$0xff]
    %v6590 = vld [vmem:[#allocation5 + $0x7f0] sm:$0xff]
    %v6591 = vld [vmem:[#allocation5 + $0x7f8] sm:$0xff]
    %v6592 = vld [vmem:[#allocation5 + $0x800] sm:$0xff]
    %v6593 = vld [vmem:[#allocation5 + $0x808] sm:$0xff]
    %v6594 = vld [vmem:[#allocation5 + $0x810] sm:$0xff]
    %v6595 = vld [vmem:[#allocation5 + $0x818] sm:$0xff]
    %v6596 = vld [vmem:[#allocation5 + $0x820] sm:$0xff]
    %v6597 = vld [vmem:[#allocation5 + $0x828] sm:$0xff]
    %v6598 = vld [vmem:[#allocation5 + $0x830] sm:$0xff]
    %v6599 = vld [vmem:[#allocation5 + $0x838] sm:$0xff]
    %v6600 = vld [vmem:[#allocation5 + $0x840] sm:$0xff]
    %v6601 = vld [vmem:[#allocation5 + $0x848] sm:$0xff]
    %v6602 = vld [vmem:[#allocation5 + $0x850] sm:$0xff]
    %v6603 = vld [vmem:[#allocation5 + $0x858] sm:$0xff]
    %v6604 = vld [vmem:[#allocation5 + $0x860] sm:$0xff]
    %v6605 = vld [vmem:[#allocation5 + $0x868] sm:$0xff]
    %v6606 = vld [vmem:[#allocation5 + $0x870] sm:$0xff]
    %v6607 = vld [vmem:[#allocation5 + $0x878] sm:$0xff]
    %v6608 = vld [vmem:[#allocation5 + $0x880] sm:$0xff]
    %v6609 = vld [vmem:[#allocation5 + $0x888] sm:$0xff]
    %v6610 = vld [vmem:[#allocation5 + $0x890] sm:$0xff]
    %v6611 = vld [vmem:[#allocation5 + $0x898] sm:$0xff]
    %v6612 = vld [vmem:[#allocation5 + $0x8a0] sm:$0xff]
    %v6613 = vld [vmem:[#allocation5 + $0x8a8] sm:$0xff]
    %v6614 = vld [vmem:[#allocation5 + $0x8b0] sm:$0xff]
    %v6615 = vld [vmem:[#allocation5 + $0x8b8] sm:$0xff]
    %v6616 = vld [vmem:[#allocation5 + $0x8c0] sm:$0xff]
    %v6617 = vld [vmem:[#allocation5 + $0x8c8] sm:$0xff]
    %v6618 = vld [vmem:[#allocation5 + $0x8d0] sm:$0xff]
    %v6619 = vld [vmem:[#allocation5 + $0x8d8] sm:$0xff]
    %v6620 = vld [vmem:[#allocation5 + $0x8e0] sm:$0xff]
    %v6621 = vld [vmem:[#allocation5 + $0x8e8] sm:$0xff]
    %v6622 = vld [vmem:[#allocation5 + $0x8f0] sm:$0xff]
    %v6623 = vld [vmem:[#allocation5 + $0x8f8] sm:$0xff]
    %v6624 = vld [vmem:[#allocation5 + $0x900] sm:$0xff]
    %v6625 = vld [vmem:[#allocation5 + $0x908] sm:$0xff]
    %v6626 = vld [vmem:[#allocation5 + $0x910] sm:$0xff]
    %v6627 = vld [vmem:[#allocation5 + $0x918] sm:$0xff]
    %v6628 = vld [vmem:[#allocation5 + $0x920] sm:$0xff]
    %v6629 = vld [vmem:[#allocation5 + $0x928] sm:$0xff]
    %v6630 = vld [vmem:[#allocation5 + $0x930] sm:$0xff]
    %v6631 = vld [vmem:[#allocation5 + $0x938] sm:$0xff]
    %v6632 = vld [vmem:[#allocation5 + $0x940] sm:$0xff]
    %v6633 = vld [vmem:[#allocation5 + $0x948] sm:$0xff]
    %v6634 = vld [vmem:[#allocation5 + $0x950] sm:$0xff]
    %v6635 = vld [vmem:[#allocation5 + $0x958] sm:$0xff]
    %v6636 = vld [vmem:[#allocation5 + $0x960] sm:$0xff]
    %v6637 = vld [vmem:[#allocation5 + $0x968] sm:$0xff]
    %v6638 = vld [vmem:[#allocation5 + $0x970] sm:$0xff]
    %v6639 = vld [vmem:[#allocation5 + $0x978] sm:$0xff]
    %v6640 = vld [vmem:[#allocation5 + $0x980] sm:$0xff]
    %v6641 = vld [vmem:[#allocation5 + $0x988] sm:$0xff]
    %v6642 = vld [vmem:[#allocation5 + $0x990] sm:$0xff]
    %v6643 = vld [vmem:[#allocation5 + $0x998] sm:$0xff]
    %v6644 = vld [vmem:[#allocation5 + $0x9a0] sm:$0xff]
    %v6645 = vld [vmem:[#allocation5 + $0x9a8] sm:$0xff]
    %v6646 = vld [vmem:[#allocation5 + $0x9b0] sm:$0xff]
    %v6647 = vld [vmem:[#allocation5 + $0x9b8] sm:$0xff]
    %v6648 = vld [vmem:[#allocation5 + $0x9c0] sm:$0xff]
    %v6649 = vld [vmem:[#allocation5 + $0x9c8] sm:$0xff]
    %v6650 = vld [vmem:[#allocation5 + $0x9d0] sm:$0xff]
    %v6651 = vld [vmem:[#allocation5 + $0x9d8] sm:$0xff]
    %v6652 = vld [vmem:[#allocation5 + $0x9e0] sm:$0xff]
    %v6653 = vld [vmem:[#allocation5 + $0x9e8] sm:$0xff]
    %v6654 = vld [vmem:[#allocation5 + $0x9f0] sm:$0xff]
    %v6655 = vld [vmem:[#allocation5 + $0x9f8] sm:$0xff]
    %v6656 = vld [vmem:[#allocation5 + $0xa00] sm:$0xff]
    %v6657 = vld [vmem:[#allocation5 + $0xa08] sm:$0xff]
    %v6658 = vld [vmem:[#allocation5 + $0xa10] sm:$0xff]
    %v6659 = vld [vmem:[#allocation5 + $0xa18] sm:$0xff]
    %v6660 = vld [vmem:[#allocation5 + $0xa20] sm:$0xff]
    %v6661 = vld [vmem:[#allocation5 + $0xa28] sm:$0xff]
    %v6662 = vld [vmem:[#allocation5 + $0xa30] sm:$0xff]
    %v6663 = vld [vmem:[#allocation5 + $0xa38] sm:$0xff]
    %v6664 = vld [vmem:[#allocation5 + $0xa40] sm:$0xff]
    %v6665 = vld [vmem:[#allocation5 + $0xa48] sm:$0xff]
    %v6666 = vld [vmem:[#allocation5 + $0xa50] sm:$0xff]
    %v6667 = vld [vmem:[#allocation5 + $0xa58] sm:$0xff]
    %v6668 = vld [vmem:[#allocation5 + $0xa60] sm:$0xff]
    %v6669 = vld [vmem:[#allocation5 + $0xa68] sm:$0xff]
    %v6670 = vld [vmem:[#allocation5 + $0xa70] sm:$0xff]
    %v6671 = vld [vmem:[#allocation5 + $0xa78] sm:$0xff]
    %v6672 = vld [vmem:[#allocation5 + $0xa80] sm:$0xff]
    %v6673 = vld [vmem:[#allocation5 + $0xa88] sm:$0xff]
    %v6674 = vld [vmem:[#allocation5 + $0xa90] sm:$0xff]
    %v6675 = vld [vmem:[#allocation5 + $0xa98] sm:$0xff]
    %v6676 = vld [vmem:[#allocation5 + $0xaa0] sm:$0xff]
    %v6677 = vld [vmem:[#allocation5 + $0xaa8] sm:$0xff]
    %v6678 = vld [vmem:[#allocation5 + $0xab0] sm:$0xff]
    %v6679 = vld [vmem:[#allocation5 + $0xab8] sm:$0xff]
    %v6680 = vld [vmem:[#allocation5 + $0xac0] sm:$0xff]
    %v6681 = vld [vmem:[#allocation5 + $0xac8] sm:$0xff]
    %v6682 = vld [vmem:[#allocation5 + $0xad0] sm:$0xff]
    %v6683 = vld [vmem:[#allocation5 + $0xad8] sm:$0xff]
    %v6684 = vld [vmem:[#allocation5 + $0xae0] sm:$0xff]
    %v6685 = vld [vmem:[#allocation5 + $0xae8] sm:$0xff]
    %v6686 = vld [vmem:[#allocation5 + $0xaf0] sm:$0xff]
    %v6687 = vld [vmem:[#allocation5 + $0xaf8] sm:$0xff]
    %v6688 = vld [vmem:[#allocation5 + $0xb00] sm:$0xff]
    %v6689 = vld [vmem:[#allocation5 + $0xb08] sm:$0xff]
    %v6690 = vld [vmem:[#allocation5 + $0xb10] sm:$0xff]
    %v6691 = vld [vmem:[#allocation5 + $0xb18] sm:$0xff]
    %v6692 = vld [vmem:[#allocation5 + $0xb20] sm:$0xff]
    %v6693 = vld [vmem:[#allocation5 + $0xb28] sm:$0xff]
    %v6694 = vld [vmem:[#allocation5 + $0xb30] sm:$0xff]
    %v6695 = vld [vmem:[#allocation5 + $0xb38] sm:$0xff]
    %v6696 = vld [vmem:[#allocation5 + $0xb40] sm:$0xff]
    %v6697 = vld [vmem:[#allocation5 + $0xb48] sm:$0xff]
    %v6698 = vld [vmem:[#allocation5 + $0xb50] sm:$0xff]
    %v6699 = vld [vmem:[#allocation5 + $0xb58] sm:$0xff]
    %v6700 = vld [vmem:[#allocation5 + $0xb60] sm:$0xff]
    %v6701 = vld [vmem:[#allocation5 + $0xb68] sm:$0xff]
    %v6702 = vld [vmem:[#allocation5 + $0xb70] sm:$0xff]
    %v6703 = vld [vmem:[#allocation5 + $0xb78] sm:$0xff]
    %v6704 = vld [vmem:[#allocation5 + $0xb80] sm:$0xff]
    %v6705 = vld [vmem:[#allocation5 + $0xb88] sm:$0xff]
    %v6706 = vld [vmem:[#allocation5 + $0xb90] sm:$0xff]
    %v6707 = vld [vmem:[#allocation5 + $0xb98] sm:$0xff]
    %v6708 = vld [vmem:[#allocation5 + $0xba0] sm:$0xff]
    %v6709 = vld [vmem:[#allocation5 + $0xba8] sm:$0xff]
    %v6710 = vld [vmem:[#allocation5 + $0xbb0] sm:$0xff]
    %v6711 = vld [vmem:[#allocation5 + $0xbb8] sm:$0xff]
    %v6712 = vld [vmem:[#allocation5 + $0xbc0] sm:$0xff]
    %v6713 = vld [vmem:[#allocation5 + $0xbc8] sm:$0xff]
    %v6714 = vld [vmem:[#allocation5 + $0xbd0] sm:$0xff]
    %v6715 = vld [vmem:[#allocation5 + $0xbd8] sm:$0xff]
    %v6716 = vld [vmem:[#allocation5 + $0xbe0] sm:$0xff]
    %v6717 = vld [vmem:[#allocation5 + $0xbe8] sm:$0xff]
    %v6718 = vld [vmem:[#allocation5 + $0xbf0] sm:$0xff]
    %v6719 = vld [vmem:[#allocation5 + $0xbf8] sm:$0xff]
    %v6720 = vld [vmem:[#allocation7] sm:$0xff]
    %v6722 = vlaneseq
    %v6723 = vshrl.u32 %v6722, 7
    %v6724 = vsub.s32 0, %v6723
    %v6725 = vrot.slane %v6720, %v6724
    %v6726 = vlaneseq
    %v6727 = vshrl.u32 %v6726, 7
    %v6728 = vsub.s32 1, %v6727
    %v6729 = vrot.slane %v6720, %v6728
    %v6730 = vlaneseq
    %v6731 = vshrl.u32 %v6730, 7
    %v6732 = vsub.s32 2, %v6731
    %v6733 = vrot.slane %v6720, %v6732
    %v6734 = vlaneseq
    %v6735 = vshrl.u32 %v6734, 7
    %v6736 = vsub.s32 3, %v6735
    %v6737 = vrot.slane %v6720, %v6736
    %v6738 = vlaneseq
    %v6739 = vshrl.u32 %v6738, 7
    %v6740 = vsub.s32 4, %v6739
    %v6741 = vrot.slane %v6720, %v6740
    %v6742 = vlaneseq
    %v6743 = vshrl.u32 %v6742, 7
    %v6744 = vsub.s32 5, %v6743
    %v6745 = vrot.slane %v6720, %v6744
    %v6746 = vlaneseq
    %v6747 = vshrl.u32 %v6746, 7
    %v6748 = vsub.s32 6, %v6747
    %v6749 = vrot.slane %v6720, %v6748
    %v6750 = vlaneseq
    %v6751 = vshrl.u32 %v6750, 7
    %v6752 = vsub.s32 7, %v6751
    %v6753 = vrot.slane %v6720, %v6752
    %6762 = vmatprep.subr.mxu0 %v6337
    %6763 = vmatpush1.msra.mxu0 %v6336
    %6764 = vmatprep.subr.mxu0 %v6345
    %6765 = vmatpush1.msra.mxu0 %v6344
    %6766 = vmatprep.subr.mxu0 %v6353
    %6767 = vmatpush1.msra.mxu0 %v6352
    %6768 = vmatprep.subr.mxu0 %v6361
    %6769 = vmatpush1.msra.mxu0 %v6360
    %6770 = vmatprep.subr.mxu0 %v6369
    %6771 = vmatpush1.msra.mxu0 %v6368
    %6772 = vmatprep.subr.mxu0 %v6377
    %6773 = vmatpush1.msra.mxu0 %v6376
    %6774 = vmatprep.subr.mxu0 %v6385
    %6775 = vmatpush1.msra.mxu0 %v6384
    %6776 = vmatprep.subr.mxu0 %v6393
    %6777 = vmatpush1.msra.mxu0 %v6392
    %6778 = vmatprep.subr.mxu0 %v6401
    %6779 = vmatpush1.msra.mxu0 %v6400
    %6780 = vmatprep.subr.mxu0 %v6409
    %6781 = vmatpush1.msra.mxu0 %v6408
    %6782 = vmatprep.subr.mxu0 %v6417
    %6783 = vmatpush1.msra.mxu0 %v6416
    %6784 = vmatprep.subr.mxu0 %v6425
    %6785 = vmatpush1.msra.mxu0 %v6424
    %6786 = vmatprep.subr.mxu0 %v6433
    %6787 = vmatpush1.msra.mxu0 %v6432
    %6788 = vmatprep.subr.mxu0 %v6441
    %6789 = vmatpush1.msra.mxu0 %v6440
    %6790 = vmatprep.subr.mxu0 %v6449
    %6791 = vmatpush1.msra.mxu0 %v6448
    %6792 = vmatprep.subr.mxu0 %v6457
    %6793 = vmatpush1.msra.mxu0 %v6456
    %6794 = vmatprep.subr.mxu0 %v6465
    %6795 = vmatpush1.msra.mxu0 %v6464
    %6796 = vmatprep.subr.mxu0 %v6473
    %6797 = vmatpush1.msra.mxu0 %v6472
    %6798 = vmatprep.subr.mxu0 %v6481
    %6799 = vmatpush1.msra.mxu0 %v6480
    %6800 = vmatprep.subr.mxu0 %v6489
    %6801 = vmatpush1.msra.mxu0 %v6488
    %6802 = vmatprep.subr.mxu0 %v6497
    %6803 = vmatpush1.msra.mxu0 %v6496
    %6804 = vmatprep.subr.mxu0 %v6505
    %6805 = vmatpush1.msra.mxu0 %v6504
    %6806 = vmatprep.subr.mxu0 %v6513
    %6807 = vmatpush1.msra.mxu0 %v6512
    %6808 = vmatprep.subr.mxu0 %v6521
    %6809 = vmatpush1.msra.mxu0 %v6520
    %6810 = vmatprep.subr.mxu0 %v6529
    %6811 = vmatpush1.msra.mxu0 %v6528
    %6812 = vmatprep.subr.mxu0 %v6537
    %6813 = vmatpush1.msra.mxu0 %v6536
    %6814 = vmatprep.subr.mxu0 %v6545
    %6815 = vmatpush1.msra.mxu0 %v6544
    %6816 = vmatprep.subr.mxu0 %v6553
    %6817 = vmatpush1.msra.mxu0 %v6552
    %6818 = vmatprep.subr.mxu0 %v6561
    %6819 = vmatpush1.msra.mxu0 %v6560
    %6820 = vmatprep.subr.mxu0 %v6569
    %6821 = vmatpush1.msra.mxu0 %v6568
    %6822 = vmatprep.subr.mxu0 %v6577
    %6823 = vmatpush1.msra.mxu0 %v6576
    %6824 = vmatprep.subr.mxu0 %v6585
    %6825 = vmatpush1.msra.mxu0 %v6584
    %6826 = vmatprep.mubr.f32.mxu0 %v6329
    %6827 = vmatmul.mubr.f32.gmra.mrb[0].mxu0 %v6335
    %v6828 = vpop.f32.mrb[0].mxu0
    %v6829 = vadd.f32 %v6725, %v6828
    %v6830 = vpop.f32.mrb[0].mxu0
    %v6831 = vadd.f32 %v6729, %v6830
    %6832 = vdwg.mxu0
    %6833 = vmatprep.subr.mxu0 %v6593
    %6834 = vmatpush1.msra.mxu0 %v6592
    %6835 = vmatprep.subr.mxu0 %v6601
    %6836 = vmatpush1.msra.mxu0 %v6600
    %6837 = vmatprep.subr.mxu0 %v6609
    %6838 = vmatpush1.msra.mxu0 %v6608
    %6839 = vmatprep.subr.mxu0 %v6617
    %6840 = vmatpush1.msra.mxu0 %v6616
    %6841 = vmatprep.subr.mxu0 %v6625
    %6842 = vmatpush1.msra.mxu0 %v6624
    %6843 = vmatprep.subr.mxu0 %v6633
    %6844 = vmatpush1.msra.mxu0 %v6632
    %6845 = vmatprep.subr.mxu0 %v6641
    %6846 = vmatpush1.msra.mxu0 %v6640
    %6847 = vmatprep.subr.mxu0 %v6649
    %6848 = vmatpush1.msra.mxu0 %v6648
    %6849 = vmatprep.subr.mxu0 %v6657
    %6850 = vmatpush1.msra.mxu0 %v6656
    %6851 = vmatprep.subr.mxu0 %v6665
    %6852 = vmatpush1.msra.mxu0 %v6664
    %6853 = vmatprep.subr.mxu0 %v6673
    %6854 = vmatpush1.msra.mxu0 %v6672
    %6855 = vmatprep.subr.mxu0 %v6681
    %6856 = vmatpush1.msra.mxu0 %v6680
    %6857 = vmatprep.subr.mxu0 %v6689
    %6858 = vmatpush1.msra.mxu0 %v6688
    %6859 = vmatprep.subr.mxu0 %v6697
    %6860 = vmatpush1.msra.mxu0 %v6696
    %6861 = vmatprep.subr.mxu0 %v6705
    %6862 = vmatpush1.msra.mxu0 %v6704
    %6863 = vmatprep.subr.mxu0 %v6713
    %6864 = vmatpush1.msra.mxu0 %v6712
    %6865 = vmatprep.subr.mxu0 0.0
    %6866 = vmatpush1.msra.mxu0 0.0
    %6867 = vmatprep.subr.mxu0 0.0
    %6868 = vmatpush1.msra.mxu0 0.0
    %6869 = vmatprep.subr.mxu0 0.0
    %6870 = vmatpush1.msra.mxu0 0.0
    %6871 = vmatprep.subr.mxu0 0.0
    %6872 = vmatpush1.msra.mxu0 0.0
    %6873 = vmatprep.subr.mxu0 0.0
    %6874 = vmatpush1.msra.mxu0 0.0
    %6875 = vmatprep.subr.mxu0 0.0
    %6876 = vmatpush1.msra.mxu0 0.0
    %6877 = vmatprep.subr.mxu0 0.0
    %6878 = vmatpush1.msra.mxu0 0.0
    %6879 = vmatprep.subr.mxu0 0.0
    %6880 = vmatpush1.msra.mxu0 0.0
    %6881 = vmatprep.subr.mxu0 0.0
    %6882 = vmatpush1.msra.mxu0 0.0
    %6883 = vmatprep.subr.mxu0 0.0
    %6884 = vmatpush1.msra.mxu0 0.0
    %6885 = vmatprep.subr.mxu0 0.0
    %6886 = vmatpush1.msra.mxu0 0.0
    %6887 = vmatprep.subr.mxu0 0.0
    %6888 = vmatpush1.msra.mxu0 0.0
    %6889 = vmatprep.subr.mxu0 0.0
    %6890 = vmatpush1.msra.mxu0 0.0
    %6891 = vmatprep.subr.mxu0 0.0
    %6892 = vmatpush1.msra.mxu0 0.0
    %6893 = vmatprep.subr.mxu0 0.0
    %6894 = vmatpush1.msra.mxu0 0.0
    %6895 = vmatprep.subr.mxu0 0.0
    %6896 = vmatpush1.msra.mxu0 0.0
    %6897 = vmatprep.mubr.f32.mxu0 0.0
    %6898 = vmatmul.mubr.f32.gmra.mrb[0].mxu0 %v6330
    %v6899 = vpop.f32.mrb[0].mxu0
    %v6900 = vadd.f32 %v6829, %v6899
    %v6901 = vpop.f32.mrb[0].mxu0
    %v6902 = vadd.f32 %v6831, %v6901
    %6903 = vdwg.mxu0
    %6904 = vmatprep.subr.mxu0 %v6339
    %6905 = vmatpush1.msra.mxu0 %v6338
    %6906 = vmatprep.subr.mxu0 %v6347
    %6907 = vmatpush1.msra.mxu0 %v6346
    %6908 = vmatprep.subr.mxu0 %v6355
    %6909 = vmatpush1.msra.mxu0 %v6354
    %6910 = vmatprep.subr.mxu0 %v6363
    %6911 = vmatpush1.msra.mxu0 %v6362
    %6912 = vmatprep.subr.mxu0 %v6371
    %6913 = vmatpush1.msra.mxu0 %v6370
    %6914 = vmatprep.subr.mxu0 %v6379
    %6915 = vmatpush1.msra.mxu0 %v6378
    %6916 = vmatprep.subr.mxu0 %v6387
    %6917 = vmatpush1.msra.mxu0 %v6386
    %6918 = vmatprep.subr.mxu0 %v6395
    %6919 = vmatpush1.msra.mxu0 %v6394
    %6920 = vmatprep.subr.mxu0 %v6403
    %6921 = vmatpush1.msra.mxu0 %v6402
    %6922 = vmatprep.subr.mxu0 %v6411
    %6923 = vmatpush1.msra.mxu0 %v6410
    %6924 = vmatprep.subr.mxu0 %v6419
    %6925 = vmatpush1.msra.mxu0 %v6418
    %6926 = vmatprep.subr.mxu0 %v6427
    %6927 = vmatpush1.msra.mxu0 %v6426
    %6928 = vmatprep.subr.mxu0 %v6435
    %6929 = vmatpush1.msra.mxu0 %v6434
    %6930 = vmatprep.subr.mxu0 %v6443
    %6931 = vmatpush1.msra.mxu0 %v6442
    %6932 = vmatprep.subr.mxu0 %v6451
    %6933 = vmatpush1.msra.mxu0 %v6450
    %6934 = vmatprep.subr.mxu0 %v6459
    %6935 = vmatpush1.msra.mxu0 %v6458
    %6936 = vmatprep.subr.mxu0 %v6467
    %6937 = vmatpush1.msra.mxu0 %v6466
    %6938 = vmatprep.subr.mxu0 %v6475
    %6939 = vmatpush1.msra.mxu0 %v6474
    %6940 = vmatprep.subr.mxu0 %v6483
    %6941 = vmatpush1.msra.mxu0 %v6482
    %6942 = vmatprep.subr.mxu0 %v6491
    %6943 = vmatpush1.msra.mxu0 %v6490
    %6944 = vmatprep.subr.mxu0 %v6499
    %6945 = vmatpush1.msra.mxu0 %v6498
    %6946 = vmatprep.subr.mxu0 %v6507
    %6947 = vmatpush1.msra.mxu0 %v6506
    %6948 = vmatprep.subr.mxu0 %v6515
    %6949 = vmatpush1.msra.mxu0 %v6514
    %6950 = vmatprep.subr.mxu0 %v6523
    %6951 = vmatpush1.msra.mxu0 %v6522
    %6952 = vmatprep.subr.mxu0 %v6531
    %6953 = vmatpush1.msra.mxu0 %v6530
    %6954 = vmatprep.subr.mxu0 %v6539
    %6955 = vmatpush1.msra.mxu0 %v6538
    %6956 = vmatprep.subr.mxu0 %v6547
    %6957 = vmatpush1.msra.mxu0 %v6546
    %6958 = vmatprep.subr.mxu0 %v6555
    %6959 = vmatpush1.msra.mxu0 %v6554
    %6960 = vmatprep.subr.mxu0 %v6563
    %6961 = vmatpush1.msra.mxu0 %v6562
    %6962 = vmatprep.subr.mxu0 %v6571
    %6963 = vmatpush1.msra.mxu0 %v6570
    %6964 = vmatprep.subr.mxu0 %v6579
    %6965 = vmatpush1.msra.mxu0 %v6578
    %6966 = vmatprep.subr.mxu0 %v6587
    %6967 = vmatpush1.msra.mxu0 %v6586
    %6968 = vmatprep.mubr.f32.mxu0 %v6329
    %6969 = vmatmul.mubr.f32.gmra.mrb[0].mxu0 %v6335
    %v6970 = vpop.f32.mrb[0].mxu0
    %v6971 = vadd.f32 %v6733, %v6970
    %v6972 = vpop.f32.mrb[0].mxu0
    %v6973 = vadd.f32 %v6737, %v6972
    %6974 = vdwg.mxu0
    %6975 = vmatprep.subr.mxu0 %v6595
    %6976 = vmatpush1.msra.mxu0 %v6594
    %6977 = vmatprep.subr.mxu0 %v6603
    %6978 = vmatpush1.msra.mxu0 %v6602
    %6979 = vmatprep.subr.mxu0 %v6611
    %6980 = vmatpush1.msra.mxu0 %v6610
    %6981 = vmatprep.subr.mxu0 %v6619
    %6982 = vmatpush1.msra.mxu0 %v6618
    %6983 = vmatprep.subr.mxu0 %v6627
    %6984 = vmatpush1.msra.mxu0 %v6626
    %6985 = vmatprep.subr.mxu0 %v6635
    %6986 = vmatpush1.msra.mxu0 %v6634
    %6987 = vmatprep.subr.mxu0 %v6643
    %6988 = vmatpush1.msra.mxu0 %v6642
    %6989 = vmatprep.subr.mxu0 %v6651
    %6990 = vmatpush1.msra.mxu0 %v6650
    %6991 = vmatprep.subr.mxu0 %v6659
    %6992 = vmatpush1.msra.mxu0 %v6658
    %6993 = vmatprep.subr.mxu0 %v6667
    %6994 = vmatpush1.msra.mxu0 %v6666
    %6995 = vmatprep.subr.mxu0 %v6675
    %6996 = vmatpush1.msra.mxu0 %v6674
    %6997 = vmatprep.subr.mxu0 %v6683
    %6998 = vmatpush1.msra.mxu0 %v6682
    %6999 = vmatprep.subr.mxu0 %v6691
    %7000 = vmatpush1.msra.mxu0 %v6690
    %7001 = vmatprep.subr.mxu0 %v6699
    %7002 = vmatpush1.msra.mxu0 %v6698
    %7003 = vmatprep.subr.mxu0 %v6707
    %7004 = vmatpush1.msra.mxu0 %v6706
    %7005 = vmatprep.subr.mxu0 %v6715
    %7006 = vmatpush1.msra.mxu0 %v6714
    %7007 = vmatprep.subr.mxu0 0.0
    %7008 = vmatpush1.msra.mxu0 0.0
    %7009 = vmatprep.subr.mxu0 0.0
    %7010 = vmatpush1.msra.mxu0 0.0
    %7011 = vmatprep.subr.mxu0 0.0
    %7012 = vmatpush1.msra.mxu0 0.0
    %7013 = vmatprep.subr.mxu0 0.0
    %7014 = vmatpush1.msra.mxu0 0.0
    %7015 = vmatprep.subr.mxu0 0.0
    %7016 = vmatpush1.msra.mxu0 0.0
    %7017 = vmatprep.subr.mxu0 0.0
    %7018 = vmatpush1.msra.mxu0 0.0
    %7019 = vmatprep.subr.mxu0 0.0
    %7020 = vmatpush1.msra.mxu0 0.0
    %7021 = vmatprep.subr.mxu0 0.0
    %7022 = vmatpush1.msra.mxu0 0.0
    %7023 = vmatprep.subr.mxu0 0.0
    %7024 = vmatpush1.msra.mxu0 0.0
    %7025 = vmatprep.subr.mxu0 0.0
    %7026 = vmatpush1.msra.mxu0 0.0
    %7027 = vmatprep.subr.mxu0 0.0
    %7028 = vmatpush1.msra.mxu0 0.0
    %7029 = vmatprep.subr.mxu0 0.0
    %7030 = vmatpush1.msra.mxu0 0.0
    %7031 = vmatprep.subr.mxu0 0.0
    %7032 = vmatpush1.msra.mxu0 0.0
    %7033 = vmatprep.subr.mxu0 0.0
    %7034 = vmatpush1.msra.mxu0 0.0
    %7035 = vmatprep.subr.mxu0 0.0
    %7036 = vmatpush1.msra.mxu0 0.0
    %7037 = vmatprep.subr.mxu0 0.0
    %7038 = vmatpush1.msra.mxu0 0.0
    %7039 = vmatprep.mubr.f32.mxu0 0.0
    %7040 = vmatmul.mubr.f32.gmra.mrb[0].mxu0 %v6330
    %v7041 = vpop.f32.mrb[0].mxu0
    %v7042 = vadd.f32 %v6971, %v7041
    %v7043 = vpop.f32.mrb[0].mxu0
    %v7044 = vadd.f32 %v6973, %v7043
    %7045 = vdwg.mxu0
    %7046 = vmatprep.subr.mxu0 %v6341
    %7047 = vmatpush1.msra.mxu0 %v6340
    %7048 = vmatprep.subr.mxu0 %v6349
    %7049 = vmatpush1.msra.mxu0 %v6348
    %7050 = vmatprep.subr.mxu0 %v6357
    %7051 = vmatpush1.msra.mxu0 %v6356
    %7052 = vmatprep.subr.mxu0 %v6365
    %7053 = vmatpush1.msra.mxu0 %v6364
    %7054 = vmatprep.subr.mxu0 %v6373
    %7055 = vmatpush1.msra.mxu0 %v6372
    %7056 = vmatprep.subr.mxu0 %v6381
    %7057 = vmatpush1.msra.mxu0 %v6380
    %7058 = vmatprep.subr.mxu0 %v6389
    %7059 = vmatpush1.msra.mxu0 %v6388
    %7060 = vmatprep.subr.mxu0 %v6397
    %7061 = vmatpush1.msra.mxu0 %v6396
    %7062 = vmatprep.subr.mxu0 %v6405
    %7063 = vmatpush1.msra.mxu0 %v6404
    %7064 = vmatprep.subr.mxu0 %v6413
    %7065 = vmatpush1.msra.mxu0 %v6412
    %7066 = vmatprep.subr.mxu0 %v6421
    %7067 = vmatpush1.msra.mxu0 %v6420
    %7068 = vmatprep.subr.mxu0 %v6429
    %7069 = vmatpush1.msra.mxu0 %v6428
    %7070 = vmatprep.subr.mxu0 %v6437
    %7071 = vmatpush1.msra.mxu0 %v6436
    %7072 = vmatprep.subr.mxu0 %v6445
    %7073 = vmatpush1.msra.mxu0 %v6444
    %7074 = vmatprep.subr.mxu0 %v6453
    %7075 = vmatpush1.msra.mxu0 %v6452
    %7076 = vmatprep.subr.mxu0 %v6461
    %7077 = vmatpush1.msra.mxu0 %v6460
    %7078 = vmatprep.subr.mxu0 %v6469
    %7079 = vmatpush1.msra.mxu0 %v6468
    %7080 = vmatprep.subr.mxu0 %v6477
    %7081 = vmatpush1.msra.mxu0 %v6476
    %7082 = vmatprep.subr.mxu0 %v6485
    %7083 = vmatpush1.msra.mxu0 %v6484
    %7084 = vmatprep.subr.mxu0 %v6493
    %7085 = vmatpush1.msra.mxu0 %v6492
    %7086 = vmatprep.subr.mxu0 %v6501
    %7087 = vmatpush1.msra.mxu0 %v6500
    %7088 = vmatprep.subr.mxu0 %v6509
    %7089 = vmatpush1.msra.mxu0 %v6508
    %7090 = vmatprep.subr.mxu0 %v6517
    %7091 = vmatpush1.msra.mxu0 %v6516
    %7092 = vmatprep.subr.mxu0 %v6525
    %7093 = vmatpush1.msra.mxu0 %v6524
    %7094 = vmatprep.subr.mxu0 %v6533
    %7095 = vmatpush1.msra.mxu0 %v6532
    %7096 = vmatprep.subr.mxu0 %v6541
    %7097 = vmatpush1.msra.mxu0 %v6540
    %7098 = vmatprep.subr.mxu0 %v6549
    %7099 = vmatpush1.msra.mxu0 %v6548
    %7100 = vmatprep.subr.mxu0 %v6557
    %7101 = vmatpush1.msra.mxu0 %v6556
    %7102 = vmatprep.subr.mxu0 %v6565
    %7103 = vmatpush1.msra.mxu0 %v6564
    %7104 = vmatprep.subr.mxu0 %v6573
    %7105 = vmatpush1.msra.mxu0 %v6572
    %7106 = vmatprep.subr.mxu0 %v6581
    %7107 = vmatpush1.msra.mxu0 %v6580
    %7108 = vmatprep.subr.mxu0 %v6589
    %7109 = vmatpush1.msra.mxu0 %v6588
    %7110 = vmatprep.mubr.f32.mxu0 %v6329
    %7111 = vmatmul.mubr.f32.gmra.mrb[0].mxu0 %v6335
    %v7112 = vpop.f32.mrb[0].mxu0
    %v7113 = vadd.f32 %v6741, %v7112
    %v7114 = vpop.f32.mrb[0].mxu0
    %v7115 = vadd.f32 %v6745, %v7114
    %7116 = vdwg.mxu0
    %7117 = vmatprep.subr.mxu0 %v6597
    %7118 = vmatpush1.msra.mxu0 %v6596
    %7119 = vmatprep.subr.mxu0 %v6605
    %7120 = vmatpush1.msra.mxu0 %v6604
    %7121 = vmatprep.subr.mxu0 %v6613
    %7122 = vmatpush1.msra.mxu0 %v6612
    %7123 = vmatprep.subr.mxu0 %v6621
    %7124 = vmatpush1.msra.mxu0 %v6620
    %7125 = vmatprep.subr.mxu0 %v6629
    %7126 = vmatpush1.msra.mxu0 %v6628
    %7127 = vmatprep.subr.mxu0 %v6637
    %7128 = vmatpush1.msra.mxu0 %v6636
    %7129 = vmatprep.subr.mxu0 %v6645
    %7130 = vmatpush1.msra.mxu0 %v6644
    %7131 = vmatprep.subr.mxu0 %v6653
    %7132 = vmatpush1.msra.mxu0 %v6652
    %7133 = vmatprep.subr.mxu0 %v6661
    %7134 = vmatpush1.msra.mxu0 %v6660
    %7135 = vmatprep.subr.mxu0 %v6669
    %7136 = vmatpush1.msra.mxu0 %v6668
    %7137 = vmatprep.subr.mxu0 %v6677
    %7138 = vmatpush1.msra.mxu0 %v6676
    %7139 = vmatprep.subr.mxu0 %v6685
    %7140 = vmatpush1.msra.mxu0 %v6684
    %7141 = vmatprep.subr.mxu0 %v6693
    %7142 = vmatpush1.msra.mxu0 %v6692
    %7143 = vmatprep.subr.mxu0 %v6701
    %7144 = vmatpush1.msra.mxu0 %v6700
    %7145 = vmatprep.subr.mxu0 %v6709
    %7146 = vmatpush1.msra.mxu0 %v6708
    %7147 = vmatprep.subr.mxu0 %v6717
    %7148 = vmatpush1.msra.mxu0 %v6716
    %7149 = vmatprep.subr.mxu0 0.0
    %7150 = vmatpush1.msra.mxu0 0.0
    %7151 = vmatprep.subr.mxu0 0.0
    %7152 = vmatpush1.msra.mxu0 0.0
    %7153 = vmatprep.subr.mxu0 0.0
    %7154 = vmatpush1.msra.mxu0 0.0
    %7155 = vmatprep.subr.mxu0 0.0
    %7156 = vmatpush1.msra.mxu0 0.0
    %7157 = vmatprep.subr.mxu0 0.0
    %7158 = vmatpush1.msra.mxu0 0.0
    %7159 = vmatprep.subr.mxu0 0.0
    %7160 = vmatpush1.msra.mxu0 0.0
    %7161 = vmatprep.subr.mxu0 0.0
    %7162 = vmatpush1.msra.mxu0 0.0
    %7163 = vmatprep.subr.mxu0 0.0
    %7164 = vmatpush1.msra.mxu0 0.0
    %7165 = vmatprep.subr.mxu0 0.0
    %7166 = vmatpush1.msra.mxu0 0.0
    %7167 = vmatprep.subr.mxu0 0.0
    %7168 = vmatpush1.msra.mxu0 0.0
    %7169 = vmatprep.subr.mxu0 0.0
    %7170 = vmatpush1.msra.mxu0 0.0
    %7171 = vmatprep.subr.mxu0 0.0
    %7172 = vmatpush1.msra.mxu0 0.0
    %7173 = vmatprep.subr.mxu0 0.0
    %7174 = vmatpush1.msra.mxu0 0.0
    %7175 = vmatprep.subr.mxu0 0.0
    %7176 = vmatpush1.msra.mxu0 0.0
    %7177 = vmatprep.subr.mxu0 0.0
    %7178 = vmatpush1.msra.mxu0 0.0
    %7179 = vmatprep.subr.mxu0 0.0
    %7180 = vmatpush1.msra.mxu0 0.0
    %7181 = vmatprep.mubr.f32.mxu0 0.0
    %7182 = vmatmul.mubr.f32.gmra.mrb[0].mxu0 %v6330
    %v7183 = vpop.f32.mrb[0].mxu0
    %v7184 = vadd.f32 %v7113, %v7183
    %v7185 = vpop.f32.mrb[0].mxu0
    %v7186 = vadd.f32 %v7115, %v7185
    %7187 = vdwg.mxu0
    %7188 = vmatprep.subr.mxu0 %v6343
    %7189 = vmatpush1.msra.mxu0 %v6342
    %7190 = vmatprep.subr.mxu0 %v6351
    %7191 = vmatpush1.msra.mxu0 %v6350
    %7192 = vmatprep.subr.mxu0 %v6359
    %7193 = vmatpush1.msra.mxu0 %v6358
    %7194 = vmatprep.subr.mxu0 %v6367
    %7195 = vmatpush1.msra.mxu0 %v6366
    %7196 = vmatprep.subr.mxu0 %v6375
    %7197 = vmatpush1.msra.mxu0 %v6374
    %7198 = vmatprep.subr.mxu0 %v6383
    %7199 = vmatpush1.msra.mxu0 %v6382
    %7200 = vmatprep.subr.mxu0 %v6391
    %7201 = vmatpush1.msra.mxu0 %v6390
    %7202 = vmatprep.subr.mxu0 %v6399
    %7203 = vmatpush1.msra.mxu0 %v6398
    %7204 = vmatprep.subr.mxu0 %v6407
    %7205 = vmatpush1.msra.mxu0 %v6406
    %7206 = vmatprep.subr.mxu0 %v6415
    %7207 = vmatpush1.msra.mxu0 %v6414
    %7208 = vmatprep.subr.mxu0 %v6423
    %7209 = vmatpush1.msra.mxu0 %v6422
    %7210 = vmatprep.subr.mxu0 %v6431
    %7211 = vmatpush1.msra.mxu0 %v6430
    %7212 = vmatprep.subr.mxu0 %v6439
    %7213 = vmatpush1.msra.mxu0 %v6438
    %7214 = vmatprep.subr.mxu0 %v6447
    %7215 = vmatpush1.msra.mxu0 %v6446
    %7216 = vmatprep.subr.mxu0 %v6455
    %7217 = vmatpush1.msra.mxu0 %v6454
    %7218 = vmatprep.subr.mxu0 %v6463
    %7219 = vmatpush1.msra.mxu0 %v6462
    %7220 = vmatprep.subr.mxu0 %v6471
    %7221 = vmatpush1.msra.mxu0 %v6470
    %7222 = vmatprep.subr.mxu0 %v6479
    %7223 = vmatpush1.msra.mxu0 %v6478
    %7224 = vmatprep.subr.mxu0 %v6487
    %7225 = vmatpush1.msra.mxu0 %v6486
    %7226 = vmatprep.subr.mxu0 %v6495
    %7227 = vmatpush1.msra.mxu0 %v6494
    %7228 = vmatprep.subr.mxu0 %v6503
    %7229 = vmatpush1.msra.mxu0 %v6502
    %7230 = vmatprep.subr.mxu0 %v6511
    %7231 = vmatpush1.msra.mxu0 %v6510
    %7232 = vmatprep.subr.mxu0 %v6519
    %7233 = vmatpush1.msra.mxu0 %v6518
    %7234 = vmatprep.subr.mxu0 %v6527
    %7235 = vmatpush1.msra.mxu0 %v6526
    %7236 = vmatprep.subr.mxu0 %v6535
    %7237 = vmatpush1.msra.mxu0 %v6534
    %7238 = vmatprep.subr.mxu0 %v6543
    %7239 = vmatpush1.msra.mxu0 %v6542
    %7240 = vmatprep.subr.mxu0 %v6551
    %7241 = vmatpush1.msra.mxu0 %v6550
    %7242 = vmatprep.subr.mxu0 %v6559
    %7243 = vmatpush1.msra.mxu0 %v6558
    %7244 = vmatprep.subr.mxu0 %v6567
    %7245 = vmatpush1.msra.mxu0 %v6566
    %7246 = vmatprep.subr.mxu0 %v6575
    %7247 = vmatpush1.msra.mxu0 %v6574
    %7248 = vmatprep.subr.mxu0 %v6583
    %7249 = vmatpush1.msra.mxu0 %v6582
    %7250 = vmatprep.subr.mxu0 %v6591
    %7251 = vmatpush1.msra.mxu0 %v6590
    %7252 = vmatprep.mubr.f32.mxu0 %v6329
    %7253 = vmatmul.mubr.f32.gmra.mrb[0].mxu0 %v6335
    %v7254 = vpop.f32.mrb[0].mxu0
    %v7255 = vadd.f32 %v6749, %v7254
    %v7256 = vpop.f32.mrb[0].mxu0
    %v7257 = vadd.f32 %v6753, %v7256
    %7258 = vdwg.mxu0
    %7259 = vmatprep.subr.mxu0 %v6599
    %7260 = vmatpush1.msra.mxu0 %v6598
    %7261 = vmatprep.subr.mxu0 %v6607
    %7262 = vmatpush1.msra.mxu0 %v6606
    %7263 = vmatprep.subr.mxu0 %v6615
    %7264 = vmatpush1.msra.mxu0 %v6614
    %7265 = vmatprep.subr.mxu0 %v6623
    %7266 = vmatpush1.msra.mxu0 %v6622
    %7267 = vmatprep.subr.mxu0 %v6631
    %7268 = vmatpush1.msra.mxu0 %v6630
    %7269 = vmatprep.subr.mxu0 %v6639
    %7270 = vmatpush1.msra.mxu0 %v6638
    %7271 = vmatprep.subr.mxu0 %v6647
    %7272 = vmatpush1.msra.mxu0 %v6646
    %7273 = vmatprep.subr.mxu0 %v6655
    %7274 = vmatpush1.msra.mxu0 %v6654
    %7275 = vmatprep.subr.mxu0 %v6663
    %7276 = vmatpush1.msra.mxu0 %v6662
    %7277 = vmatprep.subr.mxu0 %v6671
    %7278 = vmatpush1.msra.mxu0 %v6670
    %7279 = vmatprep.subr.mxu0 %v6679
    %7280 = vmatpush1.msra.mxu0 %v6678
    %7281 = vmatprep.subr.mxu0 %v6687
    %7282 = vmatpush1.msra.mxu0 %v6686
    %7283 = vmatprep.subr.mxu0 %v6695
    %7284 = vmatpush1.msra.mxu0 %v6694
    %7285 = vmatprep.subr.mxu0 %v6703
    %7286 = vmatpush1.msra.mxu0 %v6702
    %7287 = vmatprep.subr.mxu0 %v6711
    %7288 = vmatpush1.msra.mxu0 %v6710
    %7289 = vmatprep.subr.mxu0 %v6719
    %7290 = vmatpush1.msra.mxu0 %v6718
    %7291 = vmatprep.subr.mxu0 0.0
    %7292 = vmatpush1.msra.mxu0 0.0
    %7293 = vmatprep.subr.mxu0 0.0
    %7294 = vmatpush1.msra.mxu0 0.0
    %7295 = vmatprep.subr.mxu0 0.0
    %7296 = vmatpush1.msra.mxu0 0.0
    %7297 = vmatprep.subr.mxu0 0.0
    %7298 = vmatpush1.msra.mxu0 0.0
    %7299 = vmatprep.subr.mxu0 0.0
    %7300 = vmatpush1.msra.mxu0 0.0
    %7301 = vmatprep.subr.mxu0 0.0
    %7302 = vmatpush1.msra.mxu0 0.0
    %7303 = vmatprep.subr.mxu0 0.0
    %7304 = vmatpush1.msra.mxu0 0.0
    %7305 = vmatprep.subr.mxu0 0.0
    %7306 = vmatpush1.msra.mxu0 0.0
    %7307 = vmatprep.subr.mxu0 0.0
    %7308 = vmatpush1.msra.mxu0 0.0
    %7309 = vmatprep.subr.mxu0 0.0
    %7310 = vmatpush1.msra.mxu0 0.0
    %7311 = vmatprep.subr.mxu0 0.0
    %7312 = vmatpush1.msra.mxu0 0.0
    %7313 = vmatprep.subr.mxu0 0.0
    %7314 = vmatpush1.msra.mxu0 0.0
    %7315 = vmatprep.subr.mxu0 0.0
    %7316 = vmatpush1.msra.mxu0 0.0
    %7317 = vmatprep.subr.mxu0 0.0
    %7318 = vmatpush1.msra.mxu0 0.0
    %7319 = vmatprep.subr.mxu0 0.0
    %7320 = vmatpush1.msra.mxu0 0.0
    %7321 = vmatprep.subr.mxu0 0.0
    %7322 = vmatpush1.msra.mxu0 0.0
    %7323 = vmatprep.mubr.f32.mxu0 0.0
    %7324 = vmatmul.mubr.f32.gmra.mrb[0].mxu0 %v6330
    %v7325 = vpop.f32.mrb[0].mxu0
    %v7326 = vadd.f32 %v7255, %v7325
    %v7327 = vpop.f32.mrb[0].mxu0
    %v7328 = vadd.f32 %v7257, %v7327
    %7329 = vdwg.mxu0
    %v7330 = vxor.u32 %v6900, 2147483648
    %v7331 = vxor.u32 %v6902, 2147483648
    %v7332 = vmul.f32 %v7330, 1.442695
    %v7333 = vpow.pop %v7332
    %v7334 = vmul.f32 %v7331, 1.442695
    %v7335 = vpow.pop %v7334
    %v7336 = vadd.f32 %v7333, 1.0
    %v7337 = vadd.f32 %v7335, 1.0
    %v7338 = vrcp.pop %v7336
    %v7339 = vmul.f32 1.0, %v7338
    %v7340 = vrcp.pop %v7337
    %v7341 = vmul.f32 1.0, %v7340
    %v7342 = vxor.u32 %v7042, 2147483648
    %v7343 = vxor.u32 %v7044, 2147483648
    %v7344 = vmul.f32 %v7342, 1.442695
    %v7345 = vpow.pop %v7344
    %v7346 = vmul.f32 %v7343, 1.442695
    %v7347 = vpow.pop %v7346
    %v7348 = vadd.f32 %v7345, 1.0
    %v7349 = vadd.f32 %v7347, 1.0
    %v7350 = vrcp.pop %v7348
    %v7351 = vmul.f32 1.0, %v7350
    %v7352 = vrcp.pop %v7349
    %v7353 = vmul.f32 1.0, %v7352
    %v7354 = vtanh.pop %v7184
    %v7355 = vtanh.pop %v7186
    %v7356 = vxor.u32 %v7326, 2147483648
    %v7357 = vxor.u32 %v7328, 2147483648
    %v7358 = vmul.f32 %v7356, 1.442695
    %v7359 = vpow.pop %v7358
    %v7360 = vmul.f32 %v7357, 1.442695
    %v7361 = vpow.pop %v7360
    %v7362 = vadd.f32 %v7359, 1.0
    %v7363 = vadd.f32 %v7361, 1.0
    %v7364 = vrcp.pop %v7362
    %v7365 = vmul.f32 1.0, %v7364
    %v7366 = vrcp.pop %v7363
    %v7367 = vmul.f32 1.0, %v7366
    %v7368 = vmul.f32 %v7351, %v6325
    %v7369 = vmul.f32 %v7353, %v6326
    %v7370 = vmul.f32 %v7339, %v7354
    %v7371 = vmul.f32 %v7341, %v7355
    %v7372 = vadd.f32 %v7368, %v7370
    %v7373 = vadd.f32 %v7369, %v7371
    %v7374 = vtanh.pop %v7372
    %v7375 = vtanh.pop %v7373
    %v7376 = vmul.f32 %v7365, %v7374
    %v7377 = vmul.f32 %v7367, %v7375
    %s7378 = scalar_lea.vmem [#allocation8], 96
    %7379 = vst [vmem:[%s7378] sm:$0xff] %v7376
    %7380 = vst [vmem:[%s7378 + $0x8] sm:$0xff] %v7377
    %s7381 = scalar_lea.vmem [#allocation2], 56
    %v7382 = vld [vmem:[%s7381] sm:$0xff]
    %v7383 = vld [vmem:[#allocation5] sm:$0xff]
    %v7384 = vld [vmem:[#allocation5 + $0x8] sm:$0xff]
    %v7385 = vld [vmem:[#allocation5 + $0x10] sm:$0xff]
    %v7386 = vld [vmem:[#allocation5 + $0x18] sm:$0xff]
    %v7387 = vld [vmem:[#allocation5 + $0x20] sm:$0xff]
    %v7388 = vld [vmem:[#allocation5 + $0x28] sm:$0xff]
    %v7389 = vld [vmem:[#allocation5 + $0x30] sm:$0xff]
    %v7390 = vld [vmem:[#allocation5 + $0x38] sm:$0xff]
    %v7391 = vld [vmem:[#allocation5 + $0x40] sm:$0xff]
    %v7392 = vld [vmem:[#allocation5 + $0x48] sm:$0xff]
    %v7393 = vld [vmem:[#allocation5 + $0x50] sm:$0xff]
    %v7394 = vld [vmem:[#allocation5 + $0x58] sm:$0xff]
    %v7395 = vld [vmem:[#allocation5 + $0x60] sm:$0xff]
    %v7396 = vld [vmem:[#allocation5 + $0x68] sm:$0xff]
    %v7397 = vld [vmem:[#allocation5 + $0x70] sm:$0xff]
    %v7398 = vld [vmem:[#allocation5 + $0x78] sm:$0xff]
    %v7399 = vld [vmem:[#allocation5 + $0x80] sm:$0xff]
    %v7400 = vld [vmem:[#allocation5 + $0x88] sm:$0xff]
    %v7401 = vld [vmem:[#allocation5 + $0x90] sm:$0xff]
    %v7402 = vld [vmem:[#allocation5 + $0x98] sm:$0xff]
    %v7403 = vld [vmem:[#allocation5 + $0xa0] sm:$0xff]
    %v7404 = vld [vmem:[#allocation5 + $0xa8] sm:$0xff]
    %v7405 = vld [vmem:[#allocation5 + $0xb0] sm:$0xff]
    %v7406 = vld [vmem:[#allocation5 + $0xb8] sm:$0xff]
    %v7407 = vld [vmem:[#allocation5 + $0xc0] sm:$0xff]
    %v7408 = vld [vmem:[#allocation5 + $0xc8] sm:$0xff]
    %v7409 = vld [vmem:[#allocation5 + $0xd0] sm:$0xff]
    %v7410 = vld [vmem:[#allocation5 + $0xd8] sm:$0xff]
    %v7411 = vld [vmem:[#allocation5 + $0xe0] sm:$0xff]
    %v7412 = vld [vmem:[#allocation5 + $0xe8] sm:$0xff]
    %v7413 = vld [vmem:[#allocation5 + $0xf0] sm:$0xff]
    %v7414 = vld [vmem:[#allocation5 + $0xf8] sm:$0xff]
    %v7415 = vld [vmem:[#allocation5 + $0x100] sm:$0xff]
    %v7416 = vld [vmem:[#allocation5 + $0x108] sm:$0xff]
    %v7417 = vld [vmem:[#allocation5 + $0x110] sm:$0xff]
    %v7418 = vld [vmem:[#allocation5 + $0x118] sm:$0xff]
    %v7419 = vld [vmem:[#allocation5 + $0x120] sm:$0xff]
    %v7420 = vld [vmem:[#allocation5 + $0x128] sm:$0xff]
    %v7421 = vld [vmem:[#allocation5 + $0x130] sm:$0xff]
    %v7422 = vld [vmem:[#allocation5 + $0x138] sm:$0xff]
    %v7423 = vld [vmem:[#allocation5 + $0x140] sm:$0xff]
    %v7424 = vld [vmem:[#allocation5 + $0x148] sm:$0xff]
    %v7425 = vld [vmem:[#allocation5 + $0x150] sm:$0xff]
    %v7426 = vld [vmem:[#allocation5 + $0x158] sm:$0xff]
    %v7427 = vld [vmem:[#allocation5 + $0x160] sm:$0xff]
    %v7428 = vld [vmem:[#allocation5 + $0x168] sm:$0xff]
    %v7429 = vld [vmem:[#allocation5 + $0x170] sm:$0xff]
    %v7430 = vld [vmem:[#allocation5 + $0x178] sm:$0xff]
    %v7431 = vld [vmem:[#allocation5 + $0x180] sm:$0xff]
    %v7432 = vld [vmem:[#allocation5 + $0x188] sm:$0xff]
    %v7433 = vld [vmem:[#allocation5 + $0x190] sm:$0xff]
    %v7434 = vld [vmem:[#allocation5 + $0x198] sm:$0xff]
    %v7435 = vld [vmem:[#allocation5 + $0x1a0] sm:$0xff]
    %v7436 = vld [vmem:[#allocation5 + $0x1a8] sm:$0xff]
    %v7437 = vld [vmem:[#allocation5 + $0x1b0] sm:$0xff]
    %v7438 = vld [vmem:[#allocation5 + $0x1b8] sm:$0xff]
    %v7439 = vld [vmem:[#allocation5 + $0x1c0] sm:$0xff]
    %v7440 = vld [vmem:[#allocation5 + $0x1c8] sm:$0xff]
    %v7441 = vld [vmem:[#allocation5 + $0x1d0] sm:$0xff]
    %v7442 = vld [vmem:[#allocation5 + $0x1d8] sm:$0xff]
    %v7443 = vld [vmem:[#allocation5 + $0x1e0] sm:$0xff]
    %v7444 = vld [vmem:[#allocation5 + $0x1e8] sm:$0xff]
    %v7445 = vld [vmem:[#allocation5 + $0x1f0] sm:$0xff]
    %v7446 = vld [vmem:[#allocation5 + $0x1f8] sm:$0xff]
    %v7447 = vld [vmem:[#allocation5 + $0x200] sm:$0xff]
    %v7448 = vld [vmem:[#allocation5 + $0x208] sm:$0xff]
    %v7449 = vld [vmem:[#allocation5 + $0x210] sm:$0xff]
    %v7450 = vld [vmem:[#allocation5 + $0x218] sm:$0xff]
    %v7451 = vld [vmem:[#allocation5 + $0x220] sm:$0xff]
    %v7452 = vld [vmem:[#allocation5 + $0x228] sm:$0xff]
    %v7453 = vld [vmem:[#allocation5 + $0x230] sm:$0xff]
    %v7454 = vld [vmem:[#allocation5 + $0x238] sm:$0xff]
    %v7455 = vld [vmem:[#allocation5 + $0x240] sm:$0xff]
    %v7456 = vld [vmem:[#allocation5 + $0x248] sm:$0xff]
    %v7457 = vld [vmem:[#allocation5 + $0x250] sm:$0xff]
    %v7458 = vld [vmem:[#allocation5 + $0x258] sm:$0xff]
    %v7459 = vld [vmem:[#allocation5 + $0x260] sm:$0xff]
    %v7460 = vld [vmem:[#allocation5 + $0x268] sm:$0xff]
    %v7461 = vld [vmem:[#allocation5 + $0x270] sm:$0xff]
    %v7462 = vld [vmem:[#allocation5 + $0x278] sm:$0xff]
    %v7463 = vld [vmem:[#allocation5 + $0x280] sm:$0xff]
    %v7464 = vld [vmem:[#allocation5 + $0x288] sm:$0xff]
    %v7465 = vld [vmem:[#allocation5 + $0x290] sm:$0xff]
    %v7466 = vld [vmem:[#allocation5 + $0x298] sm:$0xff]
    %v7467 = vld [vmem:[#allocation5 + $0x2a0] sm:$0xff]
    %v7468 = vld [vmem:[#allocation5 + $0x2a8] sm:$0xff]
    %v7469 = vld [vmem:[#allocation5 + $0x2b0] sm:$0xff]
    %v7470 = vld [vmem:[#allocation5 + $0x2b8] sm:$0xff]
    %v7471 = vld [vmem:[#allocation5 + $0x2c0] sm:$0xff]
    %v7472 = vld [vmem:[#allocation5 + $0x2c8] sm:$0xff]
    %v7473 = vld [vmem:[#allocation5 + $0x2d0] sm:$0xff]
    %v7474 = vld [vmem:[#allocation5 + $0x2d8] sm:$0xff]
    %v7475 = vld [vmem:[#allocation5 + $0x2e0] sm:$0xff]
    %v7476 = vld [vmem:[#allocation5 + $0x2e8] sm:$0xff]
    %v7477 = vld [vmem:[#allocation5 + $0x2f0] sm:$0xff]
    %v7478 = vld [vmem:[#allocation5 + $0x2f8] sm:$0xff]
    %v7479 = vld [vmem:[#allocation5 + $0x300] sm:$0xff]
    %v7480 = vld [vmem:[#allocation5 + $0x308] sm:$0xff]
    %v7481 = vld [vmem:[#allocation5 + $0x310] sm:$0xff]
    %v7482 = vld [vmem:[#allocation5 + $0x318] sm:$0xff]
    %v7483 = vld [vmem:[#allocation5 + $0x320] sm:$0xff]
    %v7484 = vld [vmem:[#allocation5 + $0x328] sm:$0xff]
    %v7485 = vld [vmem:[#allocation5 + $0x330] sm:$0xff]
    %v7486 = vld [vmem:[#allocation5 + $0x338] sm:$0xff]
    %v7487 = vld [vmem:[#allocation5 + $0x340] sm:$0xff]
    %v7488 = vld [vmem:[#allocation5 + $0x348] sm:$0xff]
    %v7489 = vld [vmem:[#allocation5 + $0x350] sm:$0xff]
    %v7490 = vld [vmem:[#allocation5 + $0x358] sm:$0xff]
    %v7491 = vld [vmem:[#allocation5 + $0x360] sm:$0xff]
    %v7492 = vld [vmem:[#allocation5 + $0x368] sm:$0xff]
    %v7493 = vld [vmem:[#allocation5 + $0x370] sm:$0xff]
    %v7494 = vld [vmem:[#allocation5 + $0x378] sm:$0xff]
    %v7495 = vld [vmem:[#allocation5 + $0x380] sm:$0xff]
    %v7496 = vld [vmem:[#allocation5 + $0x388] sm:$0xff]
    %v7497 = vld [vmem:[#allocation5 + $0x390] sm:$0xff]
    %v7498 = vld [vmem:[#allocation5 + $0x398] sm:$0xff]
    %v7499 = vld [vmem:[#allocation5 + $0x3a0] sm:$0xff]
    %v7500 = vld [vmem:[#allocation5 + $0x3a8] sm:$0xff]
    %v7501 = vld [vmem:[#allocation5 + $0x3b0] sm:$0xff]
    %v7502 = vld [vmem:[#allocation5 + $0x3b8] sm:$0xff]
    %v7503 = vld [vmem:[#allocation5 + $0x3c0] sm:$0xff]
    %v7504 = vld [vmem:[#allocation5 + $0x3c8] sm:$0xff]
    %v7505 = vld [vmem:[#allocation5 + $0x3d0] sm:$0xff]
    %v7506 = vld [vmem:[#allocation5 + $0x3d8] sm:$0xff]
    %v7507 = vld [vmem:[#allocation5 + $0x3e0] sm:$0xff]
    %v7508 = vld [vmem:[#allocation5 + $0x3e8] sm:$0xff]
    %v7509 = vld [vmem:[#allocation5 + $0x3f0] sm:$0xff]
    %v7510 = vld [vmem:[#allocation5 + $0x3f8] sm:$0xff]
    %v7511 = vld [vmem:[#allocation5 + $0x400] sm:$0xff]
    %v7512 = vld [vmem:[#allocation5 + $0x408] sm:$0xff]
    %v7513 = vld [vmem:[#allocation5 + $0x410] sm:$0xff]
    %v7514 = vld [vmem:[#allocation5 + $0x418] sm:$0xff]
    %v7515 = vld [vmem:[#allocation5 + $0x420] sm:$0xff]
    %v7516 = vld [vmem:[#allocation5 + $0x428] sm:$0xff]
    %v7517 = vld [vmem:[#allocation5 + $0x430] sm:$0xff]
    %v7518 = vld [vmem:[#allocation5 + $0x438] sm:$0xff]
    %v7519 = vld [vmem:[#allocation5 + $0x440] sm:$0xff]
    %v7520 = vld [vmem:[#allocation5 + $0x448] sm:$0xff]
    %v7521 = vld [vmem:[#allocation5 + $0x450] sm:$0xff]
    %v7522 = vld [vmem:[#allocation5 + $0x458] sm:$0xff]
    %v7523 = vld [vmem:[#allocation5 + $0x460] sm:$0xff]
    %v7524 = vld [vmem:[#allocation5 + $0x468] sm:$0xff]
    %v7525 = vld [vmem:[#allocation5 + $0x470] sm:$0xff]
    %v7526 = vld [vmem:[#allocation5 + $0x478] sm:$0xff]
    %v7527 = vld [vmem:[#allocation5 + $0x480] sm:$0xff]
    %v7528 = vld [vmem:[#allocation5 + $0x488] sm:$0xff]
    %v7529 = vld [vmem:[#allocation5 + $0x490] sm:$0xff]
    %v7530 = vld [vmem:[#allocation5 + $0x498] sm:$0xff]
    %v7531 = vld [vmem:[#allocation5 + $0x4a0] sm:$0xff]
    %v7532 = vld [vmem:[#allocation5 + $0x4a8] sm:$0xff]
    %v7533 = vld [vmem:[#allocation5 + $0x4b0] sm:$0xff]
    %v7534 = vld [vmem:[#allocation5 + $0x4b8] sm:$0xff]
    %v7535 = vld [vmem:[#allocation5 + $0x4c0] sm:$0xff]
    %v7536 = vld [vmem:[#allocation5 + $0x4c8] sm:$0xff]
    %v7537 = vld [vmem:[#allocation5 + $0x4d0] sm:$0xff]
    %v7538 = vld [vmem:[#allocation5 + $0x4d8] sm:$0xff]
    %v7539 = vld [vmem:[#allocation5 + $0x4e0] sm:$0xff]
    %v7540 = vld [vmem:[#allocation5 + $0x4e8] sm:$0xff]
    %v7541 = vld [vmem:[#allocation5 + $0x4f0] sm:$0xff]
    %v7542 = vld [vmem:[#allocation5 + $0x4f8] sm:$0xff]
    %v7543 = vld [vmem:[#allocation5 + $0x500] sm:$0xff]
    %v7544 = vld [vmem:[#allocation5 + $0x508] sm:$0xff]
    %v7545 = vld [vmem:[#allocation5 + $0x510] sm:$0xff]
    %v7546 = vld [vmem:[#allocation5 + $0x518] sm:$0xff]
    %v7547 = vld [vmem:[#allocation5 + $0x520] sm:$0xff]
    %v7548 = vld [vmem:[#allocation5 + $0x528] sm:$0xff]
    %v7549 = vld [vmem:[#allocation5 + $0x530] sm:$0xff]
    %v7550 = vld [vmem:[#allocation5 + $0x538] sm:$0xff]
    %v7551 = vld [vmem:[#allocation5 + $0x540] sm:$0xff]
    %v7552 = vld [vmem:[#allocation5 + $0x548] sm:$0xff]
    %v7553 = vld [vmem:[#allocation5 + $0x550] sm:$0xff]
    %v7554 = vld [vmem:[#allocation5 + $0x558] sm:$0xff]
    %v7555 = vld [vmem:[#allocation5 + $0x560] sm:$0xff]
    %v7556 = vld [vmem:[#allocation5 + $0x568] sm:$0xff]
    %v7557 = vld [vmem:[#allocation5 + $0x570] sm:$0xff]
    %v7558 = vld [vmem:[#allocation5 + $0x578] sm:$0xff]
    %v7559 = vld [vmem:[#allocation5 + $0x580] sm:$0xff]
    %v7560 = vld [vmem:[#allocation5 + $0x588] sm:$0xff]
    %v7561 = vld [vmem:[#allocation5 + $0x590] sm:$0xff]
    %v7562 = vld [vmem:[#allocation5 + $0x598] sm:$0xff]
    %v7563 = vld [vmem:[#allocation5 + $0x5a0] sm:$0xff]
    %v7564 = vld [vmem:[#allocation5 + $0x5a8] sm:$0xff]
    %v7565 = vld [vmem:[#allocation5 + $0x5b0] sm:$0xff]
    %v7566 = vld [vmem:[#allocation5 + $0x5b8] sm:$0xff]
    %v7567 = vld [vmem:[#allocation5 + $0x5c0] sm:$0xff]
    %v7568 = vld [vmem:[#allocation5 + $0x5c8] sm:$0xff]
    %v7569 = vld [vmem:[#allocation5 + $0x5d0] sm:$0xff]
    %v7570 = vld [vmem:[#allocation5 + $0x5d8] sm:$0xff]
    %v7571 = vld [vmem:[#allocation5 + $0x5e0] sm:$0xff]
    %v7572 = vld [vmem:[#allocation5 + $0x5e8] sm:$0xff]
    %v7573 = vld [vmem:[#allocation5 + $0x5f0] sm:$0xff]
    %v7574 = vld [vmem:[#allocation5 + $0x5f8] sm:$0xff]
    %v7575 = vld [vmem:[#allocation5 + $0x600] sm:$0xff]
    %v7576 = vld [vmem:[#allocation5 + $0x608] sm:$0xff]
    %v7577 = vld [vmem:[#allocation5 + $0x610] sm:$0xff]
    %v7578 = vld [vmem:[#allocation5 + $0x618] sm:$0xff]
    %v7579 = vld [vmem:[#allocation5 + $0x620] sm:$0xff]
    %v7580 = vld [vmem:[#allocation5 + $0x628] sm:$0xff]
    %v7581 = vld [vmem:[#allocation5 + $0x630] sm:$0xff]
    %v7582 = vld [vmem:[#allocation5 + $0x638] sm:$0xff]
    %v7583 = vld [vmem:[#allocation5 + $0x640] sm:$0xff]
    %v7584 = vld [vmem:[#allocation5 + $0x648] sm:$0xff]
    %v7585 = vld [vmem:[#allocation5 + $0x650] sm:$0xff]
    %v7586 = vld [vmem:[#allocation5 + $0x658] sm:$0xff]
    %v7587 = vld [vmem:[#allocation5 + $0x660] sm:$0xff]
    %v7588 = vld [vmem:[#allocation5 + $0x668] sm:$0xff]
    %v7589 = vld [vmem:[#allocation5 + $0x670] sm:$0xff]
    %v7590 = vld [vmem:[#allocation5 + $0x678] sm:$0xff]
    %v7591 = vld [vmem:[#allocation5 + $0x680] sm:$0xff]
    %v7592 = vld [vmem:[#allocation5 + $0x688] sm:$0xff]
    %v7593 = vld [vmem:[#allocation5 + $0x690] sm:$0xff]
    %v7594 = vld [vmem:[#allocation5 + $0x698] sm:$0xff]
    %v7595 = vld [vmem:[#allocation5 + $0x6a0] sm:$0xff]
    %v7596 = vld [vmem:[#allocation5 + $0x6a8] sm:$0xff]
    %v7597 = vld [vmem:[#allocation5 + $0x6b0] sm:$0xff]
    %v7598 = vld [vmem:[#allocation5 + $0x6b8] sm:$0xff]
    %v7599 = vld [vmem:[#allocation5 + $0x6c0] sm:$0xff]
    %v7600 = vld [vmem:[#allocation5 + $0x6c8] sm:$0xff]
    %v7601 = vld [vmem:[#allocation5 + $0x6d0] sm:$0xff]
    %v7602 = vld [vmem:[#allocation5 + $0x6d8] sm:$0xff]
    %v7603 = vld [vmem:[#allocation5 + $0x6e0] sm:$0xff]
    %v7604 = vld [vmem:[#allocation5 + $0x6e8] sm:$0xff]
    %v7605 = vld [vmem:[#allocation5 + $0x6f0] sm:$0xff]
    %v7606 = vld [vmem:[#allocation5 + $0x6f8] sm:$0xff]
    %v7607 = vld [vmem:[#allocation5 + $0x700] sm:$0xff]
    %v7608 = vld [vmem:[#allocation5 + $0x708] sm:$0xff]
    %v7609 = vld [vmem:[#allocation5 + $0x710] sm:$0xff]
    %v7610 = vld [vmem:[#allocation5 + $0x718] sm:$0xff]
    %v7611 = vld [vmem:[#allocation5 + $0x720] sm:$0xff]
    %v7612 = vld [vmem:[#allocation5 + $0x728] sm:$0xff]
    %v7613 = vld [vmem:[#allocation5 + $0x730] sm:$0xff]
    %v7614 = vld [vmem:[#allocation5 + $0x738] sm:$0xff]
    %v7615 = vld [vmem:[#allocation5 + $0x740] sm:$0xff]
    %v7616 = vld [vmem:[#allocation5 + $0x748] sm:$0xff]
    %v7617 = vld [vmem:[#allocation5 + $0x750] sm:$0xff]
    %v7618 = vld [vmem:[#allocation5 + $0x758] sm:$0xff]
    %v7619 = vld [vmem:[#allocation5 + $0x760] sm:$0xff]
    %v7620 = vld [vmem:[#allocation5 + $0x768] sm:$0xff]
    %v7621 = vld [vmem:[#allocation5 + $0x770] sm:$0xff]
    %v7622 = vld [vmem:[#allocation5 + $0x778] sm:$0xff]
    %v7623 = vld [vmem:[#allocation5 + $0x780] sm:$0xff]
    %v7624 = vld [vmem:[#allocation5 + $0x788] sm:$0xff]
    %v7625 = vld [vmem:[#allocation5 + $0x790] sm:$0xff]
    %v7626 = vld [vmem:[#allocation5 + $0x798] sm:$0xff]
    %v7627 = vld [vmem:[#allocation5 + $0x7a0] sm:$0xff]
    %v7628 = vld [vmem:[#allocation5 + $0x7a8] sm:$0xff]
    %v7629 = vld [vmem:[#allocation5 + $0x7b0] sm:$0xff]
    %v7630 = vld [vmem:[#allocation5 + $0x7b8] sm:$0xff]
    %v7631 = vld [vmem:[#allocation5 + $0x7c0] sm:$0xff]
    %v7632 = vld [vmem:[#allocation5 + $0x7c8] sm:$0xff]
    %v7633 = vld [vmem:[#allocation5 + $0x7d0] sm:$0xff]
    %v7634 = vld [vmem:[#allocation5 + $0x7d8] sm:$0xff]
    %v7635 = vld [vmem:[#allocation5 + $0x7e0] sm:$0xff]
    %v7636 = vld [vmem:[#allocation5 + $0x7e8] sm:$0xff]
    %v7637 = vld [vmem:[#allocation5 + $0x7f0] sm:$0xff]
    %v7638 = vld [vmem:[#allocation5 + $0x7f8] sm:$0xff]
    %v7639 = vld [vmem:[#allocation5 + $0x800] sm:$0xff]
    %v7640 = vld [vmem:[#allocation5 + $0x808] sm:$0xff]
    %v7641 = vld [vmem:[#allocation5 + $0x810] sm:$0xff]
    %v7642 = vld [vmem:[#allocation5 + $0x818] sm:$0xff]
    %v7643 = vld [vmem:[#allocation5 + $0x820] sm:$0xff]
    %v7644 = vld [vmem:[#allocation5 + $0x828] sm:$0xff]
    %v7645 = vld [vmem:[#allocation5 + $0x830] sm:$0xff]
    %v7646 = vld [vmem:[#allocation5 + $0x838] sm:$0xff]
    %v7647 = vld [vmem:[#allocation5 + $0x840] sm:$0xff]
    %v7648 = vld [vmem:[#allocation5 + $0x848] sm:$0xff]
    %v7649 = vld [vmem:[#allocation5 + $0x850] sm:$0xff]
    %v7650 = vld [vmem:[#allocation5 + $0x858] sm:$0xff]
    %v7651 = vld [vmem:[#allocation5 + $0x860] sm:$0xff]
    %v7652 = vld [vmem:[#allocation5 + $0x868] sm:$0xff]
    %v7653 = vld [vmem:[#allocation5 + $0x870] sm:$0xff]
    %v7654 = vld [vmem:[#allocation5 + $0x878] sm:$0xff]
    %v7655 = vld [vmem:[#allocation5 + $0x880] sm:$0xff]
    %v7656 = vld [vmem:[#allocation5 + $0x888] sm:$0xff]
    %v7657 = vld [vmem:[#allocation5 + $0x890] sm:$0xff]
    %v7658 = vld [vmem:[#allocation5 + $0x898] sm:$0xff]
    %v7659 = vld [vmem:[#allocation5 + $0x8a0] sm:$0xff]
    %v7660 = vld [vmem:[#allocation5 + $0x8a8] sm:$0xff]
    %v7661 = vld [vmem:[#allocation5 + $0x8b0] sm:$0xff]
    %v7662 = vld [vmem:[#allocation5 + $0x8b8] sm:$0xff]
    %v7663 = vld [vmem:[#allocation5 + $0x8c0] sm:$0xff]
    %v7664 = vld [vmem:[#allocation5 + $0x8c8] sm:$0xff]
    %v7665 = vld [vmem:[#allocation5 + $0x8d0] sm:$0xff]
    %v7666 = vld [vmem:[#allocation5 + $0x8d8] sm:$0xff]
    %v7667 = vld [vmem:[#allocation5 + $0x8e0] sm:$0xff]
    %v7668 = vld [vmem:[#allocation5 + $0x8e8] sm:$0xff]
    %v7669 = vld [vmem:[#allocation5 + $0x8f0] sm:$0xff]
    %v7670 = vld [vmem:[#allocation5 + $0x8f8] sm:$0xff]
    %v7671 = vld [vmem:[#allocation5 + $0x900] sm:$0xff]
    %v7672 = vld [vmem:[#allocation5 + $0x908] sm:$0xff]
    %v7673 = vld [vmem:[#allocation5 + $0x910] sm:$0xff]
    %v7674 = vld [vmem:[#allocation5 + $0x918] sm:$0xff]
    %v7675 = vld [vmem:[#allocation5 + $0x920] sm:$0xff]
    %v7676 = vld [vmem:[#allocation5 + $0x928] sm:$0xff]
    %v7677 = vld [vmem:[#allocation5 + $0x930] sm:$0xff]
    %v7678 = vld [vmem:[#allocation5 + $0x938] sm:$0xff]
    %v7679 = vld [vmem:[#allocation5 + $0x940] sm:$0xff]
    %v7680 = vld [vmem:[#allocation5 + $0x948] sm:$0xff]
    %v7681 = vld [vmem:[#allocation5 + $0x950] sm:$0xff]
    %v7682 = vld [vmem:[#allocation5 + $0x958] sm:$0xff]
    %v7683 = vld [vmem:[#allocation5 + $0x960] sm:$0xff]
    %v7684 = vld [vmem:[#allocation5 + $0x968] sm:$0xff]
    %v7685 = vld [vmem:[#allocation5 + $0x970] sm:$0xff]
    %v7686 = vld [vmem:[#allocation5 + $0x978] sm:$0xff]
    %v7687 = vld [vmem:[#allocation5 + $0x980] sm:$0xff]
    %v7688 = vld [vmem:[#allocation5 + $0x988] sm:$0xff]
    %v7689 = vld [vmem:[#allocation5 + $0x990] sm:$0xff]
    %v7690 = vld [vmem:[#allocation5 + $0x998] sm:$0xff]
    %v7691 = vld [vmem:[#allocation5 + $0x9a0] sm:$0xff]
    %v7692 = vld [vmem:[#allocation5 + $0x9a8] sm:$0xff]
    %v7693 = vld [vmem:[#allocation5 + $0x9b0] sm:$0xff]
    %v7694 = vld [vmem:[#allocation5 + $0x9b8] sm:$0xff]
    %v7695 = vld [vmem:[#allocation5 + $0x9c0] sm:$0xff]
    %v7696 = vld [vmem:[#allocation5 + $0x9c8] sm:$0xff]
    %v7697 = vld [vmem:[#allocation5 + $0x9d0] sm:$0xff]
    %v7698 = vld [vmem:[#allocation5 + $0x9d8] sm:$0xff]
    %v7699 = vld [vmem:[#allocation5 + $0x9e0] sm:$0xff]
    %v7700 = vld [vmem:[#allocation5 + $0x9e8] sm:$0xff]
    %v7701 = vld [vmem:[#allocation5 + $0x9f0] sm:$0xff]
    %v7702 = vld [vmem:[#allocation5 + $0x9f8] sm:$0xff]
    %v7703 = vld [vmem:[#allocation5 + $0xa00] sm:$0xff]
    %v7704 = vld [vmem:[#allocation5 + $0xa08] sm:$0xff]
    %v7705 = vld [vmem:[#allocation5 + $0xa10] sm:$0xff]
    %v7706 = vld [vmem:[#allocation5 + $0xa18] sm:$0xff]
    %v7707 = vld [vmem:[#allocation5 + $0xa20] sm:$0xff]
    %v7708 = vld [vmem:[#allocation5 + $0xa28] sm:$0xff]
    %v7709 = vld [vmem:[#allocation5 + $0xa30] sm:$0xff]
    %v7710 = vld [vmem:[#allocation5 + $0xa38] sm:$0xff]
    %v7711 = vld [vmem:[#allocation5 + $0xa40] sm:$0xff]
    %v7712 = vld [vmem:[#allocation5 + $0xa48] sm:$0xff]
    %v7713 = vld [vmem:[#allocation5 + $0xa50] sm:$0xff]
    %v7714 = vld [vmem:[#allocation5 + $0xa58] sm:$0xff]
    %v7715 = vld [vmem:[#allocation5 + $0xa60] sm:$0xff]
    %v7716 = vld [vmem:[#allocation5 + $0xa68] sm:$0xff]
    %v7717 = vld [vmem:[#allocation5 + $0xa70] sm:$0xff]
    %v7718 = vld [vmem:[#allocation5 + $0xa78] sm:$0xff]
    %v7719 = vld [vmem:[#allocation5 + $0xa80] sm:$0xff]
    %v7720 = vld [vmem:[#allocation5 + $0xa88] sm:$0xff]
    %v7721 = vld [vmem:[#allocation5 + $0xa90] sm:$0xff]
    %v7722 = vld [vmem:[#allocation5 + $0xa98] sm:$0xff]
    %v7723 = vld [vmem:[#allocation5 + $0xaa0] sm:$0xff]
    %v7724 = vld [vmem:[#allocation5 + $0xaa8] sm:$0xff]
    %v7725 = vld [vmem:[#allocation5 + $0xab0] sm:$0xff]
    %v7726 = vld [vmem:[#allocation5 + $0xab8] sm:$0xff]
    %v7727 = vld [vmem:[#allocation5 + $0xac0] sm:$0xff]
    %v7728 = vld [vmem:[#allocation5 + $0xac8] sm:$0xff]
    %v7729 = vld [vmem:[#allocation5 + $0xad0] sm:$0xff]
    %v7730 = vld [vmem:[#allocation5 + $0xad8] sm:$0xff]
    %v7731 = vld [vmem:[#allocation5 + $0xae0] sm:$0xff]
    %v7732 = vld [vmem:[#allocation5 + $0xae8] sm:$0xff]
    %v7733 = vld [vmem:[#allocation5 + $0xaf0] sm:$0xff]
    %v7734 = vld [vmem:[#allocation5 + $0xaf8] sm:$0xff]
    %v7735 = vld [vmem:[#allocation5 + $0xb00] sm:$0xff]
    %v7736 = vld [vmem:[#allocation5 + $0xb08] sm:$0xff]
    %v7737 = vld [vmem:[#allocation5 + $0xb10] sm:$0xff]
    %v7738 = vld [vmem:[#allocation5 + $0xb18] sm:$0xff]
    %v7739 = vld [vmem:[#allocation5 + $0xb20] sm:$0xff]
    %v7740 = vld [vmem:[#allocation5 + $0xb28] sm:$0xff]
    %v7741 = vld [vmem:[#allocation5 + $0xb30] sm:$0xff]
    %v7742 = vld [vmem:[#allocation5 + $0xb38] sm:$0xff]
    %v7743 = vld [vmem:[#allocation5 + $0xb40] sm:$0xff]
    %v7744 = vld [vmem:[#allocation5 + $0xb48] sm:$0xff]
    %v7745 = vld [vmem:[#allocation5 + $0xb50] sm:$0xff]
    %v7746 = vld [vmem:[#allocation5 + $0xb58] sm:$0xff]
    %v7747 = vld [vmem:[#allocation5 + $0xb60] sm:$0xff]
    %v7748 = vld [vmem:[#allocation5 + $0xb68] sm:$0xff]
    %v7749 = vld [vmem:[#allocation5 + $0xb70] sm:$0xff]
    %v7750 = vld [vmem:[#allocation5 + $0xb78] sm:$0xff]
    %v7751 = vld [vmem:[#allocation5 + $0xb80] sm:$0xff]
    %v7752 = vld [vmem:[#allocation5 + $0xb88] sm:$0xff]
    %v7753 = vld [vmem:[#allocation5 + $0xb90] sm:$0xff]
    %v7754 = vld [vmem:[#allocation5 + $0xb98] sm:$0xff]
    %v7755 = vld [vmem:[#allocation5 + $0xba0] sm:$0xff]
    %v7756 = vld [vmem:[#allocation5 + $0xba8] sm:$0xff]
    %v7757 = vld [vmem:[#allocation5 + $0xbb0] sm:$0xff]
    %v7758 = vld [vmem:[#allocation5 + $0xbb8] sm:$0xff]
    %v7759 = vld [vmem:[#allocation5 + $0xbc0] sm:$0xff]
    %v7760 = vld [vmem:[#allocation5 + $0xbc8] sm:$0xff]
    %v7761 = vld [vmem:[#allocation5 + $0xbd0] sm:$0xff]
    %v7762 = vld [vmem:[#allocation5 + $0xbd8] sm:$0xff]
    %v7763 = vld [vmem:[#allocation5 + $0xbe0] sm:$0xff]
    %v7764 = vld [vmem:[#allocation5 + $0xbe8] sm:$0xff]
    %v7765 = vld [vmem:[#allocation5 + $0xbf0] sm:$0xff]
    %v7766 = vld [vmem:[#allocation5 + $0xbf8] sm:$0xff]
    %v7767 = vld [vmem:[#allocation7] sm:$0xff]
    %v7769 = vlaneseq
    %v7770 = vshrl.u32 %v7769, 7
    %v7771 = vsub.s32 0, %v7770
    %v7772 = vrot.slane %v7767, %v7771
    %v7773 = vlaneseq
    %v7774 = vshrl.u32 %v7773, 7
    %v7775 = vsub.s32 1, %v7774
    %v7776 = vrot.slane %v7767, %v7775
    %v7777 = vlaneseq
    %v7778 = vshrl.u32 %v7777, 7
    %v7779 = vsub.s32 2, %v7778
    %v7780 = vrot.slane %v7767, %v7779
    %v7781 = vlaneseq
    %v7782 = vshrl.u32 %v7781, 7
    %v7783 = vsub.s32 3, %v7782
    %v7784 = vrot.slane %v7767, %v7783
    %v7785 = vlaneseq
    %v7786 = vshrl.u32 %v7785, 7
    %v7787 = vsub.s32 4, %v7786
    %v7788 = vrot.slane %v7767, %v7787
    %v7789 = vlaneseq
    %v7790 = vshrl.u32 %v7789, 7
    %v7791 = vsub.s32 5, %v7790
    %v7792 = vrot.slane %v7767, %v7791
    %v7793 = vlaneseq
    %v7794 = vshrl.u32 %v7793, 7
    %v7795 = vsub.s32 6, %v7794
    %v7796 = vrot.slane %v7767, %v7795
    %v7797 = vlaneseq
    %v7798 = vshrl.u32 %v7797, 7
    %v7799 = vsub.s32 7, %v7798
    %v7800 = vrot.slane %v7767, %v7799
    %7809 = vmatprep.subr.mxu0 %v7384
    %7810 = vmatpush1.msra.mxu0 %v7383
    %7811 = vmatprep.subr.mxu0 %v7392
    %7812 = vmatpush1.msra.mxu0 %v7391
    %7813 = vmatprep.subr.mxu0 %v7400
    %7814 = vmatpush1.msra.mxu0 %v7399
    %7815 = vmatprep.subr.mxu0 %v7408
    %7816 = vmatpush1.msra.mxu0 %v7407
    %7817 = vmatprep.subr.mxu0 %v7416
    %7818 = vmatpush1.msra.mxu0 %v7415
    %7819 = vmatprep.subr.mxu0 %v7424
    %7820 = vmatpush1.msra.mxu0 %v7423
    %7821 = vmatprep.subr.mxu0 %v7432
    %7822 = vmatpush1.msra.mxu0 %v7431
    %7823 = vmatprep.subr.mxu0 %v7440
    %7824 = vmatpush1.msra.mxu0 %v7439
    %7825 = vmatprep.subr.mxu0 %v7448
    %7826 = vmatpush1.msra.mxu0 %v7447
    %7827 = vmatprep.subr.mxu0 %v7456
    %7828 = vmatpush1.msra.mxu0 %v7455
    %7829 = vmatprep.subr.mxu0 %v7464
    %7830 = vmatpush1.msra.mxu0 %v7463
    %7831 = vmatprep.subr.mxu0 %v7472
    %7832 = vmatpush1.msra.mxu0 %v7471
    %7833 = vmatprep.subr.mxu0 %v7480
    %7834 = vmatpush1.msra.mxu0 %v7479
    %7835 = vmatprep.subr.mxu0 %v7488
    %7836 = vmatpush1.msra.mxu0 %v7487
    %7837 = vmatprep.subr.mxu0 %v7496
    %7838 = vmatpush1.msra.mxu0 %v7495
    %7839 = vmatprep.subr.mxu0 %v7504
    %7840 = vmatpush1.msra.mxu0 %v7503
    %7841 = vmatprep.subr.mxu0 %v7512
    %7842 = vmatpush1.msra.mxu0 %v7511
    %7843 = vmatprep.subr.mxu0 %v7520
    %7844 = vmatpush1.msra.mxu0 %v7519
    %7845 = vmatprep.subr.mxu0 %v7528
    %7846 = vmatpush1.msra.mxu0 %v7527
    %7847 = vmatprep.subr.mxu0 %v7536
    %7848 = vmatpush1.msra.mxu0 %v7535
    %7849 = vmatprep.subr.mxu0 %v7544
    %7850 = vmatpush1.msra.mxu0 %v7543
    %7851 = vmatprep.subr.mxu0 %v7552
    %7852 = vmatpush1.msra.mxu0 %v7551
    %7853 = vmatprep.subr.mxu0 %v7560
    %7854 = vmatpush1.msra.mxu0 %v7559
    %7855 = vmatprep.subr.mxu0 %v7568
    %7856 = vmatpush1.msra.mxu0 %v7567
    %7857 = vmatprep.subr.mxu0 %v7576
    %7858 = vmatpush1.msra.mxu0 %v7575
    %7859 = vmatprep.subr.mxu0 %v7584
    %7860 = vmatpush1.msra.mxu0 %v7583
    %7861 = vmatprep.subr.mxu0 %v7592
    %7862 = vmatpush1.msra.mxu0 %v7591
    %7863 = vmatprep.subr.mxu0 %v7600
    %7864 = vmatpush1.msra.mxu0 %v7599
    %7865 = vmatprep.subr.mxu0 %v7608
    %7866 = vmatpush1.msra.mxu0 %v7607
    %7867 = vmatprep.subr.mxu0 %v7616
    %7868 = vmatpush1.msra.mxu0 %v7615
    %7869 = vmatprep.subr.mxu0 %v7624
    %7870 = vmatpush1.msra.mxu0 %v7623
    %7871 = vmatprep.subr.mxu0 %v7632
    %7872 = vmatpush1.msra.mxu0 %v7631
    %7873 = vmatprep.mubr.f32.mxu0 %v7376
    %7874 = vmatmul.mubr.f32.gmra.mrb[0].mxu0 %v7382
    %v7875 = vpop.f32.mrb[0].mxu0
    %v7876 = vadd.f32 %v7772, %v7875
    %v7877 = vpop.f32.mrb[0].mxu0
    %v7878 = vadd.f32 %v7776, %v7877
    %7879 = vdwg.mxu0
    %7880 = vmatprep.subr.mxu0 %v7640
    %7881 = vmatpush1.msra.mxu0 %v7639
    %7882 = vmatprep.subr.mxu0 %v7648
    %7883 = vmatpush1.msra.mxu0 %v7647
    %7884 = vmatprep.subr.mxu0 %v7656
    %7885 = vmatpush1.msra.mxu0 %v7655
    %7886 = vmatprep.subr.mxu0 %v7664
    %7887 = vmatpush1.msra.mxu0 %v7663
    %7888 = vmatprep.subr.mxu0 %v7672
    %7889 = vmatpush1.msra.mxu0 %v7671
    %7890 = vmatprep.subr.mxu0 %v7680
    %7891 = vmatpush1.msra.mxu0 %v7679
    %7892 = vmatprep.subr.mxu0 %v7688
    %7893 = vmatpush1.msra.mxu0 %v7687
    %7894 = vmatprep.subr.mxu0 %v7696
    %7895 = vmatpush1.msra.mxu0 %v7695
    %7896 = vmatprep.subr.mxu0 %v7704
    %7897 = vmatpush1.msra.mxu0 %v7703
    %7898 = vmatprep.subr.mxu0 %v7712
    %7899 = vmatpush1.msra.mxu0 %v7711
    %7900 = vmatprep.subr.mxu0 %v7720
    %7901 = vmatpush1.msra.mxu0 %v7719
    %7902 = vmatprep.subr.mxu0 %v7728
    %7903 = vmatpush1.msra.mxu0 %v7727
    %7904 = vmatprep.subr.mxu0 %v7736
    %7905 = vmatpush1.msra.mxu0 %v7735
    %7906 = vmatprep.subr.mxu0 %v7744
    %7907 = vmatpush1.msra.mxu0 %v7743
    %7908 = vmatprep.subr.mxu0 %v7752
    %7909 = vmatpush1.msra.mxu0 %v7751
    %7910 = vmatprep.subr.mxu0 %v7760
    %7911 = vmatpush1.msra.mxu0 %v7759
    %7912 = vmatprep.subr.mxu0 0.0
    %7913 = vmatpush1.msra.mxu0 0.0
    %7914 = vmatprep.subr.mxu0 0.0
    %7915 = vmatpush1.msra.mxu0 0.0
    %7916 = vmatprep.subr.mxu0 0.0
    %7917 = vmatpush1.msra.mxu0 0.0
    %7918 = vmatprep.subr.mxu0 0.0
    %7919 = vmatpush1.msra.mxu0 0.0
    %7920 = vmatprep.subr.mxu0 0.0
    %7921 = vmatpush1.msra.mxu0 0.0
    %7922 = vmatprep.subr.mxu0 0.0
    %7923 = vmatpush1.msra.mxu0 0.0
    %7924 = vmatprep.subr.mxu0 0.0
    %7925 = vmatpush1.msra.mxu0 0.0
    %7926 = vmatprep.subr.mxu0 0.0
    %7927 = vmatpush1.msra.mxu0 0.0
    %7928 = vmatprep.subr.mxu0 0.0
    %7929 = vmatpush1.msra.mxu0 0.0
    %7930 = vmatprep.subr.mxu0 0.0
    %7931 = vmatpush1.msra.mxu0 0.0
    %7932 = vmatprep.subr.mxu0 0.0
    %7933 = vmatpush1.msra.mxu0 0.0
    %7934 = vmatprep.subr.mxu0 0.0
    %7935 = vmatpush1.msra.mxu0 0.0
    %7936 = vmatprep.subr.mxu0 0.0
    %7937 = vmatpush1.msra.mxu0 0.0
    %7938 = vmatprep.subr.mxu0 0.0
    %7939 = vmatpush1.msra.mxu0 0.0
    %7940 = vmatprep.subr.mxu0 0.0
    %7941 = vmatpush1.msra.mxu0 0.0
    %7942 = vmatprep.subr.mxu0 0.0
    %7943 = vmatpush1.msra.mxu0 0.0
    %7944 = vmatprep.mubr.f32.mxu0 0.0
    %7945 = vmatmul.mubr.f32.gmra.mrb[0].mxu0 %v7377
    %v7946 = vpop.f32.mrb[0].mxu0
    %v7947 = vadd.f32 %v7876, %v7946
    %v7948 = vpop.f32.mrb[0].mxu0
    %v7949 = vadd.f32 %v7878, %v7948
    %7950 = vdwg.mxu0
    %7951 = vmatprep.subr.mxu0 %v7386
    %7952 = vmatpush1.msra.mxu0 %v7385
    %7953 = vmatprep.subr.mxu0 %v7394
    %7954 = vmatpush1.msra.mxu0 %v7393
    %7955 = vmatprep.subr.mxu0 %v7402
    %7956 = vmatpush1.msra.mxu0 %v7401
    %7957 = vmatprep.subr.mxu0 %v7410
    %7958 = vmatpush1.msra.mxu0 %v7409
    %7959 = vmatprep.subr.mxu0 %v7418
    %7960 = vmatpush1.msra.mxu0 %v7417
    %7961 = vmatprep.subr.mxu0 %v7426
    %7962 = vmatpush1.msra.mxu0 %v7425
    %7963 = vmatprep.subr.mxu0 %v7434
    %7964 = vmatpush1.msra.mxu0 %v7433
    %7965 = vmatprep.subr.mxu0 %v7442
    %7966 = vmatpush1.msra.mxu0 %v7441
    %7967 = vmatprep.subr.mxu0 %v7450
    %7968 = vmatpush1.msra.mxu0 %v7449
    %7969 = vmatprep.subr.mxu0 %v7458
    %7970 = vmatpush1.msra.mxu0 %v7457
    %7971 = vmatprep.subr.mxu0 %v7466
    %7972 = vmatpush1.msra.mxu0 %v7465
    %7973 = vmatprep.subr.mxu0 %v7474
    %7974 = vmatpush1.msra.mxu0 %v7473
    %7975 = vmatprep.subr.mxu0 %v7482
    %7976 = vmatpush1.msra.mxu0 %v7481
    %7977 = vmatprep.subr.mxu0 %v7490
    %7978 = vmatpush1.msra.mxu0 %v7489
    %7979 = vmatprep.subr.mxu0 %v7498
    %7980 = vmatpush1.msra.mxu0 %v7497
    %7981 = vmatprep.subr.mxu0 %v7506
    %7982 = vmatpush1.msra.mxu0 %v7505
    %7983 = vmatprep.subr.mxu0 %v7514
    %7984 = vmatpush1.msra.mxu0 %v7513
    %7985 = vmatprep.subr.mxu0 %v7522
    %7986 = vmatpush1.msra.mxu0 %v7521
    %7987 = vmatprep.subr.mxu0 %v7530
    %7988 = vmatpush1.msra.mxu0 %v7529
    %7989 = vmatprep.subr.mxu0 %v7538
    %7990 = vmatpush1.msra.mxu0 %v7537
    %7991 = vmatprep.subr.mxu0 %v7546
    %7992 = vmatpush1.msra.mxu0 %v7545
    %7993 = vmatprep.subr.mxu0 %v7554
    %7994 = vmatpush1.msra.mxu0 %v7553
    %7995 = vmatprep.subr.mxu0 %v7562
    %7996 = vmatpush1.msra.mxu0 %v7561
    %7997 = vmatprep.subr.mxu0 %v7570
    %7998 = vmatpush1.msra.mxu0 %v7569
    %7999 = vmatprep.subr.mxu0 %v7578
    %8000 = vmatpush1.msra.mxu0 %v7577
    %8001 = vmatprep.subr.mxu0 %v7586
    %8002 = vmatpush1.msra.mxu0 %v7585
    %8003 = vmatprep.subr.mxu0 %v7594
    %8004 = vmatpush1.msra.mxu0 %v7593
    %8005 = vmatprep.subr.mxu0 %v7602
    %8006 = vmatpush1.msra.mxu0 %v7601
    %8007 = vmatprep.subr.mxu0 %v7610
    %8008 = vmatpush1.msra.mxu0 %v7609
    %8009 = vmatprep.subr.mxu0 %v7618
    %8010 = vmatpush1.msra.mxu0 %v7617
    %8011 = vmatprep.subr.mxu0 %v7626
    %8012 = vmatpush1.msra.mxu0 %v7625
    %8013 = vmatprep.subr.mxu0 %v7634
    %8014 = vmatpush1.msra.mxu0 %v7633
    %8015 = vmatprep.mubr.f32.mxu0 %v7376
    %8016 = vmatmul.mubr.f32.gmra.mrb[0].mxu0 %v7382
    %v8017 = vpop.f32.mrb[0].mxu0
    %v8018 = vadd.f32 %v7780, %v8017
    %v8019 = vpop.f32.mrb[0].mxu0
    %v8020 = vadd.f32 %v7784, %v8019
    %8021 = vdwg.mxu0
    %8022 = vmatprep.subr.mxu0 %v7642
    %8023 = vmatpush1.msra.mxu0 %v7641
    %8024 = vmatprep.subr.mxu0 %v7650
    %8025 = vmatpush1.msra.mxu0 %v7649
    %8026 = vmatprep.subr.mxu0 %v7658
    %8027 = vmatpush1.msra.mxu0 %v7657
    %8028 = vmatprep.subr.mxu0 %v7666
    %8029 = vmatpush1.msra.mxu0 %v7665
    %8030 = vmatprep.subr.mxu0 %v7674
    %8031 = vmatpush1.msra.mxu0 %v7673
    %8032 = vmatprep.subr.mxu0 %v7682
    %8033 = vmatpush1.msra.mxu0 %v7681
    %8034 = vmatprep.subr.mxu0 %v7690
    %8035 = vmatpush1.msra.mxu0 %v7689
    %8036 = vmatprep.subr.mxu0 %v7698
    %8037 = vmatpush1.msra.mxu0 %v7697
    %8038 = vmatprep.subr.mxu0 %v7706
    %8039 = vmatpush1.msra.mxu0 %v7705
    %8040 = vmatprep.subr.mxu0 %v7714
    %8041 = vmatpush1.msra.mxu0 %v7713
    %8042 = vmatprep.subr.mxu0 %v7722
    %8043 = vmatpush1.msra.mxu0 %v7721
    %8044 = vmatprep.subr.mxu0 %v7730
    %8045 = vmatpush1.msra.mxu0 %v7729
    %8046 = vmatprep.subr.mxu0 %v7738
    %8047 = vmatpush1.msra.mxu0 %v7737
    %8048 = vmatprep.subr.mxu0 %v7746
    %8049 = vmatpush1.msra.mxu0 %v7745
    %8050 = vmatprep.subr.mxu0 %v7754
    %8051 = vmatpush1.msra.mxu0 %v7753
    %8052 = vmatprep.subr.mxu0 %v7762
    %8053 = vmatpush1.msra.mxu0 %v7761
    %8054 = vmatprep.subr.mxu0 0.0
    %8055 = vmatpush1.msra.mxu0 0.0
    %8056 = vmatprep.subr.mxu0 0.0
    %8057 = vmatpush1.msra.mxu0 0.0
    %8058 = vmatprep.subr.mxu0 0.0
    %8059 = vmatpush1.msra.mxu0 0.0
    %8060 = vmatprep.subr.mxu0 0.0
    %8061 = vmatpush1.msra.mxu0 0.0
    %8062 = vmatprep.subr.mxu0 0.0
    %8063 = vmatpush1.msra.mxu0 0.0
    %8064 = vmatprep.subr.mxu0 0.0
    %8065 = vmatpush1.msra.mxu0 0.0
    %8066 = vmatprep.subr.mxu0 0.0
    %8067 = vmatpush1.msra.mxu0 0.0
    %8068 = vmatprep.subr.mxu0 0.0
    %8069 = vmatpush1.msra.mxu0 0.0
    %8070 = vmatprep.subr.mxu0 0.0
    %8071 = vmatpush1.msra.mxu0 0.0
    %8072 = vmatprep.subr.mxu0 0.0
    %8073 = vmatpush1.msra.mxu0 0.0
    %8074 = vmatprep.subr.mxu0 0.0
    %8075 = vmatpush1.msra.mxu0 0.0
    %8076 = vmatprep.subr.mxu0 0.0
    %8077 = vmatpush1.msra.mxu0 0.0
    %8078 = vmatprep.subr.mxu0 0.0
    %8079 = vmatpush1.msra.mxu0 0.0
    %8080 = vmatprep.subr.mxu0 0.0
    %8081 = vmatpush1.msra.mxu0 0.0
    %8082 = vmatprep.subr.mxu0 0.0
    %8083 = vmatpush1.msra.mxu0 0.0
    %8084 = vmatprep.subr.mxu0 0.0
    %8085 = vmatpush1.msra.mxu0 0.0
    %8086 = vmatprep.mubr.f32.mxu0 0.0
    %8087 = vmatmul.mubr.f32.gmra.mrb[0].mxu0 %v7377
    %v8088 = vpop.f32.mrb[0].mxu0
    %v8089 = vadd.f32 %v8018, %v8088
    %v8090 = vpop.f32.mrb[0].mxu0
    %v8091 = vadd.f32 %v8020, %v8090
    %8092 = vdwg.mxu0
    %8093 = vmatprep.subr.mxu0 %v7388
    %8094 = vmatpush1.msra.mxu0 %v7387
    %8095 = vmatprep.subr.mxu0 %v7396
    %8096 = vmatpush1.msra.mxu0 %v7395
    %8097 = vmatprep.subr.mxu0 %v7404
    %8098 = vmatpush1.msra.mxu0 %v7403
    %8099 = vmatprep.subr.mxu0 %v7412
    %8100 = vmatpush1.msra.mxu0 %v7411
    %8101 = vmatprep.subr.mxu0 %v7420
    %8102 = vmatpush1.msra.mxu0 %v7419
    %8103 = vmatprep.subr.mxu0 %v7428
    %8104 = vmatpush1.msra.mxu0 %v7427
    %8105 = vmatprep.subr.mxu0 %v7436
    %8106 = vmatpush1.msra.mxu0 %v7435
    %8107 = vmatprep.subr.mxu0 %v7444
    %8108 = vmatpush1.msra.mxu0 %v7443
    %8109 = vmatprep.subr.mxu0 %v7452
    %8110 = vmatpush1.msra.mxu0 %v7451
    %8111 = vmatprep.subr.mxu0 %v7460
    %8112 = vmatpush1.msra.mxu0 %v7459
    %8113 = vmatprep.subr.mxu0 %v7468
    %8114 = vmatpush1.msra.mxu0 %v7467
    %8115 = vmatprep.subr.mxu0 %v7476
    %8116 = vmatpush1.msra.mxu0 %v7475
    %8117 = vmatprep.subr.mxu0 %v7484
    %8118 = vmatpush1.msra.mxu0 %v7483
    %8119 = vmatprep.subr.mxu0 %v7492
    %8120 = vmatpush1.msra.mxu0 %v7491
    %8121 = vmatprep.subr.mxu0 %v7500
    %8122 = vmatpush1.msra.mxu0 %v7499
    %8123 = vmatprep.subr.mxu0 %v7508
    %8124 = vmatpush1.msra.mxu0 %v7507
    %8125 = vmatprep.subr.mxu0 %v7516
    %8126 = vmatpush1.msra.mxu0 %v7515
    %8127 = vmatprep.subr.mxu0 %v7524
    %8128 = vmatpush1.msra.mxu0 %v7523
    %8129 = vmatprep.subr.mxu0 %v7532
    %8130 = vmatpush1.msra.mxu0 %v7531
    %8131 = vmatprep.subr.mxu0 %v7540
    %8132 = vmatpush1.msra.mxu0 %v7539
    %8133 = vmatprep.subr.mxu0 %v7548
    %8134 = vmatpush1.msra.mxu0 %v7547
    %8135 = vmatprep.subr.mxu0 %v7556
    %8136 = vmatpush1.msra.mxu0 %v7555
    %8137 = vmatprep.subr.mxu0 %v7564
    %8138 = vmatpush1.msra.mxu0 %v7563
    %8139 = vmatprep.subr.mxu0 %v7572
    %8140 = vmatpush1.msra.mxu0 %v7571
    %8141 = vmatprep.subr.mxu0 %v7580
    %8142 = vmatpush1.msra.mxu0 %v7579
    %8143 = vmatprep.subr.mxu0 %v7588
    %8144 = vmatpush1.msra.mxu0 %v7587
    %8145 = vmatprep.subr.mxu0 %v7596
    %8146 = vmatpush1.msra.mxu0 %v7595
    %8147 = vmatprep.subr.mxu0 %v7604
    %8148 = vmatpush1.msra.mxu0 %v7603
    %8149 = vmatprep.subr.mxu0 %v7612
    %8150 = vmatpush1.msra.mxu0 %v7611
    %8151 = vmatprep.subr.mxu0 %v7620
    %8152 = vmatpush1.msra.mxu0 %v7619
    %8153 = vmatprep.subr.mxu0 %v7628
    %8154 = vmatpush1.msra.mxu0 %v7627
    %8155 = vmatprep.subr.mxu0 %v7636
    %8156 = vmatpush1.msra.mxu0 %v7635
    %8157 = vmatprep.mubr.f32.mxu0 %v7376
    %8158 = vmatmul.mubr.f32.gmra.mrb[0].mxu0 %v7382
    %v8159 = vpop.f32.mrb[0].mxu0
    %v8160 = vadd.f32 %v7788, %v8159
    %v8161 = vpop.f32.mrb[0].mxu0
    %v8162 = vadd.f32 %v7792, %v8161
    %8163 = vdwg.mxu0
    %8164 = vmatprep.subr.mxu0 %v7644
    %8165 = vmatpush1.msra.mxu0 %v7643
    %8166 = vmatprep.subr.mxu0 %v7652
    %8167 = vmatpush1.msra.mxu0 %v7651
    %8168 = vmatprep.subr.mxu0 %v7660
    %8169 = vmatpush1.msra.mxu0 %v7659
    %8170 = vmatprep.subr.mxu0 %v7668
    %8171 = vmatpush1.msra.mxu0 %v7667
    %8172 = vmatprep.subr.mxu0 %v7676
    %8173 = vmatpush1.msra.mxu0 %v7675
    %8174 = vmatprep.subr.mxu0 %v7684
    %8175 = vmatpush1.msra.mxu0 %v7683
    %8176 = vmatprep.subr.mxu0 %v7692
    %8177 = vmatpush1.msra.mxu0 %v7691
    %8178 = vmatprep.subr.mxu0 %v7700
    %8179 = vmatpush1.msra.mxu0 %v7699
    %8180 = vmatprep.subr.mxu0 %v7708
    %8181 = vmatpush1.msra.mxu0 %v7707
    %8182 = vmatprep.subr.mxu0 %v7716
    %8183 = vmatpush1.msra.mxu0 %v7715
    %8184 = vmatprep.subr.mxu0 %v7724
    %8185 = vmatpush1.msra.mxu0 %v7723
    %8186 = vmatprep.subr.mxu0 %v7732
    %8187 = vmatpush1.msra.mxu0 %v7731
    %8188 = vmatprep.subr.mxu0 %v7740
    %8189 = vmatpush1.msra.mxu0 %v7739
    %8190 = vmatprep.subr.mxu0 %v7748
    %8191 = vmatpush1.msra.mxu0 %v7747
    %8192 = vmatprep.subr.mxu0 %v7756
    %8193 = vmatpush1.msra.mxu0 %v7755
    %8194 = vmatprep.subr.mxu0 %v7764
    %8195 = vmatpush1.msra.mxu0 %v7763
    %8196 = vmatprep.subr.mxu0 0.0
    %8197 = vmatpush1.msra.mxu0 0.0
    %8198 = vmatprep.subr.mxu0 0.0
    %8199 = vmatpush1.msra.mxu0 0.0
    %8200 = vmatprep.subr.mxu0 0.0
    %8201 = vmatpush1.msra.mxu0 0.0
    %8202 = vmatprep.subr.mxu0 0.0
    %8203 = vmatpush1.msra.mxu0 0.0
    %8204 = vmatprep.subr.mxu0 0.0
    %8205 = vmatpush1.msra.mxu0 0.0
    %8206 = vmatprep.subr.mxu0 0.0
    %8207 = vmatpush1.msra.mxu0 0.0
    %8208 = vmatprep.subr.mxu0 0.0
    %8209 = vmatpush1.msra.mxu0 0.0
    %8210 = vmatprep.subr.mxu0 0.0
    %8211 = vmatpush1.msra.mxu0 0.0
    %8212 = vmatprep.subr.mxu0 0.0
    %8213 = vmatpush1.msra.mxu0 0.0
    %8214 = vmatprep.subr.mxu0 0.0
    %8215 = vmatpush1.msra.mxu0 0.0
    %8216 = vmatprep.subr.mxu0 0.0
    %8217 = vmatpush1.msra.mxu0 0.0
    %8218 = vmatprep.subr.mxu0 0.0
    %8219 = vmatpush1.msra.mxu0 0.0
    %8220 = vmatprep.subr.mxu0 0.0
    %8221 = vmatpush1.msra.mxu0 0.0
    %8222 = vmatprep.subr.mxu0 0.0
    %8223 = vmatpush1.msra.mxu0 0.0
    %8224 = vmatprep.subr.mxu0 0.0
    %8225 = vmatpush1.msra.mxu0 0.0
    %8226 = vmatprep.subr.mxu0 0.0
    %8227 = vmatpush1.msra.mxu0 0.0
    %8228 = vmatprep.mubr.f32.mxu0 0.0
    %8229 = vmatmul.mubr.f32.gmra.mrb[0].mxu0 %v7377
    %v8230 = vpop.f32.mrb[0].mxu0
    %v8231 = vadd.f32 %v8160, %v8230
    %v8232 = vpop.f32.mrb[0].mxu0
    %v8233 = vadd.f32 %v8162, %v8232
    %8234 = vdwg.mxu0
    %8235 = vmatprep.subr.mxu0 %v7390
    %8236 = vmatpush1.msra.mxu0 %v7389
    %8237 = vmatprep.subr.mxu0 %v7398
    %8238 = vmatpush1.msra.mxu0 %v7397
    %8239 = vmatprep.subr.mxu0 %v7406
    %8240 = vmatpush1.msra.mxu0 %v7405
    %8241 = vmatprep.subr.mxu0 %v7414
    %8242 = vmatpush1.msra.mxu0 %v7413
    %8243 = vmatprep.subr.mxu0 %v7422
    %8244 = vmatpush1.msra.mxu0 %v7421
    %8245 = vmatprep.subr.mxu0 %v7430
    %8246 = vmatpush1.msra.mxu0 %v7429
    %8247 = vmatprep.subr.mxu0 %v7438
    %8248 = vmatpush1.msra.mxu0 %v7437
    %8249 = vmatprep.subr.mxu0 %v7446
    %8250 = vmatpush1.msra.mxu0 %v7445
    %8251 = vmatprep.subr.mxu0 %v7454
    %8252 = vmatpush1.msra.mxu0 %v7453
    %8253 = vmatprep.subr.mxu0 %v7462
    %8254 = vmatpush1.msra.mxu0 %v7461
    %8255 = vmatprep.subr.mxu0 %v7470
    %8256 = vmatpush1.msra.mxu0 %v7469
    %8257 = vmatprep.subr.mxu0 %v7478
    %8258 = vmatpush1.msra.mxu0 %v7477
    %8259 = vmatprep.subr.mxu0 %v7486
    %8260 = vmatpush1.msra.mxu0 %v7485
    %8261 = vmatprep.subr.mxu0 %v7494
    %8262 = vmatpush1.msra.mxu0 %v7493
    %8263 = vmatprep.subr.mxu0 %v7502
    %8264 = vmatpush1.msra.mxu0 %v7501
    %8265 = vmatprep.subr.mxu0 %v7510
    %8266 = vmatpush1.msra.mxu0 %v7509
    %8267 = vmatprep.subr.mxu0 %v7518
    %8268 = vmatpush1.msra.mxu0 %v7517
    %8269 = vmatprep.subr.mxu0 %v7526
    %8270 = vmatpush1.msra.mxu0 %v7525
    %8271 = vmatprep.subr.mxu0 %v7534
    %8272 = vmatpush1.msra.mxu0 %v7533
    %8273 = vmatprep.subr.mxu0 %v7542
    %8274 = vmatpush1.msra.mxu0 %v7541
    %8275 = vmatprep.subr.mxu0 %v7550
    %8276 = vmatpush1.msra.mxu0 %v7549
    %8277 = vmatprep.subr.mxu0 %v7558
    %8278 = vmatpush1.msra.mxu0 %v7557
    %8279 = vmatprep.subr.mxu0 %v7566
    %8280 = vmatpush1.msra.mxu0 %v7565
    %8281 = vmatprep.subr.mxu0 %v7574
    %8282 = vmatpush1.msra.mxu0 %v7573
    %8283 = vmatprep.subr.mxu0 %v7582
    %8284 = vmatpush1.msra.mxu0 %v7581
    %8285 = vmatprep.subr.mxu0 %v7590
    %8286 = vmatpush1.msra.mxu0 %v7589
    %8287 = vmatprep.subr.mxu0 %v7598
    %8288 = vmatpush1.msra.mxu0 %v7597
    %8289 = vmatprep.subr.mxu0 %v7606
    %8290 = vmatpush1.msra.mxu0 %v7605
    %8291 = vmatprep.subr.mxu0 %v7614
    %8292 = vmatpush1.msra.mxu0 %v7613
    %8293 = vmatprep.subr.mxu0 %v7622
    %8294 = vmatpush1.msra.mxu0 %v7621
    %8295 = vmatprep.subr.mxu0 %v7630
    %8296 = vmatpush1.msra.mxu0 %v7629
    %8297 = vmatprep.subr.mxu0 %v7638
    %8298 = vmatpush1.msra.mxu0 %v7637
    %8299 = vmatprep.mubr.f32.mxu0 %v7376
    %8300 = vmatmul.mubr.f32.gmra.mrb[0].mxu0 %v7382
    %v8301 = vpop.f32.mrb[0].mxu0
    %v8302 = vadd.f32 %v7796, %v8301
    %v8303 = vpop.f32.mrb[0].mxu0
    %v8304 = vadd.f32 %v7800, %v8303
    %8305 = vdwg.mxu0
    %8306 = vmatprep.subr.mxu0 %v7646
    %8307 = vmatpush1.msra.mxu0 %v7645
    %8308 = vmatprep.subr.mxu0 %v7654
    %8309 = vmatpush1.msra.mxu0 %v7653
    %8310 = vmatprep.subr.mxu0 %v7662
    %8311 = vmatpush1.msra.mxu0 %v7661
    %8312 = vmatprep.subr.mxu0 %v7670
    %8313 = vmatpush1.msra.mxu0 %v7669
    %8314 = vmatprep.subr.mxu0 %v7678
    %8315 = vmatpush1.msra.mxu0 %v7677
    %8316 = vmatprep.subr.mxu0 %v7686
    %8317 = vmatpush1.msra.mxu0 %v7685
    %8318 = vmatprep.subr.mxu0 %v7694
    %8319 = vmatpush1.msra.mxu0 %v7693
    %8320 = vmatprep.subr.mxu0 %v7702
    %8321 = vmatpush1.msra.mxu0 %v7701
    %8322 = vmatprep.subr.mxu0 %v7710
    %8323 = vmatpush1.msra.mxu0 %v7709
    %8324 = vmatprep.subr.mxu0 %v7718
    %8325 = vmatpush1.msra.mxu0 %v7717
    %8326 = vmatprep.subr.mxu0 %v7726
    %8327 = vmatpush1.msra.mxu0 %v7725
    %8328 = vmatprep.subr.mxu0 %v7734
    %8329 = vmatpush1.msra.mxu0 %v7733
    %8330 = vmatprep.subr.mxu0 %v7742
    %8331 = vmatpush1.msra.mxu0 %v7741
    %8332 = vmatprep.subr.mxu0 %v7750
    %8333 = vmatpush1.msra.mxu0 %v7749
    %8334 = vmatprep.subr.mxu0 %v7758
    %8335 = vmatpush1.msra.mxu0 %v7757
    %8336 = vmatprep.subr.mxu0 %v7766
    %8337 = vmatpush1.msra.mxu0 %v7765
    %8338 = vmatprep.subr.mxu0 0.0
    %8339 = vmatpush1.msra.mxu0 0.0
    %8340 = vmatprep.subr.mxu0 0.0
    %8341 = vmatpush1.msra.mxu0 0.0
    %8342 = vmatprep.subr.mxu0 0.0
    %8343 = vmatpush1.msra.mxu0 0.0
    %8344 = vmatprep.subr.mxu0 0.0
    %8345 = vmatpush1.msra.mxu0 0.0
    %8346 = vmatprep.subr.mxu0 0.0
    %8347 = vmatpush1.msra.mxu0 0.0
    %8348 = vmatprep.subr.mxu0 0.0
    %8349 = vmatpush1.msra.mxu0 0.0
    %8350 = vmatprep.subr.mxu0 0.0
    %8351 = vmatpush1.msra.mxu0 0.0
    %8352 = vmatprep.subr.mxu0 0.0
    %8353 = vmatpush1.msra.mxu0 0.0
    %8354 = vmatprep.subr.mxu0 0.0
    %8355 = vmatpush1.msra.mxu0 0.0
    %8356 = vmatprep.subr.mxu0 0.0
    %8357 = vmatpush1.msra.mxu0 0.0
    %8358 = vmatprep.subr.mxu0 0.0
    %8359 = vmatpush1.msra.mxu0 0.0
    %8360 = vmatprep.subr.mxu0 0.0
    %8361 = vmatpush1.msra.mxu0 0.0
    %8362 = vmatprep.subr.mxu0 0.0
    %8363 = vmatpush1.msra.mxu0 0.0
    %8364 = vmatprep.subr.mxu0 0.0
    %8365 = vmatpush1.msra.mxu0 0.0
    %8366 = vmatprep.subr.mxu0 0.0
    %8367 = vmatpush1.msra.mxu0 0.0
    %8368 = vmatprep.subr.mxu0 0.0
    %8369 = vmatpush1.msra.mxu0 0.0
    %8370 = vmatprep.mubr.f32.mxu0 0.0
    %8371 = vmatmul.mubr.f32.gmra.mrb[0].mxu0 %v7377
    %v8372 = vpop.f32.mrb[0].mxu0
    %v8373 = vadd.f32 %v8302, %v8372
    %v8374 = vpop.f32.mrb[0].mxu0
    %v8375 = vadd.f32 %v8304, %v8374
    %8376 = vdwg.mxu0
    %v8377 = vxor.u32 %v7947, 2147483648
    %v8378 = vxor.u32 %v7949, 2147483648
    %v8379 = vmul.f32 %v8377, 1.442695
    %v8380 = vpow.pop %v8379
    %v8381 = vmul.f32 %v8378, 1.442695
    %v8382 = vpow.pop %v8381
    %v8383 = vadd.f32 %v8380, 1.0
    %v8384 = vadd.f32 %v8382, 1.0
    %v8385 = vrcp.pop %v8383
    %v8386 = vmul.f32 1.0, %v8385
    %v8387 = vrcp.pop %v8384
    %v8388 = vmul.f32 1.0, %v8387
    %v8389 = vxor.u32 %v8089, 2147483648
    %v8390 = vxor.u32 %v8091, 2147483648
    %v8391 = vmul.f32 %v8389, 1.442695
    %v8392 = vpow.pop %v8391
    %v8393 = vmul.f32 %v8390, 1.442695
    %v8394 = vpow.pop %v8393
    %v8395 = vadd.f32 %v8392, 1.0
    %v8396 = vadd.f32 %v8394, 1.0
    %v8397 = vrcp.pop %v8395
    %v8398 = vmul.f32 1.0, %v8397
    %v8399 = vrcp.pop %v8396
    %v8400 = vmul.f32 1.0, %v8399
    %v8401 = vtanh.pop %v8231
    %v8402 = vtanh.pop %v8233
    %v8403 = vxor.u32 %v8373, 2147483648
    %v8404 = vxor.u32 %v8375, 2147483648
    %v8405 = vmul.f32 %v8403, 1.442695
    %v8406 = vpow.pop %v8405
    %v8407 = vmul.f32 %v8404, 1.442695
    %v8408 = vpow.pop %v8407
    %v8409 = vadd.f32 %v8406, 1.0
    %v8410 = vadd.f32 %v8408, 1.0
    %v8411 = vrcp.pop %v8409
    %v8412 = vmul.f32 1.0, %v8411
    %v8413 = vrcp.pop %v8410
    %v8414 = vmul.f32 1.0, %v8413
    %v8415 = vmul.f32 %v8398, %v7372
    %v8416 = vmul.f32 %v8400, %v7373
    %v8417 = vmul.f32 %v8386, %v8401
    %v8418 = vmul.f32 %v8388, %v8402
    %v8419 = vadd.f32 %v8415, %v8417
    %v8420 = vadd.f32 %v8416, %v8418
    %v8421 = vtanh.pop %v8419
    %v8422 = vtanh.pop %v8420
    %v8423 = vmul.f32 %v8412, %v8421
    %v8424 = vmul.f32 %v8414, %v8422
    %s8425 = scalar_lea.vmem [#allocation8], 112
    %8426 = vst [vmem:[%s8425] sm:$0xff] %v8423
    %8427 = vst [vmem:[%s8425 + $0x8] sm:$0xff] %v8424
    // Predicated region
    $region26: #{tpu_custom_call.1} parent=1 // pred_check
      _
    $region27: #{tpu_custom_call.1} parent=1 // pred_check_branch
      %8429 = sbr.rel (0) target = $region29
    $region28: #{tpu_custom_call.1} parent=1 // pred_region
      %s8431 = ssub.s32 2048, 2048
      %8432 = vsyncadd [#allocation4], %s8431
      %s8433 = sshll.u32 [#allocation8], 4
      %s8434 = int_to_ptr.vmem [resolvable:$true] %s8433
      %8439 = dma.vmem_to_hbm [thread:$0]  %s8434, 2048, %s3, [#allocation4], 256, 256, 16
    $region29: #{tpu_custom_call.1} parent=1 // pred_fallthru
      _
    // Predicated region
    $region30: #{tpu_custom_call.1} parent=1 // pred_check
      _
    $region31: #{tpu_custom_call.1} parent=1 // pred_check_branch
      %8441 = sbr.rel (0) target = $region33
    $region32: #{tpu_custom_call.1} parent=1 // pred_region
      %8442 = dma.done [#allocation4], 2048
    $region33: #{tpu_custom_call.1} parent=1 // pred_fallthru
      _
    %8443 = vsyncpa [#allocation3], 1
    %8444 = vsyncpa [#allocation6], 1
    %8445 = vsyncpa [#allocation4], 1

</llo_original>
